<compile_context>
chip_gen: v7x
topology: tpu7x:2x2x1
jax: 0.10.0
libtpu: 0.0.40
codegen_flags: <defaults>
</compile_context>

<pallas_src>
import math
import numpy as np

import jax
import jax.numpy as jnp
from jax.experimental import pallas as pl
from jax.experimental.pallas import tpu as pltpu

# ----------------------- residue constants (stand-ins for sable `rc`) -----------------
DICT_SIZE = 32
VOCAB_PAD = 128           # lane-dense padded vocab for the LM-head output
PAD, BOS, EOS, MASK = 0, 1, 2, 3

# ----------------------- synthetic config ---------------------------------------------
EMBED_DIM = 64            # config.sable.encoder_embed_dim
HEADS = 4                 # config.sable.encoder_attention_heads
HEAD_DIM = EMBED_DIM // HEADS
FFN_DIM = 128             # config.sable.encoder_ffn_embed_dim
LAYERS = 2                # config.sable.encoder_layers
GBF_K = 16                # gaussian basis size in the DistanceEncoder approximation

_PARAM_DTYPE = jnp.bfloat16   # MXU operand dtype
_BIAS_DTYPE = jnp.bfloat16    # pair bias / raw scores carried between layers


# =====================================================================================
# helpers
# =====================================================================================
def _cp(n_axes=1):
    # <= ~48 MiB scoped VMEM: safe on v7x (64 MiB physical); plenty for v5e/v6e too.
    return pltpu.CompilerParams(
        dimension_semantics=("parallel",) * n_axes,
        vmem_limit_bytes=48 * 1024 * 1024)


def _pick_tm(m, target=1024):
    """Row-tile size: multiple of 8, covers small M in one step, caps VMEM for big M."""
    return max(8, min(target, ((m + 7) // 8) * 8))


def _pick_tq(n_heads, seq_len, budget_bytes=8 * 1024 * 1024):
    """Query-row tile for attention.

    Per query row we hold: bias in + scores out (bf16, double-buffered) plus two f32
    score temporaries per head -> ~ H * L * 16 bytes/row.  Bounding this keeps the
    attention step inside v7x's 64 MiB VMEM at realistic sequence lengths.
    """
    per_row = n_heads * seq_len * (2 * 2 * 2 + 2 * 4)
    tq = max(8, budget_bytes // max(per_row, 1))
    tq = min(tq, ((seq_len + 7) // 8) * 8)
    return max(8, (tq // 8) * 8)


def _gelu(x):
    # tanh-approximate GELU (lowers to the EUP slot inside Mosaic kernels).
    # TODO(synk): erf-exact GELU if bit-exactness with torch.nn.functional.gelu is required.
    return jax.nn.gelu(x, approximate=True)


def _ln_rows(x, g, b):
    mu = jnp.mean(x, axis=-1, keepdims=True)
    var = jnp.mean(jnp.square(x - mu), axis=-1, keepdims=True)
    return (x - mu) * jax.lax.rsqrt(var + 1e-5) * g + b


# =====================================================================================
# Pallas kernels
# =====================================================================================
def _emb_ln_kernel(x_ref, g_ref, b_ref, m_ref, o_ref):
    """Embedding LayerNorm fused with the (1 - padding_mask) row zeroing."""
    x = x_ref[...].astype(jnp.float32)
    o_ref[...] = (_ln_rows(x, g_ref[...], b_ref[...]) * m_ref[...]).astype(o_ref.dtype)


def _ln_kernel(x_ref, g_ref, b_ref, o_ref):
    x = x_ref[...].astype(jnp.float32)
    o_ref[...] = _ln_rows(x, g_ref[...], b_ref[...]).astype(o_ref.dtype)


def _ln_qkv_kernel(x_ref, g_ref, b_ref, w_ref, bq_ref, q_ref, k_ref, v_ref):
    """LayerNorm + packed QKV projection; q/k/v emitted as three [TM, D] bf16 slabs
    so no eager 5-D head-split transpose is needed downstream."""
    D = x_ref.shape[-1]
    x = x_ref[...].astype(jnp.float32)
    xn = _ln_rows(x, g_ref[...], b_ref[...])
    y = jnp.dot(xn.astype(w_ref.dtype), w_ref[...],
                preferred_element_type=jnp.float32) + bq_ref[...]
    y = y.astype(q_ref.dtype)
    q_ref[...] = y[:, :D]
    k_ref[...] = y[:, D:2 * D]
    v_ref[...] = y[:, 2 * D:3 * D]


def _attn_kernel(q_ref, k_ref, v_ref, bias_ref, kmask_ref, s_ref, o_ref):
    """Biased MHSA for one (batch, query-tile) block.

    q: [1,TQ,D]  k/v: [1,L,D]  bias: [1,H,TQ,L] bf16  kmask: [1,1,L] f32 (0 / -inf)
    Writes raw biased scores (bf16, becomes next layer's bias) and head-merged ctx.
    Heads are split by static column slices (no 3-D transposes); softmax normalization
    is deferred to the [TQ,Dh] ctx instead of the [TQ,L] probability tensor.
    """
    H = bias_ref.shape[1]
    D = q_ref.shape[-1]
    Dh = D // H
    q = q_ref[0]                          # [TQ, D] bf16 (1/sqrt(Dh) folded into Wq)
    k = k_ref[0]                          # [L,  D] bf16
    v = v_ref[0]                          # [L,  D] bf16
    kmask = kmask_ref[0]                  # [1, L] f32

    ctx_parts = []
    for h in range(H):                    # static unroll over heads
        qh = q[:, h * Dh:(h + 1) * Dh]
        kh = k[:, h * Dh:(h + 1) * Dh]
        vh = v[:, h * Dh:(h + 1) * Dh]
        sh = jax.lax.dot_general(qh, kh, (((1,), (1,)), ((), ())),
                                 preferred_element_type=jnp.float32)      # [TQ, L]
        sh = sh + bias_ref[0, h].astype(jnp.float32) + kmask
        s_ref[0, h] = sh.astype(s_ref.dtype)       # raw biased scores -> next layer bias
        # NaN guard: a fully padded key row would otherwise give exp(-inf - (-inf)).
        m = jnp.maximum(jnp.max(sh, axis=-1, keepdims=True), -1e30)
        p = jnp.exp(sh - m)
        l = jnp.maximum(jnp.sum(p, axis=-1, keepdims=True), 1e-30)
        ctxh = jnp.dot(p.astype(vh.dtype), vh, preferred_element_type=jnp.float32)
        ctx_parts.append(ctxh * pl.reciprocal(l, approx=True))            # deferred norm
    o_ref[0] = jnp.concatenate(ctx_parts, axis=-1).astype(o_ref.dtype)    # [TQ, D]


def _oproj_ffn_kernel(ctx_ref, r_ref, wo_ref, bo_ref, g_ref, bln_ref,
                      w1_ref, b1_ref, w2_ref, b2_ref, o_ref):
    """attention out-proj + residual + LayerNorm + fc1 + GELU + fc2 + residual,
    all in VMEM (neither the post-attention activation nor fc1's output hit HBM)."""
    x = r_ref[...].astype(jnp.float32) + bo_ref[...] + jnp.dot(
        ctx_ref[...], wo_ref[...], preferred_element_type=jnp.float32)
    xn = _ln_rows(x, g_ref[...], bln_ref[...])
    h = _gelu(jnp.dot(xn.astype(w1_ref.dtype), w1_ref[...],
                      preferred_element_type=jnp.float32) + b1_ref[...])
    y = jnp.dot(h.astype(w2_ref.dtype), w2_ref[...],
                preferred_element_type=jnp.float32) + b2_ref[...]
    o_ref[...] = (x + y).astype(o_ref.dtype)


def _lm_head_kernel(x_ref, w1_ref, b1_ref, g_ref, bln_ref, w2_ref, b2_ref, o_ref):
    """MaskLMHead: dense -> GELU -> LayerNorm -> (lane-padded) vocab projection."""
    x = x_ref[...].astype(jnp.float32)
    h = jnp.dot(x.astype(w1_ref.dtype), w1_ref[...],
                preferred_element_type=jnp.float32) + b1_ref[...]
    h = _gelu(h)
    hn = _ln_rows(h, g_ref[...], bln_ref[...])
    y = jnp.dot(hn.astype(w2_ref.dtype), w2_ref[...],
                preferred_element_type=jnp.float32) + b2_ref[...]
    o_ref[...] = y.astype(o_ref.dtype)


def _gbf_bias_kernel(d_ref, mu_ref, isig_ref, w1_ref, b1_ref, w2_ref, b2_ref, o_ref):
    """DistanceEncoder approximation: gaussian basis + 2-layer MLP per element, writing
    the [B,H,L,L] bias directly with L on the lane axis (no eager transpose afterwards).

    d: [1,TL,L] f32; weights kept feature-on-sublane ([K,1]/[K,K]/[H,K]) so every
    contraction is a plain 2-D matmul with the L axis staying lane-dense throughout.
    """
    TL = d_ref.shape[1]
    isig = isig_ref[...]                                             # [1, 1]
    for r in range(TL):                                              # static unroll
        d = d_ref[0, pl.ds(r, 1), :]                                 # [1, L]
        g = jnp.exp(-0.5 * jnp.square((d - mu_ref[...]) * isig))     # [K, L]
        h = _gelu(jnp.dot(w1_ref[...], g.astype(w1_ref.dtype),
                          preferred_element_type=jnp.float32) + b1_ref[...])   # [K, L]
        y = jnp.dot(w2_ref[...], h.astype(w2_ref.dtype),
                    preferred_element_type=jnp.float32) + b2_ref[...]          # [H, L]
        o_ref[0, :, pl.ds(r, 1), :] = y[:, None, :].astype(o_ref.dtype)


# =====================================================================================
# Pallas wrappers
# =====================================================================================
def pallas_emb_layernorm(x, ln, rowmask):
    B, L, D = x.shape
    M = B * L
    TM = _pick_tm(M)
    out = pl.pallas_call(
        _emb_ln_kernel,
        out_shape=jax.ShapeDtypeStruct((M, D), jnp.float32),
        grid=(pl.cdiv(M, TM),),
        in_specs=[
            pl.BlockSpec((TM, D), lambda i: (i, 0)),
            pl.BlockSpec((1, D), lambda i: (0, 0)),
            pl.BlockSpec((1, D), lambda i: (0, 0)),
            pl.BlockSpec((TM, 1), lambda i: (i, 0)),
        ],
        out_specs=pl.BlockSpec((TM, D), lambda i: (i, 0)),
        compiler_params=_cp(),
    )(x.reshape(M, D), ln["g"], ln["b"], rowmask.reshape(M, 1))
    return out.reshape(B, L, D)


def pallas_layernorm(x, ln):
    shape = x.shape
    D = shape[-1]
    M = int(np.prod(shape[:-1]))
    TM = _pick_tm(M)
    out = pl.pallas_call(
        _ln_kernel,
        out_shape=jax.ShapeDtypeStruct((M, D), jnp.float32),
        grid=(pl.cdiv(M, TM),),
        in_specs=[
            pl.BlockSpec((TM, D), lambda i: (i, 0)),
            pl.BlockSpec((1, D), lambda i: (0, 0)),
            pl.BlockSpec((1, D), lambda i: (0, 0)),
        ],
        out_specs=pl.BlockSpec((TM, D), lambda i: (i, 0)),
        compiler_params=_cp(),
    )(x.reshape(M, D), ln["g"], ln["b"])
    return out.reshape(shape)


def pallas_ln_qkv(x, ln, qkv):
    B, L, D = x.shape
    M = B * L
    TM = _pick_tm(M)
    out_sd = jax.ShapeDtypeStruct((M, D), jnp.bfloat16)
    q, k, v = pl.pallas_call(
        _ln_qkv_kernel,
        out_shape=(out_sd, out_sd, out_sd),
        grid=(pl.cdiv(M, TM),),
        in_specs=[
            pl.BlockSpec((TM, D), lambda i: (i, 0)),
            pl.BlockSpec((1, D), lambda i: (0, 0)),
            pl.BlockSpec((1, D), lambda i: (0, 0)),
            pl.BlockSpec((D, 3 * D), lambda i: (0, 0)),
            pl.BlockSpec((1, 3 * D), lambda i: (0, 0)),
        ],
        out_specs=(pl.BlockSpec((TM, D), lambda i: (i, 0)),
                   pl.BlockSpec((TM, D), lambda i: (i, 0)),
                   pl.BlockSpec((TM, D), lambda i: (i, 0))),
        compiler_params=_cp(),
    )(x.reshape(M, D), ln["g"], ln["b"], qkv["w"], qkv["b"])
    # [B*L, D] -> [B, L, D] is a metadata-only reshape.
    return q.reshape(B, L, D), k.reshape(B, L, D), v.reshape(B, L, D)


def pallas_attention(q, k, v, bias, kmask):
    """q/k/v: [B, L, D] bf16; bias: [B, H, L, L] bf16; kmask: [B, 1, L] f32 (0 / -inf).
    Returns (raw biased scores [B, H, L, L] bf16, head-merged context [B, L, D] bf16).
    The bias buffer is donated to the scores output (same shape/dtype)."""
    B, L, D = q.shape
    H = bias.shape[1]
    TQ = _pick_tq(H, L)
    # TODO(synk): add a head-group grid axis for configs where H*L makes even TQ=8 too big.
    scores, ctx = pl.pallas_call(
        _attn_kernel,
        out_shape=(jax.ShapeDtypeStruct((B, H, L, L), _BIAS_DTYPE),
                   jax.ShapeDtypeStruct((B, L, D), jnp.bfloat16)),
        grid=(B, pl.cdiv(L, TQ)),
        in_specs=[
            pl.BlockSpec((1, TQ, D), lambda b, qi: (b, qi, 0)),
            pl.BlockSpec((1, L, D), lambda b, qi: (b, 0, 0)),
            pl.BlockSpec((1, L, D), lambda b, qi: (b, 0, 0)),
            pl.BlockSpec((1, H, TQ, L), lambda b, qi: (b, 0, qi, 0)),
            pl.BlockSpec((1, 1, L), lambda b, qi: (b, 0, 0)),
        ],
        out_specs=(
            pl.BlockSpec((1, H, TQ, L), lambda b, qi: (b, 0, qi, 0)),
            pl.BlockSpec((1, TQ, D), lambda b, qi: (b, qi, 0)),
        ),
        input_output_aliases={3: 0},          # bias -> scores (in-place pair tensor)
        compiler_params=_cp(2),
    )(q, k, v, bias, kmask)
    return scores, ctx


def pallas_oproj_ffn(ctx, residual, o, ln, fc1, fc2):
    B, L, D = residual.shape
    F = fc1["w"].shape[-1]
    M = B * L
    TM = _pick_tm(M)
    out = pl.pallas_call(
        _oproj_ffn_kernel,
        out_shape=jax.ShapeDtypeStruct((M, D), jnp.float32),
        grid=(pl.cdiv(M, TM),),
        in_specs=[
            pl.BlockSpec((TM, D), lambda i: (i, 0)),
            pl.BlockSpec((TM, D), lambda i: (i, 0)),
            pl.BlockSpec((D, D), lambda i: (0, 0)),
            pl.BlockSpec((1, D), lambda i: (0, 0)),
            pl.BlockSpec((1, D), lambda i: (0, 0)),
            pl.BlockSpec((1, D), lambda i: (0, 0)),
            pl.BlockSpec((D, F), lambda i: (0, 0)),
            pl.BlockSpec((1, F), lambda i: (0, 0)),
            pl.BlockSpec((F, D), lambda i: (0, 0)),
            pl.BlockSpec((1, D), lambda i: (0, 0)),
        ],
        out_specs=pl.BlockSpec((TM, D), lambda i: (i, 0)),
        compiler_params=_cp(),
    )(ctx.reshape(M, D), residual.reshape(M, D), o["w"], o["b"],
      ln["g"], ln["b"], fc1["w"], fc1["b"], fc2["w"], fc2["b"])
    return out.reshape(B, L, D)


def pallas_lm_head(x, p):
    B, L, D = x.shape
    Vp = p["out"]["w"].shape[-1]
    M = B * L
    TM = _pick_tm(M)
    out = pl.pallas_call(
        _lm_head_kernel,
        out_shape=jax.ShapeDtypeStruct((M, Vp), jnp.float32),
        grid=(pl.cdiv(M, TM),),
        in_specs=[
            pl.BlockSpec((TM, D), lambda i: (i, 0)),
            pl.BlockSpec((D, D), lambda i: (0, 0)),
            pl.BlockSpec((1, D), lambda i: (0, 0)),
            pl.BlockSpec((1, D), lambda i: (0, 0)),
            pl.BlockSpec((1, D), lambda i: (0, 0)),
            pl.BlockSpec((D, Vp), lambda i: (0, 0)),
            pl.BlockSpec((1, Vp), lambda i: (0, 0)),
        ],
        out_specs=pl.BlockSpec((TM, Vp), lambda i: (i, 0)),
        compiler_params=_cp(),
    )(x.reshape(M, D), p["dense"]["w"], p["dense"]["b"],
      p["ln"]["g"], p["ln"]["b"], p["out"]["w"], p["out"]["b"])
    return out.reshape(B, L, Vp)


def pallas_distance_bias(dist, p):
    """Gaussian-basis MLP bias, written directly as [B, H, L, L] bf16 (lane-dense)."""
    B, L, _ = dist.shape
    H = p["w2t"].shape[0]
    K = p["mu"].shape[0]
    TL = 16 if L % 16 == 0 else (8 if L % 8 == 0 else L)
    return pl.pallas_call(
        _gbf_bias_kernel,
        out_shape=jax.ShapeDtypeStruct((B, H, L, L), _BIAS_DTYPE),
        grid=(B, pl.cdiv(L, TL)),
        in_specs=[
            pl.BlockSpec((1, TL, L), lambda b, i: (b, i, 0)),
            pl.BlockSpec((K, 1), lambda b, i: (0, 0)),
            pl.BlockSpec((1, 1), lambda b, i: (0, 0)),
            pl.BlockSpec((K, K), lambda b, i: (0, 0)),
            pl.BlockSpec((K, 1), lambda b, i: (0, 0)),
            pl.BlockSpec((H, K), lambda b, i: (0, 0)),
            pl.BlockSpec((H, 1), lambda b, i: (0, 0)),
        ],
        out_specs=pl.BlockSpec((1, H, TL, L), lambda b, i: (b, 0, i, 0)),
        compiler_params=_cp(2),
    )(dist.astype(jnp.float32), p["mu"], p["inv_sigma"],
      p["w1t"], p["b1"], p["w2t"], p["b2"])


# =====================================================================================
# Model components (JAX glue around the Pallas kernels)
# =====================================================================================
def encoder_layer(p, x, bias, kmask):
    q, k, v = pallas_ln_qkv(x, p["attn_ln"], p["qkv"])        # fused pre-LN + packed QKV
    scores, ctx = pallas_attention(q, k, v, bias, kmask)      # biased MHSA, scores reused
    x = pallas_oproj_ffn(ctx, x, p["o"], p["ffn_ln"], p["fc1"], p["fc2"])
    return x, scores


def transformer_encoder_with_pair(p, x, padding_mask, attn_bias):
    """x: [B, L, D]; padding_mask: [B, L] bool; attn_bias: [B, H, L, L] bf16.
    Returns encoder_rep [B, L, D] (the pair representation is not consumed here)."""
    rowmask = 1.0 - padding_mask.astype(jnp.float32)
    x = pallas_emb_layernorm(x, p["emb_ln"], rowmask)
    # key-padding mask is applied *inside* the attention kernel each layer
    # (matches the reference fill_attn_mask; -inf + -inf stays -inf on later layers).
    kmask = jnp.where(padding_mask, -jnp.inf, 0.0).astype(jnp.float32)[:, None, :]
    bias = attn_bias
    for lp in p["layers"]:
        x, bias = encoder_layer(lp, x, bias, kmask)
    x = pallas_layernorm(x, p["final_ln"])
    return x


# =====================================================================================
# Parameter init (deterministic, synthetic)
# =====================================================================================
def _dense_p(key, din, dout, valid_out=None):
    w = jax.random.normal(key, (din, dout), jnp.float32) * 0.02
    if valid_out is not None and valid_out < dout:
        w = w.at[:, valid_out:].set(0.0)   # padded vocab columns (sliced off afterwards)
    return {"w": w.astype(_PARAM_DTYPE), "b": jnp.zeros((1, dout), jnp.float32)}


def _ln_p(d):
    return {"g": jnp.ones((1, d), jnp.float32), "b": jnp.zeros((1, d), jnp.float32)}


def _encoder_layer_p(key):
    kq, kk, kv, ko, k1, k2 = jax.random.split(key, 6)
    scale = 1.0 / math.sqrt(HEAD_DIM)
    wq = jax.random.normal(kq, (EMBED_DIM, EMBED_DIM), jnp.float32) * 0.02
    wk = jax.random.normal(kk, (EMBED_DIM, EMBED_DIM), jnp.float32) * 0.02
    wv = jax.random.normal(kv, (EMBED_DIM, EMBED_DIM), jnp.float32) * 0.02
    # 1/sqrt(Dh) folded into the q columns (q bias is zero, so no bias scaling needed).
    w_qkv = jnp.concatenate([wq * scale, wk, wv], axis=1).astype(_PARAM_DTYPE)
    return {
        "attn_ln": _ln_p(EMBED_DIM),
        "ffn_ln": _ln_p(EMBED_DIM),
        "qkv": {"w": w_qkv, "b": jnp.zeros((1, 3 * EMBED_DIM), jnp.float32)},
        "o": _dense_p(ko, EMBED_DIM, EMBED_DIM),
        "fc1": _dense_p(k1, EMBED_DIM, FFN_DIM),
        "fc2": _dense_p(k2, FFN_DIM, EMBED_DIM),
    }


def init_params(key):
    keys = jax.random.split(key, 8 + LAYERS)
    emb = jax.random.normal(keys[0], (DICT_SIZE, EMBED_DIM), jnp.float32) * 0.02
    emb = emb.at[PAD].set(0.0)   # padding_idx
    return {
        "token_emb": emb,
        "dist_enc": {
            # feature-on-sublane layouts so the GBF kernel's matmuls stay 2-D / lane-dense
            "mu": jnp.linspace(0.0, 10.0, GBF_K, dtype=jnp.float32).reshape(GBF_K, 1),
            "inv_sigma": jnp.ones((1, 1), jnp.float32),
            "w1t": (jax.random.normal(keys[1], (GBF_K, GBF_K), jnp.float32) * 0.02
                    ).astype(_PARAM_DTYPE),
            "b1": jnp.zeros((GBF_K, 1), jnp.float32),
            "w2t": (jax.random.normal(keys[2], (HEADS, GBF_K), jnp.float32) * 0.02
                    ).astype(_PARAM_DTYPE),
            "b2": jnp.zeros((HEADS, 1), jnp.float32),
        },
        "pair_encoder": {
            "emb_ln": _ln_p(EMBED_DIM),
            "final_ln": _ln_p(EMBED_DIM),
            "layers": [_encoder_layer_p(keys[8 + i]) for i in range(LAYERS)],
        },
        "seq_design": {
            "dense": _dense_p(keys[3], EMBED_DIM, EMBED_DIM),
            "ln": _ln_p(EMBED_DIM),
            "out": _dense_p(keys[4], EMBED_DIM, VOCAB_PAD, valid_out=DICT_SIZE),
        },
    }


# =====================================================================================
# ProteinDesign.forward
# =====================================================================================
@jax.jit
def _dense_forward(params, src_residue, src_coordinate, src_distance):
    """Everything up to per-position (padded-vocab) logits: one static-shape program."""
    del src_coordinate
    # TODO(synk): the atom-level DistanceEncoder (which uses src_coordinate) was not
    # provided; approximated as a gaussian-basis MLP over src_distance per head.
    padding_mask = src_residue == PAD
    x = jnp.take(params["token_emb"], src_residue, axis=0)                  # token_encoder
    graph_attn_bias = pallas_distance_bias(src_distance, params["dist_enc"])
    encoder_rep = transformer_encoder_with_pair(
        params["pair_encoder"], x, padding_mask, graph_attn_bias)
    return pallas_lm_head(encoder_rep, params["seq_design"])                # [B, L, VOCAB_PAD]


def protein_design_forward(params, batch):
    """ProteinDesign.forward: logits at positions where tgt_residue != PAD."""
    logits_full = _dense_forward(params, batch["src_residue"],
                                 batch["src_coordinate"], batch["src_distance"])
    # The MaskLMHead is row-wise, so masking after the dense compute matches the PyTorch
    # features[masked_tokens] gather; the dynamic-shape boolean gather stays eager.
    keep = np.asarray(batch["tgt_residue"] != PAD).reshape(-1)
    flat = logits_full.reshape(-1, logits_full.shape[-1])
    return flat[keep][:, :DICT_SIZE]


# =====================================================================================
if __name__ == "__main__":
    key = jax.random.PRNGKey(0)
    pkey, ckey = jax.random.split(key)
    params = init_params(pkey)

    B, L = 2, 16
    rng = np.random.RandomState(0)
    src = np.full((B, L), PAD, dtype=np.int32)
    tgt = np.full((B, L), PAD, dtype=np.int32)
    lengths = [14, 11]
    for b, n in enumerate(lengths):
        body = 4 + rng.randint(0, DICT_SIZE - 4, size=n - 2)
        src[b, 0], src[b, n - 1] = BOS, EOS
        tgt[b, 0], tgt[b, n - 1] = BOS, EOS
        src[b, 1:n - 1] = body
        tgt[b, 1:n - 1] = body
        src[b, 2] = MASK            # masked residues in the source; targets keep identities
        src[b, 5] = MASK

    coord = jax.random.normal(ckey, (B, L, 3), jnp.float32)
    dist = jnp.linalg.norm(coord[:, :, None, :] - coord[:, None, :, :], axis=-1)

    batch = {
        "src_residue": jnp.asarray(src),
        "tgt_residue": jnp.asarray(tgt),
        "src_coordinate": coord,
        "src_distance": dist,
    }

    logits = protein_design_forward(params, batch)
    logits = jax.block_until_ready(logits)
    assert logits.shape == (int((tgt != PAD).sum()), DICT_SIZE)
    assert bool(jnp.all(jnp.isfinite(logits)))

    print("KERNEL_OK")
</pallas_src>

<mosaic_0001>
module attributes {stable_mosaic.version = 11 : i64} {
  func.func @_emb_ln_kernel(%arg0: i32, %arg1: memref<32x64xf32, #tpu.memory_space<vmem>>, %arg2: memref<1x64xf32, #tpu.memory_space<vmem>>, %arg3: memref<1x64xf32, #tpu.memory_space<vmem>>, %arg4: memref<32x1xf32, #tpu.memory_space<vmem>>, %arg5: memref<32x64xf32, #tpu.memory_space<vmem>>) attributes {dimension_semantics = [#tpu.dimension_semantics<parallel>], iteration_bounds = array<i64: 1>, scalar_prefetch = 0 : i64, scratch_operands = 0 : i64, tpu.core_type = #tpu.core_type<tc>, window_params = [{transform_indices = @transform_0, window_bounds = array<i64: 32, 64>}, {pipeline_mode = #tpu.pipeline_mode<synchronous>, transform_indices = @transform_1, window_bounds = array<i64: 1, 64>}, {pipeline_mode = #tpu.pipeline_mode<synchronous>, transform_indices = @transform_2, window_bounds = array<i64: 1, 64>}, {transform_indices = @transform_3, window_bounds = array<i64: 32, 1>}, {transform_indices = @transform_4, window_bounds = array<i64: 32, 64>}]} {
    %c0 = arith.constant 0 : index
    %c0_0 = arith.constant 0 : index
    %0 = vector.load %arg1[%c0, %c0_0] : memref<32x64xf32, #tpu.memory_space<vmem>>, vector<32x64xf32>
    %c0_1 = arith.constant 0 : index
    %c0_2 = arith.constant 0 : index
    %1 = vector.load %arg2[%c0_1, %c0_2] : memref<1x64xf32, #tpu.memory_space<vmem>>, vector<1x64xf32>
    %c0_3 = arith.constant 0 : index
    %c0_4 = arith.constant 0 : index
    %2 = vector.load %arg3[%c0_3, %c0_4] : memref<1x64xf32, #tpu.memory_space<vmem>>, vector<1x64xf32>
    %cst = arith.constant dense<0.000000e+00> : vector<32xf32>
    %3 = vector.multi_reduction <add>, %0, %cst [1] : vector<32x64xf32> to vector<32xf32>
    %4 = vector.shape_cast %3 : vector<32xf32> to vector<32x1xf32>
    %cst_5 = arith.constant 6.400000e+01 : f32
    %5 = vector.broadcast %cst_5 : f32 to vector<32x1xf32>
    %6 = arith.divf %4, %5 : vector<32x1xf32>
    %7 = vector.broadcast %6 : vector<32x1xf32> to vector<32x64xf32>
    %8 = arith.subf %0, %7 : vector<32x64xf32>
    %9 = arith.mulf %8, %8 : vector<32x64xf32>
    %cst_6 = arith.constant dense<0.000000e+00> : vector<32xf32>
    %10 = vector.multi_reduction <add>, %9, %cst_6 [1] : vector<32x64xf32> to vector<32xf32>
    %11 = vector.shape_cast %10 : vector<32xf32> to vector<32x1xf32>
    %cst_7 = arith.constant 6.400000e+01 : f32
    %12 = vector.broadcast %cst_7 : f32 to vector<32x1xf32>
    %13 = arith.divf %11, %12 : vector<32x1xf32>
    %14 = vector.broadcast %6 : vector<32x1xf32> to vector<32x64xf32>
    %15 = arith.subf %0, %14 : vector<32x64xf32>
    %cst_8 = arith.constant 9.99999974E-6 : f32
    %16 = vector.broadcast %cst_8 : f32 to vector<32x1xf32>
    %17 = arith.addf %13, %16 : vector<32x1xf32>
    %18 = math.rsqrt %17 : vector<32x1xf32>
    %19 = vector.broadcast %18 : vector<32x1xf32> to vector<32x64xf32>
    %20 = arith.mulf %15, %19 : vector<32x64xf32>
    %21 = vector.broadcast %1 : vector<1x64xf32> to vector<32x64xf32>
    %22 = arith.mulf %20, %21 : vector<32x64xf32>
    %23 = vector.broadcast %2 : vector<1x64xf32> to vector<32x64xf32>
    %24 = arith.addf %22, %23 : vector<32x64xf32>
    %c0_9 = arith.constant 0 : index
    %c0_10 = arith.constant 0 : index
    %25 = vector.load %arg4[%c0_9, %c0_10] : memref<32x1xf32, #tpu.memory_space<vmem>>, vector<32x1xf32>
    %26 = vector.broadcast %25 : vector<32x1xf32> to vector<32x64xf32>
    %27 = arith.mulf %24, %26 : vector<32x64xf32>
    %c0_11 = arith.constant 0 : index
    %c0_12 = arith.constant 0 : index
    %28 = vector.load %arg5[%c0_11, %c0_12] : memref<32x64xf32, #tpu.memory_space<vmem>>, vector<32x64xf32>
    tpu.vector_store %arg5[%c0_11, %c0_12], %27 {strides = array<i32>} : memref<32x64xf32, #tpu.memory_space<vmem>>, vector<32x64xf32>,
    return
  }
  func.func @transform_0(%arg0: i32) -> (i32, i32) {
    %c0_i32 = arith.constant 0 : i32
    %c0_i32_0 = arith.constant 0 : i32
    return %arg0, %c0_i32 : i32, i32
  }
  func.func @transform_1(%arg0: i32) -> (i32, i32) {
    %c0_i32 = arith.constant 0 : i32
    %c0_i32_0 = arith.constant 0 : i32
    %c0_i32_1 = arith.constant 0 : i32
    return %c0_i32, %c0_i32_0 : i32, i32
  }
  func.func @transform_2(%arg0: i32) -> (i32, i32) {
    %c0_i32 = arith.constant 0 : i32
    %c0_i32_0 = arith.constant 0 : i32
    %c0_i32_1 = arith.constant 0 : i32
    return %c0_i32, %c0_i32_0 : i32, i32
  }
  func.func @transform_3(%arg0: i32) -> (i32, i32) {
    %c0_i32 = arith.constant 0 : i32
    %c0_i32_0 = arith.constant 0 : i32
    return %arg0, %c0_i32 : i32, i32
  }
  func.func @transform_4(%arg0: i32) -> (i32, i32) {
    %c0_i32 = arith.constant 0 : i32
    %c0_i32_0 = arith.constant 0 : i32
    return %arg0, %c0_i32 : i32, i32
  }
}

module attributes {stable_mosaic.version = 11 : i64} {
  func.func @_ln_qkv_kernel(%arg0: i32, %arg1: memref<32x64xf32, #tpu.memory_space<vmem>>, %arg2: memref<1x64xf32, #tpu.memory_space<vmem>>, %arg3: memref<1x64xf32, #tpu.memory_space<vmem>>, %arg4: memref<64x192xbf16, #tpu.memory_space<vmem>>, %arg5: memref<1x192xf32, #tpu.memory_space<vmem>>, %arg6: memref<32x64xbf16, #tpu.memory_space<vmem>>, %arg7: memref<32x64xbf16, #tpu.memory_space<vmem>>, %arg8: memref<32x64xbf16, #tpu.memory_space<vmem>>) attributes {dimension_semantics = [#tpu.dimension_semantics<parallel>], iteration_bounds = array<i64: 1>, scalar_prefetch = 0 : i64, scratch_operands = 0 : i64, tpu.core_type = #tpu.core_type<tc>, window_params = [{transform_indices = @transform_0, window_bounds = array<i64: 32, 64>}, {pipeline_mode = #tpu.pipeline_mode<synchronous>, transform_indices = @transform_1, window_bounds = array<i64: 1, 64>}, {pipeline_mode = #tpu.pipeline_mode<synchronous>, transform_indices = @transform_2, window_bounds = array<i64: 1, 64>}, {pipeline_mode = #tpu.pipeline_mode<synchronous>, transform_indices = @transform_3, window_bounds = array<i64: 64, 192>}, {pipeline_mode = #tpu.pipeline_mode<synchronous>, transform_indices = @transform_4, window_bounds = array<i64: 1, 192>}, {transform_indices = @transform_5, window_bounds = array<i64: 32, 64>}, {transform_indices = @transform_6, window_bounds = array<i64: 32, 64>}, {transform_indices = @transform_7, window_bounds = array<i64: 32, 64>}]} {
    %c0 = arith.constant 0 : index
    %c0_0 = arith.constant 0 : index
    %0 = vector.load %arg1[%c0, %c0_0] : memref<32x64xf32, #tpu.memory_space<vmem>>, vector<32x64xf32>
    %c0_1 = arith.constant 0 : index
    %c0_2 = arith.constant 0 : index
    %1 = vector.load %arg2[%c0_1, %c0_2] : memref<1x64xf32, #tpu.memory_space<vmem>>, vector<1x64xf32>
    %c0_3 = arith.constant 0 : index
    %c0_4 = arith.constant 0 : index
    %2 = vector.load %arg3[%c0_3, %c0_4] : memref<1x64xf32, #tpu.memory_space<vmem>>, vector<1x64xf32>
    %cst = arith.constant dense<0.000000e+00> : vector<32xf32>
    %3 = vector.multi_reduction <add>, %0, %cst [1] : vector<32x64xf32> to vector<32xf32>
    %4 = vector.shape_cast %3 : vector<32xf32> to vector<32x1xf32>
    %cst_5 = arith.constant 6.400000e+01 : f32
    %5 = vector.broadcast %cst_5 : f32 to vector<32x1xf32>
    %6 = arith.divf %4, %5 : vector<32x1xf32>
    %7 = vector.broadcast %6 : vector<32x1xf32> to vector<32x64xf32>
    %8 = arith.subf %0, %7 : vector<32x64xf32>
    %9 = arith.mulf %8, %8 : vector<32x64xf32>
    %cst_6 = arith.constant dense<0.000000e+00> : vector<32xf32>
    %10 = vector.multi_reduction <add>, %9, %cst_6 [1] : vector<32x64xf32> to vector<32xf32>
    %11 = vector.shape_cast %10 : vector<32xf32> to vector<32x1xf32>
    %cst_7 = arith.constant 6.400000e+01 : f32
    %12 = vector.broadcast %cst_7 : f32 to vector<32x1xf32>
    %13 = arith.divf %11, %12 : vector<32x1xf32>
    %14 = vector.broadcast %6 : vector<32x1xf32> to vector<32x64xf32>
    %15 = arith.subf %0, %14 : vector<32x64xf32>
    %cst_8 = arith.constant 9.99999974E-6 : f32
    %16 = vector.broadcast %cst_8 : f32 to vector<32x1xf32>
    %17 = arith.addf %13, %16 : vector<32x1xf32>
    %18 = math.rsqrt %17 : vector<32x1xf32>
    %19 = vector.broadcast %18 : vector<32x1xf32> to vector<32x64xf32>
    %20 = arith.mulf %15, %19 : vector<32x64xf32>
    %21 = vector.broadcast %1 : vector<1x64xf32> to vector<32x64xf32>
    %22 = arith.mulf %20, %21 : vector<32x64xf32>
    %23 = vector.broadcast %2 : vector<1x64xf32> to vector<32x64xf32>
    %24 = arith.addf %22, %23 : vector<32x64xf32>
    %25 = arith.truncf %24 : vector<32x64xf32> to vector<32x64xbf16>
    %c0_9 = arith.constant 0 : index
    %c0_10 = arith.constant 0 : index
    %26 = vector.load %arg4[%c0_9, %c0_10] : memref<64x192xbf16, #tpu.memory_space<vmem>>, vector<64x192xbf16>
    %cst_11 = arith.constant dense<0.000000e+00> : vector<32x192xf32>
    %27 = tpu.matmul %25, %26, %cst_11 {dimension_numbers = #tpu.dot_dimension_numbers<[1], [0], [0], [1], [0, 0, 1, 1], [], []>} : vector<32x64xbf16>, vector<64x192xbf16>, vector<32x192xf32> -> vector<32x192xf32>
    %c0_12 = arith.constant 0 : index
    %c0_13 = arith.constant 0 : index
    %28 = vector.load %arg5[%c0_12, %c0_13] : memref<1x192xf32, #tpu.memory_space<vmem>>, vector<1x192xf32>
    %29 = vector.broadcast %28 : vector<1x192xf32> to vector<32x192xf32>
    %30 = arith.addf %27, %29 : vector<32x192xf32>
    %31 = arith.truncf %30 : vector<32x192xf32> to vector<32x192xbf16>
    %32 = vector.extract_strided_slice %31 {offsets = [0, 0], sizes = [32, 64], strides = [1, 1]} : vector<32x192xbf16> to vector<32x64xbf16>
    %c0_14 = arith.constant 0 : index
    %c0_15 = arith.constant 0 : index
    %33 = vector.load %arg6[%c0_14, %c0_15] : memref<32x64xbf16, #tpu.memory_space<vmem>>, vector<32x64xbf16>
    tpu.vector_store %arg6[%c0_14, %c0_15], %32 {strides = array<i32>} : memref<32x64xbf16, #tpu.memory_space<vmem>>, vector<32x64xbf16>,
    %34 = vector.extract_strided_slice %31 {offsets = [0, 64], sizes = [32, 64], strides = [1, 1]} : vector<32x192xbf16> to vector<32x64xbf16>
    %c0_16 = arith.constant 0 : index
    %c0_17 = arith.constant 0 : index
    %35 = vector.load %arg7[%c0_16, %c0_17] : memref<32x64xbf16, #tpu.memory_space<vmem>>, vector<32x64xbf16>
    tpu.vector_store %arg7[%c0_16, %c0_17], %34 {strides = array<i32>} : memref<32x64xbf16, #tpu.memory_space<vmem>>, vector<32x64xbf16>,
    %36 = vector.extract_strided_slice %31 {offsets = [0, 128], sizes = [32, 64], strides = [1, 1]} : vector<32x192xbf16> to vector<32x64xbf16>
    %c0_18 = arith.constant 0 : index
    %c0_19 = arith.constant 0 : index
    %37 = vector.load %arg8[%c0_18, %c0_19] : memref<32x64xbf16, #tpu.memory_space<vmem>>, vector<32x64xbf16>
    tpu.vector_store %arg8[%c0_18, %c0_19], %36 {strides = array<i32>} : memref<32x64xbf16, #tpu.memory_space<vmem>>, vector<32x64xbf16>,
    return
  }
  func.func @transform_0(%arg0: i32) -> (i32, i32) {
    %c0_i32 = arith.constant 0 : i32
    %c0_i32_0 = arith.constant 0 : i32
    return %arg0, %c0_i32 : i32, i32
  }
  func.func @transform_1(%arg0: i32) -> (i32, i32) {
    %c0_i32 = arith.constant 0 : i32
    %c0_i32_0 = arith.constant 0 : i32
    %c0_i32_1 = arith.constant 0 : i32
    return %c0_i32, %c0_i32_0 : i32, i32
  }
  func.func @transform_2(%arg0: i32) -> (i32, i32) {
    %c0_i32 = arith.constant 0 : i32
    %c0_i32_0 = arith.constant 0 : i32
    %c0_i32_1 = arith.constant 0 : i32
    return %c0_i32, %c0_i32_0 : i32, i32
  }
  func.func @transform_3(%arg0: i32) -> (i32, i32) {
    %c0_i32 = arith.constant 0 : i32
    %c0_i32_0 = arith.constant 0 : i32
    %c0_i32_1 = arith.constant 0 : i32
    return %c0_i32, %c0_i32_0 : i32, i32
  }
  func.func @transform_4(%arg0: i32) -> (i32, i32) {
    %c0_i32 = arith.constant 0 : i32
    %c0_i32_0 = arith.constant 0 : i32
    %c0_i32_1 = arith.constant 0 : i32
    return %c0_i32, %c0_i32_0 : i32, i32
  }
  func.func @transform_5(%arg0: i32) -> (i32, i32) {
    %c0_i32 = arith.constant 0 : i32
    %c0_i32_0 = arith.constant 0 : i32
    return %arg0, %c0_i32 : i32, i32
  }
  func.func @transform_6(%arg0: i32) -> (i32, i32) {
    %c0_i32 = arith.constant 0 : i32
    %c0_i32_0 = arith.constant 0 : i32
    return %arg0, %c0_i32 : i32, i32
  }
  func.func @transform_7(%arg0: i32) -> (i32, i32) {
    %c0_i32 = arith.constant 0 : i32
    %c0_i32_0 = arith.constant 0 : i32
    return %arg0, %c0_i32 : i32, i32
  }
}

module attributes {stable_mosaic.version = 11 : i64} {
  func.func @_attn_kernel(%arg0: i32, %arg1: i32, %arg2: memref<1x16x64xbf16, #tpu.memory_space<vmem>>, %arg3: memref<1x16x64xbf16, #tpu.memory_space<vmem>>, %arg4: memref<1x16x64xbf16, #tpu.memory_space<vmem>>, %arg5: memref<1x4x16x16xbf16, #tpu.memory_space<vmem>>, %arg6: memref<1x1x16xf32, #tpu.memory_space<vmem>>, %arg7: memref<1x4x16x16xbf16, #tpu.memory_space<vmem>>, %arg8: memref<1x16x64xbf16, #tpu.memory_space<vmem>>) attributes {dimension_semantics = [#tpu.dimension_semantics<parallel>, #tpu.dimension_semantics<parallel>], iteration_bounds = array<i64: 2, 1>, scalar_prefetch = 0 : i64, scratch_operands = 0 : i64, tpu.core_type = #tpu.core_type<tc>, window_params = [{transform_indices = @transform_0, window_bounds = array<i64: 1, 16, 64>}, {transform_indices = @transform_1, window_bounds = array<i64: 1, 16, 64>}, {transform_indices = @transform_2, window_bounds = array<i64: 1, 16, 64>}, {transform_indices = @transform_3, window_bounds = array<i64: 1, 4, 16, 16>}, {transform_indices = @transform_4, window_bounds = array<i64: 1, 1, 16>}, {transform_indices = @transform_5, window_bounds = array<i64: 1, 4, 16, 16>}, {transform_indices = @transform_6, window_bounds = array<i64: 1, 16, 64>}]} {
    %c0 = arith.constant 0 : index
    %c0_0 = arith.constant 0 : index
    %c0_1 = arith.constant 0 : index
    %0 = vector.load %arg2[%c0, %c0_0, %c0_1] : memref<1x16x64xbf16, #tpu.memory_space<vmem>>, vector<1x16x64xbf16>
    %1 = vector.shape_cast %0 : vector<1x16x64xbf16> to vector<16x64xbf16>
    %c0_2 = arith.constant 0 : index
    %c0_3 = arith.constant 0 : index
    %c0_4 = arith.constant 0 : index
    %2 = vector.load %arg3[%c0_2, %c0_3, %c0_4] : memref<1x16x64xbf16, #tpu.memory_space<vmem>>, vector<1x16x64xbf16>
    %3 = vector.shape_cast %2 : vector<1x16x64xbf16> to vector<16x64xbf16>
    %c0_5 = arith.constant 0 : index
    %c0_6 = arith.constant 0 : index
    %c0_7 = arith.constant 0 : index
    %4 = vector.load %arg4[%c0_5, %c0_6, %c0_7] : memref<1x16x64xbf16, #tpu.memory_space<vmem>>, vector<1x16x64xbf16>
    %5 = vector.shape_cast %4 : vector<1x16x64xbf16> to vector<16x64xbf16>
    %c0_8 = arith.constant 0 : index
    %c0_9 = arith.constant 0 : index
    %c0_10 = arith.constant 0 : index
    %6 = vector.load %arg6[%c0_8, %c0_9, %c0_10] : memref<1x1x16xf32, #tpu.memory_space<vmem>>, vector<1x1x16xf32>
    %7 = vector.shape_cast %6 : vector<1x1x16xf32> to vector<1x16xf32>
    %8 = vector.extract_strided_slice %1 {offsets = [0, 0], sizes = [16, 16], strides = [1, 1]} : vector<16x64xbf16> to vector<16x16xbf16>
    %9 = vector.extract_strided_slice %3 {offsets = [0, 0], sizes = [16, 16], strides = [1, 1]} : vector<16x64xbf16> to vector<16x16xbf16>
    %10 = vector.extract_strided_slice %5 {offsets = [0, 0], sizes = [16, 16], strides = [1, 1]} : vector<16x64xbf16> to vector<16x16xbf16>
    %cst = arith.constant dense<0.000000e+00> : vector<16x16xf32>
    %11 = tpu.matmul %8, %9, %cst {dimension_numbers = #tpu.dot_dimension_numbers<[1], [1], [0], [0], [0, 0, 1, 0], [], []>} : vector<16x16xbf16>, vector<16x16xbf16>, vector<16x16xf32> -> vector<16x16xf32>
    %c0_11 = arith.constant 0 : index
    %c0_12 = arith.constant 0 : index
    %c0_13 = arith.constant 0 : index
    %c0_14 = arith.constant 0 : index
    %12 = vector.load %arg5[%c0_11, %c0_12, %c0_13, %c0_14] : memref<1x4x16x16xbf16, #tpu.memory_space<vmem>>, vector<1x1x16x16xbf16>
    %13 = vector.shape_cast %12 : vector<1x1x16x16xbf16> to vector<16x16xbf16>
    %14 = arith.extf %13 : vector<16x16xbf16> to vector<16x16xf32>
    %15 = arith.addf %11, %14 : vector<16x16xf32>
    %16 = vector.broadcast %7 : vector<1x16xf32> to vector<16x16xf32>
    %17 = arith.addf %15, %16 : vector<16x16xf32>
    %18 = arith.truncf %17 : vector<16x16xf32> to vector<16x16xbf16>
    %c0_15 = arith.constant 0 : index
    %c0_16 = arith.constant 0 : index
    %c0_17 = arith.constant 0 : index
    %c0_18 = arith.constant 0 : index
    %19 = vector.load %arg7[%c0_15, %c0_16, %c0_17, %c0_18] : memref<1x4x16x16xbf16, #tpu.memory_space<vmem>>, vector<1x1x16x16xbf16>
    %20 = vector.shape_cast %19 : vector<1x1x16x16xbf16> to vector<16x16xbf16>
    %21 = vector.shape_cast %18 : vector<16x16xbf16> to vector<1x1x16x16xbf16>
    tpu.vector_store %arg7[%c0_15, %c0_16, %c0_17, %c0_18], %21 {strides = array<i32>} : memref<1x4x16x16xbf16, #tpu.memory_space<vmem>>, vector<1x1x16x16xbf16>,
    %cst_19 = arith.constant dense<0xFF800000> : vector<16xf32>
    %22 = vector.multi_reduction <maximumf>, %17, %cst_19 [1] : vector<16x16xf32> to vector<16xf32>
    %23 = vector.shape_cast %22 : vector<16xf32> to vector<16x1xf32>
    %cst_20 = arith.constant -1.000000e+30 : f32
    %24 = vector.broadcast %cst_20 : f32 to vector<16x1xf32>
    %25 = arith.maximumf %23, %24 : vector<16x1xf32>
    %26 = vector.broadcast %25 : vector<16x1xf32> to vector<16x16xf32>
    %27 = arith.subf %17, %26 : vector<16x16xf32>
    %28 = math.exp %27 : vector<16x16xf32>
    %cst_21 = arith.constant dense<0.000000e+00> : vector<16xf32>
    %29 = vector.multi_reduction <add>, %28, %cst_21 [1] : vector<16x16xf32> to vector<16xf32>
    %30 = vector.shape_cast %29 : vector<16xf32> to vector<16x1xf32>
    %cst_22 = arith.constant 1.000000e-30 : f32
    %31 = vector.broadcast %cst_22 : f32 to vector<16x1xf32>
    %32 = arith.maximumf %30, %31 : vector<16x1xf32>
    %33 = arith.truncf %28 : vector<16x16xf32> to vector<16x16xbf16>
    %cst_23 = arith.constant dense<0.000000e+00> : vector<16x16xf32>
    %34 = tpu.matmul %33, %10, %cst_23 {dimension_numbers = #tpu.dot_dimension_numbers<[1], [0], [0], [1], [0, 0, 1, 1], [], []>} : vector<16x16xbf16>, vector<16x16xbf16>, vector<16x16xf32> -> vector<16x16xf32>
    %35 = tpu.reciprocal %32 {approx = true} : vector<16x1xf32> -> vector<16x1xf32>
    %36 = vector.broadcast %35 : vector<16x1xf32> to vector<16x16xf32>
    %37 = arith.mulf %34, %36 : vector<16x16xf32>
    %38 = vector.extract_strided_slice %1 {offsets = [0, 16], sizes = [16, 16], strides = [1, 1]} : vector<16x64xbf16> to vector<16x16xbf16>
    %39 = vector.extract_strided_slice %3 {offsets = [0, 16], sizes = [16, 16], strides = [1, 1]} : vector<16x64xbf16> to vector<16x16xbf16>
    %40 = vector.extract_strided_slice %5 {offsets = [0, 16], sizes = [16, 16], strides = [1, 1]} : vector<16x64xbf16> to vector<16x16xbf16>
    %cst_24 = arith.constant dense<0.000000e+00> : vector<16x16xf32>
    %41 = tpu.matmul %38, %39, %cst_24 {dimension_numbers = #tpu.dot_dimension_numbers<[1], [1], [0], [0], [0, 0, 1, 0], [], []>} : vector<16x16xbf16>, vector<16x16xbf16>, vector<16x16xf32> -> vector<16x16xf32>
    %c0_25 = arith.constant 0 : index
    %c1 = arith.constant 1 : index
    %c0_26 = arith.constant 0 : index
    %c0_27 = arith.constant 0 : index
    %42 = vector.load %arg5[%c0_25, %c1, %c0_26, %c0_27] : memref<1x4x16x16xbf16, #tpu.memory_space<vmem>>, vector<1x1x16x16xbf16>
    %43 = vector.shape_cast %42 : vector<1x1x16x16xbf16> to vector<16x16xbf16>
    %44 = arith.extf %43 : vector<16x16xbf16> to vector<16x16xf32>
    %45 = arith.addf %41, %44 : vector<16x16xf32>
    %46 = vector.broadcast %7 : vector<1x16xf32> to vector<16x16xf32>
    %47 = arith.addf %45, %46 : vector<16x16xf32>
    %48 = arith.truncf %47 : vector<16x16xf32> to vector<16x16xbf16>
    %c0_28 = arith.constant 0 : index
    %c1_29 = arith.constant 1 : index
    %c0_30 = arith.constant 0 : index
    %c0_31 = arith.constant 0 : index
    %49 = vector.load %arg7[%c0_28, %c1_29, %c0_30, %c0_31] : memref<1x4x16x16xbf16, #tpu.memory_space<vmem>>, vector<1x1x16x16xbf16>
    %50 = vector.shape_cast %49 : vector<1x1x16x16xbf16> to vector<16x16xbf16>
    %51 = vector.shape_cast %48 : vector<16x16xbf16> to vector<1x1x16x16xbf16>
    tpu.vector_store %arg7[%c0_28, %c1_29, %c0_30, %c0_31], %51 {strides = array<i32>} : memref<1x4x16x16xbf16, #tpu.memory_space<vmem>>, vector<1x1x16x16xbf16>,
    %cst_32 = arith.constant dense<0xFF800000> : vector<16xf32>
    %52 = vector.multi_reduction <maximumf>, %47, %cst_32 [1] : vector<16x16xf32> to vector<16xf32>
    %53 = vector.shape_cast %52 : vector<16xf32> to vector<16x1xf32>
    %cst_33 = arith.constant -1.000000e+30 : f32
    %54 = vector.broadcast %cst_33 : f32 to vector<16x1xf32>
    %55 = arith.maximumf %53, %54 : vector<16x1xf32>
    %56 = vector.broadcast %55 : vector<16x1xf32> to vector<16x16xf32>
    %57 = arith.subf %47, %56 : vector<16x16xf32>
    %58 = math.exp %57 : vector<16x16xf32>
    %cst_34 = arith.constant dense<0.000000e+00> : vector<16xf32>
    %59 = vector.multi_reduction <add>, %58, %cst_34 [1] : vector<16x16xf32> to vector<16xf32>
    %60 = vector.shape_cast %59 : vector<16xf32> to vector<16x1xf32>
    %cst_35 = arith.constant 1.000000e-30 : f32
    %61 = vector.broadcast %cst_35 : f32 to vector<16x1xf32>
    %62 = arith.maximumf %60, %61 : vector<16x1xf32>
    %63 = arith.truncf %58 : vector<16x16xf32> to vector<16x16xbf16>
    %cst_36 = arith.constant dense<0.000000e+00> : vector<16x16xf32>
    %64 = tpu.matmul %63, %40, %cst_36 {dimension_numbers = #tpu.dot_dimension_numbers<[1], [0], [0], [1], [0, 0, 1, 1], [], []>} : vector<16x16xbf16>, vector<16x16xbf16>, vector<16x16xf32> -> vector<16x16xf32>
    %65 = tpu.reciprocal %62 {approx = true} : vector<16x1xf32> -> vector<16x1xf32>
    %66 = vector.broadcast %65 : vector<16x1xf32> to vector<16x16xf32>
    %67 = arith.mulf %64, %66 : vector<16x16xf32>
    %68 = vector.extract_strided_slice %1 {offsets = [0, 32], sizes = [16, 16], strides = [1, 1]} : vector<16x64xbf16> to vector<16x16xbf16>
    %69 = vector.extract_strided_slice %3 {offsets = [0, 32], sizes = [16, 16], strides = [1, 1]} : vector<16x64xbf16> to vector<16x16xbf16>
    %70 = vector.extract_strided_slice %5 {offsets = [0, 32], sizes = [16, 16], strides = [1, 1]} : vector<16x64xbf16> to vector<16x16xbf16>
    %cst_37 = arith.constant dense<0.000000e+00> : vector<16x16xf32>
    %71 = tpu.matmul %68, %69, %cst_37 {dimension_numbers = #tpu.dot_dimension_numbers<[1], [1], [0], [0], [0, 0, 1, 0], [], []>} : vector<16x16xbf16>, vector<16x16xbf16>, vector<16x16xf32> -> vector<16x16xf32>
    %c0_38 = arith.constant 0 : index
    %c2 = arith.constant 2 : index
    %c0_39 = arith.constant 0 : index
    %c0_40 = arith.constant 0 : index
    %72 = vector.load %arg5[%c0_38, %c2, %c0_39, %c0_40] : memref<1x4x16x16xbf16, #tpu.memory_space<vmem>>, vector<1x1x16x16xbf16>
    %73 = vector.shape_cast %72 : vector<1x1x16x16xbf16> to vector<16x16xbf16>
    %74 = arith.extf %73 : vector<16x16xbf16> to vector<16x16xf32>
    %75 = arith.addf %71, %74 : vector<16x16xf32>
    %76 = vector.broadcast %7 : vector<1x16xf32> to vector<16x16xf32>
    %77 = arith.addf %75, %76 : vector<16x16xf32>
    %78 = arith.truncf %77 : vector<16x16xf32> to vector<16x16xbf16>
    %c0_41 = arith.constant 0 : index
    %c2_42 = arith.constant 2 : index
    %c0_43 = arith.constant 0 : index
    %c0_44 = arith.constant 0 : index
    %79 = vector.load %arg7[%c0_41, %c2_42, %c0_43, %c0_44] : memref<1x4x16x16xbf16, #tpu.memory_space<vmem>>, vector<1x1x16x16xbf16>
    %80 = vector.shape_cast %79 : vector<1x1x16x16xbf16> to vector<16x16xbf16>
    %81 = vector.shape_cast %78 : vector<16x16xbf16> to vector<1x1x16x16xbf16>
    tpu.vector_store %arg7[%c0_41, %c2_42, %c0_43, %c0_44], %81 {strides = array<i32>} : memref<1x4x16x16xbf16, #tpu.memory_space<vmem>>, vector<1x1x16x16xbf16>,
    %cst_45 = arith.constant dense<0xFF800000> : vector<16xf32>
    %82 = vector.multi_reduction <maximumf>, %77, %cst_45 [1] : vector<16x16xf32> to vector<16xf32>
    %83 = vector.shape_cast %82 : vector<16xf32> to vector<16x1xf32>
    %cst_46 = arith.constant -1.000000e+30 : f32
    %84 = vector.broadcast %cst_46 : f32 to vector<16x1xf32>
    %85 = arith.maximumf %83, %84 : vector<16x1xf32>
    %86 = vector.broadcast %85 : vector<16x1xf32> to vector<16x16xf32>
    %87 = arith.subf %77, %86 : vector<16x16xf32>
    %88 = math.exp %87 : vector<16x16xf32>
    %cst_47 = arith.constant dense<0.000000e+00> : vector<16xf32>
    %89 = vector.multi_reduction <add>, %88, %cst_47 [1] : vector<16x16xf32> to vector<16xf32>
    %90 = vector.shape_cast %89 : vector<16xf32> to vector<16x1xf32>
    %cst_48 = arith.constant 1.000000e-30 : f32
    %91 = vector.broadcast %cst_48 : f32 to vector<16x1xf32>
    %92 = arith.maximumf %90, %91 : vector<16x1xf32>
    %93 = arith.truncf %88 : vector<16x16xf32> to vector<16x16xbf16>
    %cst_49 = arith.constant dense<0.000000e+00> : vector<16x16xf32>
    %94 = tpu.matmul %93, %70, %cst_49 {dimension_numbers = #tpu.dot_dimension_numbers<[1], [0], [0], [1], [0, 0, 1, 1], [], []>} : vector<16x16xbf16>, vector<16x16xbf16>, vector<16x16xf32> -> vector<16x16xf32>
    %95 = tpu.reciprocal %92 {approx = true} : vector<16x1xf32> -> vector<16x1xf32>
    %96 = vector.broadcast %95 : vector<16x1xf32> to vector<16x16xf32>
    %97 = arith.mulf %94, %96 : vector<16x16xf32>
    %98 = vector.extract_strided_slice %1 {offsets = [0, 48], sizes = [16, 16], strides = [1, 1]} : vector<16x64xbf16> to vector<16x16xbf16>
    %99 = vector.extract_strided_slice %3 {offsets = [0, 48], sizes = [16, 16], strides = [1, 1]} : vector<16x64xbf16> to vector<16x16xbf16>
    %100 = vector.extract_strided_slice %5 {offsets = [0, 48], sizes = [16, 16], strides = [1, 1]} : vector<16x64xbf16> to vector<16x16xbf16>
    %cst_50 = arith.constant dense<0.000000e+00> : vector<16x16xf32>
    %101 = tpu.matmul %98, %99, %cst_50 {dimension_numbers = #tpu.dot_dimension_numbers<[1], [1], [0], [0], [0, 0, 1, 0], [], []>} : vector<16x16xbf16>, vector<16x16xbf16>, vector<16x16xf32> -> vector<16x16xf32>
    %c0_51 = arith.constant 0 : index
    %c3 = arith.constant 3 : index
    %c0_52 = arith.constant 0 : index
    %c0_53 = arith.constant 0 : index
    %102 = vector.load %arg5[%c0_51, %c3, %c0_52, %c0_53] : memref<1x4x16x16xbf16, #tpu.memory_space<vmem>>, vector<1x1x16x16xbf16>
    %103 = vector.shape_cast %102 : vector<1x1x16x16xbf16> to vector<16x16xbf16>
    %104 = arith.extf %103 : vector<16x16xbf16> to vector<16x16xf32>
    %105 = arith.addf %101, %104 : vector<16x16xf32>
    %106 = vector.broadcast %7 : vector<1x16xf32> to vector<16x16xf32>
    %107 = arith.addf %105, %106 : vector<16x16xf32>
    %108 = arith.truncf %107 : vector<16x16xf32> to vector<16x16xbf16>
    %c0_54 = arith.constant 0 : index
    %c3_55 = arith.constant 3 : index
    %c0_56 = arith.constant 0 : index
    %c0_57 = arith.constant 0 : index
    %109 = vector.load %arg7[%c0_54, %c3_55, %c0_56, %c0_57] : memref<1x4x16x16xbf16, #tpu.memory_space<vmem>>, vector<1x1x16x16xbf16>
    %110 = vector.shape_cast %109 : vector<1x1x16x16xbf16> to vector<16x16xbf16>
    %111 = vector.shape_cast %108 : vector<16x16xbf16> to vector<1x1x16x16xbf16>
    tpu.vector_store %arg7[%c0_54, %c3_55, %c0_56, %c0_57], %111 {strides = array<i32>} : memref<1x4x16x16xbf16, #tpu.memory_space<vmem>>, vector<1x1x16x16xbf16>,
    %cst_58 = arith.constant dense<0xFF800000> : vector<16xf32>
    %112 = vector.multi_reduction <maximumf>, %107, %cst_58 [1] : vector<16x16xf32> to vector<16xf32>
    %113 = vector.shape_cast %112 : vector<16xf32> to vector<16x1xf32>
    %cst_59 = arith.constant -1.000000e+30 : f32
    %114 = vector.broadcast %cst_59 : f32 to vector<16x1xf32>
    %115 = arith.maximumf %113, %114 : vector<16x1xf32>
    %116 = vector.broadcast %115 : vector<16x1xf32> to vector<16x16xf32>
    %117 = arith.subf %107, %116 : vector<16x16xf32>
    %118 = math.exp %117 : vector<16x16xf32>
    %cst_60 = arith.constant dense<0.000000e+00> : vector<16xf32>
    %119 = vector.multi_reduction <add>, %118, %cst_60 [1] : vector<16x16xf32> to vector<16xf32>
    %120 = vector.shape_cast %119 : vector<16xf32> to vector<16x1xf32>
    %cst_61 = arith.constant 1.000000e-30 : f32
    %121 = vector.broadcast %cst_61 : f32 to vector<16x1xf32>
    %122 = arith.maximumf %120, %121 : vector<16x1xf32>
    %123 = arith.truncf %118 : vector<16x16xf32> to vector<16x16xbf16>
    %cst_62 = arith.constant dense<0.000000e+00> : vector<16x16xf32>
    %124 = tpu.matmul %123, %100, %cst_62 {dimension_numbers = #tpu.dot_dimension_numbers<[1], [0], [0], [1], [0, 0, 1, 1], [], []>} : vector<16x16xbf16>, vector<16x16xbf16>, vector<16x16xf32> -> vector<16x16xf32>
    %125 = tpu.reciprocal %122 {approx = true} : vector<16x1xf32> -> vector<16x1xf32>
    %126 = vector.broadcast %125 : vector<16x1xf32> to vector<16x16xf32>
    %127 = arith.mulf %124, %126 : vector<16x16xf32>
    %128 = tpu.concatenate %37, %67, %97, %127 in 1 : vector<16x16xf32>, vector<16x16xf32>, vector<16x16xf32>, vector<16x16xf32> -> vector<16x64xf32>
    %129 = arith.truncf %128 : vector<16x64xf32> to vector<16x64xbf16>
    %c0_63 = arith.constant 0 : index
    %c0_64 = arith.constant 0 : index
    %c0_65 = arith.constant 0 : index
    %130 = vector.load %arg8[%c0_63, %c0_64, %c0_65] : memref<1x16x64xbf16, #tpu.memory_space<vmem>>, vector<1x16x64xbf16>
    %131 = vector.shape_cast %130 : vector<1x16x64xbf16> to vector<16x64xbf16>
    %132 = vector.shape_cast %129 : vector<16x64xbf16> to vector<1x16x64xbf16>
    tpu.vector_store %arg8[%c0_63, %c0_64, %c0_65], %132 {strides = array<i32>} : memref<1x16x64xbf16, #tpu.memory_space<vmem>>, vector<1x16x64xbf16>,
    return
  }
  func.func @transform_0(%arg0: i32, %arg1: i32) -> (i32, i32, i32) {
    %c0_i32 = arith.constant 0 : i32
    %c0_i32_0 = arith.constant 0 : i32
    return %arg0, %arg1, %c0_i32 : i32, i32, i32
  }
  func.func @transform_1(%arg0: i32, %arg1: i32) -> (i32, i32, i32) {
    %c0_i32 = arith.constant 0 : i32
    %c0_i32_0 = arith.constant 0 : i32
    %c0_i32_1 = arith.constant 0 : i32
    return %arg0, %c0_i32, %c0_i32_0 : i32, i32, i32
  }
  func.func @transform_2(%arg0: i32, %arg1: i32) -> (i32, i32, i32) {
    %c0_i32 = arith.constant 0 : i32
    %c0_i32_0 = arith.constant 0 : i32
    %c0_i32_1 = arith.constant 0 : i32
    return %arg0, %c0_i32, %c0_i32_0 : i32, i32, i32
  }
  func.func @transform_3(%arg0: i32, %arg1: i32) -> (i32, i32, i32, i32) {
    %c0_i32 = arith.constant 0 : i32
    %c0_i32_0 = arith.constant 0 : i32
    %c0_i32_1 = arith.constant 0 : i32
    return %arg0, %c0_i32, %arg1, %c0_i32_0 : i32, i32, i32, i32
  }
  func.func @transform_4(%arg0: i32, %arg1: i32) -> (i32, i32, i32) {
    %c0_i32 = arith.constant 0 : i32
    %c0_i32_0 = arith.constant 0 : i32
    %c0_i32_1 = arith.constant 0 : i32
    return %arg0, %c0_i32, %c0_i32_0 : i32, i32, i32
  }
  func.func @transform_5(%arg0: i32, %arg1: i32) -> (i32, i32, i32, i32) {
    %c0_i32 = arith.constant 0 : i32
    %c0_i32_0 = arith.constant 0 : i32
    %c0_i32_1 = arith.constant 0 : i32
    return %arg0, %c0_i32, %arg1, %c0_i32_0 : i32, i32, i32, i32
  }
  func.func @transform_6(%arg0: i32, %arg1: i32) -> (i32, i32, i32) {
    %c0_i32 = arith.constant 0 : i32
    %c0_i32_0 = arith.constant 0 : i32
    return %arg0, %arg1, %c0_i32 : i32, i32, i32
  }
}

module attributes {stable_mosaic.version = 11 : i64} {
  func.func @_gbf_bias_kernel(%arg0: i32, %arg1: i32, %arg2: memref<1x16x16xf32, #tpu.memory_space<vmem>>, %arg3: memref<16x1xf32, #tpu.memory_space<vmem>>, %arg4: memref<1x1xf32, #tpu.memory_space<vmem>>, %arg5: memref<16x16xbf16, #tpu.memory_space<vmem>>, %arg6: memref<16x1xf32, #tpu.memory_space<vmem>>, %arg7: memref<4x16xbf16, #tpu.memory_space<vmem>>, %arg8: memref<4x1xf32, #tpu.memory_space<vmem>>, %arg9: memref<1x4x16x16xbf16, #tpu.memory_space<vmem>>) attributes {dimension_semantics = [#tpu.dimension_semantics<parallel>, #tpu.dimension_semantics<parallel>], iteration_bounds = array<i64: 2, 1>, scalar_prefetch = 0 : i64, scratch_operands = 0 : i64, tpu.core_type = #tpu.core_type<tc>, window_params = [{transform_indices = @transform_0, window_bounds = array<i64: 1, 16, 16>}, {pipeline_mode = #tpu.pipeline_mode<synchronous>, transform_indices = @transform_1, window_bounds = array<i64: 16, 1>}, {pipeline_mode = #tpu.pipeline_mode<synchronous>, transform_indices = @transform_2, window_bounds = array<i64: 1, 1>}, {pipeline_mode = #tpu.pipeline_mode<synchronous>, transform_indices = @transform_3, window_bounds = array<i64: 16, 16>}, {pipeline_mode = #tpu.pipeline_mode<synchronous>, transform_indices = @transform_4, window_bounds = array<i64: 16, 1>}, {pipeline_mode = #tpu.pipeline_mode<synchronous>, transform_indices = @transform_5, window_bounds = array<i64: 4, 16>}, {pipeline_mode = #tpu.pipeline_mode<synchronous>, transform_indices = @transform_6, window_bounds = array<i64: 4, 1>}, {transform_indices = @transform_7, window_bounds = array<i64: 1, 4, 16, 16>}]} {
    %c0 = arith.constant 0 : index
    %c0_0 = arith.constant 0 : index
    %0 = vector.load %arg4[%c0, %c0_0] : memref<1x1xf32, #tpu.memory_space<vmem>>, vector<1x1xf32>
    %c0_1 = arith.constant 0 : index
    %c0_2 = arith.constant 0 : index
    %c0_3 = arith.constant 0 : index
    %1 = vector.load %arg2[%c0_1, %c0_2, %c0_3] : memref<1x16x16xf32, #tpu.memory_space<vmem>>, vector<1x1x16xf32>
    %2 = vector.shape_cast %1 : vector<1x1x16xf32> to vector<1x16xf32>
    %c0_4 = arith.constant 0 : index
    %c0_5 = arith.constant 0 : index
    %3 = vector.load %arg3[%c0_4, %c0_5] : memref<16x1xf32, #tpu.memory_space<vmem>>, vector<16x1xf32>
    %4 = vector.broadcast %2 : vector<1x16xf32> to vector<16x16xf32>
    %5 = vector.broadcast %3 : vector<16x1xf32> to vector<16x16xf32>
    %6 = arith.subf %4, %5 : vector<16x16xf32>
    %7 = vector.broadcast %0 : vector<1x1xf32> to vector<16x16xf32>
    %8 = arith.mulf %6, %7 : vector<16x16xf32>
    %9 = arith.mulf %8, %8 : vector<16x16xf32>
    %cst = arith.constant -5.000000e-01 : f32
    %10 = vector.broadcast %cst : f32 to vector<16x16xf32>
    %11 = arith.mulf %10, %9 : vector<16x16xf32>
    %12 = math.exp %11 : vector<16x16xf32>
    %c0_6 = arith.constant 0 : index
    %c0_7 = arith.constant 0 : index
    %13 = vector.load %arg5[%c0_6, %c0_7] : memref<16x16xbf16, #tpu.memory_space<vmem>>, vector<16x16xbf16>
    %14 = arith.truncf %12 : vector<16x16xf32> to vector<16x16xbf16>
    %cst_8 = arith.constant dense<0.000000e+00> : vector<16x16xf32>
    %15 = tpu.matmul %13, %14, %cst_8 {dimension_numbers = #tpu.dot_dimension_numbers<[1], [0], [0], [1], [0, 0, 1, 1], [], []>} : vector<16x16xbf16>, vector<16x16xbf16>, vector<16x16xf32> -> vector<16x16xf32>
    %c0_9 = arith.constant 0 : index
    %c0_10 = arith.constant 0 : index
    %16 = vector.load %arg6[%c0_9, %c0_10] : memref<16x1xf32, #tpu.memory_space<vmem>>, vector<16x1xf32>
    %17 = vector.broadcast %16 : vector<16x1xf32> to vector<16x16xf32>
    %18 = arith.addf %15, %17 : vector<16x16xf32>
    %19 = arith.mulf %18, %18 : vector<16x16xf32>
    %20 = arith.mulf %18, %19 : vector<16x16xf32>
    %cst_11 = arith.constant 4.471500e-02 : f32
    %21 = vector.broadcast %cst_11 : f32 to vector<16x16xf32>
    %22 = arith.mulf %21, %20 : vector<16x16xf32>
    %23 = arith.addf %18, %22 : vector<16x16xf32>
    %cst_12 = arith.constant 0.797884583 : f32
    %24 = vector.broadcast %cst_12 : f32 to vector<16x16xf32>
    %25 = arith.mulf %24, %23 : vector<16x16xf32>
    %26 = math.tanh %25 : vector<16x16xf32>
    %cst_13 = arith.constant 1.000000e+00 : f32
    %27 = vector.broadcast %cst_13 : f32 to vector<16x16xf32>
    %28 = arith.addf %27, %26 : vector<16x16xf32>
    %cst_14 = arith.constant 5.000000e-01 : f32
    %29 = vector.broadcast %cst_14 : f32 to vector<16x16xf32>
    %30 = arith.mulf %29, %28 : vector<16x16xf32>
    %31 = arith.mulf %18, %30 : vector<16x16xf32>
    %c0_15 = arith.constant 0 : index
    %c0_16 = arith.constant 0 : index
    %32 = vector.load %arg7[%c0_15, %c0_16] : memref<4x16xbf16, #tpu.memory_space<vmem>>, vector<4x16xbf16>
    %33 = arith.truncf %31 : vector<16x16xf32> to vector<16x16xbf16>
    %cst_17 = arith.constant dense<0.000000e+00> : vector<4x16xf32>
    %34 = tpu.matmul %32, %33, %cst_17 {dimension_numbers = #tpu.dot_dimension_numbers<[1], [0], [0], [1], [0, 0, 1, 1], [], []>} : vector<4x16xbf16>, vector<16x16xbf16>, vector<4x16xf32> -> vector<4x16xf32>
    %c0_18 = arith.constant 0 : index
    %c0_19 = arith.constant 0 : index
    %35 = vector.load %arg8[%c0_18, %c0_19] : memref<4x1xf32, #tpu.memory_space<vmem>>, vector<4x1xf32>
    %36 = vector.broadcast %35 : vector<4x1xf32> to vector<4x16xf32>
    %37 = arith.addf %34, %36 : vector<4x16xf32>
    %38 = vector.shape_cast %37 : vector<4x16xf32> to vector<4x1x16xf32>
    %39 = arith.truncf %38 : vector<4x1x16xf32> to vector<4x1x16xbf16>
    %c0_20 = arith.constant 0 : index
    %c0_21 = arith.constant 0 : index
    %c0_22 = arith.constant 0 : index
    %c0_23 = arith.constant 0 : index
    %40 = vector.load %arg9[%c0_20, %c0_21, %c0_22, %c0_23] : memref<1x4x16x16xbf16, #tpu.memory_space<vmem>>, vector<1x4x1x16xbf16>
    %41 = vector.shape_cast %40 : vector<1x4x1x16xbf16> to vector<4x1x16xbf16>
    %42 = vector.shape_cast %39 : vector<4x1x16xbf16> to vector<1x4x1x16xbf16>
    tpu.vector_store %arg9[%c0_20, %c0_21, %c0_22, %c0_23], %42 {strides = array<i32>} : memref<1x4x16x16xbf16, #tpu.memory_space<vmem>>, vector<1x4x1x16xbf16>,
    %c0_24 = arith.constant 0 : index
    %c1 = arith.constant 1 : index
    %c0_25 = arith.constant 0 : index
    %43 = vector.load %arg2[%c0_24, %c1, %c0_25] : memref<1x16x16xf32, #tpu.memory_space<vmem>>, vector<1x1x16xf32>
    %44 = vector.shape_cast %43 : vector<1x1x16xf32> to vector<1x16xf32>
    %c0_26 = arith.constant 0 : index
    %c0_27 = arith.constant 0 : index
    %45 = vector.load %arg3[%c0_26, %c0_27] : memref<16x1xf32, #tpu.memory_space<vmem>>, vector<16x1xf32>
    %46 = vector.broadcast %44 : vector<1x16xf32> to vector<16x16xf32>
    %47 = vector.broadcast %45 : vector<16x1xf32> to vector<16x16xf32>
    %48 = arith.subf %46, %47 : vector<16x16xf32>
    %49 = vector.broadcast %0 : vector<1x1xf32> to vector<16x16xf32>
    %50 = arith.mulf %48, %49 : vector<16x16xf32>
    %51 = arith.mulf %50, %50 : vector<16x16xf32>
    %cst_28 = arith.constant -5.000000e-01 : f32
    %52 = vector.broadcast %cst_28 : f32 to vector<16x16xf32>
    %53 = arith.mulf %52, %51 : vector<16x16xf32>
    %54 = math.exp %53 : vector<16x16xf32>
    %c0_29 = arith.constant 0 : index
    %c0_30 = arith.constant 0 : index
    %55 = vector.load %arg5[%c0_29, %c0_30] : memref<16x16xbf16, #tpu.memory_space<vmem>>, vector<16x16xbf16>
    %56 = arith.truncf %54 : vector<16x16xf32> to vector<16x16xbf16>
    %cst_31 = arith.constant dense<0.000000e+00> : vector<16x16xf32>
    %57 = tpu.matmul %55, %56, %cst_31 {dimension_numbers = #tpu.dot_dimension_numbers<[1], [0], [0], [1], [0, 0, 1, 1], [], []>} : vector<16x16xbf16>, vector<16x16xbf16>, vector<16x16xf32> -> vector<16x16xf32>
    %c0_32 = arith.constant 0 : index
    %c0_33 = arith.constant 0 : index
    %58 = vector.load %arg6[%c0_32, %c0_33] : memref<16x1xf32, #tpu.memory_space<vmem>>, vector<16x1xf32>
    %59 = vector.broadcast %58 : vector<16x1xf32> to vector<16x16xf32>
    %60 = arith.addf %57, %59 : vector<16x16xf32>
    %61 = arith.mulf %60, %60 : vector<16x16xf32>
    %62 = arith.mulf %60, %61 : vector<16x16xf32>
    %cst_34 = arith.constant 4.471500e-02 : f32
    %63 = vector.broadcast %cst_34 : f32 to vector<16x16xf32>
    %64 = arith.mulf %63, %62 : vector<16x16xf32>
    %65 = arith.addf %60, %64 : vector<16x16xf32>
    %cst_35 = arith.constant 0.797884583 : f32
    %66 = vector.broadcast %cst_35 : f32 to vector<16x16xf32>
    %67 = arith.mulf %66, %65 : vector<16x16xf32>
    %68 = math.tanh %67 : vector<16x16xf32>
    %cst_36 = arith.constant 1.000000e+00 : f32
    %69 = vector.broadcast %cst_36 : f32 to vector<16x16xf32>
    %70 = arith.addf %69, %68 : vector<16x16xf32>
    %cst_37 = arith.constant 5.000000e-01 : f32
    %71 = vector.broadcast %cst_37 : f32 to vector<16x16xf32>
    %72 = arith.mulf %71, %70 : vector<16x16xf32>
    %73 = arith.mulf %60, %72 : vector<16x16xf32>
    %c0_38 = arith.constant 0 : index
    %c0_39 = arith.constant 0 : index
    %74 = vector.load %arg7[%c0_38, %c0_39] : memref<4x16xbf16, #tpu.memory_space<vmem>>, vector<4x16xbf16>
    %75 = arith.truncf %73 : vector<16x16xf32> to vector<16x16xbf16>
    %cst_40 = arith.constant dense<0.000000e+00> : vector<4x16xf32>
    %76 = tpu.matmul %74, %75, %cst_40 {dimension_numbers = #tpu.dot_dimension_numbers<[1], [0], [0], [1], [0, 0, 1, 1], [], []>} : vector<4x16xbf16>, vector<16x16xbf16>, vector<4x16xf32> -> vector<4x16xf32>
    %c0_41 = arith.constant 0 : index
    %c0_42 = arith.constant 0 : index
    %77 = vector.load %arg8[%c0_41, %c0_42] : memref<4x1xf32, #tpu.memory_space<vmem>>, vector<4x1xf32>
    %78 = vector.broadcast %77 : vector<4x1xf32> to vector<4x16xf32>
    %79 = arith.addf %76, %78 : vector<4x16xf32>
    %80 = vector.shape_cast %79 : vector<4x16xf32> to vector<4x1x16xf32>
    %81 = arith.truncf %80 : vector<4x1x16xf32> to vector<4x1x16xbf16>
    %c0_43 = arith.constant 0 : index
    %c0_44 = arith.constant 0 : index
    %c1_45 = arith.constant 1 : index
    %c0_46 = arith.constant 0 : index
    %82 = vector.load %arg9[%c0_43, %c0_44, %c1_45, %c0_46] : memref<1x4x16x16xbf16, #tpu.memory_space<vmem>>, vector<1x4x1x16xbf16>
    %83 = vector.shape_cast %82 : vector<1x4x1x16xbf16> to vector<4x1x16xbf16>
    %84 = vector.shape_cast %81 : vector<4x1x16xbf16> to vector<1x4x1x16xbf16>
    tpu.vector_store %arg9[%c0_43, %c0_44, %c1_45, %c0_46], %84 {strides = array<i32>} : memref<1x4x16x16xbf16, #tpu.memory_space<vmem>>, vector<1x4x1x16xbf16>,
    %c0_47 = arith.constant 0 : index
    %c2 = arith.constant 2 : index
    %c0_48 = arith.constant 0 : index
    %85 = vector.load %arg2[%c0_47, %c2, %c0_48] : memref<1x16x16xf32, #tpu.memory_space<vmem>>, vector<1x1x16xf32>
    %86 = vector.shape_cast %85 : vector<1x1x16xf32> to vector<1x16xf32>
    %c0_49 = arith.constant 0 : index
    %c0_50 = arith.constant 0 : index
    %87 = vector.load %arg3[%c0_49, %c0_50] : memref<16x1xf32, #tpu.memory_space<vmem>>, vector<16x1xf32>
    %88 = vector.broadcast %86 : vector<1x16xf32> to vector<16x16xf32>
    %89 = vector.broadcast %87 : vector<16x1xf32> to vector<16x16xf32>
    %90 = arith.subf %88, %89 : vector<16x16xf32>
    %91 = vector.broadcast %0 : vector<1x1xf32> to vector<16x16xf32>
    %92 = arith.mulf %90, %91 : vector<16x16xf32>
    %93 = arith.mulf %92, %92 : vector<16x16xf32>
    %cst_51 = arith.constant -5.000000e-01 : f32
    %94 = vector.broadcast %cst_51 : f32 to vector<16x16xf32>
    %95 = arith.mulf %94, %93 : vector<16x16xf32>
    %96 = math.exp %95 : vector<16x16xf32>
    %c0_52 = arith.constant 0 : index
    %c0_53 = arith.constant 0 : index
    %97 = vector.load %arg5[%c0_52, %c0_53] : memref<16x16xbf16, #tpu.memory_space<vmem>>, vector<16x16xbf16>
    %98 = arith.truncf %96 : vector<16x16xf32> to vector<16x16xbf16>
    %cst_54 = arith.constant dense<0.000000e+00> : vector<16x16xf32>
    %99 = tpu.matmul %97, %98, %cst_54 {dimension_numbers = #tpu.dot_dimension_numbers<[1], [0], [0], [1], [0, 0, 1, 1], [], []>} : vector<16x16xbf16>, vector<16x16xbf16>, vector<16x16xf32> -> vector<16x16xf32>
    %c0_55 = arith.constant 0 : index
    %c0_56 = arith.constant 0 : index
    %100 = vector.load %arg6[%c0_55, %c0_56] : memref<16x1xf32, #tpu.memory_space<vmem>>, vector<16x1xf32>
    %101 = vector.broadcast %100 : vector<16x1xf32> to vector<16x16xf32>
    %102 = arith.addf %99, %101 : vector<16x16xf32>
    %103 = arith.mulf %102, %102 : vector<16x16xf32>
    %104 = arith.mulf %102, %103 : vector<16x16xf32>
    %cst_57 = arith.constant 4.471500e-02 : f32
    %105 = vector.broadcast %cst_57 : f32 to vector<16x16xf32>
    %106 = arith.mulf %105, %104 : vector<16x16xf32>
    %107 = arith.addf %102, %106 : vector<16x16xf32>
    %cst_58 = arith.constant 0.797884583 : f32
    %108 = vector.broadcast %cst_58 : f32 to vector<16x16xf32>
    %109 = arith.mulf %108, %107 : vector<16x16xf32>
    %110 = math.tanh %109 : vector<16x16xf32>
    %cst_59 = arith.constant 1.000000e+00 : f32
    %111 = vector.broadcast %cst_59 : f32 to vector<16x16xf32>
    %112 = arith.addf %111, %110 : vector<16x16xf32>
    %cst_60 = arith.constant 5.000000e-01 : f32
    %113 = vector.broadcast %cst_60 : f32 to vector<16x16xf32>
    %114 = arith.mulf %113, %112 : vector<16x16xf32>
    %115 = arith.mulf %102, %114 : vector<16x16xf32>
    %c0_61 = arith.constant 0 : index
    %c0_62 = arith.constant 0 : index
    %116 = vector.load %arg7[%c0_61, %c0_62] : memref<4x16xbf16, #tpu.memory_space<vmem>>, vector<4x16xbf16>
    %117 = arith.truncf %115 : vector<16x16xf32> to vector<16x16xbf16>
    %cst_63 = arith.constant dense<0.000000e+00> : vector<4x16xf32>
    %118 = tpu.matmul %116, %117, %cst_63 {dimension_numbers = #tpu.dot_dimension_numbers<[1], [0], [0], [1], [0, 0, 1, 1], [], []>} : vector<4x16xbf16>, vector<16x16xbf16>, vector<4x16xf32> -> vector<4x16xf32>
    %c0_64 = arith.constant 0 : index
    %c0_65 = arith.constant 0 : index
    %119 = vector.load %arg8[%c0_64, %c0_65] : memref<4x1xf32, #tpu.memory_space<vmem>>, vector<4x1xf32>
    %120 = vector.broadcast %119 : vector<4x1xf32> to vector<4x16xf32>
    %121 = arith.addf %118, %120 : vector<4x16xf32>
    %122 = vector.shape_cast %121 : vector<4x16xf32> to vector<4x1x16xf32>
    %123 = arith.truncf %122 : vector<4x1x16xf32> to vector<4x1x16xbf16>
    %c0_66 = arith.constant 0 : index
    %c0_67 = arith.constant 0 : index
    %c2_68 = arith.constant 2 : index
    %c0_69 = arith.constant 0 : index
    %124 = vector.load %arg9[%c0_66, %c0_67, %c2_68, %c0_69] : memref<1x4x16x16xbf16, #tpu.memory_space<vmem>>, vector<1x4x1x16xbf16>
    %125 = vector.shape_cast %124 : vector<1x4x1x16xbf16> to vector<4x1x16xbf16>
    %126 = vector.shape_cast %123 : vector<4x1x16xbf16> to vector<1x4x1x16xbf16>
    tpu.vector_store %arg9[%c0_66, %c0_67, %c2_68, %c0_69], %126 {strides = array<i32>} : memref<1x4x16x16xbf16, #tpu.memory_space<vmem>>, vector<1x4x1x16xbf16>,
    %c0_70 = arith.constant 0 : index
    %c3 = arith.constant 3 : index
    %c0_71 = arith.constant 0 : index
    %127 = vector.load %arg2[%c0_70, %c3, %c0_71] : memref<1x16x16xf32, #tpu.memory_space<vmem>>, vector<1x1x16xf32>
    %128 = vector.shape_cast %127 : vector<1x1x16xf32> to vector<1x16xf32>
    %c0_72 = arith.constant 0 : index
    %c0_73 = arith.constant 0 : index
    %129 = vector.load %arg3[%c0_72, %c0_73] : memref<16x1xf32, #tpu.memory_space<vmem>>, vector<16x1xf32>
    %130 = vector.broadcast %128 : vector<1x16xf32> to vector<16x16xf32>
    %131 = vector.broadcast %129 : vector<16x1xf32> to vector<16x16xf32>
    %132 = arith.subf %130, %131 : vector<16x16xf32>
    %133 = vector.broadcast %0 : vector<1x1xf32> to vector<16x16xf32>
    %134 = arith.mulf %132, %133 : vector<16x16xf32>
    %135 = arith.mulf %134, %134 : vector<16x16xf32>
    %cst_74 = arith.constant -5.000000e-01 : f32
    %136 = vector.broadcast %cst_74 : f32 to vector<16x16xf32>
    %137 = arith.mulf %136, %135 : vector<16x16xf32>
    %138 = math.exp %137 : vector<16x16xf32>
    %c0_75 = arith.constant 0 : index
    %c0_76 = arith.constant 0 : index
    %139 = vector.load %arg5[%c0_75, %c0_76] : memref<16x16xbf16, #tpu.memory_space<vmem>>, vector<16x16xbf16>
    %140 = arith.truncf %138 : vector<16x16xf32> to vector<16x16xbf16>
    %cst_77 = arith.constant dense<0.000000e+00> : vector<16x16xf32>
    %141 = tpu.matmul %139, %140, %cst_77 {dimension_numbers = #tpu.dot_dimension_numbers<[1], [0], [0], [1], [0, 0, 1, 1], [], []>} : vector<16x16xbf16>, vector<16x16xbf16>, vector<16x16xf32> -> vector<16x16xf32>
    %c0_78 = arith.constant 0 : index
    %c0_79 = arith.constant 0 : index
    %142 = vector.load %arg6[%c0_78, %c0_79] : memref<16x1xf32, #tpu.memory_space<vmem>>, vector<16x1xf32>
    %143 = vector.broadcast %142 : vector<16x1xf32> to vector<16x16xf32>
    %144 = arith.addf %141, %143 : vector<16x16xf32>
    %145 = arith.mulf %144, %144 : vector<16x16xf32>
    %146 = arith.mulf %144, %145 : vector<16x16xf32>
    %cst_80 = arith.constant 4.471500e-02 : f32
    %147 = vector.broadcast %cst_80 : f32 to vector<16x16xf32>
    %148 = arith.mulf %147, %146 : vector<16x16xf32>
    %149 = arith.addf %144, %148 : vector<16x16xf32>
    %cst_81 = arith.constant 0.797884583 : f32
    %150 = vector.broadcast %cst_81 : f32 to vector<16x16xf32>
    %151 = arith.mulf %150, %149 : vector<16x16xf32>
    %152 = math.tanh %151 : vector<16x16xf32>
    %cst_82 = arith.constant 1.000000e+00 : f32
    %153 = vector.broadcast %cst_82 : f32 to vector<16x16xf32>
    %154 = arith.addf %153, %152 : vector<16x16xf32>
    %cst_83 = arith.constant 5.000000e-01 : f32
    %155 = vector.broadcast %cst_83 : f32 to vector<16x16xf32>
    %156 = arith.mulf %155, %154 : vector<16x16xf32>
    %157 = arith.mulf %144, %156 : vector<16x16xf32>
    %c0_84 = arith.constant 0 : index
    %c0_85 = arith.constant 0 : index
    %158 = vector.load %arg7[%c0_84, %c0_85] : memref<4x16xbf16, #tpu.memory_space<vmem>>, vector<4x16xbf16>
    %159 = arith.truncf %157 : vector<16x16xf32> to vector<16x16xbf16>
    %cst_86 = arith.constant dense<0.000000e+00> : vector<4x16xf32>
    %160 = tpu.matmul %158, %159, %cst_86 {dimension_numbers = #tpu.dot_dimension_numbers<[1], [0], [0], [1], [0, 0, 1, 1], [], []>} : vector<4x16xbf16>, vector<16x16xbf16>, vector<4x16xf32> -> vector<4x16xf32>
    %c0_87 = arith.constant 0 : index
    %c0_88 = arith.constant 0 : index
    %161 = vector.load %arg8[%c0_87, %c0_88] : memref<4x1xf32, #tpu.memory_space<vmem>>, vector<4x1xf32>
    %162 = vector.broadcast %161 : vector<4x1xf32> to vector<4x16xf32>
    %163 = arith.addf %160, %162 : vector<4x16xf32>
    %164 = vector.shape_cast %163 : vector<4x16xf32> to vector<4x1x16xf32>
    %165 = arith.truncf %164 : vector<4x1x16xf32> to vector<4x1x16xbf16>
    %c0_89 = arith.constant 0 : index
    %c0_90 = arith.constant 0 : index
    %c3_91 = arith.constant 3 : index
    %c0_92 = arith.constant 0 : index
    %166 = vector.load %arg9[%c0_89, %c0_90, %c3_91, %c0_92] : memref<1x4x16x16xbf16, #tpu.memory_space<vmem>>, vector<1x4x1x16xbf16>
    %167 = vector.shape_cast %166 : vector<1x4x1x16xbf16> to vector<4x1x16xbf16>
    %168 = vector.shape_cast %165 : vector<4x1x16xbf16> to vector<1x4x1x16xbf16>
    tpu.vector_store %arg9[%c0_89, %c0_90, %c3_91, %c0_92], %168 {strides = array<i32>} : memref<1x4x16x16xbf16, #tpu.memory_space<vmem>>, vector<1x4x1x16xbf16>,
    %c0_93 = arith.constant 0 : index
    %c4 = arith.constant 4 : index
    %c0_94 = arith.constant 0 : index
    %169 = vector.load %arg2[%c0_93, %c4, %c0_94] : memref<1x16x16xf32, #tpu.memory_space<vmem>>, vector<1x1x16xf32>
    %170 = vector.shape_cast %169 : vector<1x1x16xf32> to vector<1x16xf32>
    %c0_95 = arith.constant 0 : index
    %c0_96 = arith.constant 0 : index
    %171 = vector.load %arg3[%c0_95, %c0_96] : memref<16x1xf32, #tpu.memory_space<vmem>>, vector<16x1xf32>
    %172 = vector.broadcast %170 : vector<1x16xf32> to vector<16x16xf32>
    %173 = vector.broadcast %171 : vector<16x1xf32> to vector<16x16xf32>
    %174 = arith.subf %172, %173 : vector<16x16xf32>
    %175 = vector.broadcast %0 : vector<1x1xf32> to vector<16x16xf32>
    %176 = arith.mulf %174, %175 : vector<16x16xf32>
    %177 = arith.mulf %176, %176 : vector<16x16xf32>
    %cst_97 = arith.constant -5.000000e-01 : f32
    %178 = vector.broadcast %cst_97 : f32 to vector<16x16xf32>
    %179 = arith.mulf %178, %177 : vector<16x16xf32>
    %180 = math.exp %179 : vector<16x16xf32>
    %c0_98 = arith.constant 0 : index
    %c0_99 = arith.constant 0 : index
    %181 = vector.load %arg5[%c0_98, %c0_99] : memref<16x16xbf16, #tpu.memory_space<vmem>>, vector<16x16xbf16>
    %182 = arith.truncf %180 : vector<16x16xf32> to vector<16x16xbf16>
    %cst_100 = arith.constant dense<0.000000e+00> : vector<16x16xf32>
    %183 = tpu.matmul %181, %182, %cst_100 {dimension_numbers = #tpu.dot_dimension_numbers<[1], [0], [0], [1], [0, 0, 1, 1], [], []>} : vector<16x16xbf16>, vector<16x16xbf16>, vector<16x16xf32> -> vector<16x16xf32>
    %c0_101 = arith.constant 0 : index
    %c0_102 = arith.constant 0 : index
    %184 = vector.load %arg6[%c0_101, %c0_102] : memref<16x1xf32, #tpu.memory_space<vmem>>, vector<16x1xf32>
    %185 = vector.broadcast %184 : vector<16x1xf32> to vector<16x16xf32>
    %186 = arith.addf %183, %185 : vector<16x16xf32>
    %187 = arith.mulf %186, %186 : vector<16x16xf32>
    %188 = arith.mulf %186, %187 : vector<16x16xf32>
    %cst_103 = arith.constant 4.471500e-02 : f32
    %189 = vector.broadcast %cst_103 : f32 to vector<16x16xf32>
    %190 = arith.mulf %189, %188 : vector<16x16xf32>
    %191 = arith.addf %186, %190 : vector<16x16xf32>
    %cst_104 = arith.constant 0.797884583 : f32
    %192 = vector.broadcast %cst_104 : f32 to vector<16x16xf32>
    %193 = arith.mulf %192, %191 : vector<16x16xf32>
    %194 = math.tanh %193 : vector<16x16xf32>
    %cst_105 = arith.constant 1.000000e+00 : f32
    %195 = vector.broadcast %cst_105 : f32 to vector<16x16xf32>
    %196 = arith.addf %195, %194 : vector<16x16xf32>
    %cst_106 = arith.constant 5.000000e-01 : f32
    %197 = vector.broadcast %cst_106 : f32 to vector<16x16xf32>
    %198 = arith.mulf %197, %196 : vector<16x16xf32>
    %199 = arith.mulf %186, %198 : vector<16x16xf32>
    %c0_107 = arith.constant 0 : index
    %c0_108 = arith.constant 0 : index
    %200 = vector.load %arg7[%c0_107, %c0_108] : memref<4x16xbf16, #tpu.memory_space<vmem>>, vector<4x16xbf16>
    %201 = arith.truncf %199 : vector<16x16xf32> to vector<16x16xbf16>
    %cst_109 = arith.constant dense<0.000000e+00> : vector<4x16xf32>
    %202 = tpu.matmul %200, %201, %cst_109 {dimension_numbers = #tpu.dot_dimension_numbers<[1], [0], [0], [1], [0, 0, 1, 1], [], []>} : vector<4x16xbf16>, vector<16x16xbf16>, vector<4x16xf32> -> vector<4x16xf32>
    %c0_110 = arith.constant 0 : index
    %c0_111 = arith.constant 0 : index
    %203 = vector.load %arg8[%c0_110, %c0_111] : memref<4x1xf32, #tpu.memory_space<vmem>>, vector<4x1xf32>
    %204 = vector.broadcast %203 : vector<4x1xf32> to vector<4x16xf32>
    %205 = arith.addf %202, %204 : vector<4x16xf32>
    %206 = vector.shape_cast %205 : vector<4x16xf32> to vector<4x1x16xf32>
    %207 = arith.truncf %206 : vector<4x1x16xf32> to vector<4x1x16xbf16>
    %c0_112 = arith.constant 0 : index
    %c0_113 = arith.constant 0 : index
    %c4_114 = arith.constant 4 : index
    %c0_115 = arith.constant 0 : index
    %208 = vector.load %arg9[%c0_112, %c0_113, %c4_114, %c0_115] : memref<1x4x16x16xbf16, #tpu.memory_space<vmem>>, vector<1x4x1x16xbf16>
    %209 = vector.shape_cast %208 : vector<1x4x1x16xbf16> to vector<4x1x16xbf16>
    %210 = vector.shape_cast %207 : vector<4x1x16xbf16> to vector<1x4x1x16xbf16>
    tpu.vector_store %arg9[%c0_112, %c0_113, %c4_114, %c0_115], %210 {strides = array<i32>} : memref<1x4x16x16xbf16, #tpu.memory_space<vmem>>, vector<1x4x1x16xbf16>,
    %c0_116 = arith.constant 0 : index
    %c5 = arith.constant 5 : index
    %c0_117 = arith.constant 0 : index
    %211 = vector.load %arg2[%c0_116, %c5, %c0_117] : memref<1x16x16xf32, #tpu.memory_space<vmem>>, vector<1x1x16xf32>
    %212 = vector.shape_cast %211 : vector<1x1x16xf32> to vector<1x16xf32>
    %c0_118 = arith.constant 0 : index
    %c0_119 = arith.constant 0 : index
    %213 = vector.load %arg3[%c0_118, %c0_119] : memref<16x1xf32, #tpu.memory_space<vmem>>, vector<16x1xf32>
    %214 = vector.broadcast %212 : vector<1x16xf32> to vector<16x16xf32>
    %215 = vector.broadcast %213 : vector<16x1xf32> to vector<16x16xf32>
    %216 = arith.subf %214, %215 : vector<16x16xf32>
    %217 = vector.broadcast %0 : vector<1x1xf32> to vector<16x16xf32>
    %218 = arith.mulf %216, %217 : vector<16x16xf32>
    %219 = arith.mulf %218, %218 : vector<16x16xf32>
    %cst_120 = arith.constant -5.000000e-01 : f32
    %220 = vector.broadcast %cst_120 : f32 to vector<16x16xf32>
    %221 = arith.mulf %220, %219 : vector<16x16xf32>
    %222 = math.exp %221 : vector<16x16xf32>
    %c0_121 = arith.constant 0 : index
    %c0_122 = arith.constant 0 : index
    %223 = vector.load %arg5[%c0_121, %c0_122] : memref<16x16xbf16, #tpu.memory_space<vmem>>, vector<16x16xbf16>
    %224 = arith.truncf %222 : vector<16x16xf32> to vector<16x16xbf16>
    %cst_123 = arith.constant dense<0.000000e+00> : vector<16x16xf32>
    %225 = tpu.matmul %223, %224, %cst_123 {dimension_numbers = #tpu.dot_dimension_numbers<[1], [0], [0], [1], [0, 0, 1, 1], [], []>} : vector<16x16xbf16>, vector<16x16xbf16>, vector<16x16xf32> -> vector<16x16xf32>
    %c0_124 = arith.constant 0 : index
    %c0_125 = arith.constant 0 : index
    %226 = vector.load %arg6[%c0_124, %c0_125] : memref<16x1xf32, #tpu.memory_space<vmem>>, vector<16x1xf32>
    %227 = vector.broadcast %226 : vector<16x1xf32> to vector<16x16xf32>
    %228 = arith.addf %225, %227 : vector<16x16xf32>
    %229 = arith.mulf %228, %228 : vector<16x16xf32>
    %230 = arith.mulf %228, %229 : vector<16x16xf32>
    %cst_126 = arith.constant 4.471500e-02 : f32
    %231 = vector.broadcast %cst_126 : f32 to vector<16x16xf32>
    %232 = arith.mulf %231, %230 : vector<16x16xf32>
    %233 = arith.addf %228, %232 : vector<16x16xf32>
    %cst_127 = arith.constant 0.797884583 : f32
    %234 = vector.broadcast %cst_127 : f32 to vector<16x16xf32>
    %235 = arith.mulf %234, %233 : vector<16x16xf32>
    %236 = math.tanh %235 : vector<16x16xf32>
    %cst_128 = arith.constant 1.000000e+00 : f32
    %237 = vector.broadcast %cst_128 : f32 to vector<16x16xf32>
    %238 = arith.addf %237, %236 : vector<16x16xf32>
    %cst_129 = arith.constant 5.000000e-01 : f32
    %239 = vector.broadcast %cst_129 : f32 to vector<16x16xf32>
    %240 = arith.mulf %239, %238 : vector<16x16xf32>
    %241 = arith.mulf %228, %240 : vector<16x16xf32>
    %c0_130 = arith.constant 0 : index
    %c0_131 = arith.constant 0 : index
    %242 = vector.load %arg7[%c0_130, %c0_131] : memref<4x16xbf16, #tpu.memory_space<vmem>>, vector<4x16xbf16>
    %243 = arith.truncf %241 : vector<16x16xf32> to vector<16x16xbf16>
    %cst_132 = arith.constant dense<0.000000e+00> : vector<4x16xf32>
    %244 = tpu.matmul %242, %243, %cst_132 {dimension_numbers = #tpu.dot_dimension_numbers<[1], [0], [0], [1], [0, 0, 1, 1], [], []>} : vector<4x16xbf16>, vector<16x16xbf16>, vector<4x16xf32> -> vector<4x16xf32>
    %c0_133 = arith.constant 0 : index
    %c0_134 = arith.constant 0 : index
    %245 = vector.load %arg8[%c0_133, %c0_134] : memref<4x1xf32, #tpu.memory_space<vmem>>, vector<4x1xf32>
    %246 = vector.broadcast %245 : vector<4x1xf32> to vector<4x16xf32>
    %247 = arith.addf %244, %246 : vector<4x16xf32>
    %248 = vector.shape_cast %247 : vector<4x16xf32> to vector<4x1x16xf32>
    %249 = arith.truncf %248 : vector<4x1x16xf32> to vector<4x1x16xbf16>
    %c0_135 = arith.constant 0 : index
    %c0_136 = arith.constant 0 : index
    %c5_137 = arith.constant 5 : index
    %c0_138 = arith.constant 0 : index
    %250 = vector.load %arg9[%c0_135, %c0_136, %c5_137, %c0_138] : memref<1x4x16x16xbf16, #tpu.memory_space<vmem>>, vector<1x4x1x16xbf16>
    %251 = vector.shape_cast %250 : vector<1x4x1x16xbf16> to vector<4x1x16xbf16>
    %252 = vector.shape_cast %249 : vector<4x1x16xbf16> to vector<1x4x1x16xbf16>
    tpu.vector_store %arg9[%c0_135, %c0_136, %c5_137, %c0_138], %252 {strides = array<i32>} : memref<1x4x16x16xbf16, #tpu.memory_space<vmem>>, vector<1x4x1x16xbf16>,
    %c0_139 = arith.constant 0 : index
    %c6 = arith.constant 6 : index
    %c0_140 = arith.constant 0 : index
    %253 = vector.load %arg2[%c0_139, %c6, %c0_140] : memref<1x16x16xf32, #tpu.memory_space<vmem>>, vector<1x1x16xf32>
    %254 = vector.shape_cast %253 : vector<1x1x16xf32> to vector<1x16xf32>
    %c0_141 = arith.constant 0 : index
    %c0_142 = arith.constant 0 : index
    %255 = vector.load %arg3[%c0_141, %c0_142] : memref<16x1xf32, #tpu.memory_space<vmem>>, vector<16x1xf32>
    %256 = vector.broadcast %254 : vector<1x16xf32> to vector<16x16xf32>
    %257 = vector.broadcast %255 : vector<16x1xf32> to vector<16x16xf32>
    %258 = arith.subf %256, %257 : vector<16x16xf32>
    %259 = vector.broadcast %0 : vector<1x1xf32> to vector<16x16xf32>
    %260 = arith.mulf %258, %259 : vector<16x16xf32>
    %261 = arith.mulf %260, %260 : vector<16x16xf32>
    %cst_143 = arith.constant -5.000000e-01 : f32
    %262 = vector.broadcast %cst_143 : f32 to vector<16x16xf32>
    %263 = arith.mulf %262, %261 : vector<16x16xf32>
    %264 = math.exp %263 : vector<16x16xf32>
    %c0_144 = arith.constant 0 : index
    %c0_145 = arith.constant 0 : index
    %265 = vector.load %arg5[%c0_144, %c0_145] : memref<16x16xbf16, #tpu.memory_space<vmem>>, vector<16x16xbf16>
    %266 = arith.truncf %264 : vector<16x16xf32> to vector<16x16xbf16>
    %cst_146 = arith.constant dense<0.000000e+00> : vector<16x16xf32>
    %267 = tpu.matmul %265, %266, %cst_146 {dimension_numbers = #tpu.dot_dimension_numbers<[1], [0], [0], [1], [0, 0, 1, 1], [], []>} : vector<16x16xbf16>, vector<16x16xbf16>, vector<16x16xf32> -> vector<16x16xf32>
    %c0_147 = arith.constant 0 : index
    %c0_148 = arith.constant 0 : index
    %268 = vector.load %arg6[%c0_147, %c0_148] : memref<16x1xf32, #tpu.memory_space<vmem>>, vector<16x1xf32>
    %269 = vector.broadcast %268 : vector<16x1xf32> to vector<16x16xf32>
    %270 = arith.addf %267, %269 : vector<16x16xf32>
    %271 = arith.mulf %270, %270 : vector<16x16xf32>
    %272 = arith.mulf %270, %271 : vector<16x16xf32>
    %cst_149 = arith.constant 4.471500e-02 : f32
    %273 = vector.broadcast %cst_149 : f32 to vector<16x16xf32>
    %274 = arith.mulf %273, %272 : vector<16x16xf32>
    %275 = arith.addf %270, %274 : vector<16x16xf32>
    %cst_150 = arith.constant 0.797884583 : f32
    %276 = vector.broadcast %cst_150 : f32 to vector<16x16xf32>
    %277 = arith.mulf %276, %275 : vector<16x16xf32>
    %278 = math.tanh %277 : vector<16x16xf32>
    %cst_151 = arith.constant 1.000000e+00 : f32
    %279 = vector.broadcast %cst_151 : f32 to vector<16x16xf32>
    %280 = arith.addf %279, %278 : vector<16x16xf32>
    %cst_152 = arith.constant 5.000000e-01 : f32
    %281 = vector.broadcast %cst_152 : f32 to vector<16x16xf32>
    %282 = arith.mulf %281, %280 : vector<16x16xf32>
    %283 = arith.mulf %270, %282 : vector<16x16xf32>
    %c0_153 = arith.constant 0 : index
    %c0_154 = arith.constant 0 : index
    %284 = vector.load %arg7[%c0_153, %c0_154] : memref<4x16xbf16, #tpu.memory_space<vmem>>, vector<4x16xbf16>
    %285 = arith.truncf %283 : vector<16x16xf32> to vector<16x16xbf16>
    %cst_155 = arith.constant dense<0.000000e+00> : vector<4x16xf32>
    %286 = tpu.matmul %284, %285, %cst_155 {dimension_numbers = #tpu.dot_dimension_numbers<[1], [0], [0], [1], [0, 0, 1, 1], [], []>} : vector<4x16xbf16>, vector<16x16xbf16>, vector<4x16xf32> -> vector<4x16xf32>
    %c0_156 = arith.constant 0 : index
    %c0_157 = arith.constant 0 : index
    %287 = vector.load %arg8[%c0_156, %c0_157] : memref<4x1xf32, #tpu.memory_space<vmem>>, vector<4x1xf32>
    %288 = vector.broadcast %287 : vector<4x1xf32> to vector<4x16xf32>
    %289 = arith.addf %286, %288 : vector<4x16xf32>
    %290 = vector.shape_cast %289 : vector<4x16xf32> to vector<4x1x16xf32>
    %291 = arith.truncf %290 : vector<4x1x16xf32> to vector<4x1x16xbf16>
    %c0_158 = arith.constant 0 : index
    %c0_159 = arith.constant 0 : index
    %c6_160 = arith.constant 6 : index
    %c0_161 = arith.constant 0 : index
    %292 = vector.load %arg9[%c0_158, %c0_159, %c6_160, %c0_161] : memref<1x4x16x16xbf16, #tpu.memory_space<vmem>>, vector<1x4x1x16xbf16>
    %293 = vector.shape_cast %292 : vector<1x4x1x16xbf16> to vector<4x1x16xbf16>
    %294 = vector.shape_cast %291 : vector<4x1x16xbf16> to vector<1x4x1x16xbf16>
    tpu.vector_store %arg9[%c0_158, %c0_159, %c6_160, %c0_161], %294 {strides = array<i32>} : memref<1x4x16x16xbf16, #tpu.memory_space<vmem>>, vector<1x4x1x16xbf16>,
    %c0_162 = arith.constant 0 : index
    %c7 = arith.constant 7 : index
    %c0_163 = arith.constant 0 : index
    %295 = vector.load %arg2[%c0_162, %c7, %c0_163] : memref<1x16x16xf32, #tpu.memory_space<vmem>>, vector<1x1x16xf32>
    %296 = vector.shape_cast %295 : vector<1x1x16xf32> to vector<1x16xf32>
    %c0_164 = arith.constant 0 : index
    %c0_165 = arith.constant 0 : index
    %297 = vector.load %arg3[%c0_164, %c0_165] : memref<16x1xf32, #tpu.memory_space<vmem>>, vector<16x1xf32>
    %298 = vector.broadcast %296 : vector<1x16xf32> to vector<16x16xf32>
    %299 = vector.broadcast %297 : vector<16x1xf32> to vector<16x16xf32>
    %300 = arith.subf %298, %299 : vector<16x16xf32>
    %301 = vector.broadcast %0 : vector<1x1xf32> to vector<16x16xf32>
    %302 = arith.mulf %300, %301 : vector<16x16xf32>
    %303 = arith.mulf %302, %302 : vector<16x16xf32>
    %cst_166 = arith.constant -5.000000e-01 : f32
    %304 = vector.broadcast %cst_166 : f32 to vector<16x16xf32>
    %305 = arith.mulf %304, %303 : vector<16x16xf32>
    %306 = math.exp %305 : vector<16x16xf32>
    %c0_167 = arith.constant 0 : index
    %c0_168 = arith.constant 0 : index
    %307 = vector.load %arg5[%c0_167, %c0_168] : memref<16x16xbf16, #tpu.memory_space<vmem>>, vector<16x16xbf16>
    %308 = arith.truncf %306 : vector<16x16xf32> to vector<16x16xbf16>
    %cst_169 = arith.constant dense<0.000000e+00> : vector<16x16xf32>
    %309 = tpu.matmul %307, %308, %cst_169 {dimension_numbers = #tpu.dot_dimension_numbers<[1], [0], [0], [1], [0, 0, 1, 1], [], []>} : vector<16x16xbf16>, vector<16x16xbf16>, vector<16x16xf32> -> vector<16x16xf32>
    %c0_170 = arith.constant 0 : index
    %c0_171 = arith.constant 0 : index
    %310 = vector.load %arg6[%c0_170, %c0_171] : memref<16x1xf32, #tpu.memory_space<vmem>>, vector<16x1xf32>
    %311 = vector.broadcast %310 : vector<16x1xf32> to vector<16x16xf32>
    %312 = arith.addf %309, %311 : vector<16x16xf32>
    %313 = arith.mulf %312, %312 : vector<16x16xf32>
    %314 = arith.mulf %312, %313 : vector<16x16xf32>
    %cst_172 = arith.constant 4.471500e-02 : f32
    %315 = vector.broadcast %cst_172 : f32 to vector<16x16xf32>
    %316 = arith.mulf %315, %314 : vector<16x16xf32>
    %317 = arith.addf %312, %316 : vector<16x16xf32>
    %cst_173 = arith.constant 0.797884583 : f32
    %318 = vector.broadcast %cst_173 : f32 to vector<16x16xf32>
    %319 = arith.mulf %318, %317 : vector<16x16xf32>
    %320 = math.tanh %319 : vector<16x16xf32>
    %cst_174 = arith.constant 1.000000e+00 : f32
    %321 = vector.broadcast %cst_174 : f32 to vector<16x16xf32>
    %322 = arith.addf %321, %320 : vector<16x16xf32>
    %cst_175 = arith.constant 5.000000e-01 : f32
    %323 = vector.broadcast %cst_175 : f32 to vector<16x16xf32>
    %324 = arith.mulf %323, %322 : vector<16x16xf32>
    %325 = arith.mulf %312, %324 : vector<16x16xf32>
    %c0_176 = arith.constant 0 : index
    %c0_177 = arith.constant 0 : index
    %326 = vector.load %arg7[%c0_176, %c0_177] : memref<4x16xbf16, #tpu.memory_space<vmem>>, vector<4x16xbf16>
    %327 = arith.truncf %325 : vector<16x16xf32> to vector<16x16xbf16>
    %cst_178 = arith.constant dense<0.000000e+00> : vector<4x16xf32>
    %328 = tpu.matmul %326, %327, %cst_178 {dimension_numbers = #tpu.dot_dimension_numbers<[1], [0], [0], [1], [0, 0, 1, 1], [], []>} : vector<4x16xbf16>, vector<16x16xbf16>, vector<4x16xf32> -> vector<4x16xf32>
    %c0_179 = arith.constant 0 : index
    %c0_180 = arith.constant 0 : index
    %329 = vector.load %arg8[%c0_179, %c0_180] : memref<4x1xf32, #tpu.memory_space<vmem>>, vector<4x1xf32>
    %330 = vector.broadcast %329 : vector<4x1xf32> to vector<4x16xf32>
    %331 = arith.addf %328, %330 : vector<4x16xf32>
    %332 = vector.shape_cast %331 : vector<4x16xf32> to vector<4x1x16xf32>
    %333 = arith.truncf %332 : vector<4x1x16xf32> to vector<4x1x16xbf16>
    %c0_181 = arith.constant 0 : index
    %c0_182 = arith.constant 0 : index
    %c7_183 = arith.constant 7 : index
    %c0_184 = arith.constant 0 : index
    %334 = vector.load %arg9[%c0_181, %c0_182, %c7_183, %c0_184] : memref<1x4x16x16xbf16, #tpu.memory_space<vmem>>, vector<1x4x1x16xbf16>
    %335 = vector.shape_cast %334 : vector<1x4x1x16xbf16> to vector<4x1x16xbf16>
    %336 = vector.shape_cast %333 : vector<4x1x16xbf16> to vector<1x4x1x16xbf16>
    tpu.vector_store %arg9[%c0_181, %c0_182, %c7_183, %c0_184], %336 {strides = array<i32>} : memref<1x4x16x16xbf16, #tpu.memory_space<vmem>>, vector<1x4x1x16xbf16>,
    %c0_185 = arith.constant 0 : index
    %c8 = arith.constant 8 : index
    %c0_186 = arith.constant 0 : index
    %337 = vector.load %arg2[%c0_185, %c8, %c0_186] : memref<1x16x16xf32, #tpu.memory_space<vmem>>, vector<1x1x16xf32>
    %338 = vector.shape_cast %337 : vector<1x1x16xf32> to vector<1x16xf32>
    %c0_187 = arith.constant 0 : index
    %c0_188 = arith.constant 0 : index
    %339 = vector.load %arg3[%c0_187, %c0_188] : memref<16x1xf32, #tpu.memory_space<vmem>>, vector<16x1xf32>
    %340 = vector.broadcast %338 : vector<1x16xf32> to vector<16x16xf32>
    %341 = vector.broadcast %339 : vector<16x1xf32> to vector<16x16xf32>
    %342 = arith.subf %340, %341 : vector<16x16xf32>
    %343 = vector.broadcast %0 : vector<1x1xf32> to vector<16x16xf32>
    %344 = arith.mulf %342, %343 : vector<16x16xf32>
    %345 = arith.mulf %344, %344 : vector<16x16xf32>
    %cst_189 = arith.constant -5.000000e-01 : f32
    %346 = vector.broadcast %cst_189 : f32 to vector<16x16xf32>
    %347 = arith.mulf %346, %345 : vector<16x16xf32>
    %348 = math.exp %347 : vector<16x16xf32>
    %c0_190 = arith.constant 0 : index
    %c0_191 = arith.constant 0 : index
    %349 = vector.load %arg5[%c0_190, %c0_191] : memref<16x16xbf16, #tpu.memory_space<vmem>>, vector<16x16xbf16>
    %350 = arith.truncf %348 : vector<16x16xf32> to vector<16x16xbf16>
    %cst_192 = arith.constant dense<0.000000e+00> : vector<16x16xf32>
    %351 = tpu.matmul %349, %350, %cst_192 {dimension_numbers = #tpu.dot_dimension_numbers<[1], [0], [0], [1], [0, 0, 1, 1], [], []>} : vector<16x16xbf16>, vector<16x16xbf16>, vector<16x16xf32> -> vector<16x16xf32>
    %c0_193 = arith.constant 0 : index
    %c0_194 = arith.constant 0 : index
    %352 = vector.load %arg6[%c0_193, %c0_194] : memref<16x1xf32, #tpu.memory_space<vmem>>, vector<16x1xf32>
    %353 = vector.broadcast %352 : vector<16x1xf32> to vector<16x16xf32>
    %354 = arith.addf %351, %353 : vector<16x16xf32>
    %355 = arith.mulf %354, %354 : vector<16x16xf32>
    %356 = arith.mulf %354, %355 : vector<16x16xf32>
    %cst_195 = arith.constant 4.471500e-02 : f32
    %357 = vector.broadcast %cst_195 : f32 to vector<16x16xf32>
    %358 = arith.mulf %357, %356 : vector<16x16xf32>
    %359 = arith.addf %354, %358 : vector<16x16xf32>
    %cst_196 = arith.constant 0.797884583 : f32
    %360 = vector.broadcast %cst_196 : f32 to vector<16x16xf32>
    %361 = arith.mulf %360, %359 : vector<16x16xf32>
    %362 = math.tanh %361 : vector<16x16xf32>
    %cst_197 = arith.constant 1.000000e+00 : f32
    %363 = vector.broadcast %cst_197 : f32 to vector<16x16xf32>
    %364 = arith.addf %363, %362 : vector<16x16xf32>
    %cst_198 = arith.constant 5.000000e-01 : f32
    %365 = vector.broadcast %cst_198 : f32 to vector<16x16xf32>
    %366 = arith.mulf %365, %364 : vector<16x16xf32>
    %367 = arith.mulf %354, %366 : vector<16x16xf32>
    %c0_199 = arith.constant 0 : index
    %c0_200 = arith.constant 0 : index
    %368 = vector.load %arg7[%c0_199, %c0_200] : memref<4x16xbf16, #tpu.memory_space<vmem>>, vector<4x16xbf16>
    %369 = arith.truncf %367 : vector<16x16xf32> to vector<16x16xbf16>
    %cst_201 = arith.constant dense<0.000000e+00> : vector<4x16xf32>
    %370 = tpu.matmul %368, %369, %cst_201 {dimension_numbers = #tpu.dot_dimension_numbers<[1], [0], [0], [1], [0, 0, 1, 1], [], []>} : vector<4x16xbf16>, vector<16x16xbf16>, vector<4x16xf32> -> vector<4x16xf32>
    %c0_202 = arith.constant 0 : index
    %c0_203 = arith.constant 0 : index
    %371 = vector.load %arg8[%c0_202, %c0_203] : memref<4x1xf32, #tpu.memory_space<vmem>>, vector<4x1xf32>
    %372 = vector.broadcast %371 : vector<4x1xf32> to vector<4x16xf32>
    %373 = arith.addf %370, %372 : vector<4x16xf32>
    %374 = vector.shape_cast %373 : vector<4x16xf32> to vector<4x1x16xf32>
    %375 = arith.truncf %374 : vector<4x1x16xf32> to vector<4x1x16xbf16>
    %c0_204 = arith.constant 0 : index
    %c0_205 = arith.constant 0 : index
    %c8_206 = arith.constant 8 : index
    %c0_207 = arith.constant 0 : index
    %376 = vector.load %arg9[%c0_204, %c0_205, %c8_206, %c0_207] : memref<1x4x16x16xbf16, #tpu.memory_space<vmem>>, vector<1x4x1x16xbf16>
    %377 = vector.shape_cast %376 : vector<1x4x1x16xbf16> to vector<4x1x16xbf16>
    %378 = vector.shape_cast %375 : vector<4x1x16xbf16> to vector<1x4x1x16xbf16>
    tpu.vector_store %arg9[%c0_204, %c0_205, %c8_206, %c0_207], %378 {strides = array<i32>} : memref<1x4x16x16xbf16, #tpu.memory_space<vmem>>, vector<1x4x1x16xbf16>,
    %c0_208 = arith.constant 0 : index
    %c9 = arith.constant 9 : index
    %c0_209 = arith.constant 0 : index
    %379 = vector.load %arg2[%c0_208, %c9, %c0_209] : memref<1x16x16xf32, #tpu.memory_space<vmem>>, vector<1x1x16xf32>
    %380 = vector.shape_cast %379 : vector<1x1x16xf32> to vector<1x16xf32>
    %c0_210 = arith.constant 0 : index
    %c0_211 = arith.constant 0 : index
    %381 = vector.load %arg3[%c0_210, %c0_211] : memref<16x1xf32, #tpu.memory_space<vmem>>, vector<16x1xf32>
    %382 = vector.broadcast %380 : vector<1x16xf32> to vector<16x16xf32>
    %383 = vector.broadcast %381 : vector<16x1xf32> to vector<16x16xf32>
    %384 = arith.subf %382, %383 : vector<16x16xf32>
    %385 = vector.broadcast %0 : vector<1x1xf32> to vector<16x16xf32>
    %386 = arith.mulf %384, %385 : vector<16x16xf32>
    %387 = arith.mulf %386, %386 : vector<16x16xf32>
    %cst_212 = arith.constant -5.000000e-01 : f32
    %388 = vector.broadcast %cst_212 : f32 to vector<16x16xf32>
    %389 = arith.mulf %388, %387 : vector<16x16xf32>
    %390 = math.exp %389 : vector<16x16xf32>
    %c0_213 = arith.constant 0 : index
    %c0_214 = arith.constant 0 : index
    %391 = vector.load %arg5[%c0_213, %c0_214] : memref<16x16xbf16, #tpu.memory_space<vmem>>, vector<16x16xbf16>
    %392 = arith.truncf %390 : vector<16x16xf32> to vector<16x16xbf16>
    %cst_215 = arith.constant dense<0.000000e+00> : vector<16x16xf32>
    %393 = tpu.matmul %391, %392, %cst_215 {dimension_numbers = #tpu.dot_dimension_numbers<[1], [0], [0], [1], [0, 0, 1, 1], [], []>} : vector<16x16xbf16>, vector<16x16xbf16>, vector<16x16xf32> -> vector<16x16xf32>
    %c0_216 = arith.constant 0 : index
    %c0_217 = arith.constant 0 : index
    %394 = vector.load %arg6[%c0_216, %c0_217] : memref<16x1xf32, #tpu.memory_space<vmem>>, vector<16x1xf32>
    %395 = vector.broadcast %394 : vector<16x1xf32> to vector<16x16xf32>
    %396 = arith.addf %393, %395 : vector<16x16xf32>
    %397 = arith.mulf %396, %396 : vector<16x16xf32>
    %398 = arith.mulf %396, %397 : vector<16x16xf32>
    %cst_218 = arith.constant 4.471500e-02 : f32
    %399 = vector.broadcast %cst_218 : f32 to vector<16x16xf32>
    %400 = arith.mulf %399, %398 : vector<16x16xf32>
    %401 = arith.addf %396, %400 : vector<16x16xf32>
    %cst_219 = arith.constant 0.797884583 : f32
    %402 = vector.broadcast %cst_219 : f32 to vector<16x16xf32>
    %403 = arith.mulf %402, %401 : vector<16x16xf32>
    %404 = math.tanh %403 : vector<16x16xf32>
    %cst_220 = arith.constant 1.000000e+00 : f32
    %405 = vector.broadcast %cst_220 : f32 to vector<16x16xf32>
    %406 = arith.addf %405, %404 : vector<16x16xf32>
    %cst_221 = arith.constant 5.000000e-01 : f32
    %407 = vector.broadcast %cst_221 : f32 to vector<16x16xf32>
    %408 = arith.mulf %407, %406 : vector<16x16xf32>
    %409 = arith.mulf %396, %408 : vector<16x16xf32>
    %c0_222 = arith.constant 0 : index
    %c0_223 = arith.constant 0 : index
    %410 = vector.load %arg7[%c0_222, %c0_223] : memref<4x16xbf16, #tpu.memory_space<vmem>>, vector<4x16xbf16>
    %411 = arith.truncf %409 : vector<16x16xf32> to vector<16x16xbf16>
    %cst_224 = arith.constant dense<0.000000e+00> : vector<4x16xf32>
    %412 = tpu.matmul %410, %411, %cst_224 {dimension_numbers = #tpu.dot_dimension_numbers<[1], [0], [0], [1], [0, 0, 1, 1], [], []>} : vector<4x16xbf16>, vector<16x16xbf16>, vector<4x16xf32> -> vector<4x16xf32>
    %c0_225 = arith.constant 0 : index
    %c0_226 = arith.constant 0 : index
    %413 = vector.load %arg8[%c0_225, %c0_226] : memref<4x1xf32, #tpu.memory_space<vmem>>, vector<4x1xf32>
    %414 = vector.broadcast %413 : vector<4x1xf32> to vector<4x16xf32>
    %415 = arith.addf %412, %414 : vector<4x16xf32>
    %416 = vector.shape_cast %415 : vector<4x16xf32> to vector<4x1x16xf32>
    %417 = arith.truncf %416 : vector<4x1x16xf32> to vector<4x1x16xbf16>
    %c0_227 = arith.constant 0 : index
    %c0_228 = arith.constant 0 : index
    %c9_229 = arith.constant 9 : index
    %c0_230 = arith.constant 0 : index
    %418 = vector.load %arg9[%c0_227, %c0_228, %c9_229, %c0_230] : memref<1x4x16x16xbf16, #tpu.memory_space<vmem>>, vector<1x4x1x16xbf16>
    %419 = vector.shape_cast %418 : vector<1x4x1x16xbf16> to vector<4x1x16xbf16>
    %420 = vector.shape_cast %417 : vector<4x1x16xbf16> to vector<1x4x1x16xbf16>
    tpu.vector_store %arg9[%c0_227, %c0_228, %c9_229, %c0_230], %420 {strides = array<i32>} : memref<1x4x16x16xbf16, #tpu.memory_space<vmem>>, vector<1x4x1x16xbf16>,
    %c0_231 = arith.constant 0 : index
    %c10 = arith.constant 10 : index
    %c0_232 = arith.constant 0 : index
    %421 = vector.load %arg2[%c0_231, %c10, %c0_232] : memref<1x16x16xf32, #tpu.memory_space<vmem>>, vector<1x1x16xf32>
    %422 = vector.shape_cast %421 : vector<1x1x16xf32> to vector<1x16xf32>
    %c0_233 = arith.constant 0 : index
    %c0_234 = arith.constant 0 : index
    %423 = vector.load %arg3[%c0_233, %c0_234] : memref<16x1xf32, #tpu.memory_space<vmem>>, vector<16x1xf32>
    %424 = vector.broadcast %422 : vector<1x16xf32> to vector<16x16xf32>
    %425 = vector.broadcast %423 : vector<16x1xf32> to vector<16x16xf32>
    %426 = arith.subf %424, %425 : vector<16x16xf32>
    %427 = vector.broadcast %0 : vector<1x1xf32> to vector<16x16xf32>
    %428 = arith.mulf %426, %427 : vector<16x16xf32>
    %429 = arith.mulf %428, %428 : vector<16x16xf32>
    %cst_235 = arith.constant -5.000000e-01 : f32
    %430 = vector.broadcast %cst_235 : f32 to vector<16x16xf32>
    %431 = arith.mulf %430, %429 : vector<16x16xf32>
    %432 = math.exp %431 : vector<16x16xf32>
    %c0_236 = arith.constant 0 : index
    %c0_237 = arith.constant 0 : index
    %433 = vector.load %arg5[%c0_236, %c0_237] : memref<16x16xbf16, #tpu.memory_space<vmem>>, vector<16x16xbf16>
    %434 = arith.truncf %432 : vector<16x16xf32> to vector<16x16xbf16>
    %cst_238 = arith.constant dense<0.000000e+00> : vector<16x16xf32>
    %435 = tpu.matmul %433, %434, %cst_238 {dimension_numbers = #tpu.dot_dimension_numbers<[1], [0], [0], [1], [0, 0, 1, 1], [], []>} : vector<16x16xbf16>, vector<16x16xbf16>, vector<16x16xf32> -> vector<16x16xf32>
    %c0_239 = arith.constant 0 : index
    %c0_240 = arith.constant 0 : index
    %436 = vector.load %arg6[%c0_239, %c0_240] : memref<16x1xf32, #tpu.memory_space<vmem>>, vector<16x1xf32>
    %437 = vector.broadcast %436 : vector<16x1xf32> to vector<16x16xf32>
    %438 = arith.addf %435, %437 : vector<16x16xf32>
    %439 = arith.mulf %438, %438 : vector<16x16xf32>
    %440 = arith.mulf %438, %439 : vector<16x16xf32>
    %cst_241 = arith.constant 4.471500e-02 : f32
    %441 = vector.broadcast %cst_241 : f32 to vector<16x16xf32>
    %442 = arith.mulf %441, %440 : vector<16x16xf32>
    %443 = arith.addf %438, %442 : vector<16x16xf32>
    %cst_242 = arith.constant 0.797884583 : f32
    %444 = vector.broadcast %cst_242 : f32 to vector<16x16xf32>
    %445 = arith.mulf %444, %443 : vector<16x16xf32>
    %446 = math.tanh %445 : vector<16x16xf32>
    %cst_243 = arith.constant 1.000000e+00 : f32
    %447 = vector.broadcast %cst_243 : f32 to vector<16x16xf32>
    %448 = arith.addf %447, %446 : vector<16x16xf32>
    %cst_244 = arith.constant 5.000000e-01 : f32
    %449 = vector.broadcast %cst_244 : f32 to vector<16x16xf32>
    %450 = arith.mulf %449, %448 : vector<16x16xf32>
    %451 = arith.mulf %438, %450 : vector<16x16xf32>
    %c0_245 = arith.constant 0 : index
    %c0_246 = arith.constant 0 : index
    %452 = vector.load %arg7[%c0_245, %c0_246] : memref<4x16xbf16, #tpu.memory_space<vmem>>, vector<4x16xbf16>
    %453 = arith.truncf %451 : vector<16x16xf32> to vector<16x16xbf16>
    %cst_247 = arith.constant dense<0.000000e+00> : vector<4x16xf32>
    %454 = tpu.matmul %452, %453, %cst_247 {dimension_numbers = #tpu.dot_dimension_numbers<[1], [0], [0], [1], [0, 0, 1, 1], [], []>} : vector<4x16xbf16>, vector<16x16xbf16>, vector<4x16xf32> -> vector<4x16xf32>
    %c0_248 = arith.constant 0 : index
    %c0_249 = arith.constant 0 : index
    %455 = vector.load %arg8[%c0_248, %c0_249] : memref<4x1xf32, #tpu.memory_space<vmem>>, vector<4x1xf32>
    %456 = vector.broadcast %455 : vector<4x1xf32> to vector<4x16xf32>
    %457 = arith.addf %454, %456 : vector<4x16xf32>
    %458 = vector.shape_cast %457 : vector<4x16xf32> to vector<4x1x16xf32>
    %459 = arith.truncf %458 : vector<4x1x16xf32> to vector<4x1x16xbf16>
    %c0_250 = arith.constant 0 : index
    %c0_251 = arith.constant 0 : index
    %c10_252 = arith.constant 10 : index
    %c0_253 = arith.constant 0 : index
    %460 = vector.load %arg9[%c0_250, %c0_251, %c10_252, %c0_253] : memref<1x4x16x16xbf16, #tpu.memory_space<vmem>>, vector<1x4x1x16xbf16>
    %461 = vector.shape_cast %460 : vector<1x4x1x16xbf16> to vector<4x1x16xbf16>
    %462 = vector.shape_cast %459 : vector<4x1x16xbf16> to vector<1x4x1x16xbf16>
    tpu.vector_store %arg9[%c0_250, %c0_251, %c10_252, %c0_253], %462 {strides = array<i32>} : memref<1x4x16x16xbf16, #tpu.memory_space<vmem>>, vector<1x4x1x16xbf16>,
    %c0_254 = arith.constant 0 : index
    %c11 = arith.constant 11 : index
    %c0_255 = arith.constant 0 : index
    %463 = vector.load %arg2[%c0_254, %c11, %c0_255] : memref<1x16x16xf32, #tpu.memory_space<vmem>>, vector<1x1x16xf32>
    %464 = vector.shape_cast %463 : vector<1x1x16xf32> to vector<1x16xf32>
    %c0_256 = arith.constant 0 : index
    %c0_257 = arith.constant 0 : index
    %465 = vector.load %arg3[%c0_256, %c0_257] : memref<16x1xf32, #tpu.memory_space<vmem>>, vector<16x1xf32>
    %466 = vector.broadcast %464 : vector<1x16xf32> to vector<16x16xf32>
    %467 = vector.broadcast %465 : vector<16x1xf32> to vector<16x16xf32>
    %468 = arith.subf %466, %467 : vector<16x16xf32>
    %469 = vector.broadcast %0 : vector<1x1xf32> to vector<16x16xf32>
    %470 = arith.mulf %468, %469 : vector<16x16xf32>
    %471 = arith.mulf %470, %470 : vector<16x16xf32>
    %cst_258 = arith.constant -5.000000e-01 : f32
    %472 = vector.broadcast %cst_258 : f32 to vector<16x16xf32>
    %473 = arith.mulf %472, %471 : vector<16x16xf32>
    %474 = math.exp %473 : vector<16x16xf32>
    %c0_259 = arith.constant 0 : index
    %c0_260 = arith.constant 0 : index
    %475 = vector.load %arg5[%c0_259, %c0_260] : memref<16x16xbf16, #tpu.memory_space<vmem>>, vector<16x16xbf16>
    %476 = arith.truncf %474 : vector<16x16xf32> to vector<16x16xbf16>
    %cst_261 = arith.constant dense<0.000000e+00> : vector<16x16xf32>
    %477 = tpu.matmul %475, %476, %cst_261 {dimension_numbers = #tpu.dot_dimension_numbers<[1], [0], [0], [1], [0, 0, 1, 1], [], []>} : vector<16x16xbf16>, vector<16x16xbf16>, vector<16x16xf32> -> vector<16x16xf32>
    %c0_262 = arith.constant 0 : index
    %c0_263 = arith.constant 0 : index
    %478 = vector.load %arg6[%c0_262, %c0_263] : memref<16x1xf32, #tpu.memory_space<vmem>>, vector<16x1xf32>
    %479 = vector.broadcast %478 : vector<16x1xf32> to vector<16x16xf32>
    %480 = arith.addf %477, %479 : vector<16x16xf32>
    %481 = arith.mulf %480, %480 : vector<16x16xf32>
    %482 = arith.mulf %480, %481 : vector<16x16xf32>
    %cst_264 = arith.constant 4.471500e-02 : f32
    %483 = vector.broadcast %cst_264 : f32 to vector<16x16xf32>
    %484 = arith.mulf %483, %482 : vector<16x16xf32>
    %485 = arith.addf %480, %484 : vector<16x16xf32>
    %cst_265 = arith.constant 0.797884583 : f32
    %486 = vector.broadcast %cst_265 : f32 to vector<16x16xf32>
    %487 = arith.mulf %486, %485 : vector<16x16xf32>
    %488 = math.tanh %487 : vector<16x16xf32>
    %cst_266 = arith.constant 1.000000e+00 : f32
    %489 = vector.broadcast %cst_266 : f32 to vector<16x16xf32>
    %490 = arith.addf %489, %488 : vector<16x16xf32>
    %cst_267 = arith.constant 5.000000e-01 : f32
    %491 = vector.broadcast %cst_267 : f32 to vector<16x16xf32>
    %492 = arith.mulf %491, %490 : vector<16x16xf32>
    %493 = arith.mulf %480, %492 : vector<16x16xf32>
    %c0_268 = arith.constant 0 : index
    %c0_269 = arith.constant 0 : index
    %494 = vector.load %arg7[%c0_268, %c0_269] : memref<4x16xbf16, #tpu.memory_space<vmem>>, vector<4x16xbf16>
    %495 = arith.truncf %493 : vector<16x16xf32> to vector<16x16xbf16>
    %cst_270 = arith.constant dense<0.000000e+00> : vector<4x16xf32>
    %496 = tpu.matmul %494, %495, %cst_270 {dimension_numbers = #tpu.dot_dimension_numbers<[1], [0], [0], [1], [0, 0, 1, 1], [], []>} : vector<4x16xbf16>, vector<16x16xbf16>, vector<4x16xf32> -> vector<4x16xf32>
    %c0_271 = arith.constant 0 : index
    %c0_272 = arith.constant 0 : index
    %497 = vector.load %arg8[%c0_271, %c0_272] : memref<4x1xf32, #tpu.memory_space<vmem>>, vector<4x1xf32>
    %498 = vector.broadcast %497 : vector<4x1xf32> to vector<4x16xf32>
    %499 = arith.addf %496, %498 : vector<4x16xf32>
    %500 = vector.shape_cast %499 : vector<4x16xf32> to vector<4x1x16xf32>
    %501 = arith.truncf %500 : vector<4x1x16xf32> to vector<4x1x16xbf16>
    %c0_273 = arith.constant 0 : index
    %c0_274 = arith.constant 0 : index
    %c11_275 = arith.constant 11 : index
    %c0_276 = arith.constant 0 : index
    %502 = vector.load %arg9[%c0_273, %c0_274, %c11_275, %c0_276] : memref<1x4x16x16xbf16, #tpu.memory_space<vmem>>, vector<1x4x1x16xbf16>
    %503 = vector.shape_cast %502 : vector<1x4x1x16xbf16> to vector<4x1x16xbf16>
    %504 = vector.shape_cast %501 : vector<4x1x16xbf16> to vector<1x4x1x16xbf16>
    tpu.vector_store %arg9[%c0_273, %c0_274, %c11_275, %c0_276], %504 {strides = array<i32>} : memref<1x4x16x16xbf16, #tpu.memory_space<vmem>>, vector<1x4x1x16xbf16>,
    %c0_277 = arith.constant 0 : index
    %c12 = arith.constant 12 : index
    %c0_278 = arith.constant 0 : index
    %505 = vector.load %arg2[%c0_277, %c12, %c0_278] : memref<1x16x16xf32, #tpu.memory_space<vmem>>, vector<1x1x16xf32>
    %506 = vector.shape_cast %505 : vector<1x1x16xf32> to vector<1x16xf32>
    %c0_279 = arith.constant 0 : index
    %c0_280 = arith.constant 0 : index
    %507 = vector.load %arg3[%c0_279, %c0_280] : memref<16x1xf32, #tpu.memory_space<vmem>>, vector<16x1xf32>
    %508 = vector.broadcast %506 : vector<1x16xf32> to vector<16x16xf32>
    %509 = vector.broadcast %507 : vector<16x1xf32> to vector<16x16xf32>
    %510 = arith.subf %508, %509 : vector<16x16xf32>
    %511 = vector.broadcast %0 : vector<1x1xf32> to vector<16x16xf32>
    %512 = arith.mulf %510, %511 : vector<16x16xf32>
    %513 = arith.mulf %512, %512 : vector<16x16xf32>
    %cst_281 = arith.constant -5.000000e-01 : f32
    %514 = vector.broadcast %cst_281 : f32 to vector<16x16xf32>
    %515 = arith.mulf %514, %513 : vector<16x16xf32>
    %516 = math.exp %515 : vector<16x16xf32>
    %c0_282 = arith.constant 0 : index
    %c0_283 = arith.constant 0 : index
    %517 = vector.load %arg5[%c0_282, %c0_283] : memref<16x16xbf16, #tpu.memory_space<vmem>>, vector<16x16xbf16>
    %518 = arith.truncf %516 : vector<16x16xf32> to vector<16x16xbf16>
    %cst_284 = arith.constant dense<0.000000e+00> : vector<16x16xf32>
    %519 = tpu.matmul %517, %518, %cst_284 {dimension_numbers = #tpu.dot_dimension_numbers<[1], [0], [0], [1], [0, 0, 1, 1], [], []>} : vector<16x16xbf16>, vector<16x16xbf16>, vector<16x16xf32> -> vector<16x16xf32>
    %c0_285 = arith.constant 0 : index
    %c0_286 = arith.constant 0 : index
    %520 = vector.load %arg6[%c0_285, %c0_286] : memref<16x1xf32, #tpu.memory_space<vmem>>, vector<16x1xf32>
    %521 = vector.broadcast %520 : vector<16x1xf32> to vector<16x16xf32>
    %522 = arith.addf %519, %521 : vector<16x16xf32>
    %523 = arith.mulf %522, %522 : vector<16x16xf32>
    %524 = arith.mulf %522, %523 : vector<16x16xf32>
    %cst_287 = arith.constant 4.471500e-02 : f32
    %525 = vector.broadcast %cst_287 : f32 to vector<16x16xf32>
    %526 = arith.mulf %525, %524 : vector<16x16xf32>
    %527 = arith.addf %522, %526 : vector<16x16xf32>
    %cst_288 = arith.constant 0.797884583 : f32
    %528 = vector.broadcast %cst_288 : f32 to vector<16x16xf32>
    %529 = arith.mulf %528, %527 : vector<16x16xf32>
    %530 = math.tanh %529 : vector<16x16xf32>
    %cst_289 = arith.constant 1.000000e+00 : f32
    %531 = vector.broadcast %cst_289 : f32 to vector<16x16xf32>
    %532 = arith.addf %531, %530 : vector<16x16xf32>
    %cst_290 = arith.constant 5.000000e-01 : f32
    %533 = vector.broadcast %cst_290 : f32 to vector<16x16xf32>
    %534 = arith.mulf %533, %532 : vector<16x16xf32>
    %535 = arith.mulf %522, %534 : vector<16x16xf32>
    %c0_291 = arith.constant 0 : index
    %c0_292 = arith.constant 0 : index
    %536 = vector.load %arg7[%c0_291, %c0_292] : memref<4x16xbf16, #tpu.memory_space<vmem>>, vector<4x16xbf16>
    %537 = arith.truncf %535 : vector<16x16xf32> to vector<16x16xbf16>
    %cst_293 = arith.constant dense<0.000000e+00> : vector<4x16xf32>
    %538 = tpu.matmul %536, %537, %cst_293 {dimension_numbers = #tpu.dot_dimension_numbers<[1], [0], [0], [1], [0, 0, 1, 1], [], []>} : vector<4x16xbf16>, vector<16x16xbf16>, vector<4x16xf32> -> vector<4x16xf32>
    %c0_294 = arith.constant 0 : index
    %c0_295 = arith.constant 0 : index
    %539 = vector.load %arg8[%c0_294, %c0_295] : memref<4x1xf32, #tpu.memory_space<vmem>>, vector<4x1xf32>
    %540 = vector.broadcast %539 : vector<4x1xf32> to vector<4x16xf32>
    %541 = arith.addf %538, %540 : vector<4x16xf32>
    %542 = vector.shape_cast %541 : vector<4x16xf32> to vector<4x1x16xf32>
    %543 = arith.truncf %542 : vector<4x1x16xf32> to vector<4x1x16xbf16>
    %c0_296 = arith.constant 0 : index
    %c0_297 = arith.constant 0 : index
    %c12_298 = arith.constant 12 : index
    %c0_299 = arith.constant 0 : index
    %544 = vector.load %arg9[%c0_296, %c0_297, %c12_298, %c0_299] : memref<1x4x16x16xbf16, #tpu.memory_space<vmem>>, vector<1x4x1x16xbf16>
    %545 = vector.shape_cast %544 : vector<1x4x1x16xbf16> to vector<4x1x16xbf16>
    %546 = vector.shape_cast %543 : vector<4x1x16xbf16> to vector<1x4x1x16xbf16>
    tpu.vector_store %arg9[%c0_296, %c0_297, %c12_298, %c0_299], %546 {strides = array<i32>} : memref<1x4x16x16xbf16, #tpu.memory_space<vmem>>, vector<1x4x1x16xbf16>,
    %c0_300 = arith.constant 0 : index
    %c13 = arith.constant 13 : index
    %c0_301 = arith.constant 0 : index
    %547 = vector.load %arg2[%c0_300, %c13, %c0_301] : memref<1x16x16xf32, #tpu.memory_space<vmem>>, vector<1x1x16xf32>
    %548 = vector.shape_cast %547 : vector<1x1x16xf32> to vector<1x16xf32>
    %c0_302 = arith.constant 0 : index
    %c0_303 = arith.constant 0 : index
    %549 = vector.load %arg3[%c0_302, %c0_303] : memref<16x1xf32, #tpu.memory_space<vmem>>, vector<16x1xf32>
    %550 = vector.broadcast %548 : vector<1x16xf32> to vector<16x16xf32>
    %551 = vector.broadcast %549 : vector<16x1xf32> to vector<16x16xf32>
    %552 = arith.subf %550, %551 : vector<16x16xf32>
    %553 = vector.broadcast %0 : vector<1x1xf32> to vector<16x16xf32>
    %554 = arith.mulf %552, %553 : vector<16x16xf32>
    %555 = arith.mulf %554, %554 : vector<16x16xf32>
    %cst_304 = arith.constant -5.000000e-01 : f32
    %556 = vector.broadcast %cst_304 : f32 to vector<16x16xf32>
    %557 = arith.mulf %556, %555 : vector<16x16xf32>
    %558 = math.exp %557 : vector<16x16xf32>
    %c0_305 = arith.constant 0 : index
    %c0_306 = arith.constant 0 : index
    %559 = vector.load %arg5[%c0_305, %c0_306] : memref<16x16xbf16, #tpu.memory_space<vmem>>, vector<16x16xbf16>
    %560 = arith.truncf %558 : vector<16x16xf32> to vector<16x16xbf16>
    %cst_307 = arith.constant dense<0.000000e+00> : vector<16x16xf32>
    %561 = tpu.matmul %559, %560, %cst_307 {dimension_numbers = #tpu.dot_dimension_numbers<[1], [0], [0], [1], [0, 0, 1, 1], [], []>} : vector<16x16xbf16>, vector<16x16xbf16>, vector<16x16xf32> -> vector<16x16xf32>
    %c0_308 = arith.constant 0 : index
    %c0_309 = arith.constant 0 : index
    %562 = vector.load %arg6[%c0_308, %c0_309] : memref<16x1xf32, #tpu.memory_space<vmem>>, vector<16x1xf32>
    %563 = vector.broadcast %562 : vector<16x1xf32> to vector<16x16xf32>
    %564 = arith.addf %561, %563 : vector<16x16xf32>
    %565 = arith.mulf %564, %564 : vector<16x16xf32>
    %566 = arith.mulf %564, %565 : vector<16x16xf32>
    %cst_310 = arith.constant 4.471500e-02 : f32
    %567 = vector.broadcast %cst_310 : f32 to vector<16x16xf32>
    %568 = arith.mulf %567, %566 : vector<16x16xf32>
    %569 = arith.addf %564, %568 : vector<16x16xf32>
    %cst_311 = arith.constant 0.797884583 : f32
    %570 = vector.broadcast %cst_311 : f32 to vector<16x16xf32>
    %571 = arith.mulf %570, %569 : vector<16x16xf32>
    %572 = math.tanh %571 : vector<16x16xf32>
    %cst_312 = arith.constant 1.000000e+00 : f32
    %573 = vector.broadcast %cst_312 : f32 to vector<16x16xf32>
    %574 = arith.addf %573, %572 : vector<16x16xf32>
    %cst_313 = arith.constant 5.000000e-01 : f32
    %575 = vector.broadcast %cst_313 : f32 to vector<16x16xf32>
    %576 = arith.mulf %575, %574 : vector<16x16xf32>
    %577 = arith.mulf %564, %576 : vector<16x16xf32>
    %c0_314 = arith.constant 0 : index
    %c0_315 = arith.constant 0 : index
    %578 = vector.load %arg7[%c0_314, %c0_315] : memref<4x16xbf16, #tpu.memory_space<vmem>>, vector<4x16xbf16>
    %579 = arith.truncf %577 : vector<16x16xf32> to vector<16x16xbf16>
    %cst_316 = arith.constant dense<0.000000e+00> : vector<4x16xf32>
    %580 = tpu.matmul %578, %579, %cst_316 {dimension_numbers = #tpu.dot_dimension_numbers<[1], [0], [0], [1], [0, 0, 1, 1], [], []>} : vector<4x16xbf16>, vector<16x16xbf16>, vector<4x16xf32> -> vector<4x16xf32>
    %c0_317 = arith.constant 0 : index
    %c0_318 = arith.constant 0 : index
    %581 = vector.load %arg8[%c0_317, %c0_318] : memref<4x1xf32, #tpu.memory_space<vmem>>, vector<4x1xf32>
    %582 = vector.broadcast %581 : vector<4x1xf32> to vector<4x16xf32>
    %583 = arith.addf %580, %582 : vector<4x16xf32>
    %584 = vector.shape_cast %583 : vector<4x16xf32> to vector<4x1x16xf32>
    %585 = arith.truncf %584 : vector<4x1x16xf32> to vector<4x1x16xbf16>
    %c0_319 = arith.constant 0 : index
    %c0_320 = arith.constant 0 : index
    %c13_321 = arith.constant 13 : index
    %c0_322 = arith.constant 0 : index
    %586 = vector.load %arg9[%c0_319, %c0_320, %c13_321, %c0_322] : memref<1x4x16x16xbf16, #tpu.memory_space<vmem>>, vector<1x4x1x16xbf16>
    %587 = vector.shape_cast %586 : vector<1x4x1x16xbf16> to vector<4x1x16xbf16>
    %588 = vector.shape_cast %585 : vector<4x1x16xbf16> to vector<1x4x1x16xbf16>
    tpu.vector_store %arg9[%c0_319, %c0_320, %c13_321, %c0_322], %588 {strides = array<i32>} : memref<1x4x16x16xbf16, #tpu.memory_space<vmem>>, vector<1x4x1x16xbf16>,
    %c0_323 = arith.constant 0 : index
    %c14 = arith.constant 14 : index
    %c0_324 = arith.constant 0 : index
    %589 = vector.load %arg2[%c0_323, %c14, %c0_324] : memref<1x16x16xf32, #tpu.memory_space<vmem>>, vector<1x1x16xf32>
    %590 = vector.shape_cast %589 : vector<1x1x16xf32> to vector<1x16xf32>
    %c0_325 = arith.constant 0 : index
    %c0_326 = arith.constant 0 : index
    %591 = vector.load %arg3[%c0_325, %c0_326] : memref<16x1xf32, #tpu.memory_space<vmem>>, vector<16x1xf32>
    %592 = vector.broadcast %590 : vector<1x16xf32> to vector<16x16xf32>
    %593 = vector.broadcast %591 : vector<16x1xf32> to vector<16x16xf32>
    %594 = arith.subf %592, %593 : vector<16x16xf32>
    %595 = vector.broadcast %0 : vector<1x1xf32> to vector<16x16xf32>
    %596 = arith.mulf %594, %595 : vector<16x16xf32>
    %597 = arith.mulf %596, %596 : vector<16x16xf32>
    %cst_327 = arith.constant -5.000000e-01 : f32
    %598 = vector.broadcast %cst_327 : f32 to vector<16x16xf32>
    %599 = arith.mulf %598, %597 : vector<16x16xf32>
    %600 = math.exp %599 : vector<16x16xf32>
    %c0_328 = arith.constant 0 : index
    %c0_329 = arith.constant 0 : index
    %601 = vector.load %arg5[%c0_328, %c0_329] : memref<16x16xbf16, #tpu.memory_space<vmem>>, vector<16x16xbf16>
    %602 = arith.truncf %600 : vector<16x16xf32> to vector<16x16xbf16>
    %cst_330 = arith.constant dense<0.000000e+00> : vector<16x16xf32>
    %603 = tpu.matmul %601, %602, %cst_330 {dimension_numbers = #tpu.dot_dimension_numbers<[1], [0], [0], [1], [0, 0, 1, 1], [], []>} : vector<16x16xbf16>, vector<16x16xbf16>, vector<16x16xf32> -> vector<16x16xf32>
    %c0_331 = arith.constant 0 : index
    %c0_332 = arith.constant 0 : index
    %604 = vector.load %arg6[%c0_331, %c0_332] : memref<16x1xf32, #tpu.memory_space<vmem>>, vector<16x1xf32>
    %605 = vector.broadcast %604 : vector<16x1xf32> to vector<16x16xf32>
    %606 = arith.addf %603, %605 : vector<16x16xf32>
    %607 = arith.mulf %606, %606 : vector<16x16xf32>
    %608 = arith.mulf %606, %607 : vector<16x16xf32>
    %cst_333 = arith.constant 4.471500e-02 : f32
    %609 = vector.broadcast %cst_333 : f32 to vector<16x16xf32>
    %610 = arith.mulf %609, %608 : vector<16x16xf32>
    %611 = arith.addf %606, %610 : vector<16x16xf32>
    %cst_334 = arith.constant 0.797884583 : f32
    %612 = vector.broadcast %cst_334 : f32 to vector<16x16xf32>
    %613 = arith.mulf %612, %611 : vector<16x16xf32>
    %614 = math.tanh %613 : vector<16x16xf32>
    %cst_335 = arith.constant 1.000000e+00 : f32
    %615 = vector.broadcast %cst_335 : f32 to vector<16x16xf32>
    %616 = arith.addf %615, %614 : vector<16x16xf32>
    %cst_336 = arith.constant 5.000000e-01 : f32
    %617 = vector.broadcast %cst_336 : f32 to vector<16x16xf32>
    %618 = arith.mulf %617, %616 : vector<16x16xf32>
    %619 = arith.mulf %606, %618 : vector<16x16xf32>
    %c0_337 = arith.constant 0 : index
    %c0_338 = arith.constant 0 : index
    %620 = vector.load %arg7[%c0_337, %c0_338] : memref<4x16xbf16, #tpu.memory_space<vmem>>, vector<4x16xbf16>
    %621 = arith.truncf %619 : vector<16x16xf32> to vector<16x16xbf16>
    %cst_339 = arith.constant dense<0.000000e+00> : vector<4x16xf32>
    %622 = tpu.matmul %620, %621, %cst_339 {dimension_numbers = #tpu.dot_dimension_numbers<[1], [0], [0], [1], [0, 0, 1, 1], [], []>} : vector<4x16xbf16>, vector<16x16xbf16>, vector<4x16xf32> -> vector<4x16xf32>
    %c0_340 = arith.constant 0 : index
    %c0_341 = arith.constant 0 : index
    %623 = vector.load %arg8[%c0_340, %c0_341] : memref<4x1xf32, #tpu.memory_space<vmem>>, vector<4x1xf32>
    %624 = vector.broadcast %623 : vector<4x1xf32> to vector<4x16xf32>
    %625 = arith.addf %622, %624 : vector<4x16xf32>
    %626 = vector.shape_cast %625 : vector<4x16xf32> to vector<4x1x16xf32>
    %627 = arith.truncf %626 : vector<4x1x16xf32> to vector<4x1x16xbf16>
    %c0_342 = arith.constant 0 : index
    %c0_343 = arith.constant 0 : index
    %c14_344 = arith.constant 14 : index
    %c0_345 = arith.constant 0 : index
    %628 = vector.load %arg9[%c0_342, %c0_343, %c14_344, %c0_345] : memref<1x4x16x16xbf16, #tpu.memory_space<vmem>>, vector<1x4x1x16xbf16>
    %629 = vector.shape_cast %628 : vector<1x4x1x16xbf16> to vector<4x1x16xbf16>
    %630 = vector.shape_cast %627 : vector<4x1x16xbf16> to vector<1x4x1x16xbf16>
    tpu.vector_store %arg9[%c0_342, %c0_343, %c14_344, %c0_345], %630 {strides = array<i32>} : memref<1x4x16x16xbf16, #tpu.memory_space<vmem>>, vector<1x4x1x16xbf16>,
    %c0_346 = arith.constant 0 : index
    %c15 = arith.constant 15 : index
    %c0_347 = arith.constant 0 : index
    %631 = vector.load %arg2[%c0_346, %c15, %c0_347] : memref<1x16x16xf32, #tpu.memory_space<vmem>>, vector<1x1x16xf32>
    %632 = vector.shape_cast %631 : vector<1x1x16xf32> to vector<1x16xf32>
    %c0_348 = arith.constant 0 : index
    %c0_349 = arith.constant 0 : index
    %633 = vector.load %arg3[%c0_348, %c0_349] : memref<16x1xf32, #tpu.memory_space<vmem>>, vector<16x1xf32>
    %634 = vector.broadcast %632 : vector<1x16xf32> to vector<16x16xf32>
    %635 = vector.broadcast %633 : vector<16x1xf32> to vector<16x16xf32>
    %636 = arith.subf %634, %635 : vector<16x16xf32>
    %637 = vector.broadcast %0 : vector<1x1xf32> to vector<16x16xf32>
    %638 = arith.mulf %636, %637 : vector<16x16xf32>
    %639 = arith.mulf %638, %638 : vector<16x16xf32>
    %cst_350 = arith.constant -5.000000e-01 : f32
    %640 = vector.broadcast %cst_350 : f32 to vector<16x16xf32>
    %641 = arith.mulf %640, %639 : vector<16x16xf32>
    %642 = math.exp %641 : vector<16x16xf32>
    %c0_351 = arith.constant 0 : index
    %c0_352 = arith.constant 0 : index
    %643 = vector.load %arg5[%c0_351, %c0_352] : memref<16x16xbf16, #tpu.memory_space<vmem>>, vector<16x16xbf16>
    %644 = arith.truncf %642 : vector<16x16xf32> to vector<16x16xbf16>
    %cst_353 = arith.constant dense<0.000000e+00> : vector<16x16xf32>
    %645 = tpu.matmul %643, %644, %cst_353 {dimension_numbers = #tpu.dot_dimension_numbers<[1], [0], [0], [1], [0, 0, 1, 1], [], []>} : vector<16x16xbf16>, vector<16x16xbf16>, vector<16x16xf32> -> vector<16x16xf32>
    %c0_354 = arith.constant 0 : index
    %c0_355 = arith.constant 0 : index
    %646 = vector.load %arg6[%c0_354, %c0_355] : memref<16x1xf32, #tpu.memory_space<vmem>>, vector<16x1xf32>
    %647 = vector.broadcast %646 : vector<16x1xf32> to vector<16x16xf32>
    %648 = arith.addf %645, %647 : vector<16x16xf32>
    %649 = arith.mulf %648, %648 : vector<16x16xf32>
    %650 = arith.mulf %648, %649 : vector<16x16xf32>
    %cst_356 = arith.constant 4.471500e-02 : f32
    %651 = vector.broadcast %cst_356 : f32 to vector<16x16xf32>
    %652 = arith.mulf %651, %650 : vector<16x16xf32>
    %653 = arith.addf %648, %652 : vector<16x16xf32>
    %cst_357 = arith.constant 0.797884583 : f32
    %654 = vector.broadcast %cst_357 : f32 to vector<16x16xf32>
    %655 = arith.mulf %654, %653 : vector<16x16xf32>
    %656 = math.tanh %655 : vector<16x16xf32>
    %cst_358 = arith.constant 1.000000e+00 : f32
    %657 = vector.broadcast %cst_358 : f32 to vector<16x16xf32>
    %658 = arith.addf %657, %656 : vector<16x16xf32>
    %cst_359 = arith.constant 5.000000e-01 : f32
    %659 = vector.broadcast %cst_359 : f32 to vector<16x16xf32>
    %660 = arith.mulf %659, %658 : vector<16x16xf32>
    %661 = arith.mulf %648, %660 : vector<16x16xf32>
    %c0_360 = arith.constant 0 : index
    %c0_361 = arith.constant 0 : index
    %662 = vector.load %arg7[%c0_360, %c0_361] : memref<4x16xbf16, #tpu.memory_space<vmem>>, vector<4x16xbf16>
    %663 = arith.truncf %661 : vector<16x16xf32> to vector<16x16xbf16>
    %cst_362 = arith.constant dense<0.000000e+00> : vector<4x16xf32>
    %664 = tpu.matmul %662, %663, %cst_362 {dimension_numbers = #tpu.dot_dimension_numbers<[1], [0], [0], [1], [0, 0, 1, 1], [], []>} : vector<4x16xbf16>, vector<16x16xbf16>, vector<4x16xf32> -> vector<4x16xf32>
    %c0_363 = arith.constant 0 : index
    %c0_364 = arith.constant 0 : index
    %665 = vector.load %arg8[%c0_363, %c0_364] : memref<4x1xf32, #tpu.memory_space<vmem>>, vector<4x1xf32>
    %666 = vector.broadcast %665 : vector<4x1xf32> to vector<4x16xf32>
    %667 = arith.addf %664, %666 : vector<4x16xf32>
    %668 = vector.shape_cast %667 : vector<4x16xf32> to vector<4x1x16xf32>
    %669 = arith.truncf %668 : vector<4x1x16xf32> to vector<4x1x16xbf16>
    %c0_365 = arith.constant 0 : index
    %c0_366 = arith.constant 0 : index
    %c15_367 = arith.constant 15 : index
    %c0_368 = arith.constant 0 : index
    %670 = vector.load %arg9[%c0_365, %c0_366, %c15_367, %c0_368] : memref<1x4x16x16xbf16, #tpu.memory_space<vmem>>, vector<1x4x1x16xbf16>
    %671 = vector.shape_cast %670 : vector<1x4x1x16xbf16> to vector<4x1x16xbf16>
    %672 = vector.shape_cast %669 : vector<4x1x16xbf16> to vector<1x4x1x16xbf16>
    tpu.vector_store %arg9[%c0_365, %c0_366, %c15_367, %c0_368], %672 {strides = array<i32>} : memref<1x4x16x16xbf16, #tpu.memory_space<vmem>>, vector<1x4x1x16xbf16>,
    return
  }
  func.func @transform_0(%arg0: i32, %arg1: i32) -> (i32, i32, i32) {
    %c0_i32 = arith.constant 0 : i32
    %c0_i32_0 = arith.constant 0 : i32
    return %arg0, %arg1, %c0_i32 : i32, i32, i32
  }
  func.func @transform_1(%arg0: i32, %arg1: i32) -> (i32, i32) {
    %c0_i32 = arith.constant 0 : i32
    %c0_i32_0 = arith.constant 0 : i32
    %c0_i32_1 = arith.constant 0 : i32
    return %c0_i32, %c0_i32_0 : i32, i32
  }
  func.func @transform_2(%arg0: i32, %arg1: i32) -> (i32, i32) {
    %c0_i32 = arith.constant 0 : i32
    %c0_i32_0 = arith.constant 0 : i32
    %c0_i32_1 = arith.constant 0 : i32
    return %c0_i32, %c0_i32_0 : i32, i32
  }
  func.func @transform_3(%arg0: i32, %arg1: i32) -> (i32, i32) {
    %c0_i32 = arith.constant 0 : i32
    %c0_i32_0 = arith.constant 0 : i32
    %c0_i32_1 = arith.constant 0 : i32
    return %c0_i32, %c0_i32_0 : i32, i32
  }
  func.func @transform_4(%arg0: i32, %arg1: i32) -> (i32, i32) {
    %c0_i32 = arith.constant 0 : i32
    %c0_i32_0 = arith.constant 0 : i32
    %c0_i32_1 = arith.constant 0 : i32
    return %c0_i32, %c0_i32_0 : i32, i32
  }
  func.func @transform_5(%arg0: i32, %arg1: i32) -> (i32, i32) {
    %c0_i32 = arith.constant 0 : i32
    %c0_i32_0 = arith.constant 0 : i32
    %c0_i32_1 = arith.constant 0 : i32
    return %c0_i32, %c0_i32_0 : i32, i32
  }
  func.func @transform_6(%arg0: i32, %arg1: i32) -> (i32, i32) {
    %c0_i32 = arith.constant 0 : i32
    %c0_i32_0 = arith.constant 0 : i32
    %c0_i32_1 = arith.constant 0 : i32
    return %c0_i32, %c0_i32_0 : i32, i32
  }
  func.func @transform_7(%arg0: i32, %arg1: i32) -> (i32, i32, i32, i32) {
    %c0_i32 = arith.constant 0 : i32
    %c0_i32_0 = arith.constant 0 : i32
    %c0_i32_1 = arith.constant 0 : i32
    return %arg0, %c0_i32, %arg1, %c0_i32_0 : i32, i32, i32, i32
  }
}

module attributes {stable_mosaic.version = 11 : i64} {
  func.func @_oproj_ffn_kernel(%arg0: i32, %arg1: memref<32x64xbf16, #tpu.memory_space<vmem>>, %arg2: memref<32x64xf32, #tpu.memory_space<vmem>>, %arg3: memref<64x64xbf16, #tpu.memory_space<vmem>>, %arg4: memref<1x64xf32, #tpu.memory_space<vmem>>, %arg5: memref<1x64xf32, #tpu.memory_space<vmem>>, %arg6: memref<1x64xf32, #tpu.memory_space<vmem>>, %arg7: memref<64x128xbf16, #tpu.memory_space<vmem>>, %arg8: memref<1x128xf32, #tpu.memory_space<vmem>>, %arg9: memref<128x64xbf16, #tpu.memory_space<vmem>>, %arg10: memref<1x64xf32, #tpu.memory_space<vmem>>, %arg11: memref<32x64xf32, #tpu.memory_space<vmem>>) attributes {dimension_semantics = [#tpu.dimension_semantics<parallel>], iteration_bounds = array<i64: 1>, scalar_prefetch = 0 : i64, scratch_operands = 0 : i64, tpu.core_type = #tpu.core_type<tc>, window_params = [{transform_indices = @transform_0, window_bounds = array<i64: 32, 64>}, {transform_indices = @transform_1, window_bounds = array<i64: 32, 64>}, {pipeline_mode = #tpu.pipeline_mode<synchronous>, transform_indices = @transform_2, window_bounds = array<i64: 64, 64>}, {pipeline_mode = #tpu.pipeline_mode<synchronous>, transform_indices = @transform_3, window_bounds = array<i64: 1, 64>}, {pipeline_mode = #tpu.pipeline_mode<synchronous>, transform_indices = @transform_4, window_bounds = array<i64: 1, 64>}, {pipeline_mode = #tpu.pipeline_mode<synchronous>, transform_indices = @transform_5, window_bounds = array<i64: 1, 64>}, {pipeline_mode = #tpu.pipeline_mode<synchronous>, transform_indices = @transform_6, window_bounds = array<i64: 64, 128>}, {pipeline_mode = #tpu.pipeline_mode<synchronous>, transform_indices = @transform_7, window_bounds = array<i64: 1, 128>}, {pipeline_mode = #tpu.pipeline_mode<synchronous>, transform_indices = @transform_8, window_bounds = array<i64: 128, 64>}, {pipeline_mode = #tpu.pipeline_mode<synchronous>, transform_indices = @transform_9, window_bounds = array<i64: 1, 64>}, {transform_indices = @transform_10, window_bounds = array<i64: 32, 64>}]} {
    %c0 = arith.constant 0 : index
    %c0_0 = arith.constant 0 : index
    %0 = vector.load %arg2[%c0, %c0_0] : memref<32x64xf32, #tpu.memory_space<vmem>>, vector<32x64xf32>
    %c0_1 = arith.constant 0 : index
    %c0_2 = arith.constant 0 : index
    %1 = vector.load %arg4[%c0_1, %c0_2] : memref<1x64xf32, #tpu.memory_space<vmem>>, vector<1x64xf32>
    %2 = vector.broadcast %1 : vector<1x64xf32> to vector<32x64xf32>
    %3 = arith.addf %0, %2 : vector<32x64xf32>
    %c0_3 = arith.constant 0 : index
    %c0_4 = arith.constant 0 : index
    %4 = vector.load %arg1[%c0_3, %c0_4] : memref<32x64xbf16, #tpu.memory_space<vmem>>, vector<32x64xbf16>
    %c0_5 = arith.constant 0 : index
    %c0_6 = arith.constant 0 : index
    %5 = vector.load %arg3[%c0_5, %c0_6] : memref<64x64xbf16, #tpu.memory_space<vmem>>, vector<64x64xbf16>
    %cst = arith.constant dense<0.000000e+00> : vector<32x64xf32>
    %6 = tpu.matmul %4, %5, %cst {dimension_numbers = #tpu.dot_dimension_numbers<[1], [0], [0], [1], [0, 0, 1, 1], [], []>} : vector<32x64xbf16>, vector<64x64xbf16>, vector<32x64xf32> -> vector<32x64xf32>
    %7 = arith.addf %3, %6 : vector<32x64xf32>
    %c0_7 = arith.constant 0 : index
    %c0_8 = arith.constant 0 : index
    %8 = vector.load %arg5[%c0_7, %c0_8] : memref<1x64xf32, #tpu.memory_space<vmem>>, vector<1x64xf32>
    %c0_9 = arith.constant 0 : index
    %c0_10 = arith.constant 0 : index
    %9 = vector.load %arg6[%c0_9, %c0_10] : memref<1x64xf32, #tpu.memory_space<vmem>>, vector<1x64xf32>
    %cst_11 = arith.constant dense<0.000000e+00> : vector<32xf32>
    %10 = vector.multi_reduction <add>, %7, %cst_11 [1] : vector<32x64xf32> to vector<32xf32>
    %11 = vector.shape_cast %10 : vector<32xf32> to vector<32x1xf32>
    %cst_12 = arith.constant 6.400000e+01 : f32
    %12 = vector.broadcast %cst_12 : f32 to vector<32x1xf32>
    %13 = arith.divf %11, %12 : vector<32x1xf32>
    %14 = vector.broadcast %13 : vector<32x1xf32> to vector<32x64xf32>
    %15 = arith.subf %7, %14 : vector<32x64xf32>
    %16 = arith.mulf %15, %15 : vector<32x64xf32>
    %cst_13 = arith.constant dense<0.000000e+00> : vector<32xf32>
    %17 = vector.multi_reduction <add>, %16, %cst_13 [1] : vector<32x64xf32> to vector<32xf32>
    %18 = vector.shape_cast %17 : vector<32xf32> to vector<32x1xf32>
    %cst_14 = arith.constant 6.400000e+01 : f32
    %19 = vector.broadcast %cst_14 : f32 to vector<32x1xf32>
    %20 = arith.divf %18, %19 : vector<32x1xf32>
    %21 = vector.broadcast %13 : vector<32x1xf32> to vector<32x64xf32>
    %22 = arith.subf %7, %21 : vector<32x64xf32>
    %cst_15 = arith.constant 9.99999974E-6 : f32
    %23 = vector.broadcast %cst_15 : f32 to vector<32x1xf32>
    %24 = arith.addf %20, %23 : vector<32x1xf32>
    %25 = math.rsqrt %24 : vector<32x1xf32>
    %26 = vector.broadcast %25 : vector<32x1xf32> to vector<32x64xf32>
    %27 = arith.mulf %22, %26 : vector<32x64xf32>
    %28 = vector.broadcast %8 : vector<1x64xf32> to vector<32x64xf32>
    %29 = arith.mulf %27, %28 : vector<32x64xf32>
    %30 = vector.broadcast %9 : vector<1x64xf32> to vector<32x64xf32>
    %31 = arith.addf %29, %30 : vector<32x64xf32>
    %32 = arith.truncf %31 : vector<32x64xf32> to vector<32x64xbf16>
    %c0_16 = arith.constant 0 : index
    %c0_17 = arith.constant 0 : index
    %33 = vector.load %arg7[%c0_16, %c0_17] : memref<64x128xbf16, #tpu.memory_space<vmem>>, vector<64x128xbf16>
    %cst_18 = arith.constant dense<0.000000e+00> : vector<32x128xf32>
    %34 = tpu.matmul %32, %33, %cst_18 {dimension_numbers = #tpu.dot_dimension_numbers<[1], [0], [0], [1], [0, 0, 1, 1], [], []>} : vector<32x64xbf16>, vector<64x128xbf16>, vector<32x128xf32> -> vector<32x128xf32>
    %c0_19 = arith.constant 0 : index
    %c0_20 = arith.constant 0 : index
    %35 = vector.load %arg8[%c0_19, %c0_20] : memref<1x128xf32, #tpu.memory_space<vmem>>, vector<1x128xf32>
    %36 = vector.broadcast %35 : vector<1x128xf32> to vector<32x128xf32>
    %37 = arith.addf %34, %36 : vector<32x128xf32>
    %38 = arith.mulf %37, %37 : vector<32x128xf32>
    %39 = arith.mulf %37, %38 : vector<32x128xf32>
    %cst_21 = arith.constant 4.471500e-02 : f32
    %40 = vector.broadcast %cst_21 : f32 to vector<32x128xf32>
    %41 = arith.mulf %40, %39 : vector<32x128xf32>
    %42 = arith.addf %37, %41 : vector<32x128xf32>
    %cst_22 = arith.constant 0.797884583 : f32
    %43 = vector.broadcast %cst_22 : f32 to vector<32x128xf32>
    %44 = arith.mulf %43, %42 : vector<32x128xf32>
    %45 = math.tanh %44 : vector<32x128xf32>
    %cst_23 = arith.constant 1.000000e+00 : f32
    %46 = vector.broadcast %cst_23 : f32 to vector<32x128xf32>
    %47 = arith.addf %46, %45 : vector<32x128xf32>
    %cst_24 = arith.constant 5.000000e-01 : f32
    %48 = vector.broadcast %cst_24 : f32 to vector<32x128xf32>
    %49 = arith.mulf %48, %47 : vector<32x128xf32>
    %50 = arith.mulf %37, %49 : vector<32x128xf32>
    %51 = arith.truncf %50 : vector<32x128xf32> to vector<32x128xbf16>
    %c0_25 = arith.constant 0 : index
    %c0_26 = arith.constant 0 : index
    %52 = vector.load %arg9[%c0_25, %c0_26] : memref<128x64xbf16, #tpu.memory_space<vmem>>, vector<128x64xbf16>
    %cst_27 = arith.constant dense<0.000000e+00> : vector<32x64xf32>
    %53 = tpu.matmul %51, %52, %cst_27 {dimension_numbers = #tpu.dot_dimension_numbers<[1], [0], [0], [1], [0, 0, 1, 1], [], []>} : vector<32x128xbf16>, vector<128x64xbf16>, vector<32x64xf32> -> vector<32x64xf32>
    %c0_28 = arith.constant 0 : index
    %c0_29 = arith.constant 0 : index
    %54 = vector.load %arg10[%c0_28, %c0_29] : memref<1x64xf32, #tpu.memory_space<vmem>>, vector<1x64xf32>
    %55 = vector.broadcast %54 : vector<1x64xf32> to vector<32x64xf32>
    %56 = arith.addf %53, %55 : vector<32x64xf32>
    %57 = arith.addf %7, %56 : vector<32x64xf32>
    %c0_30 = arith.constant 0 : index
    %c0_31 = arith.constant 0 : index
    %58 = vector.load %arg11[%c0_30, %c0_31] : memref<32x64xf32, #tpu.memory_space<vmem>>, vector<32x64xf32>
    tpu.vector_store %arg11[%c0_30, %c0_31], %57 {strides = array<i32>} : memref<32x64xf32, #tpu.memory_space<vmem>>, vector<32x64xf32>,
    return
  }
  func.func @transform_0(%arg0: i32) -> (i32, i32) {
    %c0_i32 = arith.constant 0 : i32
    %c0_i32_0 = arith.constant 0 : i32
    return %arg0, %c0_i32 : i32, i32
  }
  func.func @transform_1(%arg0: i32) -> (i32, i32) {
    %c0_i32 = arith.constant 0 : i32
    %c0_i32_0 = arith.constant 0 : i32
    return %arg0, %c0_i32 : i32, i32
  }
  func.func @transform_2(%arg0: i32) -> (i32, i32) {
    %c0_i32 = arith.constant 0 : i32
    %c0_i32_0 = arith.constant 0 : i32
    %c0_i32_1 = arith.constant 0 : i32
    return %c0_i32, %c0_i32_0 : i32, i32
  }
  func.func @transform_3(%arg0: i32) -> (i32, i32) {
    %c0_i32 = arith.constant 0 : i32
    %c0_i32_0 = arith.constant 0 : i32
    %c0_i32_1 = arith.constant 0 : i32
    return %c0_i32, %c0_i32_0 : i32, i32
  }
  func.func @transform_4(%arg0: i32) -> (i32, i32) {
    %c0_i32 = arith.constant 0 : i32
    %c0_i32_0 = arith.constant 0 : i32
    %c0_i32_1 = arith.constant 0 : i32
    return %c0_i32, %c0_i32_0 : i32, i32
  }
  func.func @transform_5(%arg0: i32) -> (i32, i32) {
    %c0_i32 = arith.constant 0 : i32
    %c0_i32_0 = arith.constant 0 : i32
    %c0_i32_1 = arith.constant 0 : i32
    return %c0_i32, %c0_i32_0 : i32, i32
  }
  func.func @transform_6(%arg0: i32) -> (i32, i32) {
    %c0_i32 = arith.constant 0 : i32
    %c0_i32_0 = arith.constant 0 : i32
    %c0_i32_1 = arith.constant 0 : i32
    return %c0_i32, %c0_i32_0 : i32, i32
  }
  func.func @transform_7(%arg0: i32) -> (i32, i32) {
    %c0_i32 = arith.constant 0 : i32
    %c0_i32_0 = arith.constant 0 : i32
    %c0_i32_1 = arith.constant 0 : i32
    return %c0_i32, %c0_i32_0 : i32, i32
  }
  func.func @transform_8(%arg0: i32) -> (i32, i32) {
    %c0_i32 = arith.constant 0 : i32
    %c0_i32_0 = arith.constant 0 : i32
    %c0_i32_1 = arith.constant 0 : i32
    return %c0_i32, %c0_i32_0 : i32, i32
  }
  func.func @transform_9(%arg0: i32) -> (i32, i32) {
    %c0_i32 = arith.constant 0 : i32
    %c0_i32_0 = arith.constant 0 : i32
    %c0_i32_1 = arith.constant 0 : i32
    return %c0_i32, %c0_i32_0 : i32, i32
  }
  func.func @transform_10(%arg0: i32) -> (i32, i32) {
    %c0_i32 = arith.constant 0 : i32
    %c0_i32_0 = arith.constant 0 : i32
    return %arg0, %c0_i32 : i32, i32
  }
}

module attributes {stable_mosaic.version = 11 : i64} {
  func.func @_ln_kernel(%arg0: i32, %arg1: memref<32x64xf32, #tpu.memory_space<vmem>>, %arg2: memref<1x64xf32, #tpu.memory_space<vmem>>, %arg3: memref<1x64xf32, #tpu.memory_space<vmem>>, %arg4: memref<32x64xf32, #tpu.memory_space<vmem>>) attributes {dimension_semantics = [#tpu.dimension_semantics<parallel>], iteration_bounds = array<i64: 1>, scalar_prefetch = 0 : i64, scratch_operands = 0 : i64, tpu.core_type = #tpu.core_type<tc>, window_params = [{transform_indices = @transform_0, window_bounds = array<i64: 32, 64>}, {pipeline_mode = #tpu.pipeline_mode<synchronous>, transform_indices = @transform_1, window_bounds = array<i64: 1, 64>}, {pipeline_mode = #tpu.pipeline_mode<synchronous>, transform_indices = @transform_2, window_bounds = array<i64: 1, 64>}, {transform_indices = @transform_3, window_bounds = array<i64: 32, 64>}]} {
    %c0 = arith.constant 0 : index
    %c0_0 = arith.constant 0 : index
    %0 = vector.load %arg1[%c0, %c0_0] : memref<32x64xf32, #tpu.memory_space<vmem>>, vector<32x64xf32>
    %c0_1 = arith.constant 0 : index
    %c0_2 = arith.constant 0 : index
    %1 = vector.load %arg2[%c0_1, %c0_2] : memref<1x64xf32, #tpu.memory_space<vmem>>, vector<1x64xf32>
    %c0_3 = arith.constant 0 : index
    %c0_4 = arith.constant 0 : index
    %2 = vector.load %arg3[%c0_3, %c0_4] : memref<1x64xf32, #tpu.memory_space<vmem>>, vector<1x64xf32>
    %cst = arith.constant dense<0.000000e+00> : vector<32xf32>
    %3 = vector.multi_reduction <add>, %0, %cst [1] : vector<32x64xf32> to vector<32xf32>
    %4 = vector.shape_cast %3 : vector<32xf32> to vector<32x1xf32>
    %cst_5 = arith.constant 6.400000e+01 : f32
    %5 = vector.broadcast %cst_5 : f32 to vector<32x1xf32>
    %6 = arith.divf %4, %5 : vector<32x1xf32>
    %7 = vector.broadcast %6 : vector<32x1xf32> to vector<32x64xf32>
    %8 = arith.subf %0, %7 : vector<32x64xf32>
    %9 = arith.mulf %8, %8 : vector<32x64xf32>
    %cst_6 = arith.constant dense<0.000000e+00> : vector<32xf32>
    %10 = vector.multi_reduction <add>, %9, %cst_6 [1] : vector<32x64xf32> to vector<32xf32>
    %11 = vector.shape_cast %10 : vector<32xf32> to vector<32x1xf32>
    %cst_7 = arith.constant 6.400000e+01 : f32
    %12 = vector.broadcast %cst_7 : f32 to vector<32x1xf32>
    %13 = arith.divf %11, %12 : vector<32x1xf32>
    %14 = vector.broadcast %6 : vector<32x1xf32> to vector<32x64xf32>
    %15 = arith.subf %0, %14 : vector<32x64xf32>
    %cst_8 = arith.constant 9.99999974E-6 : f32
    %16 = vector.broadcast %cst_8 : f32 to vector<32x1xf32>
    %17 = arith.addf %13, %16 : vector<32x1xf32>
    %18 = math.rsqrt %17 : vector<32x1xf32>
    %19 = vector.broadcast %18 : vector<32x1xf32> to vector<32x64xf32>
    %20 = arith.mulf %15, %19 : vector<32x64xf32>
    %21 = vector.broadcast %1 : vector<1x64xf32> to vector<32x64xf32>
    %22 = arith.mulf %20, %21 : vector<32x64xf32>
    %23 = vector.broadcast %2 : vector<1x64xf32> to vector<32x64xf32>
    %24 = arith.addf %22, %23 : vector<32x64xf32>
    %c0_9 = arith.constant 0 : index
    %c0_10 = arith.constant 0 : index
    %25 = vector.load %arg4[%c0_9, %c0_10] : memref<32x64xf32, #tpu.memory_space<vmem>>, vector<32x64xf32>
    tpu.vector_store %arg4[%c0_9, %c0_10], %24 {strides = array<i32>} : memref<32x64xf32, #tpu.memory_space<vmem>>, vector<32x64xf32>,
    return
  }
  func.func @transform_0(%arg0: i32) -> (i32, i32) {
    %c0_i32 = arith.constant 0 : i32
    %c0_i32_0 = arith.constant 0 : i32
    return %arg0, %c0_i32 : i32, i32
  }
  func.func @transform_1(%arg0: i32) -> (i32, i32) {
    %c0_i32 = arith.constant 0 : i32
    %c0_i32_0 = arith.constant 0 : i32
    %c0_i32_1 = arith.constant 0 : i32
    return %c0_i32, %c0_i32_0 : i32, i32
  }
  func.func @transform_2(%arg0: i32) -> (i32, i32) {
    %c0_i32 = arith.constant 0 : i32
    %c0_i32_0 = arith.constant 0 : i32
    %c0_i32_1 = arith.constant 0 : i32
    return %c0_i32, %c0_i32_0 : i32, i32
  }
  func.func @transform_3(%arg0: i32) -> (i32, i32) {
    %c0_i32 = arith.constant 0 : i32
    %c0_i32_0 = arith.constant 0 : i32
    return %arg0, %c0_i32 : i32, i32
  }
}

module attributes {stable_mosaic.version = 11 : i64} {
  func.func @_lm_head_kernel(%arg0: i32, %arg1: memref<32x64xf32, #tpu.memory_space<vmem>>, %arg2: memref<64x64xbf16, #tpu.memory_space<vmem>>, %arg3: memref<1x64xf32, #tpu.memory_space<vmem>>, %arg4: memref<1x64xf32, #tpu.memory_space<vmem>>, %arg5: memref<1x64xf32, #tpu.memory_space<vmem>>, %arg6: memref<64x128xbf16, #tpu.memory_space<vmem>>, %arg7: memref<1x128xf32, #tpu.memory_space<vmem>>, %arg8: memref<32x128xf32, #tpu.memory_space<vmem>>) attributes {dimension_semantics = [#tpu.dimension_semantics<parallel>], iteration_bounds = array<i64: 1>, scalar_prefetch = 0 : i64, scratch_operands = 0 : i64, tpu.core_type = #tpu.core_type<tc>, window_params = [{transform_indices = @transform_0, window_bounds = array<i64: 32, 64>}, {pipeline_mode = #tpu.pipeline_mode<synchronous>, transform_indices = @transform_1, window_bounds = array<i64: 64, 64>}, {pipeline_mode = #tpu.pipeline_mode<synchronous>, transform_indices = @transform_2, window_bounds = array<i64: 1, 64>}, {pipeline_mode = #tpu.pipeline_mode<synchronous>, transform_indices = @transform_3, window_bounds = array<i64: 1, 64>}, {pipeline_mode = #tpu.pipeline_mode<synchronous>, transform_indices = @transform_4, window_bounds = array<i64: 1, 64>}, {pipeline_mode = #tpu.pipeline_mode<synchronous>, transform_indices = @transform_5, window_bounds = array<i64: 64, 128>}, {pipeline_mode = #tpu.pipeline_mode<synchronous>, transform_indices = @transform_6, window_bounds = array<i64: 1, 128>}, {transform_indices = @transform_7, window_bounds = array<i64: 32, 128>}]} {
    %c0 = arith.constant 0 : index
    %c0_0 = arith.constant 0 : index
    %0 = vector.load %arg1[%c0, %c0_0] : memref<32x64xf32, #tpu.memory_space<vmem>>, vector<32x64xf32>
    %1 = arith.truncf %0 : vector<32x64xf32> to vector<32x64xbf16>
    %c0_1 = arith.constant 0 : index
    %c0_2 = arith.constant 0 : index
    %2 = vector.load %arg2[%c0_1, %c0_2] : memref<64x64xbf16, #tpu.memory_space<vmem>>, vector<64x64xbf16>
    %cst = arith.constant dense<0.000000e+00> : vector<32x64xf32>
    %3 = tpu.matmul %1, %2, %cst {dimension_numbers = #tpu.dot_dimension_numbers<[1], [0], [0], [1], [0, 0, 1, 1], [], []>} : vector<32x64xbf16>, vector<64x64xbf16>, vector<32x64xf32> -> vector<32x64xf32>
    %c0_3 = arith.constant 0 : index
    %c0_4 = arith.constant 0 : index
    %4 = vector.load %arg3[%c0_3, %c0_4] : memref<1x64xf32, #tpu.memory_space<vmem>>, vector<1x64xf32>
    %5 = vector.broadcast %4 : vector<1x64xf32> to vector<32x64xf32>
    %6 = arith.addf %3, %5 : vector<32x64xf32>
    %7 = arith.mulf %6, %6 : vector<32x64xf32>
    %8 = arith.mulf %6, %7 : vector<32x64xf32>
    %cst_5 = arith.constant 4.471500e-02 : f32
    %9 = vector.broadcast %cst_5 : f32 to vector<32x64xf32>
    %10 = arith.mulf %9, %8 : vector<32x64xf32>
    %11 = arith.addf %6, %10 : vector<32x64xf32>
    %cst_6 = arith.constant 0.797884583 : f32
    %12 = vector.broadcast %cst_6 : f32 to vector<32x64xf32>
    %13 = arith.mulf %12, %11 : vector<32x64xf32>
    %14 = math.tanh %13 : vector<32x64xf32>
    %cst_7 = arith.constant 1.000000e+00 : f32
    %15 = vector.broadcast %cst_7 : f32 to vector<32x64xf32>
    %16 = arith.addf %15, %14 : vector<32x64xf32>
    %cst_8 = arith.constant 5.000000e-01 : f32
    %17 = vector.broadcast %cst_8 : f32 to vector<32x64xf32>
    %18 = arith.mulf %17, %16 : vector<32x64xf32>
    %19 = arith.mulf %6, %18 : vector<32x64xf32>
    %c0_9 = arith.constant 0 : index
    %c0_10 = arith.constant 0 : index
    %20 = vector.load %arg4[%c0_9, %c0_10] : memref<1x64xf32, #tpu.memory_space<vmem>>, vector<1x64xf32>
    %c0_11 = arith.constant 0 : index
    %c0_12 = arith.constant 0 : index
    %21 = vector.load %arg5[%c0_11, %c0_12] : memref<1x64xf32, #tpu.memory_space<vmem>>, vector<1x64xf32>
    %cst_13 = arith.constant dense<0.000000e+00> : vector<32xf32>
    %22 = vector.multi_reduction <add>, %19, %cst_13 [1] : vector<32x64xf32> to vector<32xf32>
    %23 = vector.shape_cast %22 : vector<32xf32> to vector<32x1xf32>
    %cst_14 = arith.constant 6.400000e+01 : f32
    %24 = vector.broadcast %cst_14 : f32 to vector<32x1xf32>
    %25 = arith.divf %23, %24 : vector<32x1xf32>
    %26 = vector.broadcast %25 : vector<32x1xf32> to vector<32x64xf32>
    %27 = arith.subf %19, %26 : vector<32x64xf32>
    %28 = arith.mulf %27, %27 : vector<32x64xf32>
    %cst_15 = arith.constant dense<0.000000e+00> : vector<32xf32>
    %29 = vector.multi_reduction <add>, %28, %cst_15 [1] : vector<32x64xf32> to vector<32xf32>
    %30 = vector.shape_cast %29 : vector<32xf32> to vector<32x1xf32>
    %cst_16 = arith.constant 6.400000e+01 : f32
    %31 = vector.broadcast %cst_16 : f32 to vector<32x1xf32>
    %32 = arith.divf %30, %31 : vector<32x1xf32>
    %33 = vector.broadcast %25 : vector<32x1xf32> to vector<32x64xf32>
    %34 = arith.subf %19, %33 : vector<32x64xf32>
    %cst_17 = arith.constant 9.99999974E-6 : f32
    %35 = vector.broadcast %cst_17 : f32 to vector<32x1xf32>
    %36 = arith.addf %32, %35 : vector<32x1xf32>
    %37 = math.rsqrt %36 : vector<32x1xf32>
    %38 = vector.broadcast %37 : vector<32x1xf32> to vector<32x64xf32>
    %39 = arith.mulf %34, %38 : vector<32x64xf32>
    %40 = vector.broadcast %20 : vector<1x64xf32> to vector<32x64xf32>
    %41 = arith.mulf %39, %40 : vector<32x64xf32>
    %42 = vector.broadcast %21 : vector<1x64xf32> to vector<32x64xf32>
    %43 = arith.addf %41, %42 : vector<32x64xf32>
    %44 = arith.truncf %43 : vector<32x64xf32> to vector<32x64xbf16>
    %c0_18 = arith.constant 0 : index
    %c0_19 = arith.constant 0 : index
    %45 = vector.load %arg6[%c0_18, %c0_19] : memref<64x128xbf16, #tpu.memory_space<vmem>>, vector<64x128xbf16>
    %cst_20 = arith.constant dense<0.000000e+00> : vector<32x128xf32>
    %46 = tpu.matmul %44, %45, %cst_20 {dimension_numbers = #tpu.dot_dimension_numbers<[1], [0], [0], [1], [0, 0, 1, 1], [], []>} : vector<32x64xbf16>, vector<64x128xbf16>, vector<32x128xf32> -> vector<32x128xf32>
    %c0_21 = arith.constant 0 : index
    %c0_22 = arith.constant 0 : index
    %47 = vector.load %arg7[%c0_21, %c0_22] : memref<1x128xf32, #tpu.memory_space<vmem>>, vector<1x128xf32>
    %48 = vector.broadcast %47 : vector<1x128xf32> to vector<32x128xf32>
    %49 = arith.addf %46, %48 : vector<32x128xf32>
    %c0_23 = arith.constant 0 : index
    %c0_24 = arith.constant 0 : index
    %50 = vector.load %arg8[%c0_23, %c0_24] : memref<32x128xf32, #tpu.memory_space<vmem>>, vector<32x128xf32>
    tpu.vector_store %arg8[%c0_23, %c0_24], %49 {strides = array<i32>} : memref<32x128xf32, #tpu.memory_space<vmem>>, vector<32x128xf32>,
    return
  }
  func.func @transform_0(%arg0: i32) -> (i32, i32) {
    %c0_i32 = arith.constant 0 : i32
    %c0_i32_0 = arith.constant 0 : i32
    return %arg0, %c0_i32 : i32, i32
  }
  func.func @transform_1(%arg0: i32) -> (i32, i32) {
    %c0_i32 = arith.constant 0 : i32
    %c0_i32_0 = arith.constant 0 : i32
    %c0_i32_1 = arith.constant 0 : i32
    return %c0_i32, %c0_i32_0 : i32, i32
  }
  func.func @transform_2(%arg0: i32) -> (i32, i32) {
    %c0_i32 = arith.constant 0 : i32
    %c0_i32_0 = arith.constant 0 : i32
    %c0_i32_1 = arith.constant 0 : i32
    return %c0_i32, %c0_i32_0 : i32, i32
  }
  func.func @transform_3(%arg0: i32) -> (i32, i32) {
    %c0_i32 = arith.constant 0 : i32
    %c0_i32_0 = arith.constant 0 : i32
    %c0_i32_1 = arith.constant 0 : i32
    return %c0_i32, %c0_i32_0 : i32, i32
  }
  func.func @transform_4(%arg0: i32) -> (i32, i32) {
    %c0_i32 = arith.constant 0 : i32
    %c0_i32_0 = arith.constant 0 : i32
    %c0_i32_1 = arith.constant 0 : i32
    return %c0_i32, %c0_i32_0 : i32, i32
  }
  func.func @transform_5(%arg0: i32) -> (i32, i32) {
    %c0_i32 = arith.constant 0 : i32
    %c0_i32_0 = arith.constant 0 : i32
    %c0_i32_1 = arith.constant 0 : i32
    return %c0_i32, %c0_i32_0 : i32, i32
  }
  func.func @transform_6(%arg0: i32) -> (i32, i32) {
    %c0_i32 = arith.constant 0 : i32
    %c0_i32_0 = arith.constant 0 : i32
    %c0_i32_1 = arith.constant 0 : i32
    return %c0_i32, %c0_i32_0 : i32, i32
  }
  func.func @transform_7(%arg0: i32) -> (i32, i32) {
    %c0_i32 = arith.constant 0 : i32
    %c0_i32_0 = arith.constant 0 : i32
    return %arg0, %c0_i32 : i32, i32
  }
}

</mosaic_0001>

<llo_original>
// kernel: _dense_forward.11
$region0: #{_dense_forward.11}
  #allocation0 [shape = 'u32[]', space=smem, size = 0x4, offset = 0x4, fixed_abs, tag = 'smem constant byte address 0x4 - core index']
  #allocation1 [shape = 'u32[144,128]{1,0:T(1,128)}', space=vmem, size = 0x12000, scoped, tag = 'internal scratch']
  %s0 = inlined_call_operand.vmem [shape: f32[32,64], index: 0, kind: input, shape index: {}]
  %s1 = inlined_call_operand.vmem [shape: f32[1,64], index: 1, kind: input, shape index: {}]
  %s2 = inlined_call_operand.vmem [shape: f32[1,64], index: 2, kind: input, shape index: {}]
  %s3 = inlined_call_operand.vmem [shape: f32[32,1], index: 3, kind: input, shape index: {}]
  %s4 = inlined_call_operand.vmem [shape: f32[32,64], index: 4, kind: output, shape index: {}]
  %s5 = sld [smem:[#allocation0]]
  $region26: #{_dense_forward.11} parent=0
    _
  %s7 = ssub.s32 1, %s5
  %s8 = scalar_select 0, %s7, %s5
  // Predicated region
  $region2: #{_dense_forward.11} parent=0 // pred_check
    _
  $region3: #{_dense_forward.11} parent=0 // pred_check_branch
    %10 = sbr.rel (0) target = $region5
  $region4: #{_dense_forward.11} parent=0 // pred_region
    _
  $region5: #{_dense_forward.11} parent=0 // pred_fallthru
    _
  // Predicated region
  $region6: #{_dense_forward.11} parent=0 // pred_check
    _
  $region7: #{_dense_forward.11} parent=0 // pred_check_branch
    %12 = sbr.rel (0) target = $region9
  $region8: #{_dense_forward.11} parent=0 // pred_region
    _
  $region9: #{_dense_forward.11} parent=0 // pred_fallthru
    _
  // Predicated region
  $region10: #{_dense_forward.11} parent=0 // pred_check
    _
  $region11: #{_dense_forward.11} parent=0 // pred_check_branch
    %14 = sbr.rel (0) target = $region13
  $region12: #{_dense_forward.11} parent=0 // pred_region
    _
  $region13: #{_dense_forward.11} parent=0 // pred_fallthru
    _
  // Predicated region
  $region14: #{_dense_forward.11} parent=0 // pred_check
    _
  $region15: #{_dense_forward.11} parent=0 // pred_check_branch
    %16 = sbr.rel (0) target = $region17
  $region16: #{_dense_forward.11} parent=0 // pred_region
    _
  $region17: #{_dense_forward.11} parent=0 // pred_fallthru
    _
  %v17 = vld [vmem:[%s0] sm:$0xff]
  %v18 = vld [vmem:[%s0 + $0x8] sm:$0xff]
  %v19 = vld [vmem:[%s0 + $0x10] sm:$0xff]
  %v20 = vld [vmem:[%s0 + $0x18] sm:$0xff]
  %v21 = vld [vmem:[%s1] sm:$0x1]
  %v22 = vld [vmem:[%s2] sm:$0x1]
  %vm23 = vcmask 523264
  %v24 = vsel %vm23, %v17, 0.0
  %25 = vadd.xlane.f32.xlu0 %v24
  %v26 = vpop.xlane.xlu0 %25
  %v27 = vsel %vm23, %v18, 0.0
  %28 = vadd.xlane.f32.xlu0 %v27
  %v29 = vpop.xlane.xlu0 %28
  %v30 = vsel %vm23, %v19, 0.0
  %31 = vadd.xlane.f32.xlu0 %v30
  %v32 = vpop.xlane.xlu0 %31
  %v33 = vsel %vm23, %v20, 0.0
  %34 = vadd.xlane.f32.xlu0 %v33
  %v35 = vpop.xlane.xlu0 %34
  %v36 = vrcp.pop 64.0
  %v37 = vmul.f32 %v26, %v36
  %v38 = vmul.f32 %v29, %v36
  %v39 = vmul.f32 %v32, %v36
  %v40 = vmul.f32 %v35, %v36
  %v41 = vsub.f32 %v17, %v37
  %v42 = vsub.f32 %v18, %v38
  %v43 = vsub.f32 %v19, %v39
  %v44 = vsub.f32 %v20, %v40
  %v45 = vmul.f32 %v41, %v41
  %v46 = vmul.f32 %v42, %v42
  %v47 = vmul.f32 %v43, %v43
  %v48 = vmul.f32 %v44, %v44
  %v49 = vsel %vm23, %v45, 0.0
  %50 = vadd.xlane.f32.xlu0 %v49
  %v51 = vpop.xlane.xlu0 %50
  %v52 = vsel %vm23, %v46, 0.0
  %53 = vadd.xlane.f32.xlu0 %v52
  %v54 = vpop.xlane.xlu0 %53
  %v55 = vsel %vm23, %v47, 0.0
  %56 = vadd.xlane.f32.xlu0 %v55
  %v57 = vpop.xlane.xlu0 %56
  %v58 = vsel %vm23, %v48, 0.0
  %59 = vadd.xlane.f32.xlu0 %v58
  %v60 = vpop.xlane.xlu0 %59
  %v61 = vmul.f32 %v51, %v36
  %v62 = vmul.f32 %v54, %v36
  %v63 = vmul.f32 %v57, %v36
  %v64 = vmul.f32 %v60, %v36
  %v65 = vadd.f32 %v61, 1e-05
  %v66 = vadd.f32 %v62, 1e-05
  %v67 = vadd.f32 %v63, 1e-05
  %v68 = vadd.f32 %v64, 1e-05
  %v69 = vrsqrt.pop %v65
  %v70 = vrsqrt.pop %v66
  %v71 = vrsqrt.pop %v67
  %v72 = vrsqrt.pop %v68
  %v73 = vmul.f32 %v41, %v69
  %v74 = vmul.f32 %v42, %v70
  %v75 = vmul.f32 %v43, %v71
  %v76 = vmul.f32 %v44, %v72
  %v78 = vlaneseq
  %v79 = vshrl.u32 %v78, 7
  %v80 = vsub.s32 0, %v79
  %v81 = vrot.slane %v21, %v80
  %v83 = vmul.f32 %v73, %v81
  %v84 = vmul.f32 %v74, %v81
  %v85 = vmul.f32 %v75, %v81
  %v86 = vmul.f32 %v76, %v81
  %v88 = vlaneseq
  %v89 = vshrl.u32 %v88, 7
  %v90 = vsub.s32 0, %v89
  %v91 = vrot.slane %v22, %v90
  %v93 = vadd.f32 %v83, %v91
  %v94 = vadd.f32 %v84, %v91
  %v95 = vadd.f32 %v85, %v91
  %v96 = vadd.f32 %v86, %v91
  %v97 = vld [vmem:[%s3] sm:$0xff]
  %v98 = vld [vmem:[%s3 + $0x8] sm:$0xff]
  %v99 = vld [vmem:[%s3 + $0x10] sm:$0xff]
  %v100 = vld [vmem:[%s3 + $0x18] sm:$0xff]
  %102 = vset.pattern.permute.xlu0 0
  %103 = vperm.xlu0 %102, %v97
  %v104 = vpop.permute.xlu0 %103
  %107 = vset.pattern.permute.xlu0 0
  %108 = vperm.xlu0 %107, %v98
  %v109 = vpop.permute.xlu0 %108
  %112 = vset.pattern.permute.xlu0 0
  %113 = vperm.xlu0 %112, %v99
  %v114 = vpop.permute.xlu0 %113
  %117 = vset.pattern.permute.xlu0 0
  %118 = vperm.xlu0 %117, %v100
  %v119 = vpop.permute.xlu0 %118
  %v121 = vmul.f32 %v93, %v104
  %v122 = vmul.f32 %v94, %v109
  %v123 = vmul.f32 %v95, %v114
  %v124 = vmul.f32 %v96, %v119
  %125 = vst.msk [vmem:[%s4] sm:$0xff] %vm23, %v121
  %126 = vst.msk [vmem:[%s4 + $0x8] sm:$0xff] %vm23, %v122
  %127 = vst.msk [vmem:[%s4 + $0x10] sm:$0xff] %vm23, %v123
  %128 = vst.msk [vmem:[%s4 + $0x18] sm:$0xff] %vm23, %v124
  // Predicated region
  $region18: #{_dense_forward.11} parent=0 // pred_check
    _
  $region19: #{_dense_forward.11} parent=0 // pred_check_branch
    %130 = sbr.rel (0) target = $region21
  $region20: #{_dense_forward.11} parent=0 // pred_region
    _
  $region21: #{_dense_forward.11} parent=0 // pred_fallthru
    _
  // Predicated region
  $region22: #{_dense_forward.11} parent=0 // pred_check
    _
  $region23: #{_dense_forward.11} parent=0 // pred_check_branch
    %132 = sbr.rel (0) target = $region25
  $region24: #{_dense_forward.11} parent=0 // pred_region
    _
  $region25: #{_dense_forward.11} parent=0 // pred_fallthru
    _

// kernel: _dense_forward.12
$region0: #{_dense_forward.12}
  #allocation0 [shape = 'u32[]', space=smem, size = 0x4, offset = 0x4, fixed_abs, tag = 'smem constant byte address 0x4 - core index']
  #allocation1 [shape = 'u32[144,128]{1,0:T(1,128)}', space=vmem, size = 0x12000, scoped, tag = 'internal scratch']
  %s0 = inlined_call_operand.vmem [shape: f32[32,64], index: 0, kind: input, shape index: {}]
  %s1 = inlined_call_operand.vmem [shape: f32[1,64], index: 1, kind: input, shape index: {}]
  %s2 = inlined_call_operand.vmem [shape: f32[1,64], index: 2, kind: input, shape index: {}]
  %s3 = inlined_call_operand.vmem [shape: bf16[64,192], index: 3, kind: input, shape index: {}]
  %s4 = inlined_call_operand.vmem [shape: f32[1,192], index: 4, kind: input, shape index: {}]
  %s5 = inlined_call_operand.vmem [shape: bf16[32,64], index: 5, kind: output, shape index: {0}]
  %s6 = inlined_call_operand.vmem [shape: bf16[32,64], index: 6, kind: output, shape index: {1}]
  %s7 = inlined_call_operand.vmem [shape: bf16[32,64], index: 7, kind: output, shape index: {2}]
  %8 = xla_tuple %s5, %s6, %s7
  %s9 = sld [smem:[#allocation0]]
  $region46: #{_dense_forward.12} parent=0
    _
  %s11 = ssub.s32 1, %s9
  %s12 = scalar_select 0, %s11, %s9
  // Predicated region
  $region2: #{_dense_forward.12} parent=0 // pred_check
    _
  $region3: #{_dense_forward.12} parent=0 // pred_check_branch
    %14 = sbr.rel (0) target = $region5
  $region4: #{_dense_forward.12} parent=0 // pred_region
    _
  $region5: #{_dense_forward.12} parent=0 // pred_fallthru
    _
  // Predicated region
  $region6: #{_dense_forward.12} parent=0 // pred_check
    _
  $region7: #{_dense_forward.12} parent=0 // pred_check_branch
    %16 = sbr.rel (0) target = $region9
  $region8: #{_dense_forward.12} parent=0 // pred_region
    _
  $region9: #{_dense_forward.12} parent=0 // pred_fallthru
    _
  // Predicated region
  $region10: #{_dense_forward.12} parent=0 // pred_check
    _
  $region11: #{_dense_forward.12} parent=0 // pred_check_branch
    %18 = sbr.rel (0) target = $region13
  $region12: #{_dense_forward.12} parent=0 // pred_region
    _
  $region13: #{_dense_forward.12} parent=0 // pred_fallthru
    _
  // Predicated region
  $region14: #{_dense_forward.12} parent=0 // pred_check
    _
  $region15: #{_dense_forward.12} parent=0 // pred_check_branch
    %20 = sbr.rel (0) target = $region17
  $region16: #{_dense_forward.12} parent=0 // pred_region
    _
  $region17: #{_dense_forward.12} parent=0 // pred_fallthru
    _
  // Predicated region
  $region18: #{_dense_forward.12} parent=0 // pred_check
    _
  $region19: #{_dense_forward.12} parent=0 // pred_check_branch
    %22 = sbr.rel (0) target = $region21
  $region20: #{_dense_forward.12} parent=0 // pred_region
    _
  $region21: #{_dense_forward.12} parent=0 // pred_fallthru
    _
  %v24 = vld [vmem:[%s0] sm:$0xff]
  %v25 = vld [vmem:[%s0 + $0x8] sm:$0xff]
  %v26 = vld [vmem:[%s0 + $0x10] sm:$0xff]
  %v27 = vld [vmem:[%s0 + $0x18] sm:$0xff]
  %v28 = vld [vmem:[%s1] sm:$0x1]
  %v29 = vld [vmem:[%s2] sm:$0x1]
  %vm30 = vcmask 523264
  %v31 = vsel %vm30, %v24, 0.0
  %32 = vadd.xlane.f32.xlu0 %v31
  %v33 = vpop.xlane.xlu0 %32
  %v34 = vsel %vm30, %v25, 0.0
  %35 = vadd.xlane.f32.xlu0 %v34
  %v36 = vpop.xlane.xlu0 %35
  %v37 = vsel %vm30, %v26, 0.0
  %38 = vadd.xlane.f32.xlu0 %v37
  %v39 = vpop.xlane.xlu0 %38
  %v40 = vsel %vm30, %v27, 0.0
  %41 = vadd.xlane.f32.xlu0 %v40
  %v42 = vpop.xlane.xlu0 %41
  %v43 = vrcp.pop 64.0
  %v44 = vmul.f32 %v33, %v43
  %v45 = vmul.f32 %v36, %v43
  %v46 = vmul.f32 %v39, %v43
  %v47 = vmul.f32 %v42, %v43
  %v48 = vsub.f32 %v24, %v44
  %v49 = vsub.f32 %v25, %v45
  %v50 = vsub.f32 %v26, %v46
  %v51 = vsub.f32 %v27, %v47
  %v52 = vmul.f32 %v48, %v48
  %v53 = vmul.f32 %v49, %v49
  %v54 = vmul.f32 %v50, %v50
  %v55 = vmul.f32 %v51, %v51
  %v56 = vsel %vm30, %v52, 0.0
  %57 = vadd.xlane.f32.xlu0 %v56
  %v58 = vpop.xlane.xlu0 %57
  %v59 = vsel %vm30, %v53, 0.0
  %60 = vadd.xlane.f32.xlu0 %v59
  %v61 = vpop.xlane.xlu0 %60
  %v62 = vsel %vm30, %v54, 0.0
  %63 = vadd.xlane.f32.xlu0 %v62
  %v64 = vpop.xlane.xlu0 %63
  %v65 = vsel %vm30, %v55, 0.0
  %66 = vadd.xlane.f32.xlu0 %v65
  %v67 = vpop.xlane.xlu0 %66
  %v68 = vmul.f32 %v58, %v43
  %v69 = vmul.f32 %v61, %v43
  %v70 = vmul.f32 %v64, %v43
  %v71 = vmul.f32 %v67, %v43
  %v72 = vadd.f32 %v68, 1e-05
  %v73 = vadd.f32 %v69, 1e-05
  %v74 = vadd.f32 %v70, 1e-05
  %v75 = vadd.f32 %v71, 1e-05
  %v76 = vrsqrt.pop %v72
  %v77 = vrsqrt.pop %v73
  %v78 = vrsqrt.pop %v74
  %v79 = vrsqrt.pop %v75
  %v80 = vmul.f32 %v48, %v76
  %v81 = vmul.f32 %v49, %v77
  %v82 = vmul.f32 %v50, %v78
  %v83 = vmul.f32 %v51, %v79
  %v85 = vlaneseq
  %v86 = vshrl.u32 %v85, 7
  %v87 = vsub.s32 0, %v86
  %v88 = vrot.slane %v28, %v87
  %v90 = vmul.f32 %v80, %v88
  %v91 = vmul.f32 %v81, %v88
  %v92 = vmul.f32 %v82, %v88
  %v93 = vmul.f32 %v83, %v88
  %v95 = vlaneseq
  %v96 = vshrl.u32 %v95, 7
  %v97 = vsub.s32 0, %v96
  %v98 = vrot.slane %v29, %v97
  %v100 = vadd.f32 %v90, %v98
  %v101 = vadd.f32 %v91, %v98
  %v102 = vadd.f32 %v92, %v98
  %v103 = vadd.f32 %v93, %v98
  %v104 = vpack.c.bf16 %v101, %v100
  %v105 = vpack.c.bf16 %v103, %v102
  %v106 = vld [vmem:[%s3] sm:$0xff]
  %v107 = vld [vmem:[%s3 + $0x8] sm:$0xff]
  %v108 = vld [vmem:[%s3 + $0x10] sm:$0xff]
  %v109 = vld [vmem:[%s3 + $0x18] sm:$0xff]
  %v110 = vld [vmem:[%s3 + $0x20] sm:$0xff]
  %v111 = vld [vmem:[%s3 + $0x28] sm:$0xff]
  %v112 = vld [vmem:[%s3 + $0x30] sm:$0xff]
  %v113 = vld [vmem:[%s3 + $0x38] sm:$0xff]
  %v114 = vld [vmem:[%s4] sm:$0x3]
  %v116 = vlaneseq
  %v117 = vshrl.u32 %v116, 7
  %v118 = vsub.s32 0, %v117
  %v119 = vrot.slane %v114, %v118
  %v120 = vlaneseq
  %v121 = vshrl.u32 %v120, 7
  %v122 = vsub.s32 1, %v121
  %v123 = vrot.slane %v114, %v122
  %v134 = vunpack.c.l.b16 %v106
  %v135 = vunpack.c.h.b16 %v106
  %v136 = vunpack.c.l.b16 %v107
  %v137 = vunpack.c.h.b16 %v107
  %v138 = vunpack.c.l.b16 %v108
  %v139 = vunpack.c.h.b16 %v108
  %v140 = vunpack.c.l.b16 %v109
  %v141 = vunpack.c.h.b16 %v109
  %v142 = vunpack.c.l.b16 %v110
  %v143 = vunpack.c.h.b16 %v110
  %v144 = vunpack.c.l.b16 %v111
  %v145 = vunpack.c.h.b16 %v111
  %v146 = vunpack.c.l.b16 %v112
  %v147 = vunpack.c.h.b16 %v112
  %v148 = vunpack.c.l.b16 %v113
  %v149 = vunpack.c.h.b16 %v113
  %v150 = vpack.c.b16 %v136, %v134
  %v151 = vpack.c.b16 %v137, %v135
  %v152 = vpack.c.b16 %v140, %v138
  %v153 = vpack.c.b16 %v141, %v139
  %v154 = vpack.c.b16 %v144, %v142
  %v155 = vpack.c.b16 %v145, %v143
  %v156 = vpack.c.b16 %v148, %v146
  %v157 = vpack.c.b16 %v149, %v147
  %v167 = vsel %vm30, %v104, 0
  %v170 = vsel %vm30, %v105, 0
  %172 = vmatprep.subr.bf16.mxu0 %v151
  %173 = vmatpush1.bf16.msra.mxu0 %v150
  %174 = vmatprep.subr.bf16.mxu0 %v153
  %175 = vmatpush1.bf16.msra.mxu0 %v152
  %176 = vmatprep.subr.bf16.mxu0 %v155
  %177 = vmatpush1.bf16.msra.mxu0 %v154
  %178 = vmatprep.subr.bf16.mxu0 %v157
  %179 = vmatpush1.bf16.msra.mxu0 %v156
  %180 = vmatprep.subr.bf16.mxu0 0
  %181 = vmatpush1.bf16.msra.mxu0 0
  %182 = vmatprep.subr.bf16.mxu0 0
  %183 = vmatpush1.bf16.msra.mxu0 0
  %184 = vmatprep.subr.bf16.mxu0 0
  %185 = vmatpush1.bf16.msra.mxu0 0
  %186 = vmatprep.subr.bf16.mxu0 0
  %187 = vmatpush1.bf16.msra.mxu0 0
  %188 = vmatprep.subr.bf16.mxu0 0
  %189 = vmatpush1.bf16.msra.mxu0 0
  %190 = vmatprep.subr.bf16.mxu0 0
  %191 = vmatpush1.bf16.msra.mxu0 0
  %192 = vmatprep.subr.bf16.mxu0 0
  %193 = vmatpush1.bf16.msra.mxu0 0
  %194 = vmatprep.subr.bf16.mxu0 0
  %195 = vmatpush1.bf16.msra.mxu0 0
  %196 = vmatprep.subr.bf16.mxu0 0
  %197 = vmatpush1.bf16.msra.mxu0 0
  %198 = vmatprep.subr.bf16.mxu0 0
  %199 = vmatpush1.bf16.msra.mxu0 0
  %200 = vmatprep.subr.bf16.mxu0 0
  %201 = vmatpush1.bf16.msra.mxu0 0
  %202 = vmatprep.subr.bf16.mxu0 0
  %203 = vmatpush1.bf16.msra.mxu0 0
  %204 = vmatprep.mubr.bf16.mxu0 0
  %205 = vmatmul.mubr.bf16.gmra.mrb[0].mxu0 %v167
  %v206 = vpop.f32.mrb[0].mxu0
  %v207 = vadd.f32 %v119, %v206
  %v208 = vpop.f32.mrb[0].mxu0
  %v209 = vadd.f32 %v123, %v208
  %v210 = vpop.f32.mrb[0].mxu0
  %v211 = vadd.f32 %v119, %v210
  %v212 = vpop.f32.mrb[0].mxu0
  %v213 = vadd.f32 %v123, %v212
  %214 = vmatprep.mubr.bf16.mxu0 0
  %215 = vmatmul.mubr.bf16.gmra.mrb[0].mxu0 %v170
  %v216 = vpop.f32.mrb[0].mxu0
  %v217 = vadd.f32 %v119, %v216
  %v218 = vpop.f32.mrb[0].mxu0
  %v219 = vadd.f32 %v123, %v218
  %v220 = vpop.f32.mrb[0].mxu0
  %v221 = vadd.f32 %v119, %v220
  %v222 = vpop.f32.mrb[0].mxu0
  %v223 = vadd.f32 %v123, %v222
  %224 = vdwg.mxu0
  %v225 = vpack.c.bf16 %v211, %v207
  %v226 = vpack.c.bf16 %v213, %v209
  %v227 = vpack.c.bf16 %v221, %v217
  %v228 = vpack.c.bf16 %v223, %v219
  %v231 = vunpack.c.l.b16 %v225
  %v232 = vunpack.c.h.b16 %v225
  %v233 = vunpack.c.l.b16 %v227
  %v234 = vunpack.c.h.b16 %v227
  %v235 = vpack.c.b16 %v231, %v231
  %v236 = vpack.c.b16 %v232, %v232
  %v237 = vpack.c.b16 %v233, %v233
  %v238 = vpack.c.b16 %v234, %v234
  %vm243 = vcmask 519168
  %244 = vst.msk [vmem:[%s5] sm:$0xf] %vm243, %v235
  %245 = vst.msk [vmem:[%s5 + $0x4] sm:$0xf] %vm243, %v236
  %246 = vst.msk [vmem:[%s5 + $0x8] sm:$0xf] %vm243, %v237
  %247 = vst.msk [vmem:[%s5 + $0xc] sm:$0xf] %vm243, %v238
  %248 = vrot.lane.b32.xlu0 %v235, 64
  %v249 = vpop.permute.xlu0 %248
  %250 = vrot.lane.b32.xlu0 %v236, 64
  %v251 = vpop.permute.xlu0 %250
  %252 = vrot.lane.b32.xlu0 %v237, 64
  %v253 = vpop.permute.xlu0 %252
  %254 = vrot.lane.b32.xlu0 %v238, 64
  %v255 = vpop.permute.xlu0 %254
  %260 = vst.msk [vmem:[%s6] sm:$0xf] %vm243, %v249
  %261 = vst.msk [vmem:[%s6 + $0x4] sm:$0xf] %vm243, %v251
  %262 = vst.msk [vmem:[%s6 + $0x8] sm:$0xf] %vm243, %v253
  %263 = vst.msk [vmem:[%s6 + $0xc] sm:$0xf] %vm243, %v255
  %v266 = vunpack.c.l.b16 %v226
  %v267 = vunpack.c.h.b16 %v226
  %v268 = vunpack.c.l.b16 %v228
  %v269 = vunpack.c.h.b16 %v228
  %v270 = vpack.c.b16 %v266, %v266
  %v271 = vpack.c.b16 %v267, %v267
  %v272 = vpack.c.b16 %v268, %v268
  %v273 = vpack.c.b16 %v269, %v269
  %278 = vst.msk [vmem:[%s7] sm:$0xf] %vm243, %v270
  %279 = vst.msk [vmem:[%s7 + $0x4] sm:$0xf] %vm243, %v271
  %280 = vst.msk [vmem:[%s7 + $0x8] sm:$0xf] %vm243, %v272
  %281 = vst.msk [vmem:[%s7 + $0xc] sm:$0xf] %vm243, %v273
  // Predicated region
  $region22: #{_dense_forward.12} parent=0 // pred_check
    _
  $region23: #{_dense_forward.12} parent=0 // pred_check_branch
    %283 = sbr.rel (0) target = $region25
  $region24: #{_dense_forward.12} parent=0 // pred_region
    _
  $region25: #{_dense_forward.12} parent=0 // pred_fallthru
    _
  // Predicated region
  $region26: #{_dense_forward.12} parent=0 // pred_check
    _
  $region27: #{_dense_forward.12} parent=0 // pred_check_branch
    %285 = sbr.rel (0) target = $region29
  $region28: #{_dense_forward.12} parent=0 // pred_region
    _
  $region29: #{_dense_forward.12} parent=0 // pred_fallthru
    _
  // Predicated region
  $region30: #{_dense_forward.12} parent=0 // pred_check
    _
  $region31: #{_dense_forward.12} parent=0 // pred_check_branch
    %287 = sbr.rel (0) target = $region33
  $region32: #{_dense_forward.12} parent=0 // pred_region
    _
  $region33: #{_dense_forward.12} parent=0 // pred_fallthru
    _
  // Predicated region
  $region34: #{_dense_forward.12} parent=0 // pred_check
    _
  $region35: #{_dense_forward.12} parent=0 // pred_check_branch
    %289 = sbr.rel (0) target = $region37
  $region36: #{_dense_forward.12} parent=0 // pred_region
    _
  $region37: #{_dense_forward.12} parent=0 // pred_fallthru
    _
  // Predicated region
  $region38: #{_dense_forward.12} parent=0 // pred_check
    _
  $region39: #{_dense_forward.12} parent=0 // pred_check_branch
    %291 = sbr.rel (0) target = $region41
  $region40: #{_dense_forward.12} parent=0 // pred_region
    _
  $region41: #{_dense_forward.12} parent=0 // pred_fallthru
    _
  // Predicated region
  $region42: #{_dense_forward.12} parent=0 // pred_check
    _
  $region43: #{_dense_forward.12} parent=0 // pred_check_branch
    %293 = sbr.rel (0) target = $region45
  $region44: #{_dense_forward.12} parent=0 // pred_region
    _
  $region45: #{_dense_forward.12} parent=0 // pred_fallthru
    _

// kernel: _dense_forward.13
$region0: #{_dense_forward.13}
  #allocation0 [shape = 'u32[]', space=smem, size = 0x4, offset = 0x4, fixed_abs, tag = 'smem constant byte address 0x4 - core index']
  #allocation1 [shape = 'u32[144,128]{1,0:T(1,128)}', space=vmem, size = 0x12000, scoped, tag = 'internal scratch']
  %s0 = inlined_call_operand.vmem [shape: bf16[2,16,64], index: 0, kind: input, shape index: {}]
  %s1 = inlined_call_operand.vmem [shape: bf16[2,16,64], index: 1, kind: input, shape index: {}]
  %s2 = inlined_call_operand.vmem [shape: bf16[2,16,64], index: 2, kind: input, shape index: {}]
  %s3 = inlined_call_operand.vmem [shape: bf16[2,4,16,16], index: 3, kind: input, shape index: {}, may-alias: {3,5}]
  %s4 = inlined_call_operand.vmem [shape: f32[2,1,16], index: 4, kind: input, shape index: {}]
  %s5 = inlined_call_operand.vmem [shape: bf16[2,4,16,16], index: 5, kind: output, shape index: {0}, may-alias: {3,5}]
  %s6 = inlined_call_operand.vmem [shape: bf16[2,16,64], index: 6, kind: output, shape index: {1}]
  %7 = xla_tuple %s5, %s6
  %s8 = sld [smem:[#allocation0]]
  $region61: #{_dense_forward.13} parent=0
    _
  %s10 = ssub.s32 1, %s8
  %s11 = scalar_select 0, %s10, %s8
  loop: start=0, step=1, limit=4
  $region2: #{_dense_forward.13} parent=0 // loop_pre_header
    _
  $region3: #{_dense_forward.13} parent=0 // loop_header
    %s13 = sphi 0, %s17
    %p14 = scmp.ge.s32.totalorder %s13, 4
    %s20 = sphi 0, %s32
    %s21 = sphi 0, %s28
    %s22 = sphi 0, %s20
    %s23 = sphi 0, %s21
    %s24 = sphi 0, %s22
    %s25 = sphi 0, %s23
    %s37 = sphi 0, %s39
    %s40 = sphi 0, %s37
    %s41 = sphi 0, %s40
    %s57 = sphi 0, %s41
    %s63 = sphi 0, %s65
    %s66 = sphi 0, %s63
    %s67 = sphi 0, %s66
    %s83 = sphi 0, %s67
    %s89 = sphi 0, %s91
    %s92 = sphi 0, %s89
    %s93 = sphi 0, %s92
    %s109 = sphi 0, %s93
    %s117 = sphi 0, %s119
    %s120 = sphi 0, %s117
    %s121 = sphi 0, %s120
    %s137 = sphi 0, %s121
    %s143 = sphi 0, %s145
    %s146 = sphi 0, %s143
    %s147 = sphi 0, %s146
    %s163 = sphi 0, %s147
    %s171 = sphi 0, %s173
    %s174 = sphi 0, %s171
    %s175 = sphi 0, %s174
    %s191 = sphi 0, %s175
    %s199 = sphi 0, %s201
    %s202 = sphi 0, %s199
    %s203 = sphi 0, %s202
    %s219 = sphi 0, %s203
  $region4: #{_dense_forward.13} parent=0 // loop_header_branch
    %16 = sbr.rel (%p14) target = $region8
  $region5: #{_dense_forward.13} parent=0 // loop_body
    %s18 = ssub.s32 %s13, 1
    %s19 = ssub.s32 %s13, 2
    %s26 = sadd.s32 1, %s21
    %p27 = scmp.ge.s32.totalorder %s26, 1
    %s28 = scalar_select %p27, 0, %s26
    %s29 = sadd.s32 1, %s20
    %s30 = scalar_select %p27, %s29, %s20
    %p31 = scmp.ge.s32.totalorder %s30, 2
    %s32 = scalar_select %p31, 0, %s30
    %s33 = ssub.s32 %s20, %s32
    %s34 = ssub.s32 %s21, %s28
    %s35 = sor.u32 %s33, %s34
    %p36 = scmp.eq.s32.totalorder %s35, 0
    %s38 = sadd.s32 %s37, 1
    %s39 = scalar_select %p36, %s37, %s38
    %p42 = pneg %p36
    %p43 = scmp.eq.s32.totalorder %s13, 1
    %p44 = por %p42, %p43
    %p45 = scmp.ne.s32.totalorder %s37, %s40
    %p46 = scmp.eq.s32.totalorder %s13, 0
    %p47 = por %p45, %p46
    %p48 = scmp.ne.s32.totalorder %s37, %s40
    %p49 = scmp.eq.s32.totalorder %s18, 1
    %p50 = por %p48, %p49
    %p51 = scmp.ne.s32.totalorder %s40, %s41
    %p52 = scmp.eq.s32.totalorder %s18, 0
    %p53 = por %p51, %p52
    %p54 = scmp.ne.s32.totalorder %s40, %s41
    %p55 = scmp.eq.s32.totalorder %s19, 1
    %p56 = por %p54, %p55
    %p58 = scmp.ne.s32.totalorder %s41, %s57
    %p59 = scmp.eq.s32.totalorder %s19, 0
    %p60 = por %p58, %p59
    %s61 = ssub.s32 %s20, %s32
    %p62 = scmp.eq.s32.totalorder %s61, 0
    %s64 = sadd.s32 %s63, 1
    %s65 = scalar_select %p62, %s63, %s64
    %p68 = pneg %p62
    %p69 = scmp.eq.s32.totalorder %s13, 1
    %p70 = por %p68, %p69
    %p71 = scmp.ne.s32.totalorder %s63, %s66
    %p72 = scmp.eq.s32.totalorder %s13, 0
    %p73 = por %p71, %p72
    %p74 = scmp.ne.s32.totalorder %s63, %s66
    %p75 = scmp.eq.s32.totalorder %s18, 1
    %p76 = por %p74, %p75
    %p77 = scmp.ne.s32.totalorder %s66, %s67
    %p78 = scmp.eq.s32.totalorder %s18, 0
    %p79 = por %p77, %p78
    %p80 = scmp.ne.s32.totalorder %s66, %s67
    %p81 = scmp.eq.s32.totalorder %s19, 1
    %p82 = por %p80, %p81
    %p84 = scmp.ne.s32.totalorder %s67, %s83
    %p85 = scmp.eq.s32.totalorder %s19, 0
    %p86 = por %p84, %p85
    %s87 = ssub.s32 %s20, %s32
    %p88 = scmp.eq.s32.totalorder %s87, 0
    %s90 = sadd.s32 %s89, 1
    %s91 = scalar_select %p88, %s89, %s90
    %p94 = pneg %p88
    %p95 = scmp.eq.s32.totalorder %s13, 1
    %p96 = por %p94, %p95
    %p97 = scmp.ne.s32.totalorder %s89, %s92
    %p98 = scmp.eq.s32.totalorder %s13, 0
    %p99 = por %p97, %p98
    %p100 = scmp.ne.s32.totalorder %s89, %s92
    %p101 = scmp.eq.s32.totalorder %s18, 1
    %p102 = por %p100, %p101
    %p103 = scmp.ne.s32.totalorder %s92, %s93
    %p104 = scmp.eq.s32.totalorder %s18, 0
    %p105 = por %p103, %p104
    %p106 = scmp.ne.s32.totalorder %s92, %s93
    %p107 = scmp.eq.s32.totalorder %s19, 1
    %p108 = por %p106, %p107
    %p110 = scmp.ne.s32.totalorder %s93, %s109
    %p111 = scmp.eq.s32.totalorder %s19, 0
    %p112 = por %p110, %p111
    %s113 = ssub.s32 %s20, %s32
    %s114 = ssub.s32 %s21, %s28
    %s115 = sor.u32 %s113, %s114
    %p116 = scmp.eq.s32.totalorder %s115, 0
    %s118 = sadd.s32 %s117, 1
    %s119 = scalar_select %p116, %s117, %s118
    %p122 = pneg %p116
    %p123 = scmp.eq.s32.totalorder %s13, 1
    %p124 = por %p122, %p123
    %p125 = scmp.ne.s32.totalorder %s117, %s120
    %p126 = scmp.eq.s32.totalorder %s13, 0
    %p127 = por %p125, %p126
    %p128 = scmp.ne.s32.totalorder %s117, %s120
    %p129 = scmp.eq.s32.totalorder %s18, 1
    %p130 = por %p128, %p129
    %p131 = scmp.ne.s32.totalorder %s120, %s121
    %p132 = scmp.eq.s32.totalorder %s18, 0
    %p133 = por %p131, %p132
    %p134 = scmp.ne.s32.totalorder %s120, %s121
    %p135 = scmp.eq.s32.totalorder %s19, 1
    %p136 = por %p134, %p135
    %p138 = scmp.ne.s32.totalorder %s121, %s137
    %p139 = scmp.eq.s32.totalorder %s19, 0
    %p140 = por %p138, %p139
    %s141 = ssub.s32 %s20, %s32
    %p142 = scmp.eq.s32.totalorder %s141, 0
    %s144 = sadd.s32 %s143, 1
    %s145 = scalar_select %p142, %s143, %s144
    %p148 = pneg %p142
    %p149 = scmp.eq.s32.totalorder %s13, 1
    %p150 = por %p148, %p149
    %p151 = scmp.ne.s32.totalorder %s143, %s146
    %p152 = scmp.eq.s32.totalorder %s13, 0
    %p153 = por %p151, %p152
    %p154 = scmp.ne.s32.totalorder %s143, %s146
    %p155 = scmp.eq.s32.totalorder %s18, 1
    %p156 = por %p154, %p155
    %p157 = scmp.ne.s32.totalorder %s146, %s147
    %p158 = scmp.eq.s32.totalorder %s18, 0
    %p159 = por %p157, %p158
    %p160 = scmp.ne.s32.totalorder %s146, %s147
    %p161 = scmp.eq.s32.totalorder %s19, 1
    %p162 = por %p160, %p161
    %p164 = scmp.ne.s32.totalorder %s147, %s163
    %p165 = scmp.eq.s32.totalorder %s19, 0
    %p166 = por %p164, %p165
    %s167 = ssub.s32 %s20, %s32
    %s168 = ssub.s32 %s21, %s28
    %s169 = sor.u32 %s167, %s168
    %p170 = scmp.eq.s32.totalorder %s169, 0
    %s172 = sadd.s32 %s171, 1
    %s173 = scalar_select %p170, %s171, %s172
    %p176 = pneg %p170
    %p177 = scmp.eq.s32.totalorder %s13, 1
    %p178 = por %p176, %p177
    %p179 = scmp.ne.s32.totalorder %s171, %s174
    %p180 = scmp.eq.s32.totalorder %s13, 0
    %p181 = por %p179, %p180
    %p182 = scmp.ne.s32.totalorder %s171, %s174
    %p183 = scmp.eq.s32.totalorder %s18, 1
    %p184 = por %p182, %p183
    %p185 = scmp.ne.s32.totalorder %s174, %s175
    %p186 = scmp.eq.s32.totalorder %s18, 0
    %p187 = por %p185, %p186
    %p188 = scmp.ne.s32.totalorder %s174, %s175
    %p189 = scmp.eq.s32.totalorder %s19, 1
    %p190 = por %p188, %p189
    %p192 = scmp.ne.s32.totalorder %s175, %s191
    %p193 = scmp.eq.s32.totalorder %s19, 0
    %p194 = por %p192, %p193
    %s195 = ssub.s32 %s20, %s32
    %s196 = ssub.s32 %s21, %s28
    %s197 = sor.u32 %s195, %s196
    %p198 = scmp.eq.s32.totalorder %s197, 0
    %s200 = sadd.s32 %s199, 1
    %s201 = scalar_select %p198, %s199, %s200
    %p204 = pneg %p198
    %p205 = scmp.eq.s32.totalorder %s13, 1
    %p206 = por %p204, %p205
    %p207 = scmp.ne.s32.totalorder %s199, %s202
    %p208 = scmp.eq.s32.totalorder %s13, 0
    %p209 = por %p207, %p208
    %p210 = scmp.ne.s32.totalorder %s199, %s202
    %p211 = scmp.eq.s32.totalorder %s18, 1
    %p212 = por %p210, %p211
    %p213 = scmp.ne.s32.totalorder %s202, %s203
    %p214 = scmp.eq.s32.totalorder %s18, 0
    %p215 = por %p213, %p214
    %p216 = scmp.ne.s32.totalorder %s202, %s203
    %p217 = scmp.eq.s32.totalorder %s19, 1
    %p218 = por %p216, %p217
    %p220 = scmp.ne.s32.totalorder %s203, %s219
    %p221 = scmp.eq.s32.totalorder %s19, 0
    %p222 = por %p220, %p221
    %p223 = scmp.le.s32.totalorder 1, %s13
    %p224 = scmp.lt.s32.totalorder %s13, 3
    %p225 = pnand %p223, %p224
    %p226 = pneg %p225
    // Predicated region
    $region9: #{_dense_forward.13} parent=5 // pred_check
      _
    $region10: #{_dense_forward.13} parent=5 // pred_check_branch
      %228 = sbr.rel (%p225) target = $region12
    $region11: #{_dense_forward.13} parent=5 // pred_region
      %s229 = ssub.s32 %s13, 1
    $region12: #{_dense_forward.13} parent=5 // pred_fallthru
      _
    %p230 = scmp.lt.s32.totalorder %s13, 2
    // Predicated region
    $region13: #{_dense_forward.13} parent=5 // pred_check
      %p231 = pneg %p230
    $region14: #{_dense_forward.13} parent=5 // pred_check_branch
      %233 = sbr.rel (%p231) target = $region16
    $region15: #{_dense_forward.13} parent=5 // pred_region
      // Predicated region
      $region17: #{_dense_forward.13} parent=15 // pred_check
        %p234 = pneg %p47
      $region18: #{_dense_forward.13} parent=15 // pred_check_branch
        %236 = sbr.rel (%p234) target = $region20
      $region19: #{_dense_forward.13} parent=15 // pred_region
        %s237 = smul.u32 2, %s21
        %p238 = scmp.lt.s32.totalorder %s20, 1
        %s239 = scalar_select %p238, %s20, 1
        %p240 = scmp.lt.s32.totalorder %s237, 1
        %s241 = scalar_select %p240, %s237, 1
        %s242 = smul.addr %s239, 2
        %s243 = sadd.s32 %s241, %s242
        %s244 = smul.addr %s243, 4
        %s245 = scalar_lea.vmem %s0, %s244
        %s246 = smul.u32 2, %s21
      $region20: #{_dense_forward.13} parent=15 // pred_fallthru
        _
      // Predicated region
      $region21: #{_dense_forward.13} parent=15 // pred_check
        %p247 = pneg %p73
      $region22: #{_dense_forward.13} parent=15 // pred_check_branch
        %249 = sbr.rel (%p247) target = $region24
      $region23: #{_dense_forward.13} parent=15 // pred_region
        %p250 = scmp.lt.s32.totalorder %s20, 1
        %s251 = scalar_select %p250, %s20, 1
        %s252 = smul.addr %s251, 2
        %s253 = smul.addr %s252, 4
        %s254 = scalar_lea.vmem %s1, %s253
      $region24: #{_dense_forward.13} parent=15 // pred_fallthru
        _
      // Predicated region
      $region25: #{_dense_forward.13} parent=15 // pred_check
        %p255 = pneg %p99
      $region26: #{_dense_forward.13} parent=15 // pred_check_branch
        %257 = sbr.rel (%p255) target = $region28
      $region27: #{_dense_forward.13} parent=15 // pred_region
        %p258 = scmp.lt.s32.totalorder %s20, 1
        %s259 = scalar_select %p258, %s20, 1
        %s260 = smul.addr %s259, 2
        %s261 = smul.addr %s260, 4
        %s262 = scalar_lea.vmem %s2, %s261
      $region28: #{_dense_forward.13} parent=15 // pred_fallthru
        _
      // Predicated region
      $region29: #{_dense_forward.13} parent=15 // pred_check
        %p263 = pneg %p127
      $region30: #{_dense_forward.13} parent=15 // pred_check_branch
        %265 = sbr.rel (%p263) target = $region32
      $region31: #{_dense_forward.13} parent=15 // pred_region
        %s266 = smul.u32 2, %s21
        %p267 = scmp.lt.s32.totalorder %s20, 1
        %s268 = scalar_select %p267, %s20, 1
        %p269 = scmp.lt.s32.totalorder %s266, 1
        %s270 = scalar_select %p269, %s266, 1
        %s271 = smul.addr %s268, 8
        %s272 = sadd.s32 %s270, %s271
        %s273 = smul.addr %s272, 4
        %s274 = scalar_lea.vmem %s3, %s273
        %s275 = smul.u32 2, %s21
      $region32: #{_dense_forward.13} parent=15 // pred_fallthru
        _
      // Predicated region
      $region33: #{_dense_forward.13} parent=15 // pred_check
        %p276 = pneg %p153
      $region34: #{_dense_forward.13} parent=15 // pred_check_branch
        %278 = sbr.rel (%p276) target = $region36
      $region35: #{_dense_forward.13} parent=15 // pred_region
        %p279 = scmp.lt.s32.totalorder %s20, 1
        %s280 = scalar_select %p279, %s20, 1
        %s281 = scalar_lea.vmem %s4, %s280
      $region36: #{_dense_forward.13} parent=15 // pred_fallthru
        _
    $region16: #{_dense_forward.13} parent=5 // pred_fallthru
      _
    %p282 = scmp.le.s32.totalorder 1, %s13
    %p283 = scmp.lt.s32.totalorder %s13, 3
    %p284 = pnand %p282, %p283
    %p285 = pneg %p284
    // Predicated region
    $region37: #{_dense_forward.13} parent=5 // pred_check
      _
    $region38: #{_dense_forward.13} parent=5 // pred_check_branch
      %287 = sbr.rel (%p284) target = $region40
    $region39: #{_dense_forward.13} parent=5 // pred_region
      %s288 = ssub.s32 %s13, 1
      %s289 = smul.u32 2, %s23
      %p290 = scmp.lt.s32.totalorder %s22, 1
      %s291 = scalar_select %p290, %s22, 1
      %p292 = scmp.lt.s32.totalorder %s289, 1
      %s293 = scalar_select %p292, %s289, 1
      %s294 = smul.addr %s291, 2
      %s295 = sadd.s32 %s293, %s294
      %s296 = smul.addr %s295, 4
      %s297 = scalar_lea.vmem %s0, %s296
      %p298 = pneg %p53
      %p299 = pneg %p50
      %p300 = scmp.lt.s32.totalorder %s22, 1
      %s301 = scalar_select %p300, %s22, 1
      %s302 = smul.addr %s301, 2
      %s303 = smul.addr %s302, 4
      %s304 = scalar_lea.vmem %s1, %s303
      %p305 = pneg %p79
      %p306 = pneg %p76
      %p307 = scmp.lt.s32.totalorder %s22, 1
      %s308 = scalar_select %p307, %s22, 1
      %s309 = smul.addr %s308, 2
      %s310 = smul.addr %s309, 4
      %s311 = scalar_lea.vmem %s2, %s310
      %p312 = pneg %p105
      %p313 = pneg %p102
      %s314 = smul.u32 2, %s23
      %p315 = scmp.lt.s32.totalorder %s22, 1
      %s316 = scalar_select %p315, %s22, 1
      %p317 = scmp.lt.s32.totalorder %s314, 1
      %s318 = scalar_select %p317, %s314, 1
      %s319 = smul.addr %s316, 8
      %s320 = sadd.s32 %s318, %s319
      %s321 = smul.addr %s320, 4
      %s322 = scalar_lea.vmem %s3, %s321
      %p323 = pneg %p133
      %p324 = pneg %p130
      %p325 = scmp.lt.s32.totalorder %s22, 1
      %s326 = scalar_select %p325, %s22, 1
      %s327 = scalar_lea.vmem %s4, %s326
      %p328 = pneg %p159
      %p329 = pneg %p156
      %p330 = pneg %p187
      %p331 = pneg %p184
      %s332 = smul.u32 2, %s23
      %p333 = scmp.lt.s32.totalorder %s22, 1
      %s334 = scalar_select %p333, %s22, 1
      %p335 = scmp.lt.s32.totalorder %s332, 1
      %s336 = scalar_select %p335, %s332, 1
      %s337 = smul.addr %s334, 8
      %s338 = sadd.s32 %s336, %s337
      %s339 = smul.addr %s338, 4
      %s340 = scalar_lea.vmem %s5, %s339
      %p341 = pneg %p215
      %p342 = pneg %p212
      %s343 = smul.u32 2, %s23
      %p344 = scmp.lt.s32.totalorder %s22, 1
      %s345 = scalar_select %p344, %s22, 1
      %p346 = scmp.lt.s32.totalorder %s343, 1
      %s347 = scalar_select %p346, %s343, 1
      %s348 = smul.addr %s345, 2
      %s349 = sadd.s32 %s347, %s348
      %s350 = smul.addr %s349, 4
      %s351 = scalar_lea.vmem %s6, %s350
      %s352 = smul.u32 2, %s23
      %p353 = scmp.lt.s32.totalorder %s22, 1
      %s354 = scalar_select %p353, %s22, 1
      %p355 = scmp.lt.s32.totalorder %s352, 1
      %s356 = scalar_select %p355, %s352, 1
      %s357 = smul.addr %s354, 2
      %s358 = sadd.s32 %s356, %s357
      %s359 = smul.addr %s358, 4
      %s360 = scalar_lea.vmem %s0, %s359
      %s361 = smul.u32 2, %s23
      %p362 = scmp.lt.s32.totalorder %s22, 1
      %s363 = scalar_select %p362, %s22, 1
      %s364 = smul.addr %s363, 2
      %s365 = smul.addr %s364, 4
      %s366 = scalar_lea.vmem %s1, %s365
      %p367 = scmp.lt.s32.totalorder %s22, 1
      %s368 = scalar_select %p367, %s22, 1
      %s369 = smul.addr %s368, 2
      %s370 = smul.addr %s369, 4
      %s371 = scalar_lea.vmem %s2, %s370
      %s372 = smul.u32 2, %s23
      %p373 = scmp.lt.s32.totalorder %s22, 1
      %s374 = scalar_select %p373, %s22, 1
      %p375 = scmp.lt.s32.totalorder %s372, 1
      %s376 = scalar_select %p375, %s372, 1
      %s377 = smul.addr %s374, 8
      %s378 = sadd.s32 %s376, %s377
      %s379 = smul.addr %s378, 4
      %s380 = scalar_lea.vmem %s3, %s379
      %s381 = smul.u32 2, %s23
      %p382 = scmp.lt.s32.totalorder %s22, 1
      %s383 = scalar_select %p382, %s22, 1
      %s384 = scalar_lea.vmem %s4, %s383
      %s385 = smul.u32 2, %s23
      %p386 = scmp.lt.s32.totalorder %s22, 1
      %s387 = scalar_select %p386, %s22, 1
      %p388 = scmp.lt.s32.totalorder %s385, 1
      %s389 = scalar_select %p388, %s385, 1
      %s390 = smul.addr %s387, 8
      %s391 = sadd.s32 %s389, %s390
      %s392 = smul.addr %s391, 4
      %s393 = scalar_lea.vmem %s5, %s392
      %s394 = smul.u32 2, %s23
      %s395 = smul.u32 2, %s23
      %p396 = scmp.lt.s32.totalorder %s22, 1
      %s397 = scalar_select %p396, %s22, 1
      %p398 = scmp.lt.s32.totalorder %s395, 1
      %s399 = scalar_select %p398, %s395, 1
      %s400 = smul.addr %s397, 2
      %s401 = sadd.s32 %s399, %s400
      %s402 = smul.addr %s401, 4
      %s403 = scalar_lea.vmem %s6, %s402
      %s404 = smul.u32 2, %s23
      %v406 = vld [vmem:[%s360] sm:$0xf]
      %v407 = vld [vmem:[%s360 + $0x4] sm:$0xf]
      %v408 = vld [vmem:[%s366] sm:$0xf]
      %v409 = vld [vmem:[%s366 + $0x4] sm:$0xf]
      %v410 = vld [vmem:[%s371] sm:$0xf]
      %v411 = vld [vmem:[%s371 + $0x4] sm:$0xf]
      %v412 = vld [vmem:[%s384] sm:$0x1]
      %v413 = vld [vmem:[%s380] sm:$0xf]
      %v414 = vld [vmem:[%s380 + $0x4] sm:$0xf]
      %v415 = vunpack.c.l.bf16 %v413
      %v416 = vunpack.c.l.bf16 %v414
      %v419 = vunpack.c.l.b16 %v406
      %v420 = vunpack.c.l.b16 %v407
      %v421 = vpack.c.b16 %v420, %v419
      %v424 = vunpack.c.l.b16 %v408
      %v425 = vunpack.c.l.b16 %v409
      %v426 = vpack.c.b16 %v425, %v424
      %vm427 = vcmask 130048
      %v429 = vsel %vm427, %v421, 0
      %v432 = vsel %vm427, %v426, 0
      %434 = vmatprep.subr.bf16.mxu0 0
      %435 = vmatpush1.bf16.xpose.msra.mxu0 %v432
      %436 = vmatprep.subr.bf16.mxu0 0
      %437 = vmatpush1.bf16.xpose.msra.mxu0 0
      %438 = vmatprep.subr.bf16.mxu0 0
      %439 = vmatpush1.bf16.xpose.msra.mxu0 0
      %440 = vmatprep.subr.bf16.mxu0 0
      %441 = vmatpush1.bf16.xpose.msra.mxu0 0
      %442 = vmatprep.subr.bf16.mxu0 0
      %443 = vmatpush1.bf16.xpose.msra.mxu0 0
      %444 = vmatprep.subr.bf16.mxu0 0
      %445 = vmatpush1.bf16.xpose.msra.mxu0 0
      %446 = vmatprep.subr.bf16.mxu0 0
      %447 = vmatpush1.bf16.xpose.msra.mxu0 0
      %448 = vmatprep.subr.bf16.mxu0 0
      %449 = vmatpush1.bf16.xpose.msra.mxu0 0
      %450 = vmatprep.subr.bf16.mxu0 0
      %451 = vmatpush1.bf16.xpose.msra.mxu0 0
      %452 = vmatprep.subr.bf16.mxu0 0
      %453 = vmatpush1.bf16.xpose.msra.mxu0 0
      %454 = vmatprep.subr.bf16.mxu0 0
      %455 = vmatpush1.bf16.xpose.msra.mxu0 0
      %456 = vmatprep.subr.bf16.mxu0 0
      %457 = vmatpush1.bf16.xpose.msra.mxu0 0
      %458 = vmatprep.subr.bf16.mxu0 0
      %459 = vmatpush1.bf16.xpose.msra.mxu0 0
      %460 = vmatprep.subr.bf16.mxu0 0
      %461 = vmatpush1.bf16.xpose.msra.mxu0 0
      %462 = vmatprep.subr.bf16.mxu0 0
      %463 = vmatpush1.bf16.xpose.msra.mxu0 0
      %464 = vmatprep.subr.bf16.mxu0 0
      %465 = vmatpush1.bf16.xpose.msra.mxu0 0
      %466 = vmatprep.mubr.bf16.mxu0 0
      %467 = vmatmul.mubr.bf16.gmra.mrb[0].mxu0 %v429
      %v468 = vpop.f32.mrb[0].mxu0
      %v469 = vadd.f32 %v415, %v468
      %v470 = vpop.f32.mrb[0].mxu0
      %v471 = vpop.f32.mrb[0].mxu0
      %v472 = vadd.f32 %v416, %v471
      %v473 = vpop.f32.mrb[0].mxu0
      %474 = vdwg.mxu0
      %v476 = vlaneseq
      %v477 = vshrl.u32 %v476, 7
      %v478 = vsub.s32 0, %v477
      %v479 = vrot.slane %v412, %v478
      %v481 = vadd.f32 %v469, %v479
      %v482 = vadd.f32 %v472, %v479
      %v483 = vpack.c.bf16 %v482, %v481
      %v485 = vunpack.c.l.b16 %v483
      %v486 = vunpack.c.h.b16 %v483
      %v487 = vpack.c.b16 %v485, %v485
      %v488 = vpack.c.b16 %v486, %v486
      %vm491 = vcmask 125952
      %492 = vst.msk [vmem:[%s393] sm:$0xf] %vm491, %v487
      %493 = vst.msk [vmem:[%s393 + $0x4] sm:$0xf] %vm491, %v488
      %v494 = vsel %vm427, %v481, -inf
      %495 = vmax.xlane.f32.xlu0 %v494
      %v496 = vpop.xlane.xlu0 %495
      %v497 = vsel %vm427, %v482, -inf
      %498 = vmax.xlane.f32.xlu0 %v497
      %v499 = vpop.xlane.xlu0 %498
      %v500 = vmax.f32 %v496, -1e+30
      %v501 = vmax.f32 %v499, -1e+30
      %v502 = vsub.f32 %v481, %v500
      %v503 = vsub.f32 %v482, %v501
      %v504 = vmul.f32 %v502, 1.442695
      %v505 = vpow.pop %v504
      %v506 = vmul.f32 %v503, 1.442695
      %v507 = vpow.pop %v506
      %v508 = vsel %vm427, %v505, 0.0
      %509 = vadd.xlane.f32.xlu0 %v508
      %v510 = vpop.xlane.xlu0 %509
      %v511 = vsel %vm427, %v507, 0.0
      %512 = vadd.xlane.f32.xlu0 %v511
      %v513 = vpop.xlane.xlu0 %512
      %v514 = vmax.f32 %v510, 1e-30
      %v515 = vmax.f32 %v513, 1e-30
      %v516 = vpack.c.bf16 %v507, %v505
      %v519 = vunpack.c.l.b16 %v410
      %v520 = vunpack.c.l.b16 %v411
      %v521 = vpack.c.b16 %v520, %v519
      %v524 = vsel %vm427, %v516, 0
      %526 = vmatprep.subr.bf16.mxu0 0
      %527 = vmatpush1.bf16.msra.mxu0 %v521
      %528 = vmatprep.subr.bf16.mxu0 0
      %529 = vmatpush1.bf16.msra.mxu0 0
      %530 = vmatprep.subr.bf16.mxu0 0
      %531 = vmatpush1.bf16.msra.mxu0 0
      %532 = vmatprep.subr.bf16.mxu0 0
      %533 = vmatpush1.bf16.msra.mxu0 0
      %534 = vmatprep.subr.bf16.mxu0 0
      %535 = vmatpush1.bf16.msra.mxu0 0
      %536 = vmatprep.subr.bf16.mxu0 0
      %537 = vmatpush1.bf16.msra.mxu0 0
      %538 = vmatprep.subr.bf16.mxu0 0
      %539 = vmatpush1.bf16.msra.mxu0 0
      %540 = vmatprep.subr.bf16.mxu0 0
      %541 = vmatpush1.bf16.msra.mxu0 0
      %542 = vmatprep.subr.bf16.mxu0 0
      %543 = vmatpush1.bf16.msra.mxu0 0
      %544 = vmatprep.subr.bf16.mxu0 0
      %545 = vmatpush1.bf16.msra.mxu0 0
      %546 = vmatprep.subr.bf16.mxu0 0
      %547 = vmatpush1.bf16.msra.mxu0 0
      %548 = vmatprep.subr.bf16.mxu0 0
      %549 = vmatpush1.bf16.msra.mxu0 0
      %550 = vmatprep.subr.bf16.mxu0 0
      %551 = vmatpush1.bf16.msra.mxu0 0
      %552 = vmatprep.subr.bf16.mxu0 0
      %553 = vmatpush1.bf16.msra.mxu0 0
      %554 = vmatprep.subr.bf16.mxu0 0
      %555 = vmatpush1.bf16.msra.mxu0 0
      %556 = vmatprep.subr.bf16.mxu0 0
      %557 = vmatpush1.bf16.msra.mxu0 0
      %558 = vmatprep.mubr.bf16.mxu0 0
      %559 = vmatmul.mubr.bf16.gmra.mrb[0].mxu0 %v524
      %v560 = vpop.f32.mrb[0].mxu0
      %v561 = vadd.f32 0.0, %v560
      %v562 = vpop.f32.mrb[0].mxu0
      %v563 = vpop.f32.mrb[0].mxu0
      %v564 = vadd.f32 0.0, %v563
      %v565 = vpop.f32.mrb[0].mxu0
      %566 = vdwg.mxu0
      %v567 = vrcp.pop %v514
      %v568 = vrcp.pop %v515
      %v569 = vmul.f32 %v561, %v567
      %v570 = vmul.f32 %v564, %v568
      %s571 = scalar_lea.vmem %s380, 8
      %v572 = vld [vmem:[%s571] sm:$0xf]
      %v573 = vld [vmem:[%s571 + $0x4] sm:$0xf]
      %v574 = vunpack.c.l.bf16 %v572
      %v575 = vunpack.c.l.bf16 %v573
      %576 = vrot.lane.b32.xlu0 %v421, 112
      %v577 = vpop.permute.xlu0 %576
      %578 = vrot.lane.b32.xlu0 %v426, 112
      %v579 = vpop.permute.xlu0 %578
      %v581 = vsel %vm427, %v577, 0
      %v584 = vsel %vm427, %v579, 0
      %586 = vmatprep.subr.bf16.mxu0 0
      %587 = vmatpush1.bf16.xpose.msra.mxu0 %v584
      %588 = vmatprep.subr.bf16.mxu0 0
      %589 = vmatpush1.bf16.xpose.msra.mxu0 0
      %590 = vmatprep.subr.bf16.mxu0 0
      %591 = vmatpush1.bf16.xpose.msra.mxu0 0
      %592 = vmatprep.subr.bf16.mxu0 0
      %593 = vmatpush1.bf16.xpose.msra.mxu0 0
      %594 = vmatprep.subr.bf16.mxu0 0
      %595 = vmatpush1.bf16.xpose.msra.mxu0 0
      %596 = vmatprep.subr.bf16.mxu0 0
      %597 = vmatpush1.bf16.xpose.msra.mxu0 0
      %598 = vmatprep.subr.bf16.mxu0 0
      %599 = vmatpush1.bf16.xpose.msra.mxu0 0
      %600 = vmatprep.subr.bf16.mxu0 0
      %601 = vmatpush1.bf16.xpose.msra.mxu0 0
      %602 = vmatprep.subr.bf16.mxu0 0
      %603 = vmatpush1.bf16.xpose.msra.mxu0 0
      %604 = vmatprep.subr.bf16.mxu0 0
      %605 = vmatpush1.bf16.xpose.msra.mxu0 0
      %606 = vmatprep.subr.bf16.mxu0 0
      %607 = vmatpush1.bf16.xpose.msra.mxu0 0
      %608 = vmatprep.subr.bf16.mxu0 0
      %609 = vmatpush1.bf16.xpose.msra.mxu0 0
      %610 = vmatprep.subr.bf16.mxu0 0
      %611 = vmatpush1.bf16.xpose.msra.mxu0 0
      %612 = vmatprep.subr.bf16.mxu0 0
      %613 = vmatpush1.bf16.xpose.msra.mxu0 0
      %614 = vmatprep.subr.bf16.mxu0 0
      %615 = vmatpush1.bf16.xpose.msra.mxu0 0
      %616 = vmatprep.subr.bf16.mxu0 0
      %617 = vmatpush1.bf16.xpose.msra.mxu0 0
      %618 = vmatprep.mubr.bf16.mxu0 0
      %619 = vmatmul.mubr.bf16.gmra.mrb[0].mxu0 %v581
      %v620 = vpop.f32.mrb[0].mxu0
      %v621 = vadd.f32 %v574, %v620
      %v622 = vpop.f32.mrb[0].mxu0
      %v623 = vpop.f32.mrb[0].mxu0
      %v624 = vadd.f32 %v575, %v623
      %v625 = vpop.f32.mrb[0].mxu0
      %626 = vdwg.mxu0
      %v627 = vadd.f32 %v621, %v479
      %v628 = vadd.f32 %v624, %v479
      %v629 = vpack.c.bf16 %v628, %v627
      %v631 = vunpack.c.l.b16 %v629
      %v632 = vunpack.c.h.b16 %v629
      %v633 = vpack.c.b16 %v631, %v631
      %v634 = vpack.c.b16 %v632, %v632
      %s637 = scalar_lea.vmem %s393, 8
      %638 = vst.msk [vmem:[%s637] sm:$0xf] %vm491, %v633
      %639 = vst.msk [vmem:[%s637 + $0x4] sm:$0xf] %vm491, %v634
      %v640 = vsel %vm427, %v627, -inf
      %641 = vmax.xlane.f32.xlu0 %v640
      %v642 = vpop.xlane.xlu0 %641
      %v643 = vsel %vm427, %v628, -inf
      %644 = vmax.xlane.f32.xlu0 %v643
      %v645 = vpop.xlane.xlu0 %644
      %v646 = vmax.f32 %v642, -1e+30
      %v647 = vmax.f32 %v645, -1e+30
      %v648 = vsub.f32 %v627, %v646
      %v649 = vsub.f32 %v628, %v647
      %v650 = vmul.f32 %v648, 1.442695
      %v651 = vpow.pop %v650
      %v652 = vmul.f32 %v649, 1.442695
      %v653 = vpow.pop %v652
      %v654 = vsel %vm427, %v651, 0.0
      %655 = vadd.xlane.f32.xlu0 %v654
      %v656 = vpop.xlane.xlu0 %655
      %v657 = vsel %vm427, %v653, 0.0
      %658 = vadd.xlane.f32.xlu0 %v657
      %v659 = vpop.xlane.xlu0 %658
      %v660 = vmax.f32 %v656, 1e-30
      %v661 = vmax.f32 %v659, 1e-30
      %v662 = vpack.c.bf16 %v653, %v651
      %663 = vrot.lane.b32.xlu0 %v521, 112
      %v664 = vpop.permute.xlu0 %663
      %v667 = vsel %vm427, %v662, 0
      %669 = vmatprep.subr.bf16.mxu0 0
      %670 = vmatpush1.bf16.msra.mxu0 %v664
      %671 = vmatprep.subr.bf16.mxu0 0
      %672 = vmatpush1.bf16.msra.mxu0 0
      %673 = vmatprep.subr.bf16.mxu0 0
      %674 = vmatpush1.bf16.msra.mxu0 0
      %675 = vmatprep.subr.bf16.mxu0 0
      %676 = vmatpush1.bf16.msra.mxu0 0
      %677 = vmatprep.subr.bf16.mxu0 0
      %678 = vmatpush1.bf16.msra.mxu0 0
      %679 = vmatprep.subr.bf16.mxu0 0
      %680 = vmatpush1.bf16.msra.mxu0 0
      %681 = vmatprep.subr.bf16.mxu0 0
      %682 = vmatpush1.bf16.msra.mxu0 0
      %683 = vmatprep.subr.bf16.mxu0 0
      %684 = vmatpush1.bf16.msra.mxu0 0
      %685 = vmatprep.subr.bf16.mxu0 0
      %686 = vmatpush1.bf16.msra.mxu0 0
      %687 = vmatprep.subr.bf16.mxu0 0
      %688 = vmatpush1.bf16.msra.mxu0 0
      %689 = vmatprep.subr.bf16.mxu0 0
      %690 = vmatpush1.bf16.msra.mxu0 0
      %691 = vmatprep.subr.bf16.mxu0 0
      %692 = vmatpush1.bf16.msra.mxu0 0
      %693 = vmatprep.subr.bf16.mxu0 0
      %694 = vmatpush1.bf16.msra.mxu0 0
      %695 = vmatprep.subr.bf16.mxu0 0
      %696 = vmatpush1.bf16.msra.mxu0 0
      %697 = vmatprep.subr.bf16.mxu0 0
      %698 = vmatpush1.bf16.msra.mxu0 0
      %699 = vmatprep.subr.bf16.mxu0 0
      %700 = vmatpush1.bf16.msra.mxu0 0
      %701 = vmatprep.mubr.bf16.mxu0 0
      %702 = vmatmul.mubr.bf16.gmra.mrb[0].mxu0 %v667
      %v703 = vpop.f32.mrb[0].mxu0
      %v704 = vadd.f32 0.0, %v703
      %v705 = vpop.f32.mrb[0].mxu0
      %v706 = vpop.f32.mrb[0].mxu0
      %v707 = vadd.f32 0.0, %v706
      %v708 = vpop.f32.mrb[0].mxu0
      %709 = vdwg.mxu0
      %v710 = vrcp.pop %v660
      %v711 = vrcp.pop %v661
      %v712 = vmul.f32 %v704, %v710
      %v713 = vmul.f32 %v707, %v711
      %s714 = scalar_lea.vmem %s380, 16
      %v715 = vld [vmem:[%s714] sm:$0xf]
      %v716 = vld [vmem:[%s714 + $0x4] sm:$0xf]
      %v717 = vunpack.c.l.bf16 %v715
      %v718 = vunpack.c.l.bf16 %v716
      %719 = vrot.lane.b32.xlu0 %v421, 96
      %v720 = vpop.permute.xlu0 %719
      %721 = vrot.lane.b32.xlu0 %v426, 96
      %v722 = vpop.permute.xlu0 %721
      %v724 = vsel %vm427, %v720, 0
      %v727 = vsel %vm427, %v722, 0
      %729 = vmatprep.subr.bf16.mxu0 0
      %730 = vmatpush1.bf16.xpose.msra.mxu0 %v727
      %731 = vmatprep.subr.bf16.mxu0 0
      %732 = vmatpush1.bf16.xpose.msra.mxu0 0
      %733 = vmatprep.subr.bf16.mxu0 0
      %734 = vmatpush1.bf16.xpose.msra.mxu0 0
      %735 = vmatprep.subr.bf16.mxu0 0
      %736 = vmatpush1.bf16.xpose.msra.mxu0 0
      %737 = vmatprep.subr.bf16.mxu0 0
      %738 = vmatpush1.bf16.xpose.msra.mxu0 0
      %739 = vmatprep.subr.bf16.mxu0 0
      %740 = vmatpush1.bf16.xpose.msra.mxu0 0
      %741 = vmatprep.subr.bf16.mxu0 0
      %742 = vmatpush1.bf16.xpose.msra.mxu0 0
      %743 = vmatprep.subr.bf16.mxu0 0
      %744 = vmatpush1.bf16.xpose.msra.mxu0 0
      %745 = vmatprep.subr.bf16.mxu0 0
      %746 = vmatpush1.bf16.xpose.msra.mxu0 0
      %747 = vmatprep.subr.bf16.mxu0 0
      %748 = vmatpush1.bf16.xpose.msra.mxu0 0
      %749 = vmatprep.subr.bf16.mxu0 0
      %750 = vmatpush1.bf16.xpose.msra.mxu0 0
      %751 = vmatprep.subr.bf16.mxu0 0
      %752 = vmatpush1.bf16.xpose.msra.mxu0 0
      %753 = vmatprep.subr.bf16.mxu0 0
      %754 = vmatpush1.bf16.xpose.msra.mxu0 0
      %755 = vmatprep.subr.bf16.mxu0 0
      %756 = vmatpush1.bf16.xpose.msra.mxu0 0
      %757 = vmatprep.subr.bf16.mxu0 0
      %758 = vmatpush1.bf16.xpose.msra.mxu0 0
      %759 = vmatprep.subr.bf16.mxu0 0
      %760 = vmatpush1.bf16.xpose.msra.mxu0 0
      %761 = vmatprep.mubr.bf16.mxu0 0
      %762 = vmatmul.mubr.bf16.gmra.mrb[0].mxu0 %v724
      %v763 = vpop.f32.mrb[0].mxu0
      %v764 = vadd.f32 %v717, %v763
      %v765 = vpop.f32.mrb[0].mxu0
      %v766 = vpop.f32.mrb[0].mxu0
      %v767 = vadd.f32 %v718, %v766
      %v768 = vpop.f32.mrb[0].mxu0
      %769 = vdwg.mxu0
      %v770 = vadd.f32 %v764, %v479
      %v771 = vadd.f32 %v767, %v479
      %v772 = vpack.c.bf16 %v771, %v770
      %v774 = vunpack.c.l.b16 %v772
      %v775 = vunpack.c.h.b16 %v772
      %v776 = vpack.c.b16 %v774, %v774
      %v777 = vpack.c.b16 %v775, %v775
      %s780 = scalar_lea.vmem %s393, 16
      %781 = vst.msk [vmem:[%s780] sm:$0xf] %vm491, %v776
      %782 = vst.msk [vmem:[%s780 + $0x4] sm:$0xf] %vm491, %v777
      %v783 = vsel %vm427, %v770, -inf
      %784 = vmax.xlane.f32.xlu0 %v783
      %v785 = vpop.xlane.xlu0 %784
      %v786 = vsel %vm427, %v771, -inf
      %787 = vmax.xlane.f32.xlu0 %v786
      %v788 = vpop.xlane.xlu0 %787
      %v789 = vmax.f32 %v785, -1e+30
      %v790 = vmax.f32 %v788, -1e+30
      %v791 = vsub.f32 %v770, %v789
      %v792 = vsub.f32 %v771, %v790
      %v793 = vmul.f32 %v791, 1.442695
      %v794 = vpow.pop %v793
      %v795 = vmul.f32 %v792, 1.442695
      %v796 = vpow.pop %v795
      %v797 = vsel %vm427, %v794, 0.0
      %798 = vadd.xlane.f32.xlu0 %v797
      %v799 = vpop.xlane.xlu0 %798
      %v800 = vsel %vm427, %v796, 0.0
      %801 = vadd.xlane.f32.xlu0 %v800
      %v802 = vpop.xlane.xlu0 %801
      %v803 = vmax.f32 %v799, 1e-30
      %v804 = vmax.f32 %v802, 1e-30
      %v805 = vpack.c.bf16 %v796, %v794
      %806 = vrot.lane.b32.xlu0 %v521, 96
      %v807 = vpop.permute.xlu0 %806
      %v810 = vsel %vm427, %v805, 0
      %812 = vmatprep.subr.bf16.mxu0 0
      %813 = vmatpush1.bf16.msra.mxu0 %v807
      %814 = vmatprep.subr.bf16.mxu0 0
      %815 = vmatpush1.bf16.msra.mxu0 0
      %816 = vmatprep.subr.bf16.mxu0 0
      %817 = vmatpush1.bf16.msra.mxu0 0
      %818 = vmatprep.subr.bf16.mxu0 0
      %819 = vmatpush1.bf16.msra.mxu0 0
      %820 = vmatprep.subr.bf16.mxu0 0
      %821 = vmatpush1.bf16.msra.mxu0 0
      %822 = vmatprep.subr.bf16.mxu0 0
      %823 = vmatpush1.bf16.msra.mxu0 0
      %824 = vmatprep.subr.bf16.mxu0 0
      %825 = vmatpush1.bf16.msra.mxu0 0
      %826 = vmatprep.subr.bf16.mxu0 0
      %827 = vmatpush1.bf16.msra.mxu0 0
      %828 = vmatprep.subr.bf16.mxu0 0
      %829 = vmatpush1.bf16.msra.mxu0 0
      %830 = vmatprep.subr.bf16.mxu0 0
      %831 = vmatpush1.bf16.msra.mxu0 0
      %832 = vmatprep.subr.bf16.mxu0 0
      %833 = vmatpush1.bf16.msra.mxu0 0
      %834 = vmatprep.subr.bf16.mxu0 0
      %835 = vmatpush1.bf16.msra.mxu0 0
      %836 = vmatprep.subr.bf16.mxu0 0
      %837 = vmatpush1.bf16.msra.mxu0 0
      %838 = vmatprep.subr.bf16.mxu0 0
      %839 = vmatpush1.bf16.msra.mxu0 0
      %840 = vmatprep.subr.bf16.mxu0 0
      %841 = vmatpush1.bf16.msra.mxu0 0
      %842 = vmatprep.subr.bf16.mxu0 0
      %843 = vmatpush1.bf16.msra.mxu0 0
      %844 = vmatprep.mubr.bf16.mxu0 0
      %845 = vmatmul.mubr.bf16.gmra.mrb[0].mxu0 %v810
      %v846 = vpop.f32.mrb[0].mxu0
      %v847 = vadd.f32 0.0, %v846
      %v848 = vpop.f32.mrb[0].mxu0
      %v849 = vpop.f32.mrb[0].mxu0
      %v850 = vadd.f32 0.0, %v849
      %v851 = vpop.f32.mrb[0].mxu0
      %852 = vdwg.mxu0
      %v853 = vrcp.pop %v803
      %v854 = vrcp.pop %v804
      %v855 = vmul.f32 %v847, %v853
      %v856 = vmul.f32 %v850, %v854
      %s857 = scalar_lea.vmem %s380, 24
      %v858 = vld [vmem:[%s857] sm:$0xf]
      %v859 = vld [vmem:[%s857 + $0x4] sm:$0xf]
      %v860 = vunpack.c.l.bf16 %v858
      %v861 = vunpack.c.l.bf16 %v859
      %862 = vrot.lane.b32.xlu0 %v421, 80
      %v863 = vpop.permute.xlu0 %862
      %864 = vrot.lane.b32.xlu0 %v426, 80
      %v865 = vpop.permute.xlu0 %864
      %v867 = vsel %vm427, %v863, 0
      %v870 = vsel %vm427, %v865, 0
      %872 = vmatprep.subr.bf16.mxu0 0
      %873 = vmatpush1.bf16.xpose.msra.mxu0 %v870
      %874 = vmatprep.subr.bf16.mxu0 0
      %875 = vmatpush1.bf16.xpose.msra.mxu0 0
      %876 = vmatprep.subr.bf16.mxu0 0
      %877 = vmatpush1.bf16.xpose.msra.mxu0 0
      %878 = vmatprep.subr.bf16.mxu0 0
      %879 = vmatpush1.bf16.xpose.msra.mxu0 0
      %880 = vmatprep.subr.bf16.mxu0 0
      %881 = vmatpush1.bf16.xpose.msra.mxu0 0
      %882 = vmatprep.subr.bf16.mxu0 0
      %883 = vmatpush1.bf16.xpose.msra.mxu0 0
      %884 = vmatprep.subr.bf16.mxu0 0
      %885 = vmatpush1.bf16.xpose.msra.mxu0 0
      %886 = vmatprep.subr.bf16.mxu0 0
      %887 = vmatpush1.bf16.xpose.msra.mxu0 0
      %888 = vmatprep.subr.bf16.mxu0 0
      %889 = vmatpush1.bf16.xpose.msra.mxu0 0
      %890 = vmatprep.subr.bf16.mxu0 0
      %891 = vmatpush1.bf16.xpose.msra.mxu0 0
      %892 = vmatprep.subr.bf16.mxu0 0
      %893 = vmatpush1.bf16.xpose.msra.mxu0 0
      %894 = vmatprep.subr.bf16.mxu0 0
      %895 = vmatpush1.bf16.xpose.msra.mxu0 0
      %896 = vmatprep.subr.bf16.mxu0 0
      %897 = vmatpush1.bf16.xpose.msra.mxu0 0
      %898 = vmatprep.subr.bf16.mxu0 0
      %899 = vmatpush1.bf16.xpose.msra.mxu0 0
      %900 = vmatprep.subr.bf16.mxu0 0
      %901 = vmatpush1.bf16.xpose.msra.mxu0 0
      %902 = vmatprep.subr.bf16.mxu0 0
      %903 = vmatpush1.bf16.xpose.msra.mxu0 0
      %904 = vmatprep.mubr.bf16.mxu0 0
      %905 = vmatmul.mubr.bf16.gmra.mrb[0].mxu0 %v867
      %v906 = vpop.f32.mrb[0].mxu0
      %v907 = vadd.f32 %v860, %v906
      %v908 = vpop.f32.mrb[0].mxu0
      %v909 = vpop.f32.mrb[0].mxu0
      %v910 = vadd.f32 %v861, %v909
      %v911 = vpop.f32.mrb[0].mxu0
      %912 = vdwg.mxu0
      %v913 = vadd.f32 %v907, %v479
      %v914 = vadd.f32 %v910, %v479
      %v915 = vpack.c.bf16 %v914, %v913
      %v917 = vunpack.c.l.b16 %v915
      %v918 = vunpack.c.h.b16 %v915
      %v919 = vpack.c.b16 %v917, %v917
      %v920 = vpack.c.b16 %v918, %v918
      %s923 = scalar_lea.vmem %s393, 24
      %924 = vst.msk [vmem:[%s923] sm:$0xf] %vm491, %v919
      %925 = vst.msk [vmem:[%s923 + $0x4] sm:$0xf] %vm491, %v920
      %v926 = vsel %vm427, %v913, -inf
      %927 = vmax.xlane.f32.xlu0 %v926
      %v928 = vpop.xlane.xlu0 %927
      %v929 = vsel %vm427, %v914, -inf
      %930 = vmax.xlane.f32.xlu0 %v929
      %v931 = vpop.xlane.xlu0 %930
      %v932 = vmax.f32 %v928, -1e+30
      %v933 = vmax.f32 %v931, -1e+30
      %v934 = vsub.f32 %v913, %v932
      %v935 = vsub.f32 %v914, %v933
      %v936 = vmul.f32 %v934, 1.442695
      %v937 = vpow.pop %v936
      %v938 = vmul.f32 %v935, 1.442695
      %v939 = vpow.pop %v938
      %v940 = vsel %vm427, %v937, 0.0
      %941 = vadd.xlane.f32.xlu0 %v940
      %v942 = vpop.xlane.xlu0 %941
      %v943 = vsel %vm427, %v939, 0.0
      %944 = vadd.xlane.f32.xlu0 %v943
      %v945 = vpop.xlane.xlu0 %944
      %v946 = vmax.f32 %v942, 1e-30
      %v947 = vmax.f32 %v945, 1e-30
      %v948 = vpack.c.bf16 %v939, %v937
      %949 = vrot.lane.b32.xlu0 %v521, 80
      %v950 = vpop.permute.xlu0 %949
      %v953 = vsel %vm427, %v948, 0
      %955 = vmatprep.subr.bf16.mxu0 0
      %956 = vmatpush1.bf16.msra.mxu0 %v950
      %957 = vmatprep.subr.bf16.mxu0 0
      %958 = vmatpush1.bf16.msra.mxu0 0
      %959 = vmatprep.subr.bf16.mxu0 0
      %960 = vmatpush1.bf16.msra.mxu0 0
      %961 = vmatprep.subr.bf16.mxu0 0
      %962 = vmatpush1.bf16.msra.mxu0 0
      %963 = vmatprep.subr.bf16.mxu0 0
      %964 = vmatpush1.bf16.msra.mxu0 0
      %965 = vmatprep.subr.bf16.mxu0 0
      %966 = vmatpush1.bf16.msra.mxu0 0
      %967 = vmatprep.subr.bf16.mxu0 0
      %968 = vmatpush1.bf16.msra.mxu0 0
      %969 = vmatprep.subr.bf16.mxu0 0
      %970 = vmatpush1.bf16.msra.mxu0 0
      %971 = vmatprep.subr.bf16.mxu0 0
      %972 = vmatpush1.bf16.msra.mxu0 0
      %973 = vmatprep.subr.bf16.mxu0 0
      %974 = vmatpush1.bf16.msra.mxu0 0
      %975 = vmatprep.subr.bf16.mxu0 0
      %976 = vmatpush1.bf16.msra.mxu0 0
      %977 = vmatprep.subr.bf16.mxu0 0
      %978 = vmatpush1.bf16.msra.mxu0 0
      %979 = vmatprep.subr.bf16.mxu0 0
      %980 = vmatpush1.bf16.msra.mxu0 0
      %981 = vmatprep.subr.bf16.mxu0 0
      %982 = vmatpush1.bf16.msra.mxu0 0
      %983 = vmatprep.subr.bf16.mxu0 0
      %984 = vmatpush1.bf16.msra.mxu0 0
      %985 = vmatprep.subr.bf16.mxu0 0
      %986 = vmatpush1.bf16.msra.mxu0 0
      %987 = vmatprep.mubr.bf16.mxu0 0
      %988 = vmatmul.mubr.bf16.gmra.mrb[0].mxu0 %v953
      %v989 = vpop.f32.mrb[0].mxu0
      %v990 = vadd.f32 0.0, %v989
      %v991 = vpop.f32.mrb[0].mxu0
      %v992 = vpop.f32.mrb[0].mxu0
      %v993 = vadd.f32 0.0, %v992
      %v994 = vpop.f32.mrb[0].mxu0
      %995 = vdwg.mxu0
      %v996 = vrcp.pop %v946
      %v997 = vrcp.pop %v947
      %v998 = vmul.f32 %v990, %v996
      %v999 = vmul.f32 %v993, %v997
      %1002 = vrot.lane.b32.xlu0 %v712, 16
      %v1003 = vpop.permute.xlu0 %1002
      %1004 = vrot.lane.b32.xlu0 %v713, 16
      %v1005 = vpop.permute.xlu0 %1004
      %1010 = vrot.lane.b32.xlu0 %v855, 32
      %v1011 = vpop.permute.xlu0 %1010
      %1012 = vrot.lane.b32.xlu0 %v856, 32
      %v1013 = vpop.permute.xlu0 %1012
      %1018 = vrot.lane.b32.xlu0 %v998, 48
      %v1019 = vpop.permute.xlu0 %1018
      %1020 = vrot.lane.b32.xlu0 %v999, 48
      %v1021 = vpop.permute.xlu0 %1020
      %v1024 = vsel %vm427, %v569, %v1003
      %v1025 = vsel %vm427, %v570, %v1005
      %vm1026 = vcmask 261120
      %v1027 = vsel %vm1026, %v1024, %v1011
      %v1028 = vsel %vm1026, %v1025, %v1013
      %vm1029 = vcmask 392192
      %v1030 = vsel %vm1029, %v1027, %v1019
      %v1031 = vsel %vm1029, %v1028, %v1021
      %v1032 = vpack.c.bf16 %v1031, %v1030
      %v1034 = vunpack.c.l.b16 %v1032
      %v1035 = vunpack.c.h.b16 %v1032
      %v1036 = vpack.c.b16 %v1034, %v1034
      %v1037 = vpack.c.b16 %v1035, %v1035
      %vm1040 = vcmask 519168
      %1041 = vst.msk [vmem:[%s403] sm:$0xf] %vm1040, %v1036
      %1042 = vst.msk [vmem:[%s403 + $0x4] sm:$0xf] %vm1040, %v1037
      %s1043 = smul.u32 2, %s23
      %p1044 = scmp.lt.s32.totalorder %s22, 1
      %s1045 = scalar_select %p1044, %s22, 1
      %p1046 = scmp.lt.s32.totalorder %s1043, 1
      %s1047 = scalar_select %p1046, %s1043, 1
      %s1048 = smul.addr %s1045, 8
      %s1049 = sadd.s32 %s1047, %s1048
      %s1050 = smul.addr %s1049, 4
      %s1051 = scalar_lea.vmem %s5, %s1050
      %s1052 = smul.u32 2, %s23
      %p1053 = scmp.lt.s32.totalorder %s22, 1
      %s1054 = scalar_select %p1053, %s22, 1
      %p1055 = scmp.lt.s32.totalorder %s1052, 1
      %s1056 = scalar_select %p1055, %s1052, 1
      %s1057 = smul.addr %s1054, 2
      %s1058 = sadd.s32 %s1056, %s1057
      %s1059 = smul.addr %s1058, 4
      %s1060 = scalar_lea.vmem %s6, %s1059
      // Predicated region
      $region41: #{_dense_forward.13} parent=39 // pred_check
        %p1061 = pneg %p184
      $region42: #{_dense_forward.13} parent=39 // pred_check_branch
        %1063 = sbr.rel (%p1061) target = $region44
      $region43: #{_dense_forward.13} parent=39 // pred_region
        %s1064 = smul.u32 2, %s23
      $region44: #{_dense_forward.13} parent=39 // pred_fallthru
        _
      // Predicated region
      $region45: #{_dense_forward.13} parent=39 // pred_check
        %p1065 = pneg %p212
      $region46: #{_dense_forward.13} parent=39 // pred_check_branch
        %1067 = sbr.rel (%p1065) target = $region48
      $region47: #{_dense_forward.13} parent=39 // pred_region
        %s1068 = smul.u32 2, %s23
      $region48: #{_dense_forward.13} parent=39 // pred_fallthru
        _
    $region40: #{_dense_forward.13} parent=5 // pred_fallthru
      _
    %p1069 = scmp.le.s32.totalorder 2, %s13
    // Predicated region
    $region49: #{_dense_forward.13} parent=5 // pred_check
      %p1070 = pneg %p1069
    $region50: #{_dense_forward.13} parent=5 // pred_check_branch
      %1072 = sbr.rel (%p1070) target = $region52
    $region51: #{_dense_forward.13} parent=5 // pred_region
      %s1073 = ssub.s32 %s13, 2
      // Predicated region
      $region53: #{_dense_forward.13} parent=51 // pred_check
        %p1074 = pneg %p190
      $region54: #{_dense_forward.13} parent=51 // pred_check_branch
        %1076 = sbr.rel (%p1074) target = $region56
      $region55: #{_dense_forward.13} parent=51 // pred_region
        %s1077 = smul.u32 2, %s25
        %p1078 = scmp.lt.s32.totalorder %s24, 1
        %s1079 = scalar_select %p1078, %s24, 1
        %p1080 = scmp.lt.s32.totalorder %s1077, 1
        %s1081 = scalar_select %p1080, %s1077, 1
        %s1082 = smul.addr %s1079, 8
        %s1083 = sadd.s32 %s1081, %s1082
        %s1084 = smul.addr %s1083, 4
        %s1085 = scalar_lea.vmem %s5, %s1084
      $region56: #{_dense_forward.13} parent=51 // pred_fallthru
        _
      // Predicated region
      $region57: #{_dense_forward.13} parent=51 // pred_check
        %p1086 = pneg %p218
      $region58: #{_dense_forward.13} parent=51 // pred_check_branch
        %1088 = sbr.rel (%p1086) target = $region60
      $region59: #{_dense_forward.13} parent=51 // pred_region
        %s1089 = smul.u32 2, %s25
        %p1090 = scmp.lt.s32.totalorder %s24, 1
        %s1091 = scalar_select %p1090, %s24, 1
        %p1092 = scmp.lt.s32.totalorder %s1089, 1
        %s1093 = scalar_select %p1092, %s1089, 1
        %s1094 = smul.addr %s1091, 2
        %s1095 = sadd.s32 %s1093, %s1094
        %s1096 = smul.addr %s1095, 4
        %s1097 = scalar_lea.vmem %s6, %s1096
      $region60: #{_dense_forward.13} parent=51 // pred_fallthru
        _
    $region52: #{_dense_forward.13} parent=5 // pred_fallthru
      _
  $region6: #{_dense_forward.13} parent=0 // loop_footer
    %s17 = sadd.s32 1, %s13
  $region7: #{_dense_forward.13} parent=0 // loop_footer_branch
    %12 = sbr.rel target = $region3
  $region8: #{_dense_forward.13} parent=0 // loop_exit
    _

// kernel: _dense_forward.18
$region0: #{_dense_forward.18}
  #allocation0 [shape = 'u32[]', space=smem, size = 0x4, offset = 0x4, fixed_abs, tag = 'smem constant byte address 0x4 - core index']
  #allocation1 [shape = 'u32[144,128]{1,0:T(1,128)}', space=vmem, size = 0x12000, scoped, tag = 'internal scratch']
  %s0 = inlined_call_operand.vmem [shape: f32[32,64], index: 0, kind: input, shape index: {}]
  %s1 = inlined_call_operand.vmem [shape: f32[1,64], index: 1, kind: input, shape index: {}]
  %s2 = inlined_call_operand.vmem [shape: f32[1,64], index: 2, kind: input, shape index: {}]
  %s3 = inlined_call_operand.vmem [shape: f32[32,64], index: 3, kind: output, shape index: {}]
  %s4 = sld [smem:[#allocation0]]
  $region22: #{_dense_forward.18} parent=0
    _
  %s6 = ssub.s32 1, %s4
  %s7 = scalar_select 0, %s6, %s4
  // Predicated region
  $region2: #{_dense_forward.18} parent=0 // pred_check
    _
  $region3: #{_dense_forward.18} parent=0 // pred_check_branch
    %9 = sbr.rel (0) target = $region5
  $region4: #{_dense_forward.18} parent=0 // pred_region
    _
  $region5: #{_dense_forward.18} parent=0 // pred_fallthru
    _
  // Predicated region
  $region6: #{_dense_forward.18} parent=0 // pred_check
    _
  $region7: #{_dense_forward.18} parent=0 // pred_check_branch
    %11 = sbr.rel (0) target = $region9
  $region8: #{_dense_forward.18} parent=0 // pred_region
    _
  $region9: #{_dense_forward.18} parent=0 // pred_fallthru
    _
  // Predicated region
  $region10: #{_dense_forward.18} parent=0 // pred_check
    _
  $region11: #{_dense_forward.18} parent=0 // pred_check_branch
    %13 = sbr.rel (0) target = $region13
  $region12: #{_dense_forward.18} parent=0 // pred_region
    _
  $region13: #{_dense_forward.18} parent=0 // pred_fallthru
    _
  %v14 = vld [vmem:[%s0] sm:$0xff]
  %v15 = vld [vmem:[%s0 + $0x8] sm:$0xff]
  %v16 = vld [vmem:[%s0 + $0x10] sm:$0xff]
  %v17 = vld [vmem:[%s0 + $0x18] sm:$0xff]
  %v18 = vld [vmem:[%s1] sm:$0x1]
  %v19 = vld [vmem:[%s2] sm:$0x1]
  %vm20 = vcmask 523264
  %v21 = vsel %vm20, %v14, 0.0
  %22 = vadd.xlane.f32.xlu0 %v21
  %v23 = vpop.xlane.xlu0 %22
  %v24 = vsel %vm20, %v15, 0.0
  %25 = vadd.xlane.f32.xlu0 %v24
  %v26 = vpop.xlane.xlu0 %25
  %v27 = vsel %vm20, %v16, 0.0
  %28 = vadd.xlane.f32.xlu0 %v27
  %v29 = vpop.xlane.xlu0 %28
  %v30 = vsel %vm20, %v17, 0.0
  %31 = vadd.xlane.f32.xlu0 %v30
  %v32 = vpop.xlane.xlu0 %31
  %v33 = vrcp.pop 64.0
  %v34 = vmul.f32 %v23, %v33
  %v35 = vmul.f32 %v26, %v33
  %v36 = vmul.f32 %v29, %v33
  %v37 = vmul.f32 %v32, %v33
  %v38 = vsub.f32 %v14, %v34
  %v39 = vsub.f32 %v15, %v35
  %v40 = vsub.f32 %v16, %v36
  %v41 = vsub.f32 %v17, %v37
  %v42 = vmul.f32 %v38, %v38
  %v43 = vmul.f32 %v39, %v39
  %v44 = vmul.f32 %v40, %v40
  %v45 = vmul.f32 %v41, %v41
  %v46 = vsel %vm20, %v42, 0.0
  %47 = vadd.xlane.f32.xlu0 %v46
  %v48 = vpop.xlane.xlu0 %47
  %v49 = vsel %vm20, %v43, 0.0
  %50 = vadd.xlane.f32.xlu0 %v49
  %v51 = vpop.xlane.xlu0 %50
  %v52 = vsel %vm20, %v44, 0.0
  %53 = vadd.xlane.f32.xlu0 %v52
  %v54 = vpop.xlane.xlu0 %53
  %v55 = vsel %vm20, %v45, 0.0
  %56 = vadd.xlane.f32.xlu0 %v55
  %v57 = vpop.xlane.xlu0 %56
  %v58 = vmul.f32 %v48, %v33
  %v59 = vmul.f32 %v51, %v33
  %v60 = vmul.f32 %v54, %v33
  %v61 = vmul.f32 %v57, %v33
  %v62 = vadd.f32 %v58, 1e-05
  %v63 = vadd.f32 %v59, 1e-05
  %v64 = vadd.f32 %v60, 1e-05
  %v65 = vadd.f32 %v61, 1e-05
  %v66 = vrsqrt.pop %v62
  %v67 = vrsqrt.pop %v63
  %v68 = vrsqrt.pop %v64
  %v69 = vrsqrt.pop %v65
  %v70 = vmul.f32 %v38, %v66
  %v71 = vmul.f32 %v39, %v67
  %v72 = vmul.f32 %v40, %v68
  %v73 = vmul.f32 %v41, %v69
  %v75 = vlaneseq
  %v76 = vshrl.u32 %v75, 7
  %v77 = vsub.s32 0, %v76
  %v78 = vrot.slane %v18, %v77
  %v80 = vmul.f32 %v70, %v78
  %v81 = vmul.f32 %v71, %v78
  %v82 = vmul.f32 %v72, %v78
  %v83 = vmul.f32 %v73, %v78
  %v85 = vlaneseq
  %v86 = vshrl.u32 %v85, 7
  %v87 = vsub.s32 0, %v86
  %v88 = vrot.slane %v19, %v87
  %v90 = vadd.f32 %v80, %v88
  %v91 = vadd.f32 %v81, %v88
  %v92 = vadd.f32 %v82, %v88
  %v93 = vadd.f32 %v83, %v88
  %94 = vst.msk [vmem:[%s3] sm:$0xff] %vm20, %v90
  %95 = vst.msk [vmem:[%s3 + $0x8] sm:$0xff] %vm20, %v91
  %96 = vst.msk [vmem:[%s3 + $0x10] sm:$0xff] %vm20, %v92
  %97 = vst.msk [vmem:[%s3 + $0x18] sm:$0xff] %vm20, %v93
  // Predicated region
  $region14: #{_dense_forward.18} parent=0 // pred_check
    _
  $region15: #{_dense_forward.18} parent=0 // pred_check_branch
    %99 = sbr.rel (0) target = $region17
  $region16: #{_dense_forward.18} parent=0 // pred_region
    _
  $region17: #{_dense_forward.18} parent=0 // pred_fallthru
    _
  // Predicated region
  $region18: #{_dense_forward.18} parent=0 // pred_check
    _
  $region19: #{_dense_forward.18} parent=0 // pred_check_branch
    %101 = sbr.rel (0) target = $region21
  $region20: #{_dense_forward.18} parent=0 // pred_region
    _
  $region21: #{_dense_forward.18} parent=0 // pred_fallthru
    _

// kernel: _dense_forward.14
$region0: #{_dense_forward.14}
  #allocation0 [shape = 'u32[]', space=smem, size = 0x4, offset = 0x4, fixed_abs, tag = 'smem constant byte address 0x4 - core index']
  #allocation1 [shape = 'u32[144,128]{1,0:T(1,128)}', space=vmem, size = 0x12000, scoped, tag = 'internal scratch']
  %s0 = inlined_call_operand.vmem [shape: bf16[32,64], index: 0, kind: input, shape index: {}]
  %s1 = inlined_call_operand.vmem [shape: f32[32,64], index: 1, kind: input, shape index: {}]
  %s2 = inlined_call_operand.vmem [shape: bf16[64,64], index: 2, kind: input, shape index: {}]
  %s3 = inlined_call_operand.vmem [shape: f32[1,64], index: 3, kind: input, shape index: {}]
  %s4 = inlined_call_operand.vmem [shape: f32[1,64], index: 4, kind: input, shape index: {}]
  %s5 = inlined_call_operand.vmem [shape: f32[1,64], index: 5, kind: input, shape index: {}]
  %s6 = inlined_call_operand.vmem [shape: bf16[64,128], index: 6, kind: input, shape index: {}]
  %s7 = inlined_call_operand.vmem [shape: f32[1,128], index: 7, kind: input, shape index: {}]
  %s8 = inlined_call_operand.vmem [shape: bf16[128,64], index: 8, kind: input, shape index: {}]
  %s9 = inlined_call_operand.vmem [shape: f32[1,64], index: 9, kind: input, shape index: {}]
  %s10 = inlined_call_operand.vmem [shape: f32[32,64], index: 10, kind: output, shape index: {}]
  %s11 = sld [smem:[#allocation0]]
  $region50: #{_dense_forward.14} parent=0
    _
  %s13 = ssub.s32 1, %s11
  %s14 = scalar_select 0, %s13, %s11
  // Predicated region
  $region2: #{_dense_forward.14} parent=0 // pred_check
    _
  $region3: #{_dense_forward.14} parent=0 // pred_check_branch
    %16 = sbr.rel (0) target = $region5
  $region4: #{_dense_forward.14} parent=0 // pred_region
    _
  $region5: #{_dense_forward.14} parent=0 // pred_fallthru
    _
  // Predicated region
  $region6: #{_dense_forward.14} parent=0 // pred_check
    _
  $region7: #{_dense_forward.14} parent=0 // pred_check_branch
    %18 = sbr.rel (0) target = $region9
  $region8: #{_dense_forward.14} parent=0 // pred_region
    _
  $region9: #{_dense_forward.14} parent=0 // pred_fallthru
    _
  // Predicated region
  $region10: #{_dense_forward.14} parent=0 // pred_check
    _
  $region11: #{_dense_forward.14} parent=0 // pred_check_branch
    %20 = sbr.rel (0) target = $region13
  $region12: #{_dense_forward.14} parent=0 // pred_region
    _
  $region13: #{_dense_forward.14} parent=0 // pred_fallthru
    _
  // Predicated region
  $region14: #{_dense_forward.14} parent=0 // pred_check
    _
  $region15: #{_dense_forward.14} parent=0 // pred_check_branch
    %22 = sbr.rel (0) target = $region17
  $region16: #{_dense_forward.14} parent=0 // pred_region
    _
  $region17: #{_dense_forward.14} parent=0 // pred_fallthru
    _
  // Predicated region
  $region18: #{_dense_forward.14} parent=0 // pred_check
    _
  $region19: #{_dense_forward.14} parent=0 // pred_check_branch
    %24 = sbr.rel (0) target = $region21
  $region20: #{_dense_forward.14} parent=0 // pred_region
    _
  $region21: #{_dense_forward.14} parent=0 // pred_fallthru
    _
  // Predicated region
  $region22: #{_dense_forward.14} parent=0 // pred_check
    _
  $region23: #{_dense_forward.14} parent=0 // pred_check_branch
    %26 = sbr.rel (0) target = $region25
  $region24: #{_dense_forward.14} parent=0 // pred_region
    _
  $region25: #{_dense_forward.14} parent=0 // pred_fallthru
    _
  // Predicated region
  $region26: #{_dense_forward.14} parent=0 // pred_check
    _
  $region27: #{_dense_forward.14} parent=0 // pred_check_branch
    %28 = sbr.rel (0) target = $region29
  $region28: #{_dense_forward.14} parent=0 // pred_region
    _
  $region29: #{_dense_forward.14} parent=0 // pred_fallthru
    _
  // Predicated region
  $region30: #{_dense_forward.14} parent=0 // pred_check
    _
  $region31: #{_dense_forward.14} parent=0 // pred_check_branch
    %30 = sbr.rel (0) target = $region33
  $region32: #{_dense_forward.14} parent=0 // pred_region
    _
  $region33: #{_dense_forward.14} parent=0 // pred_fallthru
    _
  // Predicated region
  $region34: #{_dense_forward.14} parent=0 // pred_check
    _
  $region35: #{_dense_forward.14} parent=0 // pred_check_branch
    %32 = sbr.rel (0) target = $region37
  $region36: #{_dense_forward.14} parent=0 // pred_region
    _
  $region37: #{_dense_forward.14} parent=0 // pred_fallthru
    _
  // Predicated region
  $region38: #{_dense_forward.14} parent=0 // pred_check
    _
  $region39: #{_dense_forward.14} parent=0 // pred_check_branch
    %34 = sbr.rel (0) target = $region41
  $region40: #{_dense_forward.14} parent=0 // pred_region
    _
  $region41: #{_dense_forward.14} parent=0 // pred_fallthru
    _
  %v36 = vld [vmem:[%s1] sm:$0xff]
  %v37 = vld [vmem:[%s1 + $0x8] sm:$0xff]
  %v38 = vld [vmem:[%s1 + $0x10] sm:$0xff]
  %v39 = vld [vmem:[%s1 + $0x18] sm:$0xff]
  %v40 = vld [vmem:[%s3] sm:$0x1]
  %v42 = vlaneseq
  %v43 = vshrl.u32 %v42, 7
  %v44 = vsub.s32 0, %v43
  %v45 = vrot.slane %v40, %v44
  %v47 = vadd.f32 %v36, %v45
  %v48 = vadd.f32 %v37, %v45
  %v49 = vadd.f32 %v38, %v45
  %v50 = vadd.f32 %v39, %v45
  %v51 = vld [vmem:[%s0] sm:$0xf]
  %v52 = vld [vmem:[%s0 + $0x4] sm:$0xf]
  %v53 = vld [vmem:[%s0 + $0x8] sm:$0xf]
  %v54 = vld [vmem:[%s0 + $0xc] sm:$0xf]
  %v55 = vld [vmem:[%s2] sm:$0xf]
  %v56 = vld [vmem:[%s2 + $0x4] sm:$0xf]
  %v57 = vld [vmem:[%s2 + $0x8] sm:$0xf]
  %v58 = vld [vmem:[%s2 + $0xc] sm:$0xf]
  %v59 = vld [vmem:[%s2 + $0x10] sm:$0xf]
  %v60 = vld [vmem:[%s2 + $0x14] sm:$0xf]
  %v61 = vld [vmem:[%s2 + $0x18] sm:$0xf]
  %v62 = vld [vmem:[%s2 + $0x1c] sm:$0xf]
  %v67 = vunpack.c.l.b16 %v51
  %v68 = vunpack.c.l.b16 %v52
  %v69 = vunpack.c.l.b16 %v53
  %v70 = vunpack.c.l.b16 %v54
  %v71 = vpack.c.b16 %v68, %v67
  %v72 = vpack.c.b16 %v70, %v69
  %v81 = vunpack.c.l.b16 %v55
  %v82 = vunpack.c.l.b16 %v56
  %v83 = vunpack.c.l.b16 %v57
  %v84 = vunpack.c.l.b16 %v58
  %v85 = vunpack.c.l.b16 %v59
  %v86 = vunpack.c.l.b16 %v60
  %v87 = vunpack.c.l.b16 %v61
  %v88 = vunpack.c.l.b16 %v62
  %v89 = vpack.c.b16 %v82, %v81
  %v90 = vpack.c.b16 %v84, %v83
  %v91 = vpack.c.b16 %v86, %v85
  %v92 = vpack.c.b16 %v88, %v87
  %vm97 = vcmask 523264
  %v99 = vsel %vm97, %v71, 0
  %v102 = vsel %vm97, %v72, 0
  %104 = vmatprep.subr.bf16.mxu0 0
  %105 = vmatpush1.bf16.msra.mxu0 %v89
  %106 = vmatprep.subr.bf16.mxu0 0
  %107 = vmatpush1.bf16.msra.mxu0 %v90
  %108 = vmatprep.subr.bf16.mxu0 0
  %109 = vmatpush1.bf16.msra.mxu0 %v91
  %110 = vmatprep.subr.bf16.mxu0 0
  %111 = vmatpush1.bf16.msra.mxu0 %v92
  %112 = vmatprep.subr.bf16.mxu0 0
  %113 = vmatpush1.bf16.msra.mxu0 0
  %114 = vmatprep.subr.bf16.mxu0 0
  %115 = vmatpush1.bf16.msra.mxu0 0
  %116 = vmatprep.subr.bf16.mxu0 0
  %117 = vmatpush1.bf16.msra.mxu0 0
  %118 = vmatprep.subr.bf16.mxu0 0
  %119 = vmatpush1.bf16.msra.mxu0 0
  %120 = vmatprep.subr.bf16.mxu0 0
  %121 = vmatpush1.bf16.msra.mxu0 0
  %122 = vmatprep.subr.bf16.mxu0 0
  %123 = vmatpush1.bf16.msra.mxu0 0
  %124 = vmatprep.subr.bf16.mxu0 0
  %125 = vmatpush1.bf16.msra.mxu0 0
  %126 = vmatprep.subr.bf16.mxu0 0
  %127 = vmatpush1.bf16.msra.mxu0 0
  %128 = vmatprep.subr.bf16.mxu0 0
  %129 = vmatpush1.bf16.msra.mxu0 0
  %130 = vmatprep.subr.bf16.mxu0 0
  %131 = vmatpush1.bf16.msra.mxu0 0
  %132 = vmatprep.subr.bf16.mxu0 0
  %133 = vmatpush1.bf16.msra.mxu0 0
  %134 = vmatprep.subr.bf16.mxu0 0
  %135 = vmatpush1.bf16.msra.mxu0 0
  %136 = vmatprep.mubr.bf16.mxu0 0
  %137 = vmatmul.mubr.bf16.gmra.mrb[0].mxu0 %v99
  %v138 = vpop.f32.mrb[0].mxu0
  %v139 = vadd.f32 0.0, %v138
  %v140 = vpop.f32.mrb[0].mxu0
  %v141 = vpop.f32.mrb[0].mxu0
  %v142 = vadd.f32 0.0, %v141
  %v143 = vpop.f32.mrb[0].mxu0
  %144 = vmatprep.mubr.bf16.mxu0 0
  %145 = vmatmul.mubr.bf16.gmra.mrb[0].mxu0 %v102
  %v146 = vpop.f32.mrb[0].mxu0
  %v147 = vadd.f32 0.0, %v146
  %v148 = vpop.f32.mrb[0].mxu0
  %v149 = vpop.f32.mrb[0].mxu0
  %v150 = vadd.f32 0.0, %v149
  %v151 = vpop.f32.mrb[0].mxu0
  %152 = vdwg.mxu0
  %v153 = vadd.f32 %v47, %v139
  %v154 = vadd.f32 %v48, %v142
  %v155 = vadd.f32 %v49, %v147
  %v156 = vadd.f32 %v50, %v150
  %v157 = vld [vmem:[%s4] sm:$0x1]
  %v158 = vld [vmem:[%s5] sm:$0x1]
  %v159 = vsel %vm97, %v153, 0.0
  %160 = vadd.xlane.f32.xlu0 %v159
  %v161 = vpop.xlane.xlu0 %160
  %v162 = vsel %vm97, %v154, 0.0
  %163 = vadd.xlane.f32.xlu0 %v162
  %v164 = vpop.xlane.xlu0 %163
  %v165 = vsel %vm97, %v155, 0.0
  %166 = vadd.xlane.f32.xlu0 %v165
  %v167 = vpop.xlane.xlu0 %166
  %v168 = vsel %vm97, %v156, 0.0
  %169 = vadd.xlane.f32.xlu0 %v168
  %v170 = vpop.xlane.xlu0 %169
  %v171 = vrcp.pop 64.0
  %v172 = vmul.f32 %v161, %v171
  %v173 = vmul.f32 %v164, %v171
  %v174 = vmul.f32 %v167, %v171
  %v175 = vmul.f32 %v170, %v171
  %v176 = vsub.f32 %v153, %v172
  %v177 = vsub.f32 %v154, %v173
  %v178 = vsub.f32 %v155, %v174
  %v179 = vsub.f32 %v156, %v175
  %v180 = vmul.f32 %v176, %v176
  %v181 = vmul.f32 %v177, %v177
  %v182 = vmul.f32 %v178, %v178
  %v183 = vmul.f32 %v179, %v179
  %v184 = vsel %vm97, %v180, 0.0
  %185 = vadd.xlane.f32.xlu0 %v184
  %v186 = vpop.xlane.xlu0 %185
  %v187 = vsel %vm97, %v181, 0.0
  %188 = vadd.xlane.f32.xlu0 %v187
  %v189 = vpop.xlane.xlu0 %188
  %v190 = vsel %vm97, %v182, 0.0
  %191 = vadd.xlane.f32.xlu0 %v190
  %v192 = vpop.xlane.xlu0 %191
  %v193 = vsel %vm97, %v183, 0.0
  %194 = vadd.xlane.f32.xlu0 %v193
  %v195 = vpop.xlane.xlu0 %194
  %v196 = vmul.f32 %v186, %v171
  %v197 = vmul.f32 %v189, %v171
  %v198 = vmul.f32 %v192, %v171
  %v199 = vmul.f32 %v195, %v171
  %v200 = vadd.f32 %v196, 1e-05
  %v201 = vadd.f32 %v197, 1e-05
  %v202 = vadd.f32 %v198, 1e-05
  %v203 = vadd.f32 %v199, 1e-05
  %v204 = vrsqrt.pop %v200
  %v205 = vrsqrt.pop %v201
  %v206 = vrsqrt.pop %v202
  %v207 = vrsqrt.pop %v203
  %v208 = vmul.f32 %v176, %v204
  %v209 = vmul.f32 %v177, %v205
  %v210 = vmul.f32 %v178, %v206
  %v211 = vmul.f32 %v179, %v207
  %v213 = vlaneseq
  %v214 = vshrl.u32 %v213, 7
  %v215 = vsub.s32 0, %v214
  %v216 = vrot.slane %v157, %v215
  %v218 = vmul.f32 %v208, %v216
  %v219 = vmul.f32 %v209, %v216
  %v220 = vmul.f32 %v210, %v216
  %v221 = vmul.f32 %v211, %v216
  %v223 = vlaneseq
  %v224 = vshrl.u32 %v223, 7
  %v225 = vsub.s32 0, %v224
  %v226 = vrot.slane %v158, %v225
  %v228 = vadd.f32 %v218, %v226
  %v229 = vadd.f32 %v219, %v226
  %v230 = vadd.f32 %v220, %v226
  %v231 = vadd.f32 %v221, %v226
  %v232 = vpack.c.bf16 %v229, %v228
  %v233 = vpack.c.bf16 %v231, %v230
  %v234 = vld [vmem:[%s6] sm:$0xf]
  %v235 = vld [vmem:[%s6 + $0x4] sm:$0xf]
  %v236 = vld [vmem:[%s6 + $0x8] sm:$0xf]
  %v237 = vld [vmem:[%s6 + $0xc] sm:$0xf]
  %v238 = vld [vmem:[%s6 + $0x10] sm:$0xf]
  %v239 = vld [vmem:[%s6 + $0x14] sm:$0xf]
  %v240 = vld [vmem:[%s6 + $0x18] sm:$0xf]
  %v241 = vld [vmem:[%s6 + $0x1c] sm:$0xf]
  %v242 = vld [vmem:[%s7] sm:$0x1]
  %v244 = vlaneseq
  %v245 = vshrl.u32 %v244, 7
  %v246 = vsub.s32 0, %v245
  %v247 = vrot.slane %v242, %v246
  %v257 = vunpack.c.l.b16 %v234
  %v258 = vunpack.c.l.b16 %v235
  %v259 = vunpack.c.l.b16 %v236
  %v260 = vunpack.c.l.b16 %v237
  %v261 = vunpack.c.l.b16 %v238
  %v262 = vunpack.c.l.b16 %v239
  %v263 = vunpack.c.l.b16 %v240
  %v264 = vunpack.c.l.b16 %v241
  %v265 = vpack.c.b16 %v258, %v257
  %v266 = vpack.c.b16 %v260, %v259
  %v267 = vpack.c.b16 %v262, %v261
  %v268 = vpack.c.b16 %v264, %v263
  %v274 = vsel %vm97, %v232, 0
  %v277 = vsel %vm97, %v233, 0
  %279 = vmatprep.subr.bf16.mxu0 0
  %280 = vmatpush1.bf16.msra.mxu0 %v265
  %281 = vmatprep.subr.bf16.mxu0 0
  %282 = vmatpush1.bf16.msra.mxu0 %v266
  %283 = vmatprep.subr.bf16.mxu0 0
  %284 = vmatpush1.bf16.msra.mxu0 %v267
  %285 = vmatprep.subr.bf16.mxu0 0
  %286 = vmatpush1.bf16.msra.mxu0 %v268
  %287 = vmatprep.subr.bf16.mxu0 0
  %288 = vmatpush1.bf16.msra.mxu0 0
  %289 = vmatprep.subr.bf16.mxu0 0
  %290 = vmatpush1.bf16.msra.mxu0 0
  %291 = vmatprep.subr.bf16.mxu0 0
  %292 = vmatpush1.bf16.msra.mxu0 0
  %293 = vmatprep.subr.bf16.mxu0 0
  %294 = vmatpush1.bf16.msra.mxu0 0
  %295 = vmatprep.subr.bf16.mxu0 0
  %296 = vmatpush1.bf16.msra.mxu0 0
  %297 = vmatprep.subr.bf16.mxu0 0
  %298 = vmatpush1.bf16.msra.mxu0 0
  %299 = vmatprep.subr.bf16.mxu0 0
  %300 = vmatpush1.bf16.msra.mxu0 0
  %301 = vmatprep.subr.bf16.mxu0 0
  %302 = vmatpush1.bf16.msra.mxu0 0
  %303 = vmatprep.subr.bf16.mxu0 0
  %304 = vmatpush1.bf16.msra.mxu0 0
  %305 = vmatprep.subr.bf16.mxu0 0
  %306 = vmatpush1.bf16.msra.mxu0 0
  %307 = vmatprep.subr.bf16.mxu0 0
  %308 = vmatpush1.bf16.msra.mxu0 0
  %309 = vmatprep.subr.bf16.mxu0 0
  %310 = vmatpush1.bf16.msra.mxu0 0
  %311 = vmatprep.mubr.bf16.mxu0 0
  %312 = vmatmul.mubr.bf16.gmra.mrb[0].mxu0 %v274
  %v313 = vpop.f32.mrb[0].mxu0
  %v314 = vadd.f32 %v247, %v313
  %v315 = vpop.f32.mrb[0].mxu0
  %v316 = vpop.f32.mrb[0].mxu0
  %v317 = vadd.f32 %v247, %v316
  %v318 = vpop.f32.mrb[0].mxu0
  %319 = vmatprep.mubr.bf16.mxu0 0
  %320 = vmatmul.mubr.bf16.gmra.mrb[0].mxu0 %v277
  %v321 = vpop.f32.mrb[0].mxu0
  %v322 = vadd.f32 %v247, %v321
  %v323 = vpop.f32.mrb[0].mxu0
  %v324 = vpop.f32.mrb[0].mxu0
  %v325 = vadd.f32 %v247, %v324
  %v326 = vpop.f32.mrb[0].mxu0
  %327 = vdwg.mxu0
  %v328 = vmul.f32 %v314, %v314
  %v329 = vmul.f32 %v317, %v317
  %v330 = vmul.f32 %v322, %v322
  %v331 = vmul.f32 %v325, %v325
  %v332 = vmul.f32 %v314, %v328
  %v333 = vmul.f32 %v317, %v329
  %v334 = vmul.f32 %v322, %v330
  %v335 = vmul.f32 %v325, %v331
  %v336 = vmul.f32 %v332, 0.044715
  %v337 = vmul.f32 %v333, 0.044715
  %v338 = vmul.f32 %v334, 0.044715
  %v339 = vmul.f32 %v335, 0.044715
  %v340 = vadd.f32 %v314, %v336
  %v341 = vadd.f32 %v317, %v337
  %v342 = vadd.f32 %v322, %v338
  %v343 = vadd.f32 %v325, %v339
  %v344 = vmul.f32 %v340, 0.7978846
  %v345 = vmul.f32 %v341, 0.7978846
  %v346 = vmul.f32 %v342, 0.7978846
  %v347 = vmul.f32 %v343, 0.7978846
  %v348 = vtanh.pop %v344
  %v349 = vtanh.pop %v345
  %v350 = vtanh.pop %v346
  %v351 = vtanh.pop %v347
  %v352 = vadd.f32 %v348, 1.0
  %v353 = vadd.f32 %v349, 1.0
  %v354 = vadd.f32 %v350, 1.0
  %v355 = vadd.f32 %v351, 1.0
  %v356 = vmul.f32 %v352, 0.5
  %v357 = vmul.f32 %v353, 0.5
  %v358 = vmul.f32 %v354, 0.5
  %v359 = vmul.f32 %v355, 0.5
  %v360 = vmul.f32 %v314, %v356
  %v361 = vmul.f32 %v317, %v357
  %v362 = vmul.f32 %v322, %v358
  %v363 = vmul.f32 %v325, %v359
  %v364 = vpack.c.bf16 %v361, %v360
  %v365 = vpack.c.bf16 %v363, %v362
  %v366 = vld [vmem:[%s8] sm:$0xf]
  %v367 = vld [vmem:[%s8 + $0x4] sm:$0xf]
  %v368 = vld [vmem:[%s8 + $0x8] sm:$0xf]
  %v369 = vld [vmem:[%s8 + $0xc] sm:$0xf]
  %v370 = vld [vmem:[%s8 + $0x10] sm:$0xf]
  %v371 = vld [vmem:[%s8 + $0x14] sm:$0xf]
  %v372 = vld [vmem:[%s8 + $0x18] sm:$0xf]
  %v373 = vld [vmem:[%s8 + $0x1c] sm:$0xf]
  %v374 = vld [vmem:[%s8 + $0x20] sm:$0xf]
  %v375 = vld [vmem:[%s8 + $0x24] sm:$0xf]
  %v376 = vld [vmem:[%s8 + $0x28] sm:$0xf]
  %v377 = vld [vmem:[%s8 + $0x2c] sm:$0xf]
  %v378 = vld [vmem:[%s8 + $0x30] sm:$0xf]
  %v379 = vld [vmem:[%s8 + $0x34] sm:$0xf]
  %v380 = vld [vmem:[%s8 + $0x38] sm:$0xf]
  %v381 = vld [vmem:[%s8 + $0x3c] sm:$0xf]
  %v382 = vld [vmem:[%s9] sm:$0x1]
  %v384 = vlaneseq
  %v385 = vshrl.u32 %v384, 7
  %v386 = vsub.s32 0, %v385
  %v387 = vrot.slane %v382, %v386
  %v405 = vunpack.c.l.b16 %v366
  %v406 = vunpack.c.l.b16 %v367
  %v407 = vunpack.c.l.b16 %v368
  %v408 = vunpack.c.l.b16 %v369
  %v409 = vunpack.c.l.b16 %v370
  %v410 = vunpack.c.l.b16 %v371
  %v411 = vunpack.c.l.b16 %v372
  %v412 = vunpack.c.l.b16 %v373
  %v413 = vunpack.c.l.b16 %v374
  %v414 = vunpack.c.l.b16 %v375
  %v415 = vunpack.c.l.b16 %v376
  %v416 = vunpack.c.l.b16 %v377
  %v417 = vunpack.c.l.b16 %v378
  %v418 = vunpack.c.l.b16 %v379
  %v419 = vunpack.c.l.b16 %v380
  %v420 = vunpack.c.l.b16 %v381
  %v421 = vpack.c.b16 %v406, %v405
  %v422 = vpack.c.b16 %v408, %v407
  %v423 = vpack.c.b16 %v410, %v409
  %v424 = vpack.c.b16 %v412, %v411
  %v425 = vpack.c.b16 %v414, %v413
  %v426 = vpack.c.b16 %v416, %v415
  %v427 = vpack.c.b16 %v418, %v417
  %v428 = vpack.c.b16 %v420, %v419
  %437 = vmatprep.subr.bf16.mxu0 0
  %438 = vmatpush1.bf16.msra.mxu0 %v421
  %439 = vmatprep.subr.bf16.mxu0 0
  %440 = vmatpush1.bf16.msra.mxu0 %v422
  %441 = vmatprep.subr.bf16.mxu0 0
  %442 = vmatpush1.bf16.msra.mxu0 %v423
  %443 = vmatprep.subr.bf16.mxu0 0
  %444 = vmatpush1.bf16.msra.mxu0 %v424
  %445 = vmatprep.subr.bf16.mxu0 0
  %446 = vmatpush1.bf16.msra.mxu0 %v425
  %447 = vmatprep.subr.bf16.mxu0 0
  %448 = vmatpush1.bf16.msra.mxu0 %v426
  %449 = vmatprep.subr.bf16.mxu0 0
  %450 = vmatpush1.bf16.msra.mxu0 %v427
  %451 = vmatprep.subr.bf16.mxu0 0
  %452 = vmatpush1.bf16.msra.mxu0 %v428
  %453 = vmatprep.subr.bf16.mxu0 0
  %454 = vmatpush1.bf16.msra.mxu0 0
  %455 = vmatprep.subr.bf16.mxu0 0
  %456 = vmatpush1.bf16.msra.mxu0 0
  %457 = vmatprep.subr.bf16.mxu0 0
  %458 = vmatpush1.bf16.msra.mxu0 0
  %459 = vmatprep.subr.bf16.mxu0 0
  %460 = vmatpush1.bf16.msra.mxu0 0
  %461 = vmatprep.subr.bf16.mxu0 0
  %462 = vmatpush1.bf16.msra.mxu0 0
  %463 = vmatprep.subr.bf16.mxu0 0
  %464 = vmatpush1.bf16.msra.mxu0 0
  %465 = vmatprep.subr.bf16.mxu0 0
  %466 = vmatpush1.bf16.msra.mxu0 0
  %467 = vmatprep.subr.bf16.mxu0 0
  %468 = vmatpush1.bf16.msra.mxu0 0
  %469 = vmatprep.mubr.bf16.mxu0 0
  %470 = vmatmul.mubr.bf16.gmra.mrb[0].mxu0 %v364
  %v471 = vpop.f32.mrb[0].mxu0
  %v472 = vadd.f32 %v387, %v471
  %v473 = vpop.f32.mrb[0].mxu0
  %v474 = vpop.f32.mrb[0].mxu0
  %v475 = vadd.f32 %v387, %v474
  %v476 = vpop.f32.mrb[0].mxu0
  %477 = vmatprep.mubr.bf16.mxu0 0
  %478 = vmatmul.mubr.bf16.gmra.mrb[0].mxu0 %v365
  %v479 = vpop.f32.mrb[0].mxu0
  %v480 = vadd.f32 %v387, %v479
  %v481 = vpop.f32.mrb[0].mxu0
  %v482 = vpop.f32.mrb[0].mxu0
  %v483 = vadd.f32 %v387, %v482
  %v484 = vpop.f32.mrb[0].mxu0
  %485 = vdwg.mxu0
  %v486 = vadd.f32 %v153, %v472
  %v487 = vadd.f32 %v154, %v475
  %v488 = vadd.f32 %v155, %v480
  %v489 = vadd.f32 %v156, %v483
  %490 = vst.msk [vmem:[%s10] sm:$0xff] %vm97, %v486
  %491 = vst.msk [vmem:[%s10 + $0x8] sm:$0xff] %vm97, %v487
  %492 = vst.msk [vmem:[%s10 + $0x10] sm:$0xff] %vm97, %v488
  %493 = vst.msk [vmem:[%s10 + $0x18] sm:$0xff] %vm97, %v489
  // Predicated region
  $region42: #{_dense_forward.14} parent=0 // pred_check
    _
  $region43: #{_dense_forward.14} parent=0 // pred_check_branch
    %495 = sbr.rel (0) target = $region45
  $region44: #{_dense_forward.14} parent=0 // pred_region
    _
  $region45: #{_dense_forward.14} parent=0 // pred_fallthru
    _
  // Predicated region
  $region46: #{_dense_forward.14} parent=0 // pred_check
    _
  $region47: #{_dense_forward.14} parent=0 // pred_check_branch
    %497 = sbr.rel (0) target = $region49
  $region48: #{_dense_forward.14} parent=0 // pred_region
    _
  $region49: #{_dense_forward.14} parent=0 // pred_fallthru
    _

// kernel: _dense_forward.19
$region0: #{_dense_forward.19}
  #allocation0 [shape = 'u32[]', space=smem, size = 0x4, offset = 0x4, fixed_abs, tag = 'smem constant byte address 0x4 - core index']
  #allocation1 [shape = 'u32[144,128]{1,0:T(1,128)}', space=vmem, size = 0x12000, scoped, tag = 'internal scratch']
  %s0 = inlined_call_operand.vmem [shape: f32[32,64], index: 0, kind: input, shape index: {}]
  %s1 = inlined_call_operand.vmem [shape: bf16[64,64], index: 1, kind: input, shape index: {}]
  %s2 = inlined_call_operand.vmem [shape: f32[1,64], index: 2, kind: input, shape index: {}]
  %s3 = inlined_call_operand.vmem [shape: f32[1,64], index: 3, kind: input, shape index: {}]
  %s4 = inlined_call_operand.vmem [shape: f32[1,64], index: 4, kind: input, shape index: {}]
  %s5 = inlined_call_operand.vmem [shape: bf16[64,128], index: 5, kind: input, shape index: {}]
  %s6 = inlined_call_operand.vmem [shape: f32[1,128], index: 6, kind: input, shape index: {}]
  %s7 = inlined_call_operand.hbm [shape: f32[32,128], index: 7, kind: output, shape index: {}]
  %s8 = sld [smem:[#allocation0]]
  $region38: #{_dense_forward.19} parent=0
    _
  %s10 = ssub.s32 1, %s8
  %s11 = scalar_select 0, %s10, %s8
  $region1: #{_dense_forward.19} parent=0
    #allocation2 [shape = 'u8[16384]{0}', space=vmem, size = 0x4000, scoped, tag = 'output window, operand 0, single buffered']
    #allocation3 [shape = 's32[1]{0}', space=sflag, size = 0x4, scoped, tag = 'scoped memory for _dense_forward.19']
    %12 = vsyncpa [#allocation3], 0
    // Predicated region
    $region2: #{_dense_forward.19} parent=1 // pred_check
      _
    $region3: #{_dense_forward.19} parent=1 // pred_check_branch
      %14 = sbr.rel (0) target = $region5
    $region4: #{_dense_forward.19} parent=1 // pred_region
      _
    $region5: #{_dense_forward.19} parent=1 // pred_fallthru
      _
    // Predicated region
    $region6: #{_dense_forward.19} parent=1 // pred_check
      _
    $region7: #{_dense_forward.19} parent=1 // pred_check_branch
      %16 = sbr.rel (0) target = $region9
    $region8: #{_dense_forward.19} parent=1 // pred_region
      _
    $region9: #{_dense_forward.19} parent=1 // pred_fallthru
      _
    // Predicated region
    $region10: #{_dense_forward.19} parent=1 // pred_check
      _
    $region11: #{_dense_forward.19} parent=1 // pred_check_branch
      %18 = sbr.rel (0) target = $region13
    $region12: #{_dense_forward.19} parent=1 // pred_region
      _
    $region13: #{_dense_forward.19} parent=1 // pred_fallthru
      _
    // Predicated region
    $region14: #{_dense_forward.19} parent=1 // pred_check
      _
    $region15: #{_dense_forward.19} parent=1 // pred_check_branch
      %20 = sbr.rel (0) target = $region17
    $region16: #{_dense_forward.19} parent=1 // pred_region
      _
    $region17: #{_dense_forward.19} parent=1 // pred_fallthru
      _
    // Predicated region
    $region18: #{_dense_forward.19} parent=1 // pred_check
      _
    $region19: #{_dense_forward.19} parent=1 // pred_check_branch
      %22 = sbr.rel (0) target = $region21
    $region20: #{_dense_forward.19} parent=1 // pred_region
      _
    $region21: #{_dense_forward.19} parent=1 // pred_fallthru
      _
    // Predicated region
    $region22: #{_dense_forward.19} parent=1 // pred_check
      _
    $region23: #{_dense_forward.19} parent=1 // pred_check_branch
      %24 = sbr.rel (0) target = $region25
    $region24: #{_dense_forward.19} parent=1 // pred_region
      _
    $region25: #{_dense_forward.19} parent=1 // pred_fallthru
      _
    // Predicated region
    $region26: #{_dense_forward.19} parent=1 // pred_check
      _
    $region27: #{_dense_forward.19} parent=1 // pred_check_branch
      %26 = sbr.rel (0) target = $region29
    $region28: #{_dense_forward.19} parent=1 // pred_region
      _
    $region29: #{_dense_forward.19} parent=1 // pred_fallthru
      _
    %v28 = vld [vmem:[%s0] sm:$0xff]
    %v29 = vld [vmem:[%s0 + $0x8] sm:$0xff]
    %v30 = vld [vmem:[%s0 + $0x10] sm:$0xff]
    %v31 = vld [vmem:[%s0 + $0x18] sm:$0xff]
    %v32 = vpack.c.bf16 %v29, %v28
    %v33 = vpack.c.bf16 %v31, %v30
    %v34 = vld [vmem:[%s1] sm:$0xf]
    %v35 = vld [vmem:[%s1 + $0x4] sm:$0xf]
    %v36 = vld [vmem:[%s1 + $0x8] sm:$0xf]
    %v37 = vld [vmem:[%s1 + $0xc] sm:$0xf]
    %v38 = vld [vmem:[%s1 + $0x10] sm:$0xf]
    %v39 = vld [vmem:[%s1 + $0x14] sm:$0xf]
    %v40 = vld [vmem:[%s1 + $0x18] sm:$0xf]
    %v41 = vld [vmem:[%s1 + $0x1c] sm:$0xf]
    %v42 = vld [vmem:[%s2] sm:$0x1]
    %v44 = vlaneseq
    %v45 = vshrl.u32 %v44, 7
    %v46 = vsub.s32 0, %v45
    %v47 = vrot.slane %v42, %v46
    %v57 = vunpack.c.l.b16 %v34
    %v58 = vunpack.c.l.b16 %v35
    %v59 = vunpack.c.l.b16 %v36
    %v60 = vunpack.c.l.b16 %v37
    %v61 = vunpack.c.l.b16 %v38
    %v62 = vunpack.c.l.b16 %v39
    %v63 = vunpack.c.l.b16 %v40
    %v64 = vunpack.c.l.b16 %v41
    %v65 = vpack.c.b16 %v58, %v57
    %v66 = vpack.c.b16 %v60, %v59
    %v67 = vpack.c.b16 %v62, %v61
    %v68 = vpack.c.b16 %v64, %v63
    %vm73 = vcmask 523264
    %v75 = vsel %vm73, %v32, 0
    %v78 = vsel %vm73, %v33, 0
    %80 = vmatprep.subr.bf16.mxu0 0
    %81 = vmatpush1.bf16.msra.mxu0 %v65
    %82 = vmatprep.subr.bf16.mxu0 0
    %83 = vmatpush1.bf16.msra.mxu0 %v66
    %84 = vmatprep.subr.bf16.mxu0 0
    %85 = vmatpush1.bf16.msra.mxu0 %v67
    %86 = vmatprep.subr.bf16.mxu0 0
    %87 = vmatpush1.bf16.msra.mxu0 %v68
    %88 = vmatprep.subr.bf16.mxu0 0
    %89 = vmatpush1.bf16.msra.mxu0 0
    %90 = vmatprep.subr.bf16.mxu0 0
    %91 = vmatpush1.bf16.msra.mxu0 0
    %92 = vmatprep.subr.bf16.mxu0 0
    %93 = vmatpush1.bf16.msra.mxu0 0
    %94 = vmatprep.subr.bf16.mxu0 0
    %95 = vmatpush1.bf16.msra.mxu0 0
    %96 = vmatprep.subr.bf16.mxu0 0
    %97 = vmatpush1.bf16.msra.mxu0 0
    %98 = vmatprep.subr.bf16.mxu0 0
    %99 = vmatpush1.bf16.msra.mxu0 0
    %100 = vmatprep.subr.bf16.mxu0 0
    %101 = vmatpush1.bf16.msra.mxu0 0
    %102 = vmatprep.subr.bf16.mxu0 0
    %103 = vmatpush1.bf16.msra.mxu0 0
    %104 = vmatprep.subr.bf16.mxu0 0
    %105 = vmatpush1.bf16.msra.mxu0 0
    %106 = vmatprep.subr.bf16.mxu0 0
    %107 = vmatpush1.bf16.msra.mxu0 0
    %108 = vmatprep.subr.bf16.mxu0 0
    %109 = vmatpush1.bf16.msra.mxu0 0
    %110 = vmatprep.subr.bf16.mxu0 0
    %111 = vmatpush1.bf16.msra.mxu0 0
    %112 = vmatprep.mubr.bf16.mxu0 0
    %113 = vmatmul.mubr.bf16.gmra.mrb[0].mxu0 %v75
    %v114 = vpop.f32.mrb[0].mxu0
    %v115 = vadd.f32 %v47, %v114
    %v116 = vpop.f32.mrb[0].mxu0
    %v117 = vpop.f32.mrb[0].mxu0
    %v118 = vadd.f32 %v47, %v117
    %v119 = vpop.f32.mrb[0].mxu0
    %120 = vmatprep.mubr.bf16.mxu0 0
    %121 = vmatmul.mubr.bf16.gmra.mrb[0].mxu0 %v78
    %v122 = vpop.f32.mrb[0].mxu0
    %v123 = vadd.f32 %v47, %v122
    %v124 = vpop.f32.mrb[0].mxu0
    %v125 = vpop.f32.mrb[0].mxu0
    %v126 = vadd.f32 %v47, %v125
    %v127 = vpop.f32.mrb[0].mxu0
    %128 = vdwg.mxu0
    %v129 = vmul.f32 %v115, %v115
    %v130 = vmul.f32 %v118, %v118
    %v131 = vmul.f32 %v123, %v123
    %v132 = vmul.f32 %v126, %v126
    %v133 = vmul.f32 %v115, %v129
    %v134 = vmul.f32 %v118, %v130
    %v135 = vmul.f32 %v123, %v131
    %v136 = vmul.f32 %v126, %v132
    %v137 = vmul.f32 %v133, 0.044715
    %v138 = vmul.f32 %v134, 0.044715
    %v139 = vmul.f32 %v135, 0.044715
    %v140 = vmul.f32 %v136, 0.044715
    %v141 = vadd.f32 %v115, %v137
    %v142 = vadd.f32 %v118, %v138
    %v143 = vadd.f32 %v123, %v139
    %v144 = vadd.f32 %v126, %v140
    %v145 = vmul.f32 %v141, 0.7978846
    %v146 = vmul.f32 %v142, 0.7978846
    %v147 = vmul.f32 %v143, 0.7978846
    %v148 = vmul.f32 %v144, 0.7978846
    %v149 = vtanh.pop %v145
    %v150 = vtanh.pop %v146
    %v151 = vtanh.pop %v147
    %v152 = vtanh.pop %v148
    %v153 = vadd.f32 %v149, 1.0
    %v154 = vadd.f32 %v150, 1.0
    %v155 = vadd.f32 %v151, 1.0
    %v156 = vadd.f32 %v152, 1.0
    %v157 = vmul.f32 %v153, 0.5
    %v158 = vmul.f32 %v154, 0.5
    %v159 = vmul.f32 %v155, 0.5
    %v160 = vmul.f32 %v156, 0.5
    %v161 = vmul.f32 %v115, %v157
    %v162 = vmul.f32 %v118, %v158
    %v163 = vmul.f32 %v123, %v159
    %v164 = vmul.f32 %v126, %v160
    %v165 = vld [vmem:[%s3] sm:$0x1]
    %v166 = vld [vmem:[%s4] sm:$0x1]
    %v167 = vsel %vm73, %v161, 0.0
    %168 = vadd.xlane.f32.xlu0 %v167
    %v169 = vpop.xlane.xlu0 %168
    %v170 = vsel %vm73, %v162, 0.0
    %171 = vadd.xlane.f32.xlu0 %v170
    %v172 = vpop.xlane.xlu0 %171
    %v173 = vsel %vm73, %v163, 0.0
    %174 = vadd.xlane.f32.xlu0 %v173
    %v175 = vpop.xlane.xlu0 %174
    %v176 = vsel %vm73, %v164, 0.0
    %177 = vadd.xlane.f32.xlu0 %v176
    %v178 = vpop.xlane.xlu0 %177
    %v179 = vrcp.pop 64.0
    %v180 = vmul.f32 %v169, %v179
    %v181 = vmul.f32 %v172, %v179
    %v182 = vmul.f32 %v175, %v179
    %v183 = vmul.f32 %v178, %v179
    %v184 = vsub.f32 %v161, %v180
    %v185 = vsub.f32 %v162, %v181
    %v186 = vsub.f32 %v163, %v182
    %v187 = vsub.f32 %v164, %v183
    %v188 = vmul.f32 %v184, %v184
    %v189 = vmul.f32 %v185, %v185
    %v190 = vmul.f32 %v186, %v186
    %v191 = vmul.f32 %v187, %v187
    %v192 = vsel %vm73, %v188, 0.0
    %193 = vadd.xlane.f32.xlu0 %v192
    %v194 = vpop.xlane.xlu0 %193
    %v195 = vsel %vm73, %v189, 0.0
    %196 = vadd.xlane.f32.xlu0 %v195
    %v197 = vpop.xlane.xlu0 %196
    %v198 = vsel %vm73, %v190, 0.0
    %199 = vadd.xlane.f32.xlu0 %v198
    %v200 = vpop.xlane.xlu0 %199
    %v201 = vsel %vm73, %v191, 0.0
    %202 = vadd.xlane.f32.xlu0 %v201
    %v203 = vpop.xlane.xlu0 %202
    %v204 = vmul.f32 %v194, %v179
    %v205 = vmul.f32 %v197, %v179
    %v206 = vmul.f32 %v200, %v179
    %v207 = vmul.f32 %v203, %v179
    %v208 = vadd.f32 %v204, 1e-05
    %v209 = vadd.f32 %v205, 1e-05
    %v210 = vadd.f32 %v206, 1e-05
    %v211 = vadd.f32 %v207, 1e-05
    %v212 = vrsqrt.pop %v208
    %v213 = vrsqrt.pop %v209
    %v214 = vrsqrt.pop %v210
    %v215 = vrsqrt.pop %v211
    %v216 = vmul.f32 %v184, %v212
    %v217 = vmul.f32 %v185, %v213
    %v218 = vmul.f32 %v186, %v214
    %v219 = vmul.f32 %v187, %v215
    %v221 = vlaneseq
    %v222 = vshrl.u32 %v221, 7
    %v223 = vsub.s32 0, %v222
    %v224 = vrot.slane %v165, %v223
    %v226 = vmul.f32 %v216, %v224
    %v227 = vmul.f32 %v217, %v224
    %v228 = vmul.f32 %v218, %v224
    %v229 = vmul.f32 %v219, %v224
    %v231 = vlaneseq
    %v232 = vshrl.u32 %v231, 7
    %v233 = vsub.s32 0, %v232
    %v234 = vrot.slane %v166, %v233
    %v236 = vadd.f32 %v226, %v234
    %v237 = vadd.f32 %v227, %v234
    %v238 = vadd.f32 %v228, %v234
    %v239 = vadd.f32 %v229, %v234
    %v240 = vpack.c.bf16 %v237, %v236
    %v241 = vpack.c.bf16 %v239, %v238
    %v242 = vld [vmem:[%s5] sm:$0xf]
    %v243 = vld [vmem:[%s5 + $0x4] sm:$0xf]
    %v244 = vld [vmem:[%s5 + $0x8] sm:$0xf]
    %v245 = vld [vmem:[%s5 + $0xc] sm:$0xf]
    %v246 = vld [vmem:[%s5 + $0x10] sm:$0xf]
    %v247 = vld [vmem:[%s5 + $0x14] sm:$0xf]
    %v248 = vld [vmem:[%s5 + $0x18] sm:$0xf]
    %v249 = vld [vmem:[%s5 + $0x1c] sm:$0xf]
    %v250 = vld [vmem:[%s6] sm:$0x1]
    %v252 = vlaneseq
    %v253 = vshrl.u32 %v252, 7
    %v254 = vsub.s32 0, %v253
    %v255 = vrot.slane %v250, %v254
    %v265 = vunpack.c.l.b16 %v242
    %v266 = vunpack.c.l.b16 %v243
    %v267 = vunpack.c.l.b16 %v244
    %v268 = vunpack.c.l.b16 %v245
    %v269 = vunpack.c.l.b16 %v246
    %v270 = vunpack.c.l.b16 %v247
    %v271 = vunpack.c.l.b16 %v248
    %v272 = vunpack.c.l.b16 %v249
    %v273 = vpack.c.b16 %v266, %v265
    %v274 = vpack.c.b16 %v268, %v267
    %v275 = vpack.c.b16 %v270, %v269
    %v276 = vpack.c.b16 %v272, %v271
    %v282 = vsel %vm73, %v240, 0
    %v285 = vsel %vm73, %v241, 0
    %287 = vmatprep.subr.bf16.mxu0 0
    %288 = vmatpush1.bf16.msra.mxu0 %v273
    %289 = vmatprep.subr.bf16.mxu0 0
    %290 = vmatpush1.bf16.msra.mxu0 %v274
    %291 = vmatprep.subr.bf16.mxu0 0
    %292 = vmatpush1.bf16.msra.mxu0 %v275
    %293 = vmatprep.subr.bf16.mxu0 0
    %294 = vmatpush1.bf16.msra.mxu0 %v276
    %295 = vmatprep.subr.bf16.mxu0 0
    %296 = vmatpush1.bf16.msra.mxu0 0
    %297 = vmatprep.subr.bf16.mxu0 0
    %298 = vmatpush1.bf16.msra.mxu0 0
    %299 = vmatprep.subr.bf16.mxu0 0
    %300 = vmatpush1.bf16.msra.mxu0 0
    %301 = vmatprep.subr.bf16.mxu0 0
    %302 = vmatpush1.bf16.msra.mxu0 0
    %303 = vmatprep.subr.bf16.mxu0 0
    %304 = vmatpush1.bf16.msra.mxu0 0
    %305 = vmatprep.subr.bf16.mxu0 0
    %306 = vmatpush1.bf16.msra.mxu0 0
    %307 = vmatprep.subr.bf16.mxu0 0
    %308 = vmatpush1.bf16.msra.mxu0 0
    %309 = vmatprep.subr.bf16.mxu0 0
    %310 = vmatpush1.bf16.msra.mxu0 0
    %311 = vmatprep.subr.bf16.mxu0 0
    %312 = vmatpush1.bf16.msra.mxu0 0
    %313 = vmatprep.subr.bf16.mxu0 0
    %314 = vmatpush1.bf16.msra.mxu0 0
    %315 = vmatprep.subr.bf16.mxu0 0
    %316 = vmatpush1.bf16.msra.mxu0 0
    %317 = vmatprep.subr.bf16.mxu0 0
    %318 = vmatpush1.bf16.msra.mxu0 0
    %319 = vmatprep.mubr.bf16.mxu0 0
    %320 = vmatmul.mubr.bf16.gmra.mrb[0].mxu0 %v282
    %v321 = vpop.f32.mrb[0].mxu0
    %v322 = vadd.f32 %v255, %v321
    %v323 = vpop.f32.mrb[0].mxu0
    %v324 = vpop.f32.mrb[0].mxu0
    %v325 = vadd.f32 %v255, %v324
    %v326 = vpop.f32.mrb[0].mxu0
    %327 = vmatprep.mubr.bf16.mxu0 0
    %328 = vmatmul.mubr.bf16.gmra.mrb[0].mxu0 %v285
    %v329 = vpop.f32.mrb[0].mxu0
    %v330 = vadd.f32 %v255, %v329
    %v331 = vpop.f32.mrb[0].mxu0
    %v332 = vpop.f32.mrb[0].mxu0
    %v333 = vadd.f32 %v255, %v332
    %v334 = vpop.f32.mrb[0].mxu0
    %335 = vdwg.mxu0
    %336 = vst [vmem:[#allocation2] sm:$0xff] %v322
    %337 = vst [vmem:[#allocation2 + $0x8] sm:$0xff] %v325
    %338 = vst [vmem:[#allocation2 + $0x10] sm:$0xff] %v330
    %339 = vst [vmem:[#allocation2 + $0x18] sm:$0xff] %v333
    // Predicated region
    $region30: #{_dense_forward.19} parent=1 // pred_check
      _
    $region31: #{_dense_forward.19} parent=1 // pred_check_branch
      %341 = sbr.rel (0) target = $region33
    $region32: #{_dense_forward.19} parent=1 // pred_region
      %s343 = ssub.s32 512, 512
      %344 = vsyncadd [#allocation3], %s343
      %s345 = sshll.u32 [#allocation2], 4
      %s346 = int_to_ptr.vmem [resolvable:$true] %s345
      %351 = dma.vmem_to_hbm [thread:$0]  %s346, 512, %s7, [#allocation3], 128, 128, 8
    $region33: #{_dense_forward.19} parent=1 // pred_fallthru
      _
    // Predicated region
    $region34: #{_dense_forward.19} parent=1 // pred_check
      _
    $region35: #{_dense_forward.19} parent=1 // pred_check_branch
      %353 = sbr.rel (0) target = $region37
    $region36: #{_dense_forward.19} parent=1 // pred_region
      %354 = dma.done [#allocation3], 512
    $region37: #{_dense_forward.19} parent=1 // pred_fallthru
      _
    %355 = vsyncpa [#allocation3], 1

// kernel: _dense_forward.10
$region0: #{_dense_forward.10}
  #allocation0 [shape = 'u32[]', space=smem, size = 0x4, offset = 0x4, fixed_abs, tag = 'smem constant byte address 0x4 - core index']
  #allocation1 [shape = 'u32[144,128]{1,0:T(1,128)}', space=vmem, size = 0x12000, scoped, tag = 'internal scratch']
  #allocation2 [shape = 'f32[1,1]{1,0:T(1,128)S(1)}', space=vmem, size = 0x200, scoped, tag = 'scoped memory for _dense_forward.10']
  %s0 = inlined_call_operand.vmem [shape: f32[2,16,16], index: 0, kind: input, shape index: {}]
  %s1 = inlined_call_operand.vmem [shape: f32[16,1], index: 1, kind: input, shape index: {}]
  %s2 = inlined_call_operand.<no memory space> [shape: f32[1,1], index: 2, kind: input, shape index: {}]
  %s3 = inlined_call_operand.vmem [shape: bf16[16,16], index: 3, kind: input, shape index: {}]
  %s4 = inlined_call_operand.vmem [shape: f32[16,1], index: 4, kind: input, shape index: {}]
  %s5 = inlined_call_operand.vmem [shape: bf16[4,16], index: 5, kind: input, shape index: {}]
  %s6 = inlined_call_operand.vmem [shape: f32[4,1], index: 6, kind: input, shape index: {}]
  %s7 = inlined_call_operand.vmem [shape: bf16[2,4,16,16], index: 7, kind: output, shape index: {}]
  %s8 = sld [smem:[#allocation0]]
  $region61: #{_dense_forward.10} parent=0
    _
  %s10 = ssub.s32 1, %s8
  %s11 = scalar_select 0, %s10, %s8
  %v12 = vstv %s2
  %13 = vst [vmem:[#allocation2] sm:$0x1] %v12
  loop: start=0, step=1, limit=4
  $region2: #{_dense_forward.10} parent=0 // loop_pre_header
    _
  $region3: #{_dense_forward.10} parent=0 // loop_header
    %s15 = sphi 0, %s19
    %p16 = scmp.ge.s32.totalorder %s15, 4
    %s22 = sphi 0, %s34
    %s23 = sphi 0, %s30
    %s24 = sphi 0, %s22
    %s25 = sphi 0, %s23
    %s26 = sphi 0, %s24
    %s27 = sphi 0, %s25
    %s39 = sphi 0, %s41
    %s42 = sphi 0, %s39
    %s43 = sphi 0, %s42
    %s59 = sphi 0, %s43
    %s63 = sphi 0, %s63
    %s65 = sphi 0, %s63
    %s66 = sphi 0, %s65
    %s80 = sphi 0, %s66
    %s84 = sphi 0, %s84
    %s86 = sphi 0, %s84
    %s87 = sphi 0, %s86
    %s101 = sphi 0, %s87
    %s105 = sphi 0, %s105
    %s107 = sphi 0, %s105
    %s108 = sphi 0, %s107
    %s122 = sphi 0, %s108
    %s126 = sphi 0, %s126
    %s128 = sphi 0, %s126
    %s129 = sphi 0, %s128
    %s143 = sphi 0, %s129
    %s147 = sphi 0, %s147
    %s149 = sphi 0, %s147
    %s150 = sphi 0, %s149
    %s164 = sphi 0, %s150
    %s168 = sphi 0, %s168
    %s170 = sphi 0, %s168
    %s171 = sphi 0, %s170
    %s185 = sphi 0, %s171
    %s193 = sphi 0, %s195
    %s196 = sphi 0, %s193
    %s197 = sphi 0, %s196
    %s213 = sphi 0, %s197
  $region4: #{_dense_forward.10} parent=0 // loop_header_branch
    %18 = sbr.rel (%p16) target = $region8
  $region5: #{_dense_forward.10} parent=0 // loop_body
    %s20 = ssub.s32 %s15, 1
    %s21 = ssub.s32 %s15, 2
    %s28 = sadd.s32 1, %s23
    %p29 = scmp.ge.s32.totalorder %s28, 1
    %s30 = scalar_select %p29, 0, %s28
    %s31 = sadd.s32 1, %s22
    %s32 = scalar_select %p29, %s31, %s22
    %p33 = scmp.ge.s32.totalorder %s32, 2
    %s34 = scalar_select %p33, 0, %s32
    %s35 = ssub.s32 %s22, %s34
    %s36 = ssub.s32 %s23, %s30
    %s37 = sor.u32 %s35, %s36
    %p38 = scmp.eq.s32.totalorder %s37, 0
    %s40 = sadd.s32 %s39, 1
    %s41 = scalar_select %p38, %s39, %s40
    %p44 = pneg %p38
    %p45 = scmp.eq.s32.totalorder %s15, 1
    %p46 = por %p44, %p45
    %p47 = scmp.ne.s32.totalorder %s39, %s42
    %p48 = scmp.eq.s32.totalorder %s15, 0
    %p49 = por %p47, %p48
    %p50 = scmp.ne.s32.totalorder %s39, %s42
    %p51 = scmp.eq.s32.totalorder %s20, 1
    %p52 = por %p50, %p51
    %p53 = scmp.ne.s32.totalorder %s42, %s43
    %p54 = scmp.eq.s32.totalorder %s20, 0
    %p55 = por %p53, %p54
    %p56 = scmp.ne.s32.totalorder %s42, %s43
    %p57 = scmp.eq.s32.totalorder %s21, 1
    %p58 = por %p56, %p57
    %p60 = scmp.ne.s32.totalorder %s43, %s59
    %p61 = scmp.eq.s32.totalorder %s21, 0
    %p62 = por %p60, %p61
    %s64 = sadd.s32 %s63, 1
    %p67 = scmp.eq.s32.totalorder %s15, 1
    %p68 = scmp.ne.s32.totalorder %s63, %s65
    %p69 = scmp.eq.s32.totalorder %s15, 0
    %p70 = por %p68, %p69
    %p71 = scmp.ne.s32.totalorder %s63, %s65
    %p72 = scmp.eq.s32.totalorder %s20, 1
    %p73 = por %p71, %p72
    %p74 = scmp.ne.s32.totalorder %s65, %s66
    %p75 = scmp.eq.s32.totalorder %s20, 0
    %p76 = por %p74, %p75
    %p77 = scmp.ne.s32.totalorder %s65, %s66
    %p78 = scmp.eq.s32.totalorder %s21, 1
    %p79 = por %p77, %p78
    %p81 = scmp.ne.s32.totalorder %s66, %s80
    %p82 = scmp.eq.s32.totalorder %s21, 0
    %p83 = por %p81, %p82
    %s85 = sadd.s32 %s84, 1
    %p88 = scmp.eq.s32.totalorder %s15, 1
    %p89 = scmp.ne.s32.totalorder %s84, %s86
    %p90 = scmp.eq.s32.totalorder %s15, 0
    %p91 = por %p89, %p90
    %p92 = scmp.ne.s32.totalorder %s84, %s86
    %p93 = scmp.eq.s32.totalorder %s20, 1
    %p94 = por %p92, %p93
    %p95 = scmp.ne.s32.totalorder %s86, %s87
    %p96 = scmp.eq.s32.totalorder %s20, 0
    %p97 = por %p95, %p96
    %p98 = scmp.ne.s32.totalorder %s86, %s87
    %p99 = scmp.eq.s32.totalorder %s21, 1
    %p100 = por %p98, %p99
    %p102 = scmp.ne.s32.totalorder %s87, %s101
    %p103 = scmp.eq.s32.totalorder %s21, 0
    %p104 = por %p102, %p103
    %s106 = sadd.s32 %s105, 1
    %p109 = scmp.eq.s32.totalorder %s15, 1
    %p110 = scmp.ne.s32.totalorder %s105, %s107
    %p111 = scmp.eq.s32.totalorder %s15, 0
    %p112 = por %p110, %p111
    %p113 = scmp.ne.s32.totalorder %s105, %s107
    %p114 = scmp.eq.s32.totalorder %s20, 1
    %p115 = por %p113, %p114
    %p116 = scmp.ne.s32.totalorder %s107, %s108
    %p117 = scmp.eq.s32.totalorder %s20, 0
    %p118 = por %p116, %p117
    %p119 = scmp.ne.s32.totalorder %s107, %s108
    %p120 = scmp.eq.s32.totalorder %s21, 1
    %p121 = por %p119, %p120
    %p123 = scmp.ne.s32.totalorder %s108, %s122
    %p124 = scmp.eq.s32.totalorder %s21, 0
    %p125 = por %p123, %p124
    %s127 = sadd.s32 %s126, 1
    %p130 = scmp.eq.s32.totalorder %s15, 1
    %p131 = scmp.ne.s32.totalorder %s126, %s128
    %p132 = scmp.eq.s32.totalorder %s15, 0
    %p133 = por %p131, %p132
    %p134 = scmp.ne.s32.totalorder %s126, %s128
    %p135 = scmp.eq.s32.totalorder %s20, 1
    %p136 = por %p134, %p135
    %p137 = scmp.ne.s32.totalorder %s128, %s129
    %p138 = scmp.eq.s32.totalorder %s20, 0
    %p139 = por %p137, %p138
    %p140 = scmp.ne.s32.totalorder %s128, %s129
    %p141 = scmp.eq.s32.totalorder %s21, 1
    %p142 = por %p140, %p141
    %p144 = scmp.ne.s32.totalorder %s129, %s143
    %p145 = scmp.eq.s32.totalorder %s21, 0
    %p146 = por %p144, %p145
    %s148 = sadd.s32 %s147, 1
    %p151 = scmp.eq.s32.totalorder %s15, 1
    %p152 = scmp.ne.s32.totalorder %s147, %s149
    %p153 = scmp.eq.s32.totalorder %s15, 0
    %p154 = por %p152, %p153
    %p155 = scmp.ne.s32.totalorder %s147, %s149
    %p156 = scmp.eq.s32.totalorder %s20, 1
    %p157 = por %p155, %p156
    %p158 = scmp.ne.s32.totalorder %s149, %s150
    %p159 = scmp.eq.s32.totalorder %s20, 0
    %p160 = por %p158, %p159
    %p161 = scmp.ne.s32.totalorder %s149, %s150
    %p162 = scmp.eq.s32.totalorder %s21, 1
    %p163 = por %p161, %p162
    %p165 = scmp.ne.s32.totalorder %s150, %s164
    %p166 = scmp.eq.s32.totalorder %s21, 0
    %p167 = por %p165, %p166
    %s169 = sadd.s32 %s168, 1
    %p172 = scmp.eq.s32.totalorder %s15, 1
    %p173 = scmp.ne.s32.totalorder %s168, %s170
    %p174 = scmp.eq.s32.totalorder %s15, 0
    %p175 = por %p173, %p174
    %p176 = scmp.ne.s32.totalorder %s168, %s170
    %p177 = scmp.eq.s32.totalorder %s20, 1
    %p178 = por %p176, %p177
    %p179 = scmp.ne.s32.totalorder %s170, %s171
    %p180 = scmp.eq.s32.totalorder %s20, 0
    %p181 = por %p179, %p180
    %p182 = scmp.ne.s32.totalorder %s170, %s171
    %p183 = scmp.eq.s32.totalorder %s21, 1
    %p184 = por %p182, %p183
    %p186 = scmp.ne.s32.totalorder %s171, %s185
    %p187 = scmp.eq.s32.totalorder %s21, 0
    %p188 = por %p186, %p187
    %s189 = ssub.s32 %s22, %s34
    %s190 = ssub.s32 %s23, %s30
    %s191 = sor.u32 %s189, %s190
    %p192 = scmp.eq.s32.totalorder %s191, 0
    %s194 = sadd.s32 %s193, 1
    %s195 = scalar_select %p192, %s193, %s194
    %p198 = pneg %p192
    %p199 = scmp.eq.s32.totalorder %s15, 1
    %p200 = por %p198, %p199
    %p201 = scmp.ne.s32.totalorder %s193, %s196
    %p202 = scmp.eq.s32.totalorder %s15, 0
    %p203 = por %p201, %p202
    %p204 = scmp.ne.s32.totalorder %s193, %s196
    %p205 = scmp.eq.s32.totalorder %s20, 1
    %p206 = por %p204, %p205
    %p207 = scmp.ne.s32.totalorder %s196, %s197
    %p208 = scmp.eq.s32.totalorder %s20, 0
    %p209 = por %p207, %p208
    %p210 = scmp.ne.s32.totalorder %s196, %s197
    %p211 = scmp.eq.s32.totalorder %s21, 1
    %p212 = por %p210, %p211
    %p214 = scmp.ne.s32.totalorder %s197, %s213
    %p215 = scmp.eq.s32.totalorder %s21, 0
    %p216 = por %p214, %p215
    %p217 = scmp.le.s32.totalorder 1, %s15
    %p218 = scmp.lt.s32.totalorder %s15, 3
    %p219 = pnand %p217, %p218
    %p220 = pneg %p219
    // Predicated region
    $region9: #{_dense_forward.10} parent=5 // pred_check
      _
    $region10: #{_dense_forward.10} parent=5 // pred_check_branch
      %222 = sbr.rel (%p219) target = $region12
    $region11: #{_dense_forward.10} parent=5 // pred_region
      %s223 = ssub.s32 %s15, 1
      // Predicated region
      $region13: #{_dense_forward.10} parent=11 // pred_check
        %p224 = pneg %p76
      $region14: #{_dense_forward.10} parent=11 // pred_check_branch
        %226 = sbr.rel (%p224) target = $region16
      $region15: #{_dense_forward.10} parent=11 // pred_region
        _
      $region16: #{_dense_forward.10} parent=11 // pred_fallthru
        _
      // Predicated region
      $region17: #{_dense_forward.10} parent=11 // pred_check
        %p227 = pneg %p97
      $region18: #{_dense_forward.10} parent=11 // pred_check_branch
        %229 = sbr.rel (%p227) target = $region20
      $region19: #{_dense_forward.10} parent=11 // pred_region
        _
      $region20: #{_dense_forward.10} parent=11 // pred_fallthru
        _
      // Predicated region
      $region21: #{_dense_forward.10} parent=11 // pred_check
        %p230 = pneg %p118
      $region22: #{_dense_forward.10} parent=11 // pred_check_branch
        %232 = sbr.rel (%p230) target = $region24
      $region23: #{_dense_forward.10} parent=11 // pred_region
        _
      $region24: #{_dense_forward.10} parent=11 // pred_fallthru
        _
      // Predicated region
      $region25: #{_dense_forward.10} parent=11 // pred_check
        %p233 = pneg %p139
      $region26: #{_dense_forward.10} parent=11 // pred_check_branch
        %235 = sbr.rel (%p233) target = $region28
      $region27: #{_dense_forward.10} parent=11 // pred_region
        _
      $region28: #{_dense_forward.10} parent=11 // pred_fallthru
        _
      // Predicated region
      $region29: #{_dense_forward.10} parent=11 // pred_check
        %p236 = pneg %p160
      $region30: #{_dense_forward.10} parent=11 // pred_check_branch
        %238 = sbr.rel (%p236) target = $region32
      $region31: #{_dense_forward.10} parent=11 // pred_region
        _
      $region32: #{_dense_forward.10} parent=11 // pred_fallthru
        _
      // Predicated region
      $region33: #{_dense_forward.10} parent=11 // pred_check
        %p239 = pneg %p181
      $region34: #{_dense_forward.10} parent=11 // pred_check_branch
        %241 = sbr.rel (%p239) target = $region36
      $region35: #{_dense_forward.10} parent=11 // pred_region
        _
      $region36: #{_dense_forward.10} parent=11 // pred_fallthru
        _
    $region12: #{_dense_forward.10} parent=5 // pred_fallthru
      _
    %p242 = scmp.lt.s32.totalorder %s15, 2
    // Predicated region
    $region37: #{_dense_forward.10} parent=5 // pred_check
      %p243 = pneg %p242
    $region38: #{_dense_forward.10} parent=5 // pred_check_branch
      %245 = sbr.rel (%p243) target = $region40
    $region39: #{_dense_forward.10} parent=5 // pred_region
      // Predicated region
      $region41: #{_dense_forward.10} parent=39 // pred_check
        %p246 = pneg %p49
      $region42: #{_dense_forward.10} parent=39 // pred_check_branch
        %248 = sbr.rel (%p246) target = $region44
      $region43: #{_dense_forward.10} parent=39 // pred_region
        %s249 = smul.u32 2, %s23
        %p250 = scmp.lt.s32.totalorder %s22, 1
        %s251 = scalar_select %p250, %s22, 1
        %p252 = scmp.lt.s32.totalorder %s249, 1
        %s253 = scalar_select %p252, %s249, 1
        %s254 = smul.addr %s251, 2
        %s255 = sadd.s32 %s253, %s254
        %s256 = smul.addr %s255, 8
        %s257 = scalar_lea.vmem %s0, %s256
        %s258 = smul.u32 2, %s23
      $region44: #{_dense_forward.10} parent=39 // pred_fallthru
        _
    $region40: #{_dense_forward.10} parent=5 // pred_fallthru
      _
    %p259 = scmp.le.s32.totalorder 1, %s15
    %p260 = scmp.lt.s32.totalorder %s15, 3
    %p261 = pnand %p259, %p260
    %p262 = pneg %p261
    // Predicated region
    $region45: #{_dense_forward.10} parent=5 // pred_check
      _
    $region46: #{_dense_forward.10} parent=5 // pred_check_branch
      %264 = sbr.rel (%p261) target = $region48
    $region47: #{_dense_forward.10} parent=5 // pred_region
      %s265 = ssub.s32 %s15, 1
      %s266 = smul.u32 2, %s25
      %p267 = scmp.lt.s32.totalorder %s24, 1
      %s268 = scalar_select %p267, %s24, 1
      %p269 = scmp.lt.s32.totalorder %s266, 1
      %s270 = scalar_select %p269, %s266, 1
      %s271 = smul.addr %s268, 2
      %s272 = sadd.s32 %s270, %s271
      %s273 = smul.addr %s272, 8
      %s274 = scalar_lea.vmem %s0, %s273
      %p275 = pneg %p55
      %p276 = pneg %p52
      %p277 = pneg %p76
      %p278 = pneg %p73
      %p279 = pneg %p97
      %p280 = pneg %p94
      %p281 = pneg %p118
      %p282 = pneg %p115
      %p283 = pneg %p139
      %p284 = pneg %p136
      %p285 = pneg %p160
      %p286 = pneg %p157
      %p287 = pneg %p181
      %p288 = pneg %p178
      %p289 = pneg %p209
      %p290 = pneg %p206
      %s291 = smul.u32 2, %s25
      %p292 = scmp.lt.s32.totalorder %s24, 1
      %s293 = scalar_select %p292, %s24, 1
      %p294 = scmp.lt.s32.totalorder %s291, 1
      %s295 = scalar_select %p294, %s291, 1
      %s296 = smul.addr %s293, 8
      %s297 = sadd.s32 %s295, %s296
      %s298 = smul.addr %s297, 4
      %s299 = scalar_lea.vmem %s7, %s298
      %s300 = smul.u32 2, %s25
      %p301 = scmp.lt.s32.totalorder %s24, 1
      %s302 = scalar_select %p301, %s24, 1
      %p303 = scmp.lt.s32.totalorder %s300, 1
      %s304 = scalar_select %p303, %s300, 1
      %s305 = smul.addr %s302, 2
      %s306 = sadd.s32 %s304, %s305
      %s307 = smul.addr %s306, 8
      %s308 = scalar_lea.vmem %s0, %s307
      %s309 = smul.u32 2, %s25
      %s310 = smul.u32 2, %s25
      %p311 = scmp.lt.s32.totalorder %s24, 1
      %s312 = scalar_select %p311, %s24, 1
      %p313 = scmp.lt.s32.totalorder %s310, 1
      %s314 = scalar_select %p313, %s310, 1
      %s315 = smul.addr %s312, 8
      %s316 = sadd.s32 %s314, %s315
      %s317 = smul.addr %s316, 4
      %s318 = scalar_lea.vmem %s7, %s317
      %s319 = smul.u32 2, %s25
      %v321 = vld [vmem:[#allocation2] sm:$0x1]
      %v322 = vld [vmem:[%s308] sm:$0x1]
      %v323 = vld [vmem:[%s1] sm:$0xff]
      %v324 = vld [vmem:[%s1 + $0x8] sm:$0xff]
      %v325 = vlaneseq
      %v326 = vshrl.u32 %v325, 7
      %v327 = vsub.s32 0, %v326
      %v328 = vrot.slane %v322, %v327
      %330 = vset.pattern.permute.xlu0 0
      %331 = vperm.xlu0 %330, %v323
      %v332 = vpop.permute.xlu0 %331
      %335 = vset.pattern.permute.xlu0 0
      %336 = vperm.xlu0 %335, %v324
      %v337 = vpop.permute.xlu0 %336
      %v339 = vsub.f32 %v328, %v332
      %v340 = vsub.f32 %v328, %v337
      %v342 = vlaneseq
      %v343 = vshrl.u32 %v342, 7
      %v344 = vsub.s32 0, %v343
      %v345 = vrot.slane %v321, %v344
      %346 = vset.pattern.permute.xlu0 0
      %347 = vperm.xlu0 %346, %v345
      %v348 = vpop.permute.xlu0 %347
      %v350 = vmul.f32 %v339, %v348
      %v351 = vmul.f32 %v340, %v348
      %v352 = vmul.f32 %v350, %v350
      %v353 = vmul.f32 %v351, %v351
      %v354 = vmul.f32 %v352, -0.5
      %v355 = vmul.f32 %v353, -0.5
      %v356 = vmul.f32 %v354, 1.442695
      %v357 = vpow.pop %v356
      %v358 = vmul.f32 %v355, 1.442695
      %v359 = vpow.pop %v358
      %v360 = vld [vmem:[%s3] sm:$0xf]
      %v361 = vld [vmem:[%s3 + $0x4] sm:$0xf]
      %v362 = vpack.c.bf16 %v359, %v357
      %v363 = vld [vmem:[%s4] sm:$0xff]
      %v364 = vld [vmem:[%s4 + $0x8] sm:$0xff]
      %366 = vset.pattern.permute.xlu0 0
      %367 = vperm.xlu0 %366, %v363
      %v368 = vpop.permute.xlu0 %367
      %371 = vset.pattern.permute.xlu0 0
      %372 = vperm.xlu0 %371, %v364
      %v373 = vpop.permute.xlu0 %372
      %v377 = vunpack.c.l.b16 %v360
      %v378 = vunpack.c.l.b16 %v361
      %v379 = vpack.c.b16 %v378, %v377
      %vm380 = vcmask 130048
      %v382 = vsel %vm380, %v379, 0
      %384 = vmatprep.subr.bf16.mxu0 0
      %385 = vmatpush1.bf16.msra.mxu0 %v362
      %386 = vmatprep.subr.bf16.mxu0 0
      %387 = vmatpush1.bf16.msra.mxu0 0
      %388 = vmatprep.subr.bf16.mxu0 0
      %389 = vmatpush1.bf16.msra.mxu0 0
      %390 = vmatprep.subr.bf16.mxu0 0
      %391 = vmatpush1.bf16.msra.mxu0 0
      %392 = vmatprep.subr.bf16.mxu0 0
      %393 = vmatpush1.bf16.msra.mxu0 0
      %394 = vmatprep.subr.bf16.mxu0 0
      %395 = vmatpush1.bf16.msra.mxu0 0
      %396 = vmatprep.subr.bf16.mxu0 0
      %397 = vmatpush1.bf16.msra.mxu0 0
      %398 = vmatprep.subr.bf16.mxu0 0
      %399 = vmatpush1.bf16.msra.mxu0 0
      %400 = vmatprep.subr.bf16.mxu0 0
      %401 = vmatpush1.bf16.msra.mxu0 0
      %402 = vmatprep.subr.bf16.mxu0 0
      %403 = vmatpush1.bf16.msra.mxu0 0
      %404 = vmatprep.subr.bf16.mxu0 0
      %405 = vmatpush1.bf16.msra.mxu0 0
      %406 = vmatprep.subr.bf16.mxu0 0
      %407 = vmatpush1.bf16.msra.mxu0 0
      %408 = vmatprep.subr.bf16.mxu0 0
      %409 = vmatpush1.bf16.msra.mxu0 0
      %410 = vmatprep.subr.bf16.mxu0 0
      %411 = vmatpush1.bf16.msra.mxu0 0
      %412 = vmatprep.subr.bf16.mxu0 0
      %413 = vmatpush1.bf16.msra.mxu0 0
      %414 = vmatprep.subr.bf16.mxu0 0
      %415 = vmatpush1.bf16.msra.mxu0 0
      %416 = vmatprep.mubr.bf16.mxu0 0
      %417 = vmatmul.mubr.bf16.gmra.mrb[0].mxu0 %v382
      %v418 = vpop.f32.mrb[0].mxu0
      %v419 = vadd.f32 %v368, %v418
      %v420 = vpop.f32.mrb[0].mxu0
      %v421 = vpop.f32.mrb[0].mxu0
      %v422 = vadd.f32 %v373, %v421
      %v423 = vpop.f32.mrb[0].mxu0
      %424 = vdwg.mxu0
      %v425 = vmul.f32 %v419, %v419
      %v426 = vmul.f32 %v422, %v422
      %v427 = vmul.f32 %v419, %v425
      %v428 = vmul.f32 %v422, %v426
      %v429 = vmul.f32 %v427, 0.044715
      %v430 = vmul.f32 %v428, 0.044715
      %v431 = vadd.f32 %v419, %v429
      %v432 = vadd.f32 %v422, %v430
      %v433 = vmul.f32 %v431, 0.7978846
      %v434 = vmul.f32 %v432, 0.7978846
      %v435 = vtanh.pop %v433
      %v436 = vtanh.pop %v434
      %v437 = vadd.f32 %v435, 1.0
      %v438 = vadd.f32 %v436, 1.0
      %v439 = vmul.f32 %v437, 0.5
      %v440 = vmul.f32 %v438, 0.5
      %v441 = vmul.f32 %v419, %v439
      %v442 = vmul.f32 %v422, %v440
      %v443 = vld [vmem:[%s5] sm:$0x3]
      %v444 = vpack.c.bf16 %v442, %v441
      %v445 = vld [vmem:[%s6] sm:$0xf]
      %447 = vset.pattern.permute.xlu0 0
      %448 = vperm.xlu0 %447, %v445
      %v449 = vpop.permute.xlu0 %448
      %v452 = vsel %vm380, %v443, 0
      %454 = vmatprep.subr.bf16.mxu0 0
      %455 = vmatpush1.bf16.msra.mxu0 %v444
      %456 = vmatprep.subr.bf16.mxu0 0
      %457 = vmatpush1.bf16.msra.mxu0 0
      %458 = vmatprep.subr.bf16.mxu0 0
      %459 = vmatpush1.bf16.msra.mxu0 0
      %460 = vmatprep.subr.bf16.mxu0 0
      %461 = vmatpush1.bf16.msra.mxu0 0
      %462 = vmatprep.subr.bf16.mxu0 0
      %463 = vmatpush1.bf16.msra.mxu0 0
      %464 = vmatprep.subr.bf16.mxu0 0
      %465 = vmatpush1.bf16.msra.mxu0 0
      %466 = vmatprep.subr.bf16.mxu0 0
      %467 = vmatpush1.bf16.msra.mxu0 0
      %468 = vmatprep.subr.bf16.mxu0 0
      %469 = vmatpush1.bf16.msra.mxu0 0
      %470 = vmatprep.subr.bf16.mxu0 0
      %471 = vmatpush1.bf16.msra.mxu0 0
      %472 = vmatprep.subr.bf16.mxu0 0
      %473 = vmatpush1.bf16.msra.mxu0 0
      %474 = vmatprep.subr.bf16.mxu0 0
      %475 = vmatpush1.bf16.msra.mxu0 0
      %476 = vmatprep.subr.bf16.mxu0 0
      %477 = vmatpush1.bf16.msra.mxu0 0
      %478 = vmatprep.subr.bf16.mxu0 0
      %479 = vmatpush1.bf16.msra.mxu0 0
      %480 = vmatprep.subr.bf16.mxu0 0
      %481 = vmatpush1.bf16.msra.mxu0 0
      %482 = vmatprep.subr.bf16.mxu0 0
      %483 = vmatpush1.bf16.msra.mxu0 0
      %484 = vmatprep.subr.bf16.mxu0 0
      %485 = vmatpush1.bf16.msra.mxu0 0
      %486 = vmatprep.mubr.bf16.mxu0 0
      %487 = vmatmul.mubr.bf16.gmra.mrb[0].mxu0 %v452
      %v488 = vpop.f32.mrb[0].mxu0
      %v489 = vadd.f32 %v449, %v488
      %v490 = vpop.f32.mrb[0].mxu0
      %v491 = vpop.f32.mrb[0].mxu0
      %v492 = vpop.f32.mrb[0].mxu0
      %493 = vdwg.mxu0
      %v496 = vunpack.c.l.s4 1966171168
      %v497 = vunpack.c.0.s8 %v496
      %v498 = vlaneseq
      %v499 = vshrl.u32 %v498, 7
      %v500 = vsub.s32 %v497, %v499
      %v501 = vrot.slane %v489, %v500
      %v502 = vcombine.high %v501, %v501
      %v504 = vunpack.c.l.s4 1966171168
      %v505 = vunpack.c.0.s8 %v504
      %v506 = vlaneseq
      %v507 = vshrl.u32 %v506, 7
      %v508 = vsub.s32 %v505, %v507
      %v509 = vrot.slane %v501, %v508
      %v511 = vunpack.c.l.s4 1966171168
      %v512 = vunpack.c.0.s8 %v511
      %v513 = vlaneseq
      %v514 = vshrl.u32 %v513, 7
      %v515 = vsub.s32 %v512, %v514
      %v516 = vrot.slane %v502, %v515
      %v517 = vcombine.high %v509, %v509
      %v518 = vcombine.high %v516, %v516
      %v523 = vpack.c.bf16 %v509, %v509
      %v524 = vpack.c.bf16 %v516, %v516
      %v525 = vpack.c.bf16 %v517, %v517
      %v526 = vpack.c.bf16 %v518, %v518
      %vm527 = vcmask 122880
      %vm528 = vsmask.f32 256
      %vm529 = vmand %vm527, %vm528
      %v530 = vld [vmem:[%s318] sm:$0x1]
      %v531 = vsel %vm529, %v523, %v530
      %532 = vst [vmem:[%s318] sm:$0x1] %v531
      %v533 = vld [vmem:[%s318 + $0x8] sm:$0x1]
      %v534 = vsel %vm529, %v524, %v533
      %535 = vst [vmem:[%s318 + $0x8] sm:$0x1] %v534
      %v536 = vld [vmem:[%s318 + $0x10] sm:$0x1]
      %v537 = vsel %vm529, %v525, %v536
      %538 = vst [vmem:[%s318 + $0x10] sm:$0x1] %v537
      %v539 = vld [vmem:[%s318 + $0x18] sm:$0x1]
      %v540 = vsel %vm529, %v526, %v539
      %541 = vst [vmem:[%s318 + $0x18] sm:$0x1] %v540
      %v542 = vld [vmem:[%s308 + $0x1] sm:$0x1]
      %v543 = vld [vmem:[%s1] sm:$0xff]
      %v544 = vld [vmem:[%s1 + $0x8] sm:$0xff]
      %v545 = vlaneseq
      %v546 = vshrl.u32 %v545, 7
      %v547 = vsub.s32 0, %v546
      %v548 = vrot.slane %v542, %v547
      %550 = vset.pattern.permute.xlu0 0
      %551 = vperm.xlu0 %550, %v543
      %v552 = vpop.permute.xlu0 %551
      %555 = vset.pattern.permute.xlu0 0
      %556 = vperm.xlu0 %555, %v544
      %v557 = vpop.permute.xlu0 %556
      %v559 = vsub.f32 %v548, %v552
      %v560 = vsub.f32 %v548, %v557
      %v561 = vmul.f32 %v559, %v348
      %v562 = vmul.f32 %v560, %v348
      %v563 = vmul.f32 %v561, %v561
      %v564 = vmul.f32 %v562, %v562
      %v565 = vmul.f32 %v563, -0.5
      %v566 = vmul.f32 %v564, -0.5
      %v567 = vmul.f32 %v565, 1.442695
      %v568 = vpow.pop %v567
      %v569 = vmul.f32 %v566, 1.442695
      %v570 = vpow.pop %v569
      %v571 = vld [vmem:[%s3] sm:$0xf]
      %v572 = vld [vmem:[%s3 + $0x4] sm:$0xf]
      %v573 = vpack.c.bf16 %v570, %v568
      %v574 = vld [vmem:[%s4] sm:$0xff]
      %v575 = vld [vmem:[%s4 + $0x8] sm:$0xff]
      %577 = vset.pattern.permute.xlu0 0
      %578 = vperm.xlu0 %577, %v574
      %v579 = vpop.permute.xlu0 %578
      %582 = vset.pattern.permute.xlu0 0
      %583 = vperm.xlu0 %582, %v575
      %v584 = vpop.permute.xlu0 %583
      %v588 = vunpack.c.l.b16 %v571
      %v589 = vunpack.c.l.b16 %v572
      %v590 = vpack.c.b16 %v589, %v588
      %v592 = vsel %vm380, %v590, 0
      %594 = vmatprep.subr.bf16.mxu0 0
      %595 = vmatpush1.bf16.msra.mxu0 %v573
      %596 = vmatprep.subr.bf16.mxu0 0
      %597 = vmatpush1.bf16.msra.mxu0 0
      %598 = vmatprep.subr.bf16.mxu0 0
      %599 = vmatpush1.bf16.msra.mxu0 0
      %600 = vmatprep.subr.bf16.mxu0 0
      %601 = vmatpush1.bf16.msra.mxu0 0
      %602 = vmatprep.subr.bf16.mxu0 0
      %603 = vmatpush1.bf16.msra.mxu0 0
      %604 = vmatprep.subr.bf16.mxu0 0
      %605 = vmatpush1.bf16.msra.mxu0 0
      %606 = vmatprep.subr.bf16.mxu0 0
      %607 = vmatpush1.bf16.msra.mxu0 0
      %608 = vmatprep.subr.bf16.mxu0 0
      %609 = vmatpush1.bf16.msra.mxu0 0
      %610 = vmatprep.subr.bf16.mxu0 0
      %611 = vmatpush1.bf16.msra.mxu0 0
      %612 = vmatprep.subr.bf16.mxu0 0
      %613 = vmatpush1.bf16.msra.mxu0 0
      %614 = vmatprep.subr.bf16.mxu0 0
      %615 = vmatpush1.bf16.msra.mxu0 0
      %616 = vmatprep.subr.bf16.mxu0 0
      %617 = vmatpush1.bf16.msra.mxu0 0
      %618 = vmatprep.subr.bf16.mxu0 0
      %619 = vmatpush1.bf16.msra.mxu0 0
      %620 = vmatprep.subr.bf16.mxu0 0
      %621 = vmatpush1.bf16.msra.mxu0 0
      %622 = vmatprep.subr.bf16.mxu0 0
      %623 = vmatpush1.bf16.msra.mxu0 0
      %624 = vmatprep.subr.bf16.mxu0 0
      %625 = vmatpush1.bf16.msra.mxu0 0
      %626 = vmatprep.mubr.bf16.mxu0 0
      %627 = vmatmul.mubr.bf16.gmra.mrb[0].mxu0 %v592
      %v628 = vpop.f32.mrb[0].mxu0
      %v629 = vadd.f32 %v579, %v628
      %v630 = vpop.f32.mrb[0].mxu0
      %v631 = vpop.f32.mrb[0].mxu0
      %v632 = vadd.f32 %v584, %v631
      %v633 = vpop.f32.mrb[0].mxu0
      %634 = vdwg.mxu0
      %v635 = vmul.f32 %v629, %v629
      %v636 = vmul.f32 %v632, %v632
      %v637 = vmul.f32 %v629, %v635
      %v638 = vmul.f32 %v632, %v636
      %v639 = vmul.f32 %v637, 0.044715
      %v640 = vmul.f32 %v638, 0.044715
      %v641 = vadd.f32 %v629, %v639
      %v642 = vadd.f32 %v632, %v640
      %v643 = vmul.f32 %v641, 0.7978846
      %v644 = vmul.f32 %v642, 0.7978846
      %v645 = vtanh.pop %v643
      %v646 = vtanh.pop %v644
      %v647 = vadd.f32 %v645, 1.0
      %v648 = vadd.f32 %v646, 1.0
      %v649 = vmul.f32 %v647, 0.5
      %v650 = vmul.f32 %v648, 0.5
      %v651 = vmul.f32 %v629, %v649
      %v652 = vmul.f32 %v632, %v650
      %v653 = vld [vmem:[%s5] sm:$0x3]
      %v654 = vpack.c.bf16 %v652, %v651
      %v655 = vld [vmem:[%s6] sm:$0xf]
      %657 = vset.pattern.permute.xlu0 0
      %658 = vperm.xlu0 %657, %v655
      %v659 = vpop.permute.xlu0 %658
      %v662 = vsel %vm380, %v653, 0
      %664 = vmatprep.subr.bf16.mxu0 0
      %665 = vmatpush1.bf16.msra.mxu0 %v654
      %666 = vmatprep.subr.bf16.mxu0 0
      %667 = vmatpush1.bf16.msra.mxu0 0
      %668 = vmatprep.subr.bf16.mxu0 0
      %669 = vmatpush1.bf16.msra.mxu0 0
      %670 = vmatprep.subr.bf16.mxu0 0
      %671 = vmatpush1.bf16.msra.mxu0 0
      %672 = vmatprep.subr.bf16.mxu0 0
      %673 = vmatpush1.bf16.msra.mxu0 0
      %674 = vmatprep.subr.bf16.mxu0 0
      %675 = vmatpush1.bf16.msra.mxu0 0
      %676 = vmatprep.subr.bf16.mxu0 0
      %677 = vmatpush1.bf16.msra.mxu0 0
      %678 = vmatprep.subr.bf16.mxu0 0
      %679 = vmatpush1.bf16.msra.mxu0 0
      %680 = vmatprep.subr.bf16.mxu0 0
      %681 = vmatpush1.bf16.msra.mxu0 0
      %682 = vmatprep.subr.bf16.mxu0 0
      %683 = vmatpush1.bf16.msra.mxu0 0
      %684 = vmatprep.subr.bf16.mxu0 0
      %685 = vmatpush1.bf16.msra.mxu0 0
      %686 = vmatprep.subr.bf16.mxu0 0
      %687 = vmatpush1.bf16.msra.mxu0 0
      %688 = vmatprep.subr.bf16.mxu0 0
      %689 = vmatpush1.bf16.msra.mxu0 0
      %690 = vmatprep.subr.bf16.mxu0 0
      %691 = vmatpush1.bf16.msra.mxu0 0
      %692 = vmatprep.subr.bf16.mxu0 0
      %693 = vmatpush1.bf16.msra.mxu0 0
      %694 = vmatprep.subr.bf16.mxu0 0
      %695 = vmatpush1.bf16.msra.mxu0 0
      %696 = vmatprep.mubr.bf16.mxu0 0
      %697 = vmatmul.mubr.bf16.gmra.mrb[0].mxu0 %v662
      %v698 = vpop.f32.mrb[0].mxu0
      %v699 = vadd.f32 %v659, %v698
      %v700 = vpop.f32.mrb[0].mxu0
      %v701 = vpop.f32.mrb[0].mxu0
      %v702 = vpop.f32.mrb[0].mxu0
      %703 = vdwg.mxu0
      %v706 = vunpack.c.l.s4 1966171168
      %v707 = vunpack.c.0.s8 %v706
      %v708 = vlaneseq
      %v709 = vshrl.u32 %v708, 7
      %v710 = vsub.s32 %v707, %v709
      %v711 = vrot.slane %v699, %v710
      %v712 = vcombine.high %v711, %v711
      %v714 = vunpack.c.l.s4 1966171168
      %v715 = vunpack.c.0.s8 %v714
      %v716 = vlaneseq
      %v717 = vshrl.u32 %v716, 7
      %v718 = vsub.s32 %v715, %v717
      %v719 = vrot.slane %v711, %v718
      %v721 = vunpack.c.l.s4 1966171168
      %v722 = vunpack.c.0.s8 %v721
      %v723 = vlaneseq
      %v724 = vshrl.u32 %v723, 7
      %v725 = vsub.s32 %v722, %v724
      %v726 = vrot.slane %v712, %v725
      %v727 = vcombine.high %v719, %v719
      %v728 = vcombine.high %v726, %v726
      %v733 = vpack.c.bf16 %v719, %v719
      %v734 = vpack.c.bf16 %v726, %v726
      %v735 = vpack.c.bf16 %v727, %v727
      %v736 = vpack.c.bf16 %v728, %v728
      %v741 = vunpack.c.l.b16 %v733
      %v742 = vunpack.c.l.b16 %v734
      %v743 = vunpack.c.l.b16 %v735
      %v744 = vunpack.c.l.b16 %v736
      %v745 = vpack.c.b16 %v741, %v741
      %v746 = vpack.c.b16 %v742, %v742
      %v747 = vpack.c.b16 %v743, %v743
      %v748 = vpack.c.b16 %v744, %v744
      %v750 = vshll.u32 %v745, 16
      %v753 = vshll.u32 %v746, 16
      %v756 = vshll.u32 %v747, 16
      %v759 = vshll.u32 %v748, 16
      %vm765 = vsmask.f32 7938
      %vm766 = vmand %vm527, %vm765
      %v767 = vld [vmem:[%s318] sm:$0x1]
      %v768 = vsel %vm766, %v750, %v767
      %769 = vst [vmem:[%s318] sm:$0x1] %v768
      %v770 = vld [vmem:[%s318 + $0x8] sm:$0x1]
      %v771 = vsel %vm766, %v753, %v770
      %772 = vst [vmem:[%s318 + $0x8] sm:$0x1] %v771
      %v773 = vld [vmem:[%s318 + $0x10] sm:$0x1]
      %v774 = vsel %vm766, %v756, %v773
      %775 = vst [vmem:[%s318 + $0x10] sm:$0x1] %v774
      %v776 = vld [vmem:[%s318 + $0x18] sm:$0x1]
      %v777 = vsel %vm766, %v759, %v776
      %778 = vst [vmem:[%s318 + $0x18] sm:$0x1] %v777
      %v779 = vld [vmem:[%s308 + $0x2] sm:$0x1]
      %v780 = vld [vmem:[%s1] sm:$0xff]
      %v781 = vld [vmem:[%s1 + $0x8] sm:$0xff]
      %v782 = vlaneseq
      %v783 = vshrl.u32 %v782, 7
      %v784 = vsub.s32 0, %v783
      %v785 = vrot.slane %v779, %v784
      %787 = vset.pattern.permute.xlu0 0
      %788 = vperm.xlu0 %787, %v780
      %v789 = vpop.permute.xlu0 %788
      %792 = vset.pattern.permute.xlu0 0
      %793 = vperm.xlu0 %792, %v781
      %v794 = vpop.permute.xlu0 %793
      %v796 = vsub.f32 %v785, %v789
      %v797 = vsub.f32 %v785, %v794
      %v798 = vmul.f32 %v796, %v348
      %v799 = vmul.f32 %v797, %v348
      %v800 = vmul.f32 %v798, %v798
      %v801 = vmul.f32 %v799, %v799
      %v802 = vmul.f32 %v800, -0.5
      %v803 = vmul.f32 %v801, -0.5
      %v804 = vmul.f32 %v802, 1.442695
      %v805 = vpow.pop %v804
      %v806 = vmul.f32 %v803, 1.442695
      %v807 = vpow.pop %v806
      %v808 = vld [vmem:[%s3] sm:$0xf]
      %v809 = vld [vmem:[%s3 + $0x4] sm:$0xf]
      %v810 = vpack.c.bf16 %v807, %v805
      %v811 = vld [vmem:[%s4] sm:$0xff]
      %v812 = vld [vmem:[%s4 + $0x8] sm:$0xff]
      %814 = vset.pattern.permute.xlu0 0
      %815 = vperm.xlu0 %814, %v811
      %v816 = vpop.permute.xlu0 %815
      %819 = vset.pattern.permute.xlu0 0
      %820 = vperm.xlu0 %819, %v812
      %v821 = vpop.permute.xlu0 %820
      %v825 = vunpack.c.l.b16 %v808
      %v826 = vunpack.c.l.b16 %v809
      %v827 = vpack.c.b16 %v826, %v825
      %v829 = vsel %vm380, %v827, 0
      %831 = vmatprep.subr.bf16.mxu0 0
      %832 = vmatpush1.bf16.msra.mxu0 %v810
      %833 = vmatprep.subr.bf16.mxu0 0
      %834 = vmatpush1.bf16.msra.mxu0 0
      %835 = vmatprep.subr.bf16.mxu0 0
      %836 = vmatpush1.bf16.msra.mxu0 0
      %837 = vmatprep.subr.bf16.mxu0 0
      %838 = vmatpush1.bf16.msra.mxu0 0
      %839 = vmatprep.subr.bf16.mxu0 0
      %840 = vmatpush1.bf16.msra.mxu0 0
      %841 = vmatprep.subr.bf16.mxu0 0
      %842 = vmatpush1.bf16.msra.mxu0 0
      %843 = vmatprep.subr.bf16.mxu0 0
      %844 = vmatpush1.bf16.msra.mxu0 0
      %845 = vmatprep.subr.bf16.mxu0 0
      %846 = vmatpush1.bf16.msra.mxu0 0
      %847 = vmatprep.subr.bf16.mxu0 0
      %848 = vmatpush1.bf16.msra.mxu0 0
      %849 = vmatprep.subr.bf16.mxu0 0
      %850 = vmatpush1.bf16.msra.mxu0 0
      %851 = vmatprep.subr.bf16.mxu0 0
      %852 = vmatpush1.bf16.msra.mxu0 0
      %853 = vmatprep.subr.bf16.mxu0 0
      %854 = vmatpush1.bf16.msra.mxu0 0
      %855 = vmatprep.subr.bf16.mxu0 0
      %856 = vmatpush1.bf16.msra.mxu0 0
      %857 = vmatprep.subr.bf16.mxu0 0
      %858 = vmatpush1.bf16.msra.mxu0 0
      %859 = vmatprep.subr.bf16.mxu0 0
      %860 = vmatpush1.bf16.msra.mxu0 0
      %861 = vmatprep.subr.bf16.mxu0 0
      %862 = vmatpush1.bf16.msra.mxu0 0
      %863 = vmatprep.mubr.bf16.mxu0 0
      %864 = vmatmul.mubr.bf16.gmra.mrb[0].mxu0 %v829
      %v865 = vpop.f32.mrb[0].mxu0
      %v866 = vadd.f32 %v816, %v865
      %v867 = vpop.f32.mrb[0].mxu0
      %v868 = vpop.f32.mrb[0].mxu0
      %v869 = vadd.f32 %v821, %v868
      %v870 = vpop.f32.mrb[0].mxu0
      %871 = vdwg.mxu0
      %v872 = vmul.f32 %v866, %v866
      %v873 = vmul.f32 %v869, %v869
      %v874 = vmul.f32 %v866, %v872
      %v875 = vmul.f32 %v869, %v873
      %v876 = vmul.f32 %v874, 0.044715
      %v877 = vmul.f32 %v875, 0.044715
      %v878 = vadd.f32 %v866, %v876
      %v879 = vadd.f32 %v869, %v877
      %v880 = vmul.f32 %v878, 0.7978846
      %v881 = vmul.f32 %v879, 0.7978846
      %v882 = vtanh.pop %v880
      %v883 = vtanh.pop %v881
      %v884 = vadd.f32 %v882, 1.0
      %v885 = vadd.f32 %v883, 1.0
      %v886 = vmul.f32 %v884, 0.5
      %v887 = vmul.f32 %v885, 0.5
      %v888 = vmul.f32 %v866, %v886
      %v889 = vmul.f32 %v869, %v887
      %v890 = vld [vmem:[%s5] sm:$0x3]
      %v891 = vpack.c.bf16 %v889, %v888
      %v892 = vld [vmem:[%s6] sm:$0xf]
      %894 = vset.pattern.permute.xlu0 0
      %895 = vperm.xlu0 %894, %v892
      %v896 = vpop.permute.xlu0 %895
      %v899 = vsel %vm380, %v890, 0
      %901 = vmatprep.subr.bf16.mxu0 0
      %902 = vmatpush1.bf16.msra.mxu0 %v891
      %903 = vmatprep.subr.bf16.mxu0 0
      %904 = vmatpush1.bf16.msra.mxu0 0
      %905 = vmatprep.subr.bf16.mxu0 0
      %906 = vmatpush1.bf16.msra.mxu0 0
      %907 = vmatprep.subr.bf16.mxu0 0
      %908 = vmatpush1.bf16.msra.mxu0 0
      %909 = vmatprep.subr.bf16.mxu0 0
      %910 = vmatpush1.bf16.msra.mxu0 0
      %911 = vmatprep.subr.bf16.mxu0 0
      %912 = vmatpush1.bf16.msra.mxu0 0
      %913 = vmatprep.subr.bf16.mxu0 0
      %914 = vmatpush1.bf16.msra.mxu0 0
      %915 = vmatprep.subr.bf16.mxu0 0
      %916 = vmatpush1.bf16.msra.mxu0 0
      %917 = vmatprep.subr.bf16.mxu0 0
      %918 = vmatpush1.bf16.msra.mxu0 0
      %919 = vmatprep.subr.bf16.mxu0 0
      %920 = vmatpush1.bf16.msra.mxu0 0
      %921 = vmatprep.subr.bf16.mxu0 0
      %922 = vmatpush1.bf16.msra.mxu0 0
      %923 = vmatprep.subr.bf16.mxu0 0
      %924 = vmatpush1.bf16.msra.mxu0 0
      %925 = vmatprep.subr.bf16.mxu0 0
      %926 = vmatpush1.bf16.msra.mxu0 0
      %927 = vmatprep.subr.bf16.mxu0 0
      %928 = vmatpush1.bf16.msra.mxu0 0
      %929 = vmatprep.subr.bf16.mxu0 0
      %930 = vmatpush1.bf16.msra.mxu0 0
      %931 = vmatprep.subr.bf16.mxu0 0
      %932 = vmatpush1.bf16.msra.mxu0 0
      %933 = vmatprep.mubr.bf16.mxu0 0
      %934 = vmatmul.mubr.bf16.gmra.mrb[0].mxu0 %v899
      %v935 = vpop.f32.mrb[0].mxu0
      %v936 = vadd.f32 %v896, %v935
      %v937 = vpop.f32.mrb[0].mxu0
      %v938 = vpop.f32.mrb[0].mxu0
      %v939 = vpop.f32.mrb[0].mxu0
      %940 = vdwg.mxu0
      %v943 = vunpack.c.l.s4 1966171168
      %v944 = vunpack.c.0.s8 %v943
      %v945 = vlaneseq
      %v946 = vshrl.u32 %v945, 7
      %v947 = vsub.s32 %v944, %v946
      %v948 = vrot.slane %v936, %v947
      %v949 = vcombine.high %v948, %v948
      %v951 = vunpack.c.l.s4 1966171168
      %v952 = vunpack.c.0.s8 %v951
      %v953 = vlaneseq
      %v954 = vshrl.u32 %v953, 7
      %v955 = vsub.s32 %v952, %v954
      %v956 = vrot.slane %v948, %v955
      %v958 = vunpack.c.l.s4 1966171168
      %v959 = vunpack.c.0.s8 %v958
      %v960 = vlaneseq
      %v961 = vshrl.u32 %v960, 7
      %v962 = vsub.s32 %v959, %v961
      %v963 = vrot.slane %v949, %v962
      %v964 = vcombine.high %v956, %v956
      %v965 = vcombine.high %v963, %v963
      %v970 = vpack.c.bf16 %v956, %v956
      %v971 = vpack.c.bf16 %v963, %v963
      %v972 = vpack.c.bf16 %v964, %v964
      %v973 = vpack.c.bf16 %v965, %v965
      %v978 = vunpack.c.l.b16 %v970
      %v979 = vunpack.c.l.b16 %v971
      %v980 = vunpack.c.l.b16 %v972
      %v981 = vunpack.c.l.b16 %v973
      %v982 = vpack.c.b16 %v978, %v978
      %v983 = vpack.c.b16 %v979, %v979
      %v984 = vpack.c.b16 %v980, %v980
      %v985 = vpack.c.b16 %v981, %v981
      %v986 = vrot.slane %v982, 7
      %v987 = vrot.slane %v983, 7
      %v988 = vrot.slane %v984, 7
      %v989 = vrot.slane %v985, 7
      %vm994 = vcmask 123905
      %vm995 = vsmask.f32 1280
      %vm996 = vmand %vm994, %vm995
      %v997 = vld [vmem:[%s318] sm:$0x2]
      %v998 = vsel %vm996, %v986, %v997
      %999 = vst [vmem:[%s318] sm:$0x2] %v998
      %v1000 = vld [vmem:[%s318 + $0x8] sm:$0x2]
      %v1001 = vsel %vm996, %v987, %v1000
      %1002 = vst [vmem:[%s318 + $0x8] sm:$0x2] %v1001
      %v1003 = vld [vmem:[%s318 + $0x10] sm:$0x2]
      %v1004 = vsel %vm996, %v988, %v1003
      %1005 = vst [vmem:[%s318 + $0x10] sm:$0x2] %v1004
      %v1006 = vld [vmem:[%s318 + $0x18] sm:$0x2]
      %v1007 = vsel %vm996, %v989, %v1006
      %1008 = vst [vmem:[%s318 + $0x18] sm:$0x2] %v1007
      %v1009 = vld [vmem:[%s308 + $0x3] sm:$0x1]
      %v1010 = vld [vmem:[%s1] sm:$0xff]
      %v1011 = vld [vmem:[%s1 + $0x8] sm:$0xff]
      %v1012 = vlaneseq
      %v1013 = vshrl.u32 %v1012, 7
      %v1014 = vsub.s32 0, %v1013
      %v1015 = vrot.slane %v1009, %v1014
      %1017 = vset.pattern.permute.xlu0 0
      %1018 = vperm.xlu0 %1017, %v1010
      %v1019 = vpop.permute.xlu0 %1018
      %1022 = vset.pattern.permute.xlu0 0
      %1023 = vperm.xlu0 %1022, %v1011
      %v1024 = vpop.permute.xlu0 %1023
      %v1026 = vsub.f32 %v1015, %v1019
      %v1027 = vsub.f32 %v1015, %v1024
      %v1028 = vmul.f32 %v1026, %v348
      %v1029 = vmul.f32 %v1027, %v348
      %v1030 = vmul.f32 %v1028, %v1028
      %v1031 = vmul.f32 %v1029, %v1029
      %v1032 = vmul.f32 %v1030, -0.5
      %v1033 = vmul.f32 %v1031, -0.5
      %v1034 = vmul.f32 %v1032, 1.442695
      %v1035 = vpow.pop %v1034
      %v1036 = vmul.f32 %v1033, 1.442695
      %v1037 = vpow.pop %v1036
      %v1038 = vld [vmem:[%s3] sm:$0xf]
      %v1039 = vld [vmem:[%s3 + $0x4] sm:$0xf]
      %v1040 = vpack.c.bf16 %v1037, %v1035
      %v1041 = vld [vmem:[%s4] sm:$0xff]
      %v1042 = vld [vmem:[%s4 + $0x8] sm:$0xff]
      %1044 = vset.pattern.permute.xlu0 0
      %1045 = vperm.xlu0 %1044, %v1041
      %v1046 = vpop.permute.xlu0 %1045
      %1049 = vset.pattern.permute.xlu0 0
      %1050 = vperm.xlu0 %1049, %v1042
      %v1051 = vpop.permute.xlu0 %1050
      %v1055 = vunpack.c.l.b16 %v1038
      %v1056 = vunpack.c.l.b16 %v1039
      %v1057 = vpack.c.b16 %v1056, %v1055
      %v1059 = vsel %vm380, %v1057, 0
      %1061 = vmatprep.subr.bf16.mxu0 0
      %1062 = vmatpush1.bf16.msra.mxu0 %v1040
      %1063 = vmatprep.subr.bf16.mxu0 0
      %1064 = vmatpush1.bf16.msra.mxu0 0
      %1065 = vmatprep.subr.bf16.mxu0 0
      %1066 = vmatpush1.bf16.msra.mxu0 0
      %1067 = vmatprep.subr.bf16.mxu0 0
      %1068 = vmatpush1.bf16.msra.mxu0 0
      %1069 = vmatprep.subr.bf16.mxu0 0
      %1070 = vmatpush1.bf16.msra.mxu0 0
      %1071 = vmatprep.subr.bf16.mxu0 0
      %1072 = vmatpush1.bf16.msra.mxu0 0
      %1073 = vmatprep.subr.bf16.mxu0 0
      %1074 = vmatpush1.bf16.msra.mxu0 0
      %1075 = vmatprep.subr.bf16.mxu0 0
      %1076 = vmatpush1.bf16.msra.mxu0 0
      %1077 = vmatprep.subr.bf16.mxu0 0
      %1078 = vmatpush1.bf16.msra.mxu0 0
      %1079 = vmatprep.subr.bf16.mxu0 0
      %1080 = vmatpush1.bf16.msra.mxu0 0
      %1081 = vmatprep.subr.bf16.mxu0 0
      %1082 = vmatpush1.bf16.msra.mxu0 0
      %1083 = vmatprep.subr.bf16.mxu0 0
      %1084 = vmatpush1.bf16.msra.mxu0 0
      %1085 = vmatprep.subr.bf16.mxu0 0
      %1086 = vmatpush1.bf16.msra.mxu0 0
      %1087 = vmatprep.subr.bf16.mxu0 0
      %1088 = vmatpush1.bf16.msra.mxu0 0
      %1089 = vmatprep.subr.bf16.mxu0 0
      %1090 = vmatpush1.bf16.msra.mxu0 0
      %1091 = vmatprep.subr.bf16.mxu0 0
      %1092 = vmatpush1.bf16.msra.mxu0 0
      %1093 = vmatprep.mubr.bf16.mxu0 0
      %1094 = vmatmul.mubr.bf16.gmra.mrb[0].mxu0 %v1059
      %v1095 = vpop.f32.mrb[0].mxu0
      %v1096 = vadd.f32 %v1046, %v1095
      %v1097 = vpop.f32.mrb[0].mxu0
      %v1098 = vpop.f32.mrb[0].mxu0
      %v1099 = vadd.f32 %v1051, %v1098
      %v1100 = vpop.f32.mrb[0].mxu0
      %1101 = vdwg.mxu0
      %v1102 = vmul.f32 %v1096, %v1096
      %v1103 = vmul.f32 %v1099, %v1099
      %v1104 = vmul.f32 %v1096, %v1102
      %v1105 = vmul.f32 %v1099, %v1103
      %v1106 = vmul.f32 %v1104, 0.044715
      %v1107 = vmul.f32 %v1105, 0.044715
      %v1108 = vadd.f32 %v1096, %v1106
      %v1109 = vadd.f32 %v1099, %v1107
      %v1110 = vmul.f32 %v1108, 0.7978846
      %v1111 = vmul.f32 %v1109, 0.7978846
      %v1112 = vtanh.pop %v1110
      %v1113 = vtanh.pop %v1111
      %v1114 = vadd.f32 %v1112, 1.0
      %v1115 = vadd.f32 %v1113, 1.0
      %v1116 = vmul.f32 %v1114, 0.5
      %v1117 = vmul.f32 %v1115, 0.5
      %v1118 = vmul.f32 %v1096, %v1116
      %v1119 = vmul.f32 %v1099, %v1117
      %v1120 = vld [vmem:[%s5] sm:$0x3]
      %v1121 = vpack.c.bf16 %v1119, %v1118
      %v1122 = vld [vmem:[%s6] sm:$0xf]
      %1124 = vset.pattern.permute.xlu0 0
      %1125 = vperm.xlu0 %1124, %v1122
      %v1126 = vpop.permute.xlu0 %1125
      %v1129 = vsel %vm380, %v1120, 0
      %1131 = vmatprep.subr.bf16.mxu0 0
      %1132 = vmatpush1.bf16.msra.mxu0 %v1121
      %1133 = vmatprep.subr.bf16.mxu0 0
      %1134 = vmatpush1.bf16.msra.mxu0 0
      %1135 = vmatprep.subr.bf16.mxu0 0
      %1136 = vmatpush1.bf16.msra.mxu0 0
      %1137 = vmatprep.subr.bf16.mxu0 0
      %1138 = vmatpush1.bf16.msra.mxu0 0
      %1139 = vmatprep.subr.bf16.mxu0 0
      %1140 = vmatpush1.bf16.msra.mxu0 0
      %1141 = vmatprep.subr.bf16.mxu0 0
      %1142 = vmatpush1.bf16.msra.mxu0 0
      %1143 = vmatprep.subr.bf16.mxu0 0
      %1144 = vmatpush1.bf16.msra.mxu0 0
      %1145 = vmatprep.subr.bf16.mxu0 0
      %1146 = vmatpush1.bf16.msra.mxu0 0
      %1147 = vmatprep.subr.bf16.mxu0 0
      %1148 = vmatpush1.bf16.msra.mxu0 0
      %1149 = vmatprep.subr.bf16.mxu0 0
      %1150 = vmatpush1.bf16.msra.mxu0 0
      %1151 = vmatprep.subr.bf16.mxu0 0
      %1152 = vmatpush1.bf16.msra.mxu0 0
      %1153 = vmatprep.subr.bf16.mxu0 0
      %1154 = vmatpush1.bf16.msra.mxu0 0
      %1155 = vmatprep.subr.bf16.mxu0 0
      %1156 = vmatpush1.bf16.msra.mxu0 0
      %1157 = vmatprep.subr.bf16.mxu0 0
      %1158 = vmatpush1.bf16.msra.mxu0 0
      %1159 = vmatprep.subr.bf16.mxu0 0
      %1160 = vmatpush1.bf16.msra.mxu0 0
      %1161 = vmatprep.subr.bf16.mxu0 0
      %1162 = vmatpush1.bf16.msra.mxu0 0
      %1163 = vmatprep.mubr.bf16.mxu0 0
      %1164 = vmatmul.mubr.bf16.gmra.mrb[0].mxu0 %v1129
      %v1165 = vpop.f32.mrb[0].mxu0
      %v1166 = vadd.f32 %v1126, %v1165
      %v1167 = vpop.f32.mrb[0].mxu0
      %v1168 = vpop.f32.mrb[0].mxu0
      %v1169 = vpop.f32.mrb[0].mxu0
      %1170 = vdwg.mxu0
      %v1173 = vunpack.c.l.s4 1966171168
      %v1174 = vunpack.c.0.s8 %v1173
      %v1175 = vlaneseq
      %v1176 = vshrl.u32 %v1175, 7
      %v1177 = vsub.s32 %v1174, %v1176
      %v1178 = vrot.slane %v1166, %v1177
      %v1179 = vcombine.high %v1178, %v1178
      %v1181 = vunpack.c.l.s4 1966171168
      %v1182 = vunpack.c.0.s8 %v1181
      %v1183 = vlaneseq
      %v1184 = vshrl.u32 %v1183, 7
      %v1185 = vsub.s32 %v1182, %v1184
      %v1186 = vrot.slane %v1178, %v1185
      %v1188 = vunpack.c.l.s4 1966171168
      %v1189 = vunpack.c.0.s8 %v1188
      %v1190 = vlaneseq
      %v1191 = vshrl.u32 %v1190, 7
      %v1192 = vsub.s32 %v1189, %v1191
      %v1193 = vrot.slane %v1179, %v1192
      %v1194 = vcombine.high %v1186, %v1186
      %v1195 = vcombine.high %v1193, %v1193
      %v1200 = vpack.c.bf16 %v1186, %v1186
      %v1201 = vpack.c.bf16 %v1193, %v1193
      %v1202 = vpack.c.bf16 %v1194, %v1194
      %v1203 = vpack.c.bf16 %v1195, %v1195
      %v1208 = vunpack.c.l.b16 %v1200
      %v1209 = vunpack.c.l.b16 %v1201
      %v1210 = vunpack.c.l.b16 %v1202
      %v1211 = vunpack.c.l.b16 %v1203
      %v1212 = vpack.c.b16 %v1208, %v1208
      %v1213 = vpack.c.b16 %v1209, %v1209
      %v1214 = vpack.c.b16 %v1210, %v1210
      %v1215 = vpack.c.b16 %v1211, %v1211
      %v1217 = vshll.u32 %v1212, 16
      %v1219 = vrot.slane %v1217, 7
      %v1221 = vshll.u32 %v1213, 16
      %v1223 = vrot.slane %v1221, 7
      %v1225 = vshll.u32 %v1214, 16
      %v1227 = vrot.slane %v1225, 7
      %v1229 = vshll.u32 %v1215, 16
      %v1231 = vrot.slane %v1229, 7
      %vm1236 = vsmask.f32 7942
      %vm1237 = vmand %vm994, %vm1236
      %v1238 = vld [vmem:[%s318] sm:$0x2]
      %v1239 = vsel %vm1237, %v1219, %v1238
      %1240 = vst [vmem:[%s318] sm:$0x2] %v1239
      %v1241 = vld [vmem:[%s318 + $0x8] sm:$0x2]
      %v1242 = vsel %vm1237, %v1223, %v1241
      %1243 = vst [vmem:[%s318 + $0x8] sm:$0x2] %v1242
      %v1244 = vld [vmem:[%s318 + $0x10] sm:$0x2]
      %v1245 = vsel %vm1237, %v1227, %v1244
      %1246 = vst [vmem:[%s318 + $0x10] sm:$0x2] %v1245
      %v1247 = vld [vmem:[%s318 + $0x18] sm:$0x2]
      %v1248 = vsel %vm1237, %v1231, %v1247
      %1249 = vst [vmem:[%s318 + $0x18] sm:$0x2] %v1248
      %v1250 = vld [vmem:[%s308 + $0x4] sm:$0x1]
      %v1251 = vld [vmem:[%s1] sm:$0xff]
      %v1252 = vld [vmem:[%s1 + $0x8] sm:$0xff]
      %v1253 = vlaneseq
      %v1254 = vshrl.u32 %v1253, 7
      %v1255 = vsub.s32 0, %v1254
      %v1256 = vrot.slane %v1250, %v1255
      %1258 = vset.pattern.permute.xlu0 0
      %1259 = vperm.xlu0 %1258, %v1251
      %v1260 = vpop.permute.xlu0 %1259
      %1263 = vset.pattern.permute.xlu0 0
      %1264 = vperm.xlu0 %1263, %v1252
      %v1265 = vpop.permute.xlu0 %1264
      %v1267 = vsub.f32 %v1256, %v1260
      %v1268 = vsub.f32 %v1256, %v1265
      %v1269 = vmul.f32 %v1267, %v348
      %v1270 = vmul.f32 %v1268, %v348
      %v1271 = vmul.f32 %v1269, %v1269
      %v1272 = vmul.f32 %v1270, %v1270
      %v1273 = vmul.f32 %v1271, -0.5
      %v1274 = vmul.f32 %v1272, -0.5
      %v1275 = vmul.f32 %v1273, 1.442695
      %v1276 = vpow.pop %v1275
      %v1277 = vmul.f32 %v1274, 1.442695
      %v1278 = vpow.pop %v1277
      %v1279 = vld [vmem:[%s3] sm:$0xf]
      %v1280 = vld [vmem:[%s3 + $0x4] sm:$0xf]
      %v1281 = vpack.c.bf16 %v1278, %v1276
      %v1282 = vld [vmem:[%s4] sm:$0xff]
      %v1283 = vld [vmem:[%s4 + $0x8] sm:$0xff]
      %1285 = vset.pattern.permute.xlu0 0
      %1286 = vperm.xlu0 %1285, %v1282
      %v1287 = vpop.permute.xlu0 %1286
      %1290 = vset.pattern.permute.xlu0 0
      %1291 = vperm.xlu0 %1290, %v1283
      %v1292 = vpop.permute.xlu0 %1291
      %v1296 = vunpack.c.l.b16 %v1279
      %v1297 = vunpack.c.l.b16 %v1280
      %v1298 = vpack.c.b16 %v1297, %v1296
      %v1300 = vsel %vm380, %v1298, 0
      %1302 = vmatprep.subr.bf16.mxu0 0
      %1303 = vmatpush1.bf16.msra.mxu0 %v1281
      %1304 = vmatprep.subr.bf16.mxu0 0
      %1305 = vmatpush1.bf16.msra.mxu0 0
      %1306 = vmatprep.subr.bf16.mxu0 0
      %1307 = vmatpush1.bf16.msra.mxu0 0
      %1308 = vmatprep.subr.bf16.mxu0 0
      %1309 = vmatpush1.bf16.msra.mxu0 0
      %1310 = vmatprep.subr.bf16.mxu0 0
      %1311 = vmatpush1.bf16.msra.mxu0 0
      %1312 = vmatprep.subr.bf16.mxu0 0
      %1313 = vmatpush1.bf16.msra.mxu0 0
      %1314 = vmatprep.subr.bf16.mxu0 0
      %1315 = vmatpush1.bf16.msra.mxu0 0
      %1316 = vmatprep.subr.bf16.mxu0 0
      %1317 = vmatpush1.bf16.msra.mxu0 0
      %1318 = vmatprep.subr.bf16.mxu0 0
      %1319 = vmatpush1.bf16.msra.mxu0 0
      %1320 = vmatprep.subr.bf16.mxu0 0
      %1321 = vmatpush1.bf16.msra.mxu0 0
      %1322 = vmatprep.subr.bf16.mxu0 0
      %1323 = vmatpush1.bf16.msra.mxu0 0
      %1324 = vmatprep.subr.bf16.mxu0 0
      %1325 = vmatpush1.bf16.msra.mxu0 0
      %1326 = vmatprep.subr.bf16.mxu0 0
      %1327 = vmatpush1.bf16.msra.mxu0 0
      %1328 = vmatprep.subr.bf16.mxu0 0
      %1329 = vmatpush1.bf16.msra.mxu0 0
      %1330 = vmatprep.subr.bf16.mxu0 0
      %1331 = vmatpush1.bf16.msra.mxu0 0
      %1332 = vmatprep.subr.bf16.mxu0 0
      %1333 = vmatpush1.bf16.msra.mxu0 0
      %1334 = vmatprep.mubr.bf16.mxu0 0
      %1335 = vmatmul.mubr.bf16.gmra.mrb[0].mxu0 %v1300
      %v1336 = vpop.f32.mrb[0].mxu0
      %v1337 = vadd.f32 %v1287, %v1336
      %v1338 = vpop.f32.mrb[0].mxu0
      %v1339 = vpop.f32.mrb[0].mxu0
      %v1340 = vadd.f32 %v1292, %v1339
      %v1341 = vpop.f32.mrb[0].mxu0
      %1342 = vdwg.mxu0
      %v1343 = vmul.f32 %v1337, %v1337
      %v1344 = vmul.f32 %v1340, %v1340
      %v1345 = vmul.f32 %v1337, %v1343
      %v1346 = vmul.f32 %v1340, %v1344
      %v1347 = vmul.f32 %v1345, 0.044715
      %v1348 = vmul.f32 %v1346, 0.044715
      %v1349 = vadd.f32 %v1337, %v1347
      %v1350 = vadd.f32 %v1340, %v1348
      %v1351 = vmul.f32 %v1349, 0.7978846
      %v1352 = vmul.f32 %v1350, 0.7978846
      %v1353 = vtanh.pop %v1351
      %v1354 = vtanh.pop %v1352
      %v1355 = vadd.f32 %v1353, 1.0
      %v1356 = vadd.f32 %v1354, 1.0
      %v1357 = vmul.f32 %v1355, 0.5
      %v1358 = vmul.f32 %v1356, 0.5
      %v1359 = vmul.f32 %v1337, %v1357
      %v1360 = vmul.f32 %v1340, %v1358
      %v1361 = vld [vmem:[%s5] sm:$0x3]
      %v1362 = vpack.c.bf16 %v1360, %v1359
      %v1363 = vld [vmem:[%s6] sm:$0xf]
      %1365 = vset.pattern.permute.xlu0 0
      %1366 = vperm.xlu0 %1365, %v1363
      %v1367 = vpop.permute.xlu0 %1366
      %v1370 = vsel %vm380, %v1361, 0
      %1372 = vmatprep.subr.bf16.mxu0 0
      %1373 = vmatpush1.bf16.msra.mxu0 %v1362
      %1374 = vmatprep.subr.bf16.mxu0 0
      %1375 = vmatpush1.bf16.msra.mxu0 0
      %1376 = vmatprep.subr.bf16.mxu0 0
      %1377 = vmatpush1.bf16.msra.mxu0 0
      %1378 = vmatprep.subr.bf16.mxu0 0
      %1379 = vmatpush1.bf16.msra.mxu0 0
      %1380 = vmatprep.subr.bf16.mxu0 0
      %1381 = vmatpush1.bf16.msra.mxu0 0
      %1382 = vmatprep.subr.bf16.mxu0 0
      %1383 = vmatpush1.bf16.msra.mxu0 0
      %1384 = vmatprep.subr.bf16.mxu0 0
      %1385 = vmatpush1.bf16.msra.mxu0 0
      %1386 = vmatprep.subr.bf16.mxu0 0
      %1387 = vmatpush1.bf16.msra.mxu0 0
      %1388 = vmatprep.subr.bf16.mxu0 0
      %1389 = vmatpush1.bf16.msra.mxu0 0
      %1390 = vmatprep.subr.bf16.mxu0 0
      %1391 = vmatpush1.bf16.msra.mxu0 0
      %1392 = vmatprep.subr.bf16.mxu0 0
      %1393 = vmatpush1.bf16.msra.mxu0 0
      %1394 = vmatprep.subr.bf16.mxu0 0
      %1395 = vmatpush1.bf16.msra.mxu0 0
      %1396 = vmatprep.subr.bf16.mxu0 0
      %1397 = vmatpush1.bf16.msra.mxu0 0
      %1398 = vmatprep.subr.bf16.mxu0 0
      %1399 = vmatpush1.bf16.msra.mxu0 0
      %1400 = vmatprep.subr.bf16.mxu0 0
      %1401 = vmatpush1.bf16.msra.mxu0 0
      %1402 = vmatprep.subr.bf16.mxu0 0
      %1403 = vmatpush1.bf16.msra.mxu0 0
      %1404 = vmatprep.mubr.bf16.mxu0 0
      %1405 = vmatmul.mubr.bf16.gmra.mrb[0].mxu0 %v1370
      %v1406 = vpop.f32.mrb[0].mxu0
      %v1407 = vadd.f32 %v1367, %v1406
      %v1408 = vpop.f32.mrb[0].mxu0
      %v1409 = vpop.f32.mrb[0].mxu0
      %v1410 = vpop.f32.mrb[0].mxu0
      %1411 = vdwg.mxu0
      %v1414 = vunpack.c.l.s4 1966171168
      %v1415 = vunpack.c.0.s8 %v1414
      %v1416 = vlaneseq
      %v1417 = vshrl.u32 %v1416, 7
      %v1418 = vsub.s32 %v1415, %v1417
      %v1419 = vrot.slane %v1407, %v1418
      %v1420 = vcombine.high %v1419, %v1419
      %v1422 = vunpack.c.l.s4 1966171168
      %v1423 = vunpack.c.0.s8 %v1422
      %v1424 = vlaneseq
      %v1425 = vshrl.u32 %v1424, 7
      %v1426 = vsub.s32 %v1423, %v1425
      %v1427 = vrot.slane %v1419, %v1426
      %v1429 = vunpack.c.l.s4 1966171168
      %v1430 = vunpack.c.0.s8 %v1429
      %v1431 = vlaneseq
      %v1432 = vshrl.u32 %v1431, 7
      %v1433 = vsub.s32 %v1430, %v1432
      %v1434 = vrot.slane %v1420, %v1433
      %v1435 = vcombine.high %v1427, %v1427
      %v1436 = vcombine.high %v1434, %v1434
      %v1441 = vpack.c.bf16 %v1427, %v1427
      %v1442 = vpack.c.bf16 %v1434, %v1434
      %v1443 = vpack.c.bf16 %v1435, %v1435
      %v1444 = vpack.c.bf16 %v1436, %v1436
      %v1449 = vunpack.c.l.b16 %v1441
      %v1450 = vunpack.c.l.b16 %v1442
      %v1451 = vunpack.c.l.b16 %v1443
      %v1452 = vunpack.c.l.b16 %v1444
      %v1453 = vpack.c.b16 %v1449, %v1449
      %v1454 = vpack.c.b16 %v1450, %v1450
      %v1455 = vpack.c.b16 %v1451, %v1451
      %v1456 = vpack.c.b16 %v1452, %v1452
      %v1457 = vrot.slane %v1453, 6
      %v1458 = vrot.slane %v1454, 6
      %v1459 = vrot.slane %v1455, 6
      %v1460 = vrot.slane %v1456, 6
      %vm1465 = vcmask 124930
      %vm1466 = vsmask.f32 2304
      %vm1467 = vmand %vm1465, %vm1466
      %v1468 = vld [vmem:[%s318] sm:$0x4]
      %v1469 = vsel %vm1467, %v1457, %v1468
      %1470 = vst [vmem:[%s318] sm:$0x4] %v1469
      %v1471 = vld [vmem:[%s318 + $0x8] sm:$0x4]
      %v1472 = vsel %vm1467, %v1458, %v1471
      %1473 = vst [vmem:[%s318 + $0x8] sm:$0x4] %v1472
      %v1474 = vld [vmem:[%s318 + $0x10] sm:$0x4]
      %v1475 = vsel %vm1467, %v1459, %v1474
      %1476 = vst [vmem:[%s318 + $0x10] sm:$0x4] %v1475
      %v1477 = vld [vmem:[%s318 + $0x18] sm:$0x4]
      %v1478 = vsel %vm1467, %v1460, %v1477
      %1479 = vst [vmem:[%s318 + $0x18] sm:$0x4] %v1478
      %v1480 = vld [vmem:[%s308 + $0x5] sm:$0x1]
      %v1481 = vld [vmem:[%s1] sm:$0xff]
      %v1482 = vld [vmem:[%s1 + $0x8] sm:$0xff]
      %v1483 = vlaneseq
      %v1484 = vshrl.u32 %v1483, 7
      %v1485 = vsub.s32 0, %v1484
      %v1486 = vrot.slane %v1480, %v1485
      %1488 = vset.pattern.permute.xlu0 0
      %1489 = vperm.xlu0 %1488, %v1481
      %v1490 = vpop.permute.xlu0 %1489
      %1493 = vset.pattern.permute.xlu0 0
      %1494 = vperm.xlu0 %1493, %v1482
      %v1495 = vpop.permute.xlu0 %1494
      %v1497 = vsub.f32 %v1486, %v1490
      %v1498 = vsub.f32 %v1486, %v1495
      %v1499 = vmul.f32 %v1497, %v348
      %v1500 = vmul.f32 %v1498, %v348
      %v1501 = vmul.f32 %v1499, %v1499
      %v1502 = vmul.f32 %v1500, %v1500
      %v1503 = vmul.f32 %v1501, -0.5
      %v1504 = vmul.f32 %v1502, -0.5
      %v1505 = vmul.f32 %v1503, 1.442695
      %v1506 = vpow.pop %v1505
      %v1507 = vmul.f32 %v1504, 1.442695
      %v1508 = vpow.pop %v1507
      %v1509 = vld [vmem:[%s3] sm:$0xf]
      %v1510 = vld [vmem:[%s3 + $0x4] sm:$0xf]
      %v1511 = vpack.c.bf16 %v1508, %v1506
      %v1512 = vld [vmem:[%s4] sm:$0xff]
      %v1513 = vld [vmem:[%s4 + $0x8] sm:$0xff]
      %1515 = vset.pattern.permute.xlu0 0
      %1516 = vperm.xlu0 %1515, %v1512
      %v1517 = vpop.permute.xlu0 %1516
      %1520 = vset.pattern.permute.xlu0 0
      %1521 = vperm.xlu0 %1520, %v1513
      %v1522 = vpop.permute.xlu0 %1521
      %v1526 = vunpack.c.l.b16 %v1509
      %v1527 = vunpack.c.l.b16 %v1510
      %v1528 = vpack.c.b16 %v1527, %v1526
      %v1530 = vsel %vm380, %v1528, 0
      %1532 = vmatprep.subr.bf16.mxu0 0
      %1533 = vmatpush1.bf16.msra.mxu0 %v1511
      %1534 = vmatprep.subr.bf16.mxu0 0
      %1535 = vmatpush1.bf16.msra.mxu0 0
      %1536 = vmatprep.subr.bf16.mxu0 0
      %1537 = vmatpush1.bf16.msra.mxu0 0
      %1538 = vmatprep.subr.bf16.mxu0 0
      %1539 = vmatpush1.bf16.msra.mxu0 0
      %1540 = vmatprep.subr.bf16.mxu0 0
      %1541 = vmatpush1.bf16.msra.mxu0 0
      %1542 = vmatprep.subr.bf16.mxu0 0
      %1543 = vmatpush1.bf16.msra.mxu0 0
      %1544 = vmatprep.subr.bf16.mxu0 0
      %1545 = vmatpush1.bf16.msra.mxu0 0
      %1546 = vmatprep.subr.bf16.mxu0 0
      %1547 = vmatpush1.bf16.msra.mxu0 0
      %1548 = vmatprep.subr.bf16.mxu0 0
      %1549 = vmatpush1.bf16.msra.mxu0 0
      %1550 = vmatprep.subr.bf16.mxu0 0
      %1551 = vmatpush1.bf16.msra.mxu0 0
      %1552 = vmatprep.subr.bf16.mxu0 0
      %1553 = vmatpush1.bf16.msra.mxu0 0
      %1554 = vmatprep.subr.bf16.mxu0 0
      %1555 = vmatpush1.bf16.msra.mxu0 0
      %1556 = vmatprep.subr.bf16.mxu0 0
      %1557 = vmatpush1.bf16.msra.mxu0 0
      %1558 = vmatprep.subr.bf16.mxu0 0
      %1559 = vmatpush1.bf16.msra.mxu0 0
      %1560 = vmatprep.subr.bf16.mxu0 0
      %1561 = vmatpush1.bf16.msra.mxu0 0
      %1562 = vmatprep.subr.bf16.mxu0 0
      %1563 = vmatpush1.bf16.msra.mxu0 0
      %1564 = vmatprep.mubr.bf16.mxu0 0
      %1565 = vmatmul.mubr.bf16.gmra.mrb[0].mxu0 %v1530
      %v1566 = vpop.f32.mrb[0].mxu0
      %v1567 = vadd.f32 %v1517, %v1566
      %v1568 = vpop.f32.mrb[0].mxu0
      %v1569 = vpop.f32.mrb[0].mxu0
      %v1570 = vadd.f32 %v1522, %v1569
      %v1571 = vpop.f32.mrb[0].mxu0
      %1572 = vdwg.mxu0
      %v1573 = vmul.f32 %v1567, %v1567
      %v1574 = vmul.f32 %v1570, %v1570
      %v1575 = vmul.f32 %v1567, %v1573
      %v1576 = vmul.f32 %v1570, %v1574
      %v1577 = vmul.f32 %v1575, 0.044715
      %v1578 = vmul.f32 %v1576, 0.044715
      %v1579 = vadd.f32 %v1567, %v1577
      %v1580 = vadd.f32 %v1570, %v1578
      %v1581 = vmul.f32 %v1579, 0.7978846
      %v1582 = vmul.f32 %v1580, 0.7978846
      %v1583 = vtanh.pop %v1581
      %v1584 = vtanh.pop %v1582
      %v1585 = vadd.f32 %v1583, 1.0
      %v1586 = vadd.f32 %v1584, 1.0
      %v1587 = vmul.f32 %v1585, 0.5
      %v1588 = vmul.f32 %v1586, 0.5
      %v1589 = vmul.f32 %v1567, %v1587
      %v1590 = vmul.f32 %v1570, %v1588
      %v1591 = vld [vmem:[%s5] sm:$0x3]
      %v1592 = vpack.c.bf16 %v1590, %v1589
      %v1593 = vld [vmem:[%s6] sm:$0xf]
      %1595 = vset.pattern.permute.xlu0 0
      %1596 = vperm.xlu0 %1595, %v1593
      %v1597 = vpop.permute.xlu0 %1596
      %v1600 = vsel %vm380, %v1591, 0
      %1602 = vmatprep.subr.bf16.mxu0 0
      %1603 = vmatpush1.bf16.msra.mxu0 %v1592
      %1604 = vmatprep.subr.bf16.mxu0 0
      %1605 = vmatpush1.bf16.msra.mxu0 0
      %1606 = vmatprep.subr.bf16.mxu0 0
      %1607 = vmatpush1.bf16.msra.mxu0 0
      %1608 = vmatprep.subr.bf16.mxu0 0
      %1609 = vmatpush1.bf16.msra.mxu0 0
      %1610 = vmatprep.subr.bf16.mxu0 0
      %1611 = vmatpush1.bf16.msra.mxu0 0
      %1612 = vmatprep.subr.bf16.mxu0 0
      %1613 = vmatpush1.bf16.msra.mxu0 0
      %1614 = vmatprep.subr.bf16.mxu0 0
      %1615 = vmatpush1.bf16.msra.mxu0 0
      %1616 = vmatprep.subr.bf16.mxu0 0
      %1617 = vmatpush1.bf16.msra.mxu0 0
      %1618 = vmatprep.subr.bf16.mxu0 0
      %1619 = vmatpush1.bf16.msra.mxu0 0
      %1620 = vmatprep.subr.bf16.mxu0 0
      %1621 = vmatpush1.bf16.msra.mxu0 0
      %1622 = vmatprep.subr.bf16.mxu0 0
      %1623 = vmatpush1.bf16.msra.mxu0 0
      %1624 = vmatprep.subr.bf16.mxu0 0
      %1625 = vmatpush1.bf16.msra.mxu0 0
      %1626 = vmatprep.subr.bf16.mxu0 0
      %1627 = vmatpush1.bf16.msra.mxu0 0
      %1628 = vmatprep.subr.bf16.mxu0 0
      %1629 = vmatpush1.bf16.msra.mxu0 0
      %1630 = vmatprep.subr.bf16.mxu0 0
      %1631 = vmatpush1.bf16.msra.mxu0 0
      %1632 = vmatprep.subr.bf16.mxu0 0
      %1633 = vmatpush1.bf16.msra.mxu0 0
      %1634 = vmatprep.mubr.bf16.mxu0 0
      %1635 = vmatmul.mubr.bf16.gmra.mrb[0].mxu0 %v1600
      %v1636 = vpop.f32.mrb[0].mxu0
      %v1637 = vadd.f32 %v1597, %v1636
      %v1638 = vpop.f32.mrb[0].mxu0
      %v1639 = vpop.f32.mrb[0].mxu0
      %v1640 = vpop.f32.mrb[0].mxu0
      %1641 = vdwg.mxu0
      %v1644 = vunpack.c.l.s4 1966171168
      %v1645 = vunpack.c.0.s8 %v1644
      %v1646 = vlaneseq
      %v1647 = vshrl.u32 %v1646, 7
      %v1648 = vsub.s32 %v1645, %v1647
      %v1649 = vrot.slane %v1637, %v1648
      %v1650 = vcombine.high %v1649, %v1649
      %v1652 = vunpack.c.l.s4 1966171168
      %v1653 = vunpack.c.0.s8 %v1652
      %v1654 = vlaneseq
      %v1655 = vshrl.u32 %v1654, 7
      %v1656 = vsub.s32 %v1653, %v1655
      %v1657 = vrot.slane %v1649, %v1656
      %v1659 = vunpack.c.l.s4 1966171168
      %v1660 = vunpack.c.0.s8 %v1659
      %v1661 = vlaneseq
      %v1662 = vshrl.u32 %v1661, 7
      %v1663 = vsub.s32 %v1660, %v1662
      %v1664 = vrot.slane %v1650, %v1663
      %v1665 = vcombine.high %v1657, %v1657
      %v1666 = vcombine.high %v1664, %v1664
      %v1671 = vpack.c.bf16 %v1657, %v1657
      %v1672 = vpack.c.bf16 %v1664, %v1664
      %v1673 = vpack.c.bf16 %v1665, %v1665
      %v1674 = vpack.c.bf16 %v1666, %v1666
      %v1679 = vunpack.c.l.b16 %v1671
      %v1680 = vunpack.c.l.b16 %v1672
      %v1681 = vunpack.c.l.b16 %v1673
      %v1682 = vunpack.c.l.b16 %v1674
      %v1683 = vpack.c.b16 %v1679, %v1679
      %v1684 = vpack.c.b16 %v1680, %v1680
      %v1685 = vpack.c.b16 %v1681, %v1681
      %v1686 = vpack.c.b16 %v1682, %v1682
      %v1688 = vshll.u32 %v1683, 16
      %v1690 = vrot.slane %v1688, 6
      %v1692 = vshll.u32 %v1684, 16
      %v1694 = vrot.slane %v1692, 6
      %v1696 = vshll.u32 %v1685, 16
      %v1698 = vrot.slane %v1696, 6
      %v1700 = vshll.u32 %v1686, 16
      %v1702 = vrot.slane %v1700, 6
      %vm1707 = vsmask.f32 7946
      %vm1708 = vmand %vm1465, %vm1707
      %v1709 = vld [vmem:[%s318] sm:$0x4]
      %v1710 = vsel %vm1708, %v1690, %v1709
      %1711 = vst [vmem:[%s318] sm:$0x4] %v1710
      %v1712 = vld [vmem:[%s318 + $0x8] sm:$0x4]
      %v1713 = vsel %vm1708, %v1694, %v1712
      %1714 = vst [vmem:[%s318 + $0x8] sm:$0x4] %v1713
      %v1715 = vld [vmem:[%s318 + $0x10] sm:$0x4]
      %v1716 = vsel %vm1708, %v1698, %v1715
      %1717 = vst [vmem:[%s318 + $0x10] sm:$0x4] %v1716
      %v1718 = vld [vmem:[%s318 + $0x18] sm:$0x4]
      %v1719 = vsel %vm1708, %v1702, %v1718
      %1720 = vst [vmem:[%s318 + $0x18] sm:$0x4] %v1719
      %v1721 = vld [vmem:[%s308 + $0x6] sm:$0x1]
      %v1722 = vld [vmem:[%s1] sm:$0xff]
      %v1723 = vld [vmem:[%s1 + $0x8] sm:$0xff]
      %v1724 = vlaneseq
      %v1725 = vshrl.u32 %v1724, 7
      %v1726 = vsub.s32 0, %v1725
      %v1727 = vrot.slane %v1721, %v1726
      %1729 = vset.pattern.permute.xlu0 0
      %1730 = vperm.xlu0 %1729, %v1722
      %v1731 = vpop.permute.xlu0 %1730
      %1734 = vset.pattern.permute.xlu0 0
      %1735 = vperm.xlu0 %1734, %v1723
      %v1736 = vpop.permute.xlu0 %1735
      %v1738 = vsub.f32 %v1727, %v1731
      %v1739 = vsub.f32 %v1727, %v1736
      %v1740 = vmul.f32 %v1738, %v348
      %v1741 = vmul.f32 %v1739, %v348
      %v1742 = vmul.f32 %v1740, %v1740
      %v1743 = vmul.f32 %v1741, %v1741
      %v1744 = vmul.f32 %v1742, -0.5
      %v1745 = vmul.f32 %v1743, -0.5
      %v1746 = vmul.f32 %v1744, 1.442695
      %v1747 = vpow.pop %v1746
      %v1748 = vmul.f32 %v1745, 1.442695
      %v1749 = vpow.pop %v1748
      %v1750 = vld [vmem:[%s3] sm:$0xf]
      %v1751 = vld [vmem:[%s3 + $0x4] sm:$0xf]
      %v1752 = vpack.c.bf16 %v1749, %v1747
      %v1753 = vld [vmem:[%s4] sm:$0xff]
      %v1754 = vld [vmem:[%s4 + $0x8] sm:$0xff]
      %1756 = vset.pattern.permute.xlu0 0
      %1757 = vperm.xlu0 %1756, %v1753
      %v1758 = vpop.permute.xlu0 %1757
      %1761 = vset.pattern.permute.xlu0 0
      %1762 = vperm.xlu0 %1761, %v1754
      %v1763 = vpop.permute.xlu0 %1762
      %v1767 = vunpack.c.l.b16 %v1750
      %v1768 = vunpack.c.l.b16 %v1751
      %v1769 = vpack.c.b16 %v1768, %v1767
      %v1771 = vsel %vm380, %v1769, 0
      %1773 = vmatprep.subr.bf16.mxu0 0
      %1774 = vmatpush1.bf16.msra.mxu0 %v1752
      %1775 = vmatprep.subr.bf16.mxu0 0
      %1776 = vmatpush1.bf16.msra.mxu0 0
      %1777 = vmatprep.subr.bf16.mxu0 0
      %1778 = vmatpush1.bf16.msra.mxu0 0
      %1779 = vmatprep.subr.bf16.mxu0 0
      %1780 = vmatpush1.bf16.msra.mxu0 0
      %1781 = vmatprep.subr.bf16.mxu0 0
      %1782 = vmatpush1.bf16.msra.mxu0 0
      %1783 = vmatprep.subr.bf16.mxu0 0
      %1784 = vmatpush1.bf16.msra.mxu0 0
      %1785 = vmatprep.subr.bf16.mxu0 0
      %1786 = vmatpush1.bf16.msra.mxu0 0
      %1787 = vmatprep.subr.bf16.mxu0 0
      %1788 = vmatpush1.bf16.msra.mxu0 0
      %1789 = vmatprep.subr.bf16.mxu0 0
      %1790 = vmatpush1.bf16.msra.mxu0 0
      %1791 = vmatprep.subr.bf16.mxu0 0
      %1792 = vmatpush1.bf16.msra.mxu0 0
      %1793 = vmatprep.subr.bf16.mxu0 0
      %1794 = vmatpush1.bf16.msra.mxu0 0
      %1795 = vmatprep.subr.bf16.mxu0 0
      %1796 = vmatpush1.bf16.msra.mxu0 0
      %1797 = vmatprep.subr.bf16.mxu0 0
      %1798 = vmatpush1.bf16.msra.mxu0 0
      %1799 = vmatprep.subr.bf16.mxu0 0
      %1800 = vmatpush1.bf16.msra.mxu0 0
      %1801 = vmatprep.subr.bf16.mxu0 0
      %1802 = vmatpush1.bf16.msra.mxu0 0
      %1803 = vmatprep.subr.bf16.mxu0 0
      %1804 = vmatpush1.bf16.msra.mxu0 0
      %1805 = vmatprep.mubr.bf16.mxu0 0
      %1806 = vmatmul.mubr.bf16.gmra.mrb[0].mxu0 %v1771
      %v1807 = vpop.f32.mrb[0].mxu0
      %v1808 = vadd.f32 %v1758, %v1807
      %v1809 = vpop.f32.mrb[0].mxu0
      %v1810 = vpop.f32.mrb[0].mxu0
      %v1811 = vadd.f32 %v1763, %v1810
      %v1812 = vpop.f32.mrb[0].mxu0
      %1813 = vdwg.mxu0
      %v1814 = vmul.f32 %v1808, %v1808
      %v1815 = vmul.f32 %v1811, %v1811
      %v1816 = vmul.f32 %v1808, %v1814
      %v1817 = vmul.f32 %v1811, %v1815
      %v1818 = vmul.f32 %v1816, 0.044715
      %v1819 = vmul.f32 %v1817, 0.044715
      %v1820 = vadd.f32 %v1808, %v1818
      %v1821 = vadd.f32 %v1811, %v1819
      %v1822 = vmul.f32 %v1820, 0.7978846
      %v1823 = vmul.f32 %v1821, 0.7978846
      %v1824 = vtanh.pop %v1822
      %v1825 = vtanh.pop %v1823
      %v1826 = vadd.f32 %v1824, 1.0
      %v1827 = vadd.f32 %v1825, 1.0
      %v1828 = vmul.f32 %v1826, 0.5
      %v1829 = vmul.f32 %v1827, 0.5
      %v1830 = vmul.f32 %v1808, %v1828
      %v1831 = vmul.f32 %v1811, %v1829
      %v1832 = vld [vmem:[%s5] sm:$0x3]
      %v1833 = vpack.c.bf16 %v1831, %v1830
      %v1834 = vld [vmem:[%s6] sm:$0xf]
      %1836 = vset.pattern.permute.xlu0 0
      %1837 = vperm.xlu0 %1836, %v1834
      %v1838 = vpop.permute.xlu0 %1837
      %v1841 = vsel %vm380, %v1832, 0
      %1843 = vmatprep.subr.bf16.mxu0 0
      %1844 = vmatpush1.bf16.msra.mxu0 %v1833
      %1845 = vmatprep.subr.bf16.mxu0 0
      %1846 = vmatpush1.bf16.msra.mxu0 0
      %1847 = vmatprep.subr.bf16.mxu0 0
      %1848 = vmatpush1.bf16.msra.mxu0 0
      %1849 = vmatprep.subr.bf16.mxu0 0
      %1850 = vmatpush1.bf16.msra.mxu0 0
      %1851 = vmatprep.subr.bf16.mxu0 0
      %1852 = vmatpush1.bf16.msra.mxu0 0
      %1853 = vmatprep.subr.bf16.mxu0 0
      %1854 = vmatpush1.bf16.msra.mxu0 0
      %1855 = vmatprep.subr.bf16.mxu0 0
      %1856 = vmatpush1.bf16.msra.mxu0 0
      %1857 = vmatprep.subr.bf16.mxu0 0
      %1858 = vmatpush1.bf16.msra.mxu0 0
      %1859 = vmatprep.subr.bf16.mxu0 0
      %1860 = vmatpush1.bf16.msra.mxu0 0
      %1861 = vmatprep.subr.bf16.mxu0 0
      %1862 = vmatpush1.bf16.msra.mxu0 0
      %1863 = vmatprep.subr.bf16.mxu0 0
      %1864 = vmatpush1.bf16.msra.mxu0 0
      %1865 = vmatprep.subr.bf16.mxu0 0
      %1866 = vmatpush1.bf16.msra.mxu0 0
      %1867 = vmatprep.subr.bf16.mxu0 0
      %1868 = vmatpush1.bf16.msra.mxu0 0
      %1869 = vmatprep.subr.bf16.mxu0 0
      %1870 = vmatpush1.bf16.msra.mxu0 0
      %1871 = vmatprep.subr.bf16.mxu0 0
      %1872 = vmatpush1.bf16.msra.mxu0 0
      %1873 = vmatprep.subr.bf16.mxu0 0
      %1874 = vmatpush1.bf16.msra.mxu0 0
      %1875 = vmatprep.mubr.bf16.mxu0 0
      %1876 = vmatmul.mubr.bf16.gmra.mrb[0].mxu0 %v1841
      %v1877 = vpop.f32.mrb[0].mxu0
      %v1878 = vadd.f32 %v1838, %v1877
      %v1879 = vpop.f32.mrb[0].mxu0
      %v1880 = vpop.f32.mrb[0].mxu0
      %v1881 = vpop.f32.mrb[0].mxu0
      %1882 = vdwg.mxu0
      %v1885 = vunpack.c.l.s4 1966171168
      %v1886 = vunpack.c.0.s8 %v1885
      %v1887 = vlaneseq
      %v1888 = vshrl.u32 %v1887, 7
      %v1889 = vsub.s32 %v1886, %v1888
      %v1890 = vrot.slane %v1878, %v1889
      %v1891 = vcombine.high %v1890, %v1890
      %v1893 = vunpack.c.l.s4 1966171168
      %v1894 = vunpack.c.0.s8 %v1893
      %v1895 = vlaneseq
      %v1896 = vshrl.u32 %v1895, 7
      %v1897 = vsub.s32 %v1894, %v1896
      %v1898 = vrot.slane %v1890, %v1897
      %v1900 = vunpack.c.l.s4 1966171168
      %v1901 = vunpack.c.0.s8 %v1900
      %v1902 = vlaneseq
      %v1903 = vshrl.u32 %v1902, 7
      %v1904 = vsub.s32 %v1901, %v1903
      %v1905 = vrot.slane %v1891, %v1904
      %v1906 = vcombine.high %v1898, %v1898
      %v1907 = vcombine.high %v1905, %v1905
      %v1912 = vpack.c.bf16 %v1898, %v1898
      %v1913 = vpack.c.bf16 %v1905, %v1905
      %v1914 = vpack.c.bf16 %v1906, %v1906
      %v1915 = vpack.c.bf16 %v1907, %v1907
      %v1920 = vunpack.c.l.b16 %v1912
      %v1921 = vunpack.c.l.b16 %v1913
      %v1922 = vunpack.c.l.b16 %v1914
      %v1923 = vunpack.c.l.b16 %v1915
      %v1924 = vpack.c.b16 %v1920, %v1920
      %v1925 = vpack.c.b16 %v1921, %v1921
      %v1926 = vpack.c.b16 %v1922, %v1922
      %v1927 = vpack.c.b16 %v1923, %v1923
      %v1928 = vrot.slane %v1924, 5
      %v1929 = vrot.slane %v1925, 5
      %v1930 = vrot.slane %v1926, 5
      %v1931 = vrot.slane %v1927, 5
      %vm1936 = vcmask 125955
      %vm1937 = vsmask.f32 3328
      %vm1938 = vmand %vm1936, %vm1937
      %v1939 = vld [vmem:[%s318] sm:$0x8]
      %v1940 = vsel %vm1938, %v1928, %v1939
      %1941 = vst [vmem:[%s318] sm:$0x8] %v1940
      %v1942 = vld [vmem:[%s318 + $0x8] sm:$0x8]
      %v1943 = vsel %vm1938, %v1929, %v1942
      %1944 = vst [vmem:[%s318 + $0x8] sm:$0x8] %v1943
      %v1945 = vld [vmem:[%s318 + $0x10] sm:$0x8]
      %v1946 = vsel %vm1938, %v1930, %v1945
      %1947 = vst [vmem:[%s318 + $0x10] sm:$0x8] %v1946
      %v1948 = vld [vmem:[%s318 + $0x18] sm:$0x8]
      %v1949 = vsel %vm1938, %v1931, %v1948
      %1950 = vst [vmem:[%s318 + $0x18] sm:$0x8] %v1949
      %v1951 = vld [vmem:[%s308 + $0x7] sm:$0x1]
      %v1952 = vld [vmem:[%s1] sm:$0xff]
      %v1953 = vld [vmem:[%s1 + $0x8] sm:$0xff]
      %v1954 = vlaneseq
      %v1955 = vshrl.u32 %v1954, 7
      %v1956 = vsub.s32 0, %v1955
      %v1957 = vrot.slane %v1951, %v1956
      %1959 = vset.pattern.permute.xlu0 0
      %1960 = vperm.xlu0 %1959, %v1952
      %v1961 = vpop.permute.xlu0 %1960
      %1964 = vset.pattern.permute.xlu0 0
      %1965 = vperm.xlu0 %1964, %v1953
      %v1966 = vpop.permute.xlu0 %1965
      %v1968 = vsub.f32 %v1957, %v1961
      %v1969 = vsub.f32 %v1957, %v1966
      %v1970 = vmul.f32 %v1968, %v348
      %v1971 = vmul.f32 %v1969, %v348
      %v1972 = vmul.f32 %v1970, %v1970
      %v1973 = vmul.f32 %v1971, %v1971
      %v1974 = vmul.f32 %v1972, -0.5
      %v1975 = vmul.f32 %v1973, -0.5
      %v1976 = vmul.f32 %v1974, 1.442695
      %v1977 = vpow.pop %v1976
      %v1978 = vmul.f32 %v1975, 1.442695
      %v1979 = vpow.pop %v1978
      %v1980 = vld [vmem:[%s3] sm:$0xf]
      %v1981 = vld [vmem:[%s3 + $0x4] sm:$0xf]
      %v1982 = vpack.c.bf16 %v1979, %v1977
      %v1983 = vld [vmem:[%s4] sm:$0xff]
      %v1984 = vld [vmem:[%s4 + $0x8] sm:$0xff]
      %1986 = vset.pattern.permute.xlu0 0
      %1987 = vperm.xlu0 %1986, %v1983
      %v1988 = vpop.permute.xlu0 %1987
      %1991 = vset.pattern.permute.xlu0 0
      %1992 = vperm.xlu0 %1991, %v1984
      %v1993 = vpop.permute.xlu0 %1992
      %v1997 = vunpack.c.l.b16 %v1980
      %v1998 = vunpack.c.l.b16 %v1981
      %v1999 = vpack.c.b16 %v1998, %v1997
      %v2001 = vsel %vm380, %v1999, 0
      %2003 = vmatprep.subr.bf16.mxu0 0
      %2004 = vmatpush1.bf16.msra.mxu0 %v1982
      %2005 = vmatprep.subr.bf16.mxu0 0
      %2006 = vmatpush1.bf16.msra.mxu0 0
      %2007 = vmatprep.subr.bf16.mxu0 0
      %2008 = vmatpush1.bf16.msra.mxu0 0
      %2009 = vmatprep.subr.bf16.mxu0 0
      %2010 = vmatpush1.bf16.msra.mxu0 0
      %2011 = vmatprep.subr.bf16.mxu0 0
      %2012 = vmatpush1.bf16.msra.mxu0 0
      %2013 = vmatprep.subr.bf16.mxu0 0
      %2014 = vmatpush1.bf16.msra.mxu0 0
      %2015 = vmatprep.subr.bf16.mxu0 0
      %2016 = vmatpush1.bf16.msra.mxu0 0
      %2017 = vmatprep.subr.bf16.mxu0 0
      %2018 = vmatpush1.bf16.msra.mxu0 0
      %2019 = vmatprep.subr.bf16.mxu0 0
      %2020 = vmatpush1.bf16.msra.mxu0 0
      %2021 = vmatprep.subr.bf16.mxu0 0
      %2022 = vmatpush1.bf16.msra.mxu0 0
      %2023 = vmatprep.subr.bf16.mxu0 0
      %2024 = vmatpush1.bf16.msra.mxu0 0
      %2025 = vmatprep.subr.bf16.mxu0 0
      %2026 = vmatpush1.bf16.msra.mxu0 0
      %2027 = vmatprep.subr.bf16.mxu0 0
      %2028 = vmatpush1.bf16.msra.mxu0 0
      %2029 = vmatprep.subr.bf16.mxu0 0
      %2030 = vmatpush1.bf16.msra.mxu0 0
      %2031 = vmatprep.subr.bf16.mxu0 0
      %2032 = vmatpush1.bf16.msra.mxu0 0
      %2033 = vmatprep.subr.bf16.mxu0 0
      %2034 = vmatpush1.bf16.msra.mxu0 0
      %2035 = vmatprep.mubr.bf16.mxu0 0
      %2036 = vmatmul.mubr.bf16.gmra.mrb[0].mxu0 %v2001
      %v2037 = vpop.f32.mrb[0].mxu0
      %v2038 = vadd.f32 %v1988, %v2037
      %v2039 = vpop.f32.mrb[0].mxu0
      %v2040 = vpop.f32.mrb[0].mxu0
      %v2041 = vadd.f32 %v1993, %v2040
      %v2042 = vpop.f32.mrb[0].mxu0
      %2043 = vdwg.mxu0
      %v2044 = vmul.f32 %v2038, %v2038
      %v2045 = vmul.f32 %v2041, %v2041
      %v2046 = vmul.f32 %v2038, %v2044
      %v2047 = vmul.f32 %v2041, %v2045
      %v2048 = vmul.f32 %v2046, 0.044715
      %v2049 = vmul.f32 %v2047, 0.044715
      %v2050 = vadd.f32 %v2038, %v2048
      %v2051 = vadd.f32 %v2041, %v2049
      %v2052 = vmul.f32 %v2050, 0.7978846
      %v2053 = vmul.f32 %v2051, 0.7978846
      %v2054 = vtanh.pop %v2052
      %v2055 = vtanh.pop %v2053
      %v2056 = vadd.f32 %v2054, 1.0
      %v2057 = vadd.f32 %v2055, 1.0
      %v2058 = vmul.f32 %v2056, 0.5
      %v2059 = vmul.f32 %v2057, 0.5
      %v2060 = vmul.f32 %v2038, %v2058
      %v2061 = vmul.f32 %v2041, %v2059
      %v2062 = vld [vmem:[%s5] sm:$0x3]
      %v2063 = vpack.c.bf16 %v2061, %v2060
      %v2064 = vld [vmem:[%s6] sm:$0xf]
      %2066 = vset.pattern.permute.xlu0 0
      %2067 = vperm.xlu0 %2066, %v2064
      %v2068 = vpop.permute.xlu0 %2067
      %v2071 = vsel %vm380, %v2062, 0
      %2073 = vmatprep.subr.bf16.mxu0 0
      %2074 = vmatpush1.bf16.msra.mxu0 %v2063
      %2075 = vmatprep.subr.bf16.mxu0 0
      %2076 = vmatpush1.bf16.msra.mxu0 0
      %2077 = vmatprep.subr.bf16.mxu0 0
      %2078 = vmatpush1.bf16.msra.mxu0 0
      %2079 = vmatprep.subr.bf16.mxu0 0
      %2080 = vmatpush1.bf16.msra.mxu0 0
      %2081 = vmatprep.subr.bf16.mxu0 0
      %2082 = vmatpush1.bf16.msra.mxu0 0
      %2083 = vmatprep.subr.bf16.mxu0 0
      %2084 = vmatpush1.bf16.msra.mxu0 0
      %2085 = vmatprep.subr.bf16.mxu0 0
      %2086 = vmatpush1.bf16.msra.mxu0 0
      %2087 = vmatprep.subr.bf16.mxu0 0
      %2088 = vmatpush1.bf16.msra.mxu0 0
      %2089 = vmatprep.subr.bf16.mxu0 0
      %2090 = vmatpush1.bf16.msra.mxu0 0
      %2091 = vmatprep.subr.bf16.mxu0 0
      %2092 = vmatpush1.bf16.msra.mxu0 0
      %2093 = vmatprep.subr.bf16.mxu0 0
      %2094 = vmatpush1.bf16.msra.mxu0 0
      %2095 = vmatprep.subr.bf16.mxu0 0
      %2096 = vmatpush1.bf16.msra.mxu0 0
      %2097 = vmatprep.subr.bf16.mxu0 0
      %2098 = vmatpush1.bf16.msra.mxu0 0
      %2099 = vmatprep.subr.bf16.mxu0 0
      %2100 = vmatpush1.bf16.msra.mxu0 0
      %2101 = vmatprep.subr.bf16.mxu0 0
      %2102 = vmatpush1.bf16.msra.mxu0 0
      %2103 = vmatprep.subr.bf16.mxu0 0
      %2104 = vmatpush1.bf16.msra.mxu0 0
      %2105 = vmatprep.mubr.bf16.mxu0 0
      %2106 = vmatmul.mubr.bf16.gmra.mrb[0].mxu0 %v2071
      %v2107 = vpop.f32.mrb[0].mxu0
      %v2108 = vadd.f32 %v2068, %v2107
      %v2109 = vpop.f32.mrb[0].mxu0
      %v2110 = vpop.f32.mrb[0].mxu0
      %v2111 = vpop.f32.mrb[0].mxu0
      %2112 = vdwg.mxu0
      %v2115 = vunpack.c.l.s4 1966171168
      %v2116 = vunpack.c.0.s8 %v2115
      %v2117 = vlaneseq
      %v2118 = vshrl.u32 %v2117, 7
      %v2119 = vsub.s32 %v2116, %v2118
      %v2120 = vrot.slane %v2108, %v2119
      %v2121 = vcombine.high %v2120, %v2120
      %v2123 = vunpack.c.l.s4 1966171168
      %v2124 = vunpack.c.0.s8 %v2123
      %v2125 = vlaneseq
      %v2126 = vshrl.u32 %v2125, 7
      %v2127 = vsub.s32 %v2124, %v2126
      %v2128 = vrot.slane %v2120, %v2127
      %v2130 = vunpack.c.l.s4 1966171168
      %v2131 = vunpack.c.0.s8 %v2130
      %v2132 = vlaneseq
      %v2133 = vshrl.u32 %v2132, 7
      %v2134 = vsub.s32 %v2131, %v2133
      %v2135 = vrot.slane %v2121, %v2134
      %v2136 = vcombine.high %v2128, %v2128
      %v2137 = vcombine.high %v2135, %v2135
      %v2142 = vpack.c.bf16 %v2128, %v2128
      %v2143 = vpack.c.bf16 %v2135, %v2135
      %v2144 = vpack.c.bf16 %v2136, %v2136
      %v2145 = vpack.c.bf16 %v2137, %v2137
      %v2150 = vunpack.c.l.b16 %v2142
      %v2151 = vunpack.c.l.b16 %v2143
      %v2152 = vunpack.c.l.b16 %v2144
      %v2153 = vunpack.c.l.b16 %v2145
      %v2154 = vpack.c.b16 %v2150, %v2150
      %v2155 = vpack.c.b16 %v2151, %v2151
      %v2156 = vpack.c.b16 %v2152, %v2152
      %v2157 = vpack.c.b16 %v2153, %v2153
      %v2159 = vshll.u32 %v2154, 16
      %v2161 = vrot.slane %v2159, 5
      %v2163 = vshll.u32 %v2155, 16
      %v2165 = vrot.slane %v2163, 5
      %v2167 = vshll.u32 %v2156, 16
      %v2169 = vrot.slane %v2167, 5
      %v2171 = vshll.u32 %v2157, 16
      %v2173 = vrot.slane %v2171, 5
      %vm2178 = vsmask.f32 7950
      %vm2179 = vmand %vm1936, %vm2178
      %v2180 = vld [vmem:[%s318] sm:$0x8]
      %v2181 = vsel %vm2179, %v2161, %v2180
      %2182 = vst [vmem:[%s318] sm:$0x8] %v2181
      %v2183 = vld [vmem:[%s318 + $0x8] sm:$0x8]
      %v2184 = vsel %vm2179, %v2165, %v2183
      %2185 = vst [vmem:[%s318 + $0x8] sm:$0x8] %v2184
      %v2186 = vld [vmem:[%s318 + $0x10] sm:$0x8]
      %v2187 = vsel %vm2179, %v2169, %v2186
      %2188 = vst [vmem:[%s318 + $0x10] sm:$0x8] %v2187
      %v2189 = vld [vmem:[%s318 + $0x18] sm:$0x8]
      %v2190 = vsel %vm2179, %v2173, %v2189
      %2191 = vst [vmem:[%s318 + $0x18] sm:$0x8] %v2190
      %v2192 = vld [vmem:[%s308 + $0x8] sm:$0x1]
      %v2193 = vld [vmem:[%s1] sm:$0xff]
      %v2194 = vld [vmem:[%s1 + $0x8] sm:$0xff]
      %v2195 = vlaneseq
      %v2196 = vshrl.u32 %v2195, 7
      %v2197 = vsub.s32 0, %v2196
      %v2198 = vrot.slane %v2192, %v2197
      %2200 = vset.pattern.permute.xlu0 0
      %2201 = vperm.xlu0 %2200, %v2193
      %v2202 = vpop.permute.xlu0 %2201
      %2205 = vset.pattern.permute.xlu0 0
      %2206 = vperm.xlu0 %2205, %v2194
      %v2207 = vpop.permute.xlu0 %2206
      %v2209 = vsub.f32 %v2198, %v2202
      %v2210 = vsub.f32 %v2198, %v2207
      %v2211 = vmul.f32 %v2209, %v348
      %v2212 = vmul.f32 %v2210, %v348
      %v2213 = vmul.f32 %v2211, %v2211
      %v2214 = vmul.f32 %v2212, %v2212
      %v2215 = vmul.f32 %v2213, -0.5
      %v2216 = vmul.f32 %v2214, -0.5
      %v2217 = vmul.f32 %v2215, 1.442695
      %v2218 = vpow.pop %v2217
      %v2219 = vmul.f32 %v2216, 1.442695
      %v2220 = vpow.pop %v2219
      %v2221 = vld [vmem:[%s3] sm:$0xf]
      %v2222 = vld [vmem:[%s3 + $0x4] sm:$0xf]
      %v2223 = vpack.c.bf16 %v2220, %v2218
      %v2224 = vld [vmem:[%s4] sm:$0xff]
      %v2225 = vld [vmem:[%s4 + $0x8] sm:$0xff]
      %2227 = vset.pattern.permute.xlu0 0
      %2228 = vperm.xlu0 %2227, %v2224
      %v2229 = vpop.permute.xlu0 %2228
      %2232 = vset.pattern.permute.xlu0 0
      %2233 = vperm.xlu0 %2232, %v2225
      %v2234 = vpop.permute.xlu0 %2233
      %v2238 = vunpack.c.l.b16 %v2221
      %v2239 = vunpack.c.l.b16 %v2222
      %v2240 = vpack.c.b16 %v2239, %v2238
      %v2242 = vsel %vm380, %v2240, 0
      %2244 = vmatprep.subr.bf16.mxu0 0
      %2245 = vmatpush1.bf16.msra.mxu0 %v2223
      %2246 = vmatprep.subr.bf16.mxu0 0
      %2247 = vmatpush1.bf16.msra.mxu0 0
      %2248 = vmatprep.subr.bf16.mxu0 0
      %2249 = vmatpush1.bf16.msra.mxu0 0
      %2250 = vmatprep.subr.bf16.mxu0 0
      %2251 = vmatpush1.bf16.msra.mxu0 0
      %2252 = vmatprep.subr.bf16.mxu0 0
      %2253 = vmatpush1.bf16.msra.mxu0 0
      %2254 = vmatprep.subr.bf16.mxu0 0
      %2255 = vmatpush1.bf16.msra.mxu0 0
      %2256 = vmatprep.subr.bf16.mxu0 0
      %2257 = vmatpush1.bf16.msra.mxu0 0
      %2258 = vmatprep.subr.bf16.mxu0 0
      %2259 = vmatpush1.bf16.msra.mxu0 0
      %2260 = vmatprep.subr.bf16.mxu0 0
      %2261 = vmatpush1.bf16.msra.mxu0 0
      %2262 = vmatprep.subr.bf16.mxu0 0
      %2263 = vmatpush1.bf16.msra.mxu0 0
      %2264 = vmatprep.subr.bf16.mxu0 0
      %2265 = vmatpush1.bf16.msra.mxu0 0
      %2266 = vmatprep.subr.bf16.mxu0 0
      %2267 = vmatpush1.bf16.msra.mxu0 0
      %2268 = vmatprep.subr.bf16.mxu0 0
      %2269 = vmatpush1.bf16.msra.mxu0 0
      %2270 = vmatprep.subr.bf16.mxu0 0
      %2271 = vmatpush1.bf16.msra.mxu0 0
      %2272 = vmatprep.subr.bf16.mxu0 0
      %2273 = vmatpush1.bf16.msra.mxu0 0
      %2274 = vmatprep.subr.bf16.mxu0 0
      %2275 = vmatpush1.bf16.msra.mxu0 0
      %2276 = vmatprep.mubr.bf16.mxu0 0
      %2277 = vmatmul.mubr.bf16.gmra.mrb[0].mxu0 %v2242
      %v2278 = vpop.f32.mrb[0].mxu0
      %v2279 = vadd.f32 %v2229, %v2278
      %v2280 = vpop.f32.mrb[0].mxu0
      %v2281 = vpop.f32.mrb[0].mxu0
      %v2282 = vadd.f32 %v2234, %v2281
      %v2283 = vpop.f32.mrb[0].mxu0
      %2284 = vdwg.mxu0
      %v2285 = vmul.f32 %v2279, %v2279
      %v2286 = vmul.f32 %v2282, %v2282
      %v2287 = vmul.f32 %v2279, %v2285
      %v2288 = vmul.f32 %v2282, %v2286
      %v2289 = vmul.f32 %v2287, 0.044715
      %v2290 = vmul.f32 %v2288, 0.044715
      %v2291 = vadd.f32 %v2279, %v2289
      %v2292 = vadd.f32 %v2282, %v2290
      %v2293 = vmul.f32 %v2291, 0.7978846
      %v2294 = vmul.f32 %v2292, 0.7978846
      %v2295 = vtanh.pop %v2293
      %v2296 = vtanh.pop %v2294
      %v2297 = vadd.f32 %v2295, 1.0
      %v2298 = vadd.f32 %v2296, 1.0
      %v2299 = vmul.f32 %v2297, 0.5
      %v2300 = vmul.f32 %v2298, 0.5
      %v2301 = vmul.f32 %v2279, %v2299
      %v2302 = vmul.f32 %v2282, %v2300
      %v2303 = vld [vmem:[%s5] sm:$0x3]
      %v2304 = vpack.c.bf16 %v2302, %v2301
      %v2305 = vld [vmem:[%s6] sm:$0xf]
      %2307 = vset.pattern.permute.xlu0 0
      %2308 = vperm.xlu0 %2307, %v2305
      %v2309 = vpop.permute.xlu0 %2308
      %v2312 = vsel %vm380, %v2303, 0
      %2314 = vmatprep.subr.bf16.mxu0 0
      %2315 = vmatpush1.bf16.msra.mxu0 %v2304
      %2316 = vmatprep.subr.bf16.mxu0 0
      %2317 = vmatpush1.bf16.msra.mxu0 0
      %2318 = vmatprep.subr.bf16.mxu0 0
      %2319 = vmatpush1.bf16.msra.mxu0 0
      %2320 = vmatprep.subr.bf16.mxu0 0
      %2321 = vmatpush1.bf16.msra.mxu0 0
      %2322 = vmatprep.subr.bf16.mxu0 0
      %2323 = vmatpush1.bf16.msra.mxu0 0
      %2324 = vmatprep.subr.bf16.mxu0 0
      %2325 = vmatpush1.bf16.msra.mxu0 0
      %2326 = vmatprep.subr.bf16.mxu0 0
      %2327 = vmatpush1.bf16.msra.mxu0 0
      %2328 = vmatprep.subr.bf16.mxu0 0
      %2329 = vmatpush1.bf16.msra.mxu0 0
      %2330 = vmatprep.subr.bf16.mxu0 0
      %2331 = vmatpush1.bf16.msra.mxu0 0
      %2332 = vmatprep.subr.bf16.mxu0 0
      %2333 = vmatpush1.bf16.msra.mxu0 0
      %2334 = vmatprep.subr.bf16.mxu0 0
      %2335 = vmatpush1.bf16.msra.mxu0 0
      %2336 = vmatprep.subr.bf16.mxu0 0
      %2337 = vmatpush1.bf16.msra.mxu0 0
      %2338 = vmatprep.subr.bf16.mxu0 0
      %2339 = vmatpush1.bf16.msra.mxu0 0
      %2340 = vmatprep.subr.bf16.mxu0 0
      %2341 = vmatpush1.bf16.msra.mxu0 0
      %2342 = vmatprep.subr.bf16.mxu0 0
      %2343 = vmatpush1.bf16.msra.mxu0 0
      %2344 = vmatprep.subr.bf16.mxu0 0
      %2345 = vmatpush1.bf16.msra.mxu0 0
      %2346 = vmatprep.mubr.bf16.mxu0 0
      %2347 = vmatmul.mubr.bf16.gmra.mrb[0].mxu0 %v2312
      %v2348 = vpop.f32.mrb[0].mxu0
      %v2349 = vadd.f32 %v2309, %v2348
      %v2350 = vpop.f32.mrb[0].mxu0
      %v2351 = vpop.f32.mrb[0].mxu0
      %v2352 = vpop.f32.mrb[0].mxu0
      %2353 = vdwg.mxu0
      %v2356 = vunpack.c.l.s4 1966171168
      %v2357 = vunpack.c.0.s8 %v2356
      %v2358 = vlaneseq
      %v2359 = vshrl.u32 %v2358, 7
      %v2360 = vsub.s32 %v2357, %v2359
      %v2361 = vrot.slane %v2349, %v2360
      %v2362 = vcombine.high %v2361, %v2361
      %v2364 = vunpack.c.l.s4 1966171168
      %v2365 = vunpack.c.0.s8 %v2364
      %v2366 = vlaneseq
      %v2367 = vshrl.u32 %v2366, 7
      %v2368 = vsub.s32 %v2365, %v2367
      %v2369 = vrot.slane %v2361, %v2368
      %v2371 = vunpack.c.l.s4 1966171168
      %v2372 = vunpack.c.0.s8 %v2371
      %v2373 = vlaneseq
      %v2374 = vshrl.u32 %v2373, 7
      %v2375 = vsub.s32 %v2372, %v2374
      %v2376 = vrot.slane %v2362, %v2375
      %v2377 = vcombine.high %v2369, %v2369
      %v2378 = vcombine.high %v2376, %v2376
      %v2383 = vpack.c.bf16 %v2369, %v2369
      %v2384 = vpack.c.bf16 %v2376, %v2376
      %v2385 = vpack.c.bf16 %v2377, %v2377
      %v2386 = vpack.c.bf16 %v2378, %v2378
      %v2387 = vld [vmem:[%s318 + $0x4] sm:$0x1]
      %v2388 = vsel %vm529, %v2383, %v2387
      %2389 = vst [vmem:[%s318 + $0x4] sm:$0x1] %v2388
      %v2390 = vld [vmem:[%s318 + $0xc] sm:$0x1]
      %v2391 = vsel %vm529, %v2384, %v2390
      %2392 = vst [vmem:[%s318 + $0xc] sm:$0x1] %v2391
      %v2393 = vld [vmem:[%s318 + $0x14] sm:$0x1]
      %v2394 = vsel %vm529, %v2385, %v2393
      %2395 = vst [vmem:[%s318 + $0x14] sm:$0x1] %v2394
      %v2396 = vld [vmem:[%s318 + $0x1c] sm:$0x1]
      %v2397 = vsel %vm529, %v2386, %v2396
      %2398 = vst [vmem:[%s318 + $0x1c] sm:$0x1] %v2397
      %v2399 = vld [vmem:[%s308 + $0x9] sm:$0x1]
      %v2400 = vld [vmem:[%s1] sm:$0xff]
      %v2401 = vld [vmem:[%s1 + $0x8] sm:$0xff]
      %v2402 = vlaneseq
      %v2403 = vshrl.u32 %v2402, 7
      %v2404 = vsub.s32 0, %v2403
      %v2405 = vrot.slane %v2399, %v2404
      %2407 = vset.pattern.permute.xlu0 0
      %2408 = vperm.xlu0 %2407, %v2400
      %v2409 = vpop.permute.xlu0 %2408
      %2412 = vset.pattern.permute.xlu0 0
      %2413 = vperm.xlu0 %2412, %v2401
      %v2414 = vpop.permute.xlu0 %2413
      %v2416 = vsub.f32 %v2405, %v2409
      %v2417 = vsub.f32 %v2405, %v2414
      %v2418 = vmul.f32 %v2416, %v348
      %v2419 = vmul.f32 %v2417, %v348
      %v2420 = vmul.f32 %v2418, %v2418
      %v2421 = vmul.f32 %v2419, %v2419
      %v2422 = vmul.f32 %v2420, -0.5
      %v2423 = vmul.f32 %v2421, -0.5
      %v2424 = vmul.f32 %v2422, 1.442695
      %v2425 = vpow.pop %v2424
      %v2426 = vmul.f32 %v2423, 1.442695
      %v2427 = vpow.pop %v2426
      %v2428 = vld [vmem:[%s3] sm:$0xf]
      %v2429 = vld [vmem:[%s3 + $0x4] sm:$0xf]
      %v2430 = vpack.c.bf16 %v2427, %v2425
      %v2431 = vld [vmem:[%s4] sm:$0xff]
      %v2432 = vld [vmem:[%s4 + $0x8] sm:$0xff]
      %2434 = vset.pattern.permute.xlu0 0
      %2435 = vperm.xlu0 %2434, %v2431
      %v2436 = vpop.permute.xlu0 %2435
      %2439 = vset.pattern.permute.xlu0 0
      %2440 = vperm.xlu0 %2439, %v2432
      %v2441 = vpop.permute.xlu0 %2440
      %v2445 = vunpack.c.l.b16 %v2428
      %v2446 = vunpack.c.l.b16 %v2429
      %v2447 = vpack.c.b16 %v2446, %v2445
      %v2449 = vsel %vm380, %v2447, 0
      %2451 = vmatprep.subr.bf16.mxu0 0
      %2452 = vmatpush1.bf16.msra.mxu0 %v2430
      %2453 = vmatprep.subr.bf16.mxu0 0
      %2454 = vmatpush1.bf16.msra.mxu0 0
      %2455 = vmatprep.subr.bf16.mxu0 0
      %2456 = vmatpush1.bf16.msra.mxu0 0
      %2457 = vmatprep.subr.bf16.mxu0 0
      %2458 = vmatpush1.bf16.msra.mxu0 0
      %2459 = vmatprep.subr.bf16.mxu0 0
      %2460 = vmatpush1.bf16.msra.mxu0 0
      %2461 = vmatprep.subr.bf16.mxu0 0
      %2462 = vmatpush1.bf16.msra.mxu0 0
      %2463 = vmatprep.subr.bf16.mxu0 0
      %2464 = vmatpush1.bf16.msra.mxu0 0
      %2465 = vmatprep.subr.bf16.mxu0 0
      %2466 = vmatpush1.bf16.msra.mxu0 0
      %2467 = vmatprep.subr.bf16.mxu0 0
      %2468 = vmatpush1.bf16.msra.mxu0 0
      %2469 = vmatprep.subr.bf16.mxu0 0
      %2470 = vmatpush1.bf16.msra.mxu0 0
      %2471 = vmatprep.subr.bf16.mxu0 0
      %2472 = vmatpush1.bf16.msra.mxu0 0
      %2473 = vmatprep.subr.bf16.mxu0 0
      %2474 = vmatpush1.bf16.msra.mxu0 0
      %2475 = vmatprep.subr.bf16.mxu0 0
      %2476 = vmatpush1.bf16.msra.mxu0 0
      %2477 = vmatprep.subr.bf16.mxu0 0
      %2478 = vmatpush1.bf16.msra.mxu0 0
      %2479 = vmatprep.subr.bf16.mxu0 0
      %2480 = vmatpush1.bf16.msra.mxu0 0
      %2481 = vmatprep.subr.bf16.mxu0 0
      %2482 = vmatpush1.bf16.msra.mxu0 0
      %2483 = vmatprep.mubr.bf16.mxu0 0
      %2484 = vmatmul.mubr.bf16.gmra.mrb[0].mxu0 %v2449
      %v2485 = vpop.f32.mrb[0].mxu0
      %v2486 = vadd.f32 %v2436, %v2485
      %v2487 = vpop.f32.mrb[0].mxu0
      %v2488 = vpop.f32.mrb[0].mxu0
      %v2489 = vadd.f32 %v2441, %v2488
      %v2490 = vpop.f32.mrb[0].mxu0
      %2491 = vdwg.mxu0
      %v2492 = vmul.f32 %v2486, %v2486
      %v2493 = vmul.f32 %v2489, %v2489
      %v2494 = vmul.f32 %v2486, %v2492
      %v2495 = vmul.f32 %v2489, %v2493
      %v2496 = vmul.f32 %v2494, 0.044715
      %v2497 = vmul.f32 %v2495, 0.044715
      %v2498 = vadd.f32 %v2486, %v2496
      %v2499 = vadd.f32 %v2489, %v2497
      %v2500 = vmul.f32 %v2498, 0.7978846
      %v2501 = vmul.f32 %v2499, 0.7978846
      %v2502 = vtanh.pop %v2500
      %v2503 = vtanh.pop %v2501
      %v2504 = vadd.f32 %v2502, 1.0
      %v2505 = vadd.f32 %v2503, 1.0
      %v2506 = vmul.f32 %v2504, 0.5
      %v2507 = vmul.f32 %v2505, 0.5
      %v2508 = vmul.f32 %v2486, %v2506
      %v2509 = vmul.f32 %v2489, %v2507
      %v2510 = vld [vmem:[%s5] sm:$0x3]
      %v2511 = vpack.c.bf16 %v2509, %v2508
      %v2512 = vld [vmem:[%s6] sm:$0xf]
      %2514 = vset.pattern.permute.xlu0 0
      %2515 = vperm.xlu0 %2514, %v2512
      %v2516 = vpop.permute.xlu0 %2515
      %v2519 = vsel %vm380, %v2510, 0
      %2521 = vmatprep.subr.bf16.mxu0 0
      %2522 = vmatpush1.bf16.msra.mxu0 %v2511
      %2523 = vmatprep.subr.bf16.mxu0 0
      %2524 = vmatpush1.bf16.msra.mxu0 0
      %2525 = vmatprep.subr.bf16.mxu0 0
      %2526 = vmatpush1.bf16.msra.mxu0 0
      %2527 = vmatprep.subr.bf16.mxu0 0
      %2528 = vmatpush1.bf16.msra.mxu0 0
      %2529 = vmatprep.subr.bf16.mxu0 0
      %2530 = vmatpush1.bf16.msra.mxu0 0
      %2531 = vmatprep.subr.bf16.mxu0 0
      %2532 = vmatpush1.bf16.msra.mxu0 0
      %2533 = vmatprep.subr.bf16.mxu0 0
      %2534 = vmatpush1.bf16.msra.mxu0 0
      %2535 = vmatprep.subr.bf16.mxu0 0
      %2536 = vmatpush1.bf16.msra.mxu0 0
      %2537 = vmatprep.subr.bf16.mxu0 0
      %2538 = vmatpush1.bf16.msra.mxu0 0
      %2539 = vmatprep.subr.bf16.mxu0 0
      %2540 = vmatpush1.bf16.msra.mxu0 0
      %2541 = vmatprep.subr.bf16.mxu0 0
      %2542 = vmatpush1.bf16.msra.mxu0 0
      %2543 = vmatprep.subr.bf16.mxu0 0
      %2544 = vmatpush1.bf16.msra.mxu0 0
      %2545 = vmatprep.subr.bf16.mxu0 0
      %2546 = vmatpush1.bf16.msra.mxu0 0
      %2547 = vmatprep.subr.bf16.mxu0 0
      %2548 = vmatpush1.bf16.msra.mxu0 0
      %2549 = vmatprep.subr.bf16.mxu0 0
      %2550 = vmatpush1.bf16.msra.mxu0 0
      %2551 = vmatprep.subr.bf16.mxu0 0
      %2552 = vmatpush1.bf16.msra.mxu0 0
      %2553 = vmatprep.mubr.bf16.mxu0 0
      %2554 = vmatmul.mubr.bf16.gmra.mrb[0].mxu0 %v2519
      %v2555 = vpop.f32.mrb[0].mxu0
      %v2556 = vadd.f32 %v2516, %v2555
      %v2557 = vpop.f32.mrb[0].mxu0
      %v2558 = vpop.f32.mrb[0].mxu0
      %v2559 = vpop.f32.mrb[0].mxu0
      %2560 = vdwg.mxu0
      %v2563 = vunpack.c.l.s4 1966171168
      %v2564 = vunpack.c.0.s8 %v2563
      %v2565 = vlaneseq
      %v2566 = vshrl.u32 %v2565, 7
      %v2567 = vsub.s32 %v2564, %v2566
      %v2568 = vrot.slane %v2556, %v2567
      %v2569 = vcombine.high %v2568, %v2568
      %v2571 = vunpack.c.l.s4 1966171168
      %v2572 = vunpack.c.0.s8 %v2571
      %v2573 = vlaneseq
      %v2574 = vshrl.u32 %v2573, 7
      %v2575 = vsub.s32 %v2572, %v2574
      %v2576 = vrot.slane %v2568, %v2575
      %v2578 = vunpack.c.l.s4 1966171168
      %v2579 = vunpack.c.0.s8 %v2578
      %v2580 = vlaneseq
      %v2581 = vshrl.u32 %v2580, 7
      %v2582 = vsub.s32 %v2579, %v2581
      %v2583 = vrot.slane %v2569, %v2582
      %v2584 = vcombine.high %v2576, %v2576
      %v2585 = vcombine.high %v2583, %v2583
      %v2590 = vpack.c.bf16 %v2576, %v2576
      %v2591 = vpack.c.bf16 %v2583, %v2583
      %v2592 = vpack.c.bf16 %v2584, %v2584
      %v2593 = vpack.c.bf16 %v2585, %v2585
      %v2598 = vunpack.c.l.b16 %v2590
      %v2599 = vunpack.c.l.b16 %v2591
      %v2600 = vunpack.c.l.b16 %v2592
      %v2601 = vunpack.c.l.b16 %v2593
      %v2602 = vpack.c.b16 %v2598, %v2598
      %v2603 = vpack.c.b16 %v2599, %v2599
      %v2604 = vpack.c.b16 %v2600, %v2600
      %v2605 = vpack.c.b16 %v2601, %v2601
      %v2607 = vshll.u32 %v2602, 16
      %v2610 = vshll.u32 %v2603, 16
      %v2613 = vshll.u32 %v2604, 16
      %v2616 = vshll.u32 %v2605, 16
      %v2622 = vld [vmem:[%s318 + $0x4] sm:$0x1]
      %v2623 = vsel %vm766, %v2607, %v2622
      %2624 = vst [vmem:[%s318 + $0x4] sm:$0x1] %v2623
      %v2625 = vld [vmem:[%s318 + $0xc] sm:$0x1]
      %v2626 = vsel %vm766, %v2610, %v2625
      %2627 = vst [vmem:[%s318 + $0xc] sm:$0x1] %v2626
      %v2628 = vld [vmem:[%s318 + $0x14] sm:$0x1]
      %v2629 = vsel %vm766, %v2613, %v2628
      %2630 = vst [vmem:[%s318 + $0x14] sm:$0x1] %v2629
      %v2631 = vld [vmem:[%s318 + $0x1c] sm:$0x1]
      %v2632 = vsel %vm766, %v2616, %v2631
      %2633 = vst [vmem:[%s318 + $0x1c] sm:$0x1] %v2632
      %v2634 = vld [vmem:[%s308 + $0xa] sm:$0x1]
      %v2635 = vld [vmem:[%s1] sm:$0xff]
      %v2636 = vld [vmem:[%s1 + $0x8] sm:$0xff]
      %v2637 = vlaneseq
      %v2638 = vshrl.u32 %v2637, 7
      %v2639 = vsub.s32 0, %v2638
      %v2640 = vrot.slane %v2634, %v2639
      %2642 = vset.pattern.permute.xlu0 0
      %2643 = vperm.xlu0 %2642, %v2635
      %v2644 = vpop.permute.xlu0 %2643
      %2647 = vset.pattern.permute.xlu0 0
      %2648 = vperm.xlu0 %2647, %v2636
      %v2649 = vpop.permute.xlu0 %2648
      %v2651 = vsub.f32 %v2640, %v2644
      %v2652 = vsub.f32 %v2640, %v2649
      %v2653 = vmul.f32 %v2651, %v348
      %v2654 = vmul.f32 %v2652, %v348
      %v2655 = vmul.f32 %v2653, %v2653
      %v2656 = vmul.f32 %v2654, %v2654
      %v2657 = vmul.f32 %v2655, -0.5
      %v2658 = vmul.f32 %v2656, -0.5
      %v2659 = vmul.f32 %v2657, 1.442695
      %v2660 = vpow.pop %v2659
      %v2661 = vmul.f32 %v2658, 1.442695
      %v2662 = vpow.pop %v2661
      %v2663 = vld [vmem:[%s3] sm:$0xf]
      %v2664 = vld [vmem:[%s3 + $0x4] sm:$0xf]
      %v2665 = vpack.c.bf16 %v2662, %v2660
      %v2666 = vld [vmem:[%s4] sm:$0xff]
      %v2667 = vld [vmem:[%s4 + $0x8] sm:$0xff]
      %2669 = vset.pattern.permute.xlu0 0
      %2670 = vperm.xlu0 %2669, %v2666
      %v2671 = vpop.permute.xlu0 %2670
      %2674 = vset.pattern.permute.xlu0 0
      %2675 = vperm.xlu0 %2674, %v2667
      %v2676 = vpop.permute.xlu0 %2675
      %v2680 = vunpack.c.l.b16 %v2663
      %v2681 = vunpack.c.l.b16 %v2664
      %v2682 = vpack.c.b16 %v2681, %v2680
      %v2684 = vsel %vm380, %v2682, 0
      %2686 = vmatprep.subr.bf16.mxu0 0
      %2687 = vmatpush1.bf16.msra.mxu0 %v2665
      %2688 = vmatprep.subr.bf16.mxu0 0
      %2689 = vmatpush1.bf16.msra.mxu0 0
      %2690 = vmatprep.subr.bf16.mxu0 0
      %2691 = vmatpush1.bf16.msra.mxu0 0
      %2692 = vmatprep.subr.bf16.mxu0 0
      %2693 = vmatpush1.bf16.msra.mxu0 0
      %2694 = vmatprep.subr.bf16.mxu0 0
      %2695 = vmatpush1.bf16.msra.mxu0 0
      %2696 = vmatprep.subr.bf16.mxu0 0
      %2697 = vmatpush1.bf16.msra.mxu0 0
      %2698 = vmatprep.subr.bf16.mxu0 0
      %2699 = vmatpush1.bf16.msra.mxu0 0
      %2700 = vmatprep.subr.bf16.mxu0 0
      %2701 = vmatpush1.bf16.msra.mxu0 0
      %2702 = vmatprep.subr.bf16.mxu0 0
      %2703 = vmatpush1.bf16.msra.mxu0 0
      %2704 = vmatprep.subr.bf16.mxu0 0
      %2705 = vmatpush1.bf16.msra.mxu0 0
      %2706 = vmatprep.subr.bf16.mxu0 0
      %2707 = vmatpush1.bf16.msra.mxu0 0
      %2708 = vmatprep.subr.bf16.mxu0 0
      %2709 = vmatpush1.bf16.msra.mxu0 0
      %2710 = vmatprep.subr.bf16.mxu0 0
      %2711 = vmatpush1.bf16.msra.mxu0 0
      %2712 = vmatprep.subr.bf16.mxu0 0
      %2713 = vmatpush1.bf16.msra.mxu0 0
      %2714 = vmatprep.subr.bf16.mxu0 0
      %2715 = vmatpush1.bf16.msra.mxu0 0
      %2716 = vmatprep.subr.bf16.mxu0 0
      %2717 = vmatpush1.bf16.msra.mxu0 0
      %2718 = vmatprep.mubr.bf16.mxu0 0
      %2719 = vmatmul.mubr.bf16.gmra.mrb[0].mxu0 %v2684
      %v2720 = vpop.f32.mrb[0].mxu0
      %v2721 = vadd.f32 %v2671, %v2720
      %v2722 = vpop.f32.mrb[0].mxu0
      %v2723 = vpop.f32.mrb[0].mxu0
      %v2724 = vadd.f32 %v2676, %v2723
      %v2725 = vpop.f32.mrb[0].mxu0
      %2726 = vdwg.mxu0
      %v2727 = vmul.f32 %v2721, %v2721
      %v2728 = vmul.f32 %v2724, %v2724
      %v2729 = vmul.f32 %v2721, %v2727
      %v2730 = vmul.f32 %v2724, %v2728
      %v2731 = vmul.f32 %v2729, 0.044715
      %v2732 = vmul.f32 %v2730, 0.044715
      %v2733 = vadd.f32 %v2721, %v2731
      %v2734 = vadd.f32 %v2724, %v2732
      %v2735 = vmul.f32 %v2733, 0.7978846
      %v2736 = vmul.f32 %v2734, 0.7978846
      %v2737 = vtanh.pop %v2735
      %v2738 = vtanh.pop %v2736
      %v2739 = vadd.f32 %v2737, 1.0
      %v2740 = vadd.f32 %v2738, 1.0
      %v2741 = vmul.f32 %v2739, 0.5
      %v2742 = vmul.f32 %v2740, 0.5
      %v2743 = vmul.f32 %v2721, %v2741
      %v2744 = vmul.f32 %v2724, %v2742
      %v2745 = vld [vmem:[%s5] sm:$0x3]
      %v2746 = vpack.c.bf16 %v2744, %v2743
      %v2747 = vld [vmem:[%s6] sm:$0xf]
      %2749 = vset.pattern.permute.xlu0 0
      %2750 = vperm.xlu0 %2749, %v2747
      %v2751 = vpop.permute.xlu0 %2750
      %v2754 = vsel %vm380, %v2745, 0
      %2756 = vmatprep.subr.bf16.mxu0 0
      %2757 = vmatpush1.bf16.msra.mxu0 %v2746
      %2758 = vmatprep.subr.bf16.mxu0 0
      %2759 = vmatpush1.bf16.msra.mxu0 0
      %2760 = vmatprep.subr.bf16.mxu0 0
      %2761 = vmatpush1.bf16.msra.mxu0 0
      %2762 = vmatprep.subr.bf16.mxu0 0
      %2763 = vmatpush1.bf16.msra.mxu0 0
      %2764 = vmatprep.subr.bf16.mxu0 0
      %2765 = vmatpush1.bf16.msra.mxu0 0
      %2766 = vmatprep.subr.bf16.mxu0 0
      %2767 = vmatpush1.bf16.msra.mxu0 0
      %2768 = vmatprep.subr.bf16.mxu0 0
      %2769 = vmatpush1.bf16.msra.mxu0 0
      %2770 = vmatprep.subr.bf16.mxu0 0
      %2771 = vmatpush1.bf16.msra.mxu0 0
      %2772 = vmatprep.subr.bf16.mxu0 0
      %2773 = vmatpush1.bf16.msra.mxu0 0
      %2774 = vmatprep.subr.bf16.mxu0 0
      %2775 = vmatpush1.bf16.msra.mxu0 0
      %2776 = vmatprep.subr.bf16.mxu0 0
      %2777 = vmatpush1.bf16.msra.mxu0 0
      %2778 = vmatprep.subr.bf16.mxu0 0
      %2779 = vmatpush1.bf16.msra.mxu0 0
      %2780 = vmatprep.subr.bf16.mxu0 0
      %2781 = vmatpush1.bf16.msra.mxu0 0
      %2782 = vmatprep.subr.bf16.mxu0 0
      %2783 = vmatpush1.bf16.msra.mxu0 0
      %2784 = vmatprep.subr.bf16.mxu0 0
      %2785 = vmatpush1.bf16.msra.mxu0 0
      %2786 = vmatprep.subr.bf16.mxu0 0
      %2787 = vmatpush1.bf16.msra.mxu0 0
      %2788 = vmatprep.mubr.bf16.mxu0 0
      %2789 = vmatmul.mubr.bf16.gmra.mrb[0].mxu0 %v2754
      %v2790 = vpop.f32.mrb[0].mxu0
      %v2791 = vadd.f32 %v2751, %v2790
      %v2792 = vpop.f32.mrb[0].mxu0
      %v2793 = vpop.f32.mrb[0].mxu0
      %v2794 = vpop.f32.mrb[0].mxu0
      %2795 = vdwg.mxu0
      %v2798 = vunpack.c.l.s4 1966171168
      %v2799 = vunpack.c.0.s8 %v2798
      %v2800 = vlaneseq
      %v2801 = vshrl.u32 %v2800, 7
      %v2802 = vsub.s32 %v2799, %v2801
      %v2803 = vrot.slane %v2791, %v2802
      %v2804 = vcombine.high %v2803, %v2803
      %v2806 = vunpack.c.l.s4 1966171168
      %v2807 = vunpack.c.0.s8 %v2806
      %v2808 = vlaneseq
      %v2809 = vshrl.u32 %v2808, 7
      %v2810 = vsub.s32 %v2807, %v2809
      %v2811 = vrot.slane %v2803, %v2810
      %v2813 = vunpack.c.l.s4 1966171168
      %v2814 = vunpack.c.0.s8 %v2813
      %v2815 = vlaneseq
      %v2816 = vshrl.u32 %v2815, 7
      %v2817 = vsub.s32 %v2814, %v2816
      %v2818 = vrot.slane %v2804, %v2817
      %v2819 = vcombine.high %v2811, %v2811
      %v2820 = vcombine.high %v2818, %v2818
      %v2825 = vpack.c.bf16 %v2811, %v2811
      %v2826 = vpack.c.bf16 %v2818, %v2818
      %v2827 = vpack.c.bf16 %v2819, %v2819
      %v2828 = vpack.c.bf16 %v2820, %v2820
      %v2833 = vunpack.c.l.b16 %v2825
      %v2834 = vunpack.c.l.b16 %v2826
      %v2835 = vunpack.c.l.b16 %v2827
      %v2836 = vunpack.c.l.b16 %v2828
      %v2837 = vpack.c.b16 %v2833, %v2833
      %v2838 = vpack.c.b16 %v2834, %v2834
      %v2839 = vpack.c.b16 %v2835, %v2835
      %v2840 = vpack.c.b16 %v2836, %v2836
      %v2841 = vrot.slane %v2837, 7
      %v2842 = vrot.slane %v2838, 7
      %v2843 = vrot.slane %v2839, 7
      %v2844 = vrot.slane %v2840, 7
      %v2849 = vld [vmem:[%s318 + $0x4] sm:$0x2]
      %v2850 = vsel %vm996, %v2841, %v2849
      %2851 = vst [vmem:[%s318 + $0x4] sm:$0x2] %v2850
      %v2852 = vld [vmem:[%s318 + $0xc] sm:$0x2]
      %v2853 = vsel %vm996, %v2842, %v2852
      %2854 = vst [vmem:[%s318 + $0xc] sm:$0x2] %v2853
      %v2855 = vld [vmem:[%s318 + $0x14] sm:$0x2]
      %v2856 = vsel %vm996, %v2843, %v2855
      %2857 = vst [vmem:[%s318 + $0x14] sm:$0x2] %v2856
      %v2858 = vld [vmem:[%s318 + $0x1c] sm:$0x2]
      %v2859 = vsel %vm996, %v2844, %v2858
      %2860 = vst [vmem:[%s318 + $0x1c] sm:$0x2] %v2859
      %v2861 = vld [vmem:[%s308 + $0xb] sm:$0x1]
      %v2862 = vld [vmem:[%s1] sm:$0xff]
      %v2863 = vld [vmem:[%s1 + $0x8] sm:$0xff]
      %v2864 = vlaneseq
      %v2865 = vshrl.u32 %v2864, 7
      %v2866 = vsub.s32 0, %v2865
      %v2867 = vrot.slane %v2861, %v2866
      %2869 = vset.pattern.permute.xlu0 0
      %2870 = vperm.xlu0 %2869, %v2862
      %v2871 = vpop.permute.xlu0 %2870
      %2874 = vset.pattern.permute.xlu0 0
      %2875 = vperm.xlu0 %2874, %v2863
      %v2876 = vpop.permute.xlu0 %2875
      %v2878 = vsub.f32 %v2867, %v2871
      %v2879 = vsub.f32 %v2867, %v2876
      %v2880 = vmul.f32 %v2878, %v348
      %v2881 = vmul.f32 %v2879, %v348
      %v2882 = vmul.f32 %v2880, %v2880
      %v2883 = vmul.f32 %v2881, %v2881
      %v2884 = vmul.f32 %v2882, -0.5
      %v2885 = vmul.f32 %v2883, -0.5
      %v2886 = vmul.f32 %v2884, 1.442695
      %v2887 = vpow.pop %v2886
      %v2888 = vmul.f32 %v2885, 1.442695
      %v2889 = vpow.pop %v2888
      %v2890 = vld [vmem:[%s3] sm:$0xf]
      %v2891 = vld [vmem:[%s3 + $0x4] sm:$0xf]
      %v2892 = vpack.c.bf16 %v2889, %v2887
      %v2893 = vld [vmem:[%s4] sm:$0xff]
      %v2894 = vld [vmem:[%s4 + $0x8] sm:$0xff]
      %2896 = vset.pattern.permute.xlu0 0
      %2897 = vperm.xlu0 %2896, %v2893
      %v2898 = vpop.permute.xlu0 %2897
      %2901 = vset.pattern.permute.xlu0 0
      %2902 = vperm.xlu0 %2901, %v2894
      %v2903 = vpop.permute.xlu0 %2902
      %v2907 = vunpack.c.l.b16 %v2890
      %v2908 = vunpack.c.l.b16 %v2891
      %v2909 = vpack.c.b16 %v2908, %v2907
      %v2911 = vsel %vm380, %v2909, 0
      %2913 = vmatprep.subr.bf16.mxu0 0
      %2914 = vmatpush1.bf16.msra.mxu0 %v2892
      %2915 = vmatprep.subr.bf16.mxu0 0
      %2916 = vmatpush1.bf16.msra.mxu0 0
      %2917 = vmatprep.subr.bf16.mxu0 0
      %2918 = vmatpush1.bf16.msra.mxu0 0
      %2919 = vmatprep.subr.bf16.mxu0 0
      %2920 = vmatpush1.bf16.msra.mxu0 0
      %2921 = vmatprep.subr.bf16.mxu0 0
      %2922 = vmatpush1.bf16.msra.mxu0 0
      %2923 = vmatprep.subr.bf16.mxu0 0
      %2924 = vmatpush1.bf16.msra.mxu0 0
      %2925 = vmatprep.subr.bf16.mxu0 0
      %2926 = vmatpush1.bf16.msra.mxu0 0
      %2927 = vmatprep.subr.bf16.mxu0 0
      %2928 = vmatpush1.bf16.msra.mxu0 0
      %2929 = vmatprep.subr.bf16.mxu0 0
      %2930 = vmatpush1.bf16.msra.mxu0 0
      %2931 = vmatprep.subr.bf16.mxu0 0
      %2932 = vmatpush1.bf16.msra.mxu0 0
      %2933 = vmatprep.subr.bf16.mxu0 0
      %2934 = vmatpush1.bf16.msra.mxu0 0
      %2935 = vmatprep.subr.bf16.mxu0 0
      %2936 = vmatpush1.bf16.msra.mxu0 0
      %2937 = vmatprep.subr.bf16.mxu0 0
      %2938 = vmatpush1.bf16.msra.mxu0 0
      %2939 = vmatprep.subr.bf16.mxu0 0
      %2940 = vmatpush1.bf16.msra.mxu0 0
      %2941 = vmatprep.subr.bf16.mxu0 0
      %2942 = vmatpush1.bf16.msra.mxu0 0
      %2943 = vmatprep.subr.bf16.mxu0 0
      %2944 = vmatpush1.bf16.msra.mxu0 0
      %2945 = vmatprep.mubr.bf16.mxu0 0
      %2946 = vmatmul.mubr.bf16.gmra.mrb[0].mxu0 %v2911
      %v2947 = vpop.f32.mrb[0].mxu0
      %v2948 = vadd.f32 %v2898, %v2947
      %v2949 = vpop.f32.mrb[0].mxu0
      %v2950 = vpop.f32.mrb[0].mxu0
      %v2951 = vadd.f32 %v2903, %v2950
      %v2952 = vpop.f32.mrb[0].mxu0
      %2953 = vdwg.mxu0
      %v2954 = vmul.f32 %v2948, %v2948
      %v2955 = vmul.f32 %v2951, %v2951
      %v2956 = vmul.f32 %v2948, %v2954
      %v2957 = vmul.f32 %v2951, %v2955
      %v2958 = vmul.f32 %v2956, 0.044715
      %v2959 = vmul.f32 %v2957, 0.044715
      %v2960 = vadd.f32 %v2948, %v2958
      %v2961 = vadd.f32 %v2951, %v2959
      %v2962 = vmul.f32 %v2960, 0.7978846
      %v2963 = vmul.f32 %v2961, 0.7978846
      %v2964 = vtanh.pop %v2962
      %v2965 = vtanh.pop %v2963
      %v2966 = vadd.f32 %v2964, 1.0
      %v2967 = vadd.f32 %v2965, 1.0
      %v2968 = vmul.f32 %v2966, 0.5
      %v2969 = vmul.f32 %v2967, 0.5
      %v2970 = vmul.f32 %v2948, %v2968
      %v2971 = vmul.f32 %v2951, %v2969
      %v2972 = vld [vmem:[%s5] sm:$0x3]
      %v2973 = vpack.c.bf16 %v2971, %v2970
      %v2974 = vld [vmem:[%s6] sm:$0xf]
      %2976 = vset.pattern.permute.xlu0 0
      %2977 = vperm.xlu0 %2976, %v2974
      %v2978 = vpop.permute.xlu0 %2977
      %v2981 = vsel %vm380, %v2972, 0
      %2983 = vmatprep.subr.bf16.mxu0 0
      %2984 = vmatpush1.bf16.msra.mxu0 %v2973
      %2985 = vmatprep.subr.bf16.mxu0 0
      %2986 = vmatpush1.bf16.msra.mxu0 0
      %2987 = vmatprep.subr.bf16.mxu0 0
      %2988 = vmatpush1.bf16.msra.mxu0 0
      %2989 = vmatprep.subr.bf16.mxu0 0
      %2990 = vmatpush1.bf16.msra.mxu0 0
      %2991 = vmatprep.subr.bf16.mxu0 0
      %2992 = vmatpush1.bf16.msra.mxu0 0
      %2993 = vmatprep.subr.bf16.mxu0 0
      %2994 = vmatpush1.bf16.msra.mxu0 0
      %2995 = vmatprep.subr.bf16.mxu0 0
      %2996 = vmatpush1.bf16.msra.mxu0 0
      %2997 = vmatprep.subr.bf16.mxu0 0
      %2998 = vmatpush1.bf16.msra.mxu0 0
      %2999 = vmatprep.subr.bf16.mxu0 0
      %3000 = vmatpush1.bf16.msra.mxu0 0
      %3001 = vmatprep.subr.bf16.mxu0 0
      %3002 = vmatpush1.bf16.msra.mxu0 0
      %3003 = vmatprep.subr.bf16.mxu0 0
      %3004 = vmatpush1.bf16.msra.mxu0 0
      %3005 = vmatprep.subr.bf16.mxu0 0
      %3006 = vmatpush1.bf16.msra.mxu0 0
      %3007 = vmatprep.subr.bf16.mxu0 0
      %3008 = vmatpush1.bf16.msra.mxu0 0
      %3009 = vmatprep.subr.bf16.mxu0 0
      %3010 = vmatpush1.bf16.msra.mxu0 0
      %3011 = vmatprep.subr.bf16.mxu0 0
      %3012 = vmatpush1.bf16.msra.mxu0 0
      %3013 = vmatprep.subr.bf16.mxu0 0
      %3014 = vmatpush1.bf16.msra.mxu0 0
      %3015 = vmatprep.mubr.bf16.mxu0 0
      %3016 = vmatmul.mubr.bf16.gmra.mrb[0].mxu0 %v2981
      %v3017 = vpop.f32.mrb[0].mxu0
      %v3018 = vadd.f32 %v2978, %v3017
      %v3019 = vpop.f32.mrb[0].mxu0
      %v3020 = vpop.f32.mrb[0].mxu0
      %v3021 = vpop.f32.mrb[0].mxu0
      %3022 = vdwg.mxu0
      %v3025 = vunpack.c.l.s4 1966171168
      %v3026 = vunpack.c.0.s8 %v3025
      %v3027 = vlaneseq
      %v3028 = vshrl.u32 %v3027, 7
      %v3029 = vsub.s32 %v3026, %v3028
      %v3030 = vrot.slane %v3018, %v3029
      %v3031 = vcombine.high %v3030, %v3030
      %v3033 = vunpack.c.l.s4 1966171168
      %v3034 = vunpack.c.0.s8 %v3033
      %v3035 = vlaneseq
      %v3036 = vshrl.u32 %v3035, 7
      %v3037 = vsub.s32 %v3034, %v3036
      %v3038 = vrot.slane %v3030, %v3037
      %v3040 = vunpack.c.l.s4 1966171168
      %v3041 = vunpack.c.0.s8 %v3040
      %v3042 = vlaneseq
      %v3043 = vshrl.u32 %v3042, 7
      %v3044 = vsub.s32 %v3041, %v3043
      %v3045 = vrot.slane %v3031, %v3044
      %v3046 = vcombine.high %v3038, %v3038
      %v3047 = vcombine.high %v3045, %v3045
      %v3052 = vpack.c.bf16 %v3038, %v3038
      %v3053 = vpack.c.bf16 %v3045, %v3045
      %v3054 = vpack.c.bf16 %v3046, %v3046
      %v3055 = vpack.c.bf16 %v3047, %v3047
      %v3060 = vunpack.c.l.b16 %v3052
      %v3061 = vunpack.c.l.b16 %v3053
      %v3062 = vunpack.c.l.b16 %v3054
      %v3063 = vunpack.c.l.b16 %v3055
      %v3064 = vpack.c.b16 %v3060, %v3060
      %v3065 = vpack.c.b16 %v3061, %v3061
      %v3066 = vpack.c.b16 %v3062, %v3062
      %v3067 = vpack.c.b16 %v3063, %v3063
      %v3069 = vshll.u32 %v3064, 16
      %v3071 = vrot.slane %v3069, 7
      %v3073 = vshll.u32 %v3065, 16
      %v3075 = vrot.slane %v3073, 7
      %v3077 = vshll.u32 %v3066, 16
      %v3079 = vrot.slane %v3077, 7
      %v3081 = vshll.u32 %v3067, 16
      %v3083 = vrot.slane %v3081, 7
      %v3088 = vld [vmem:[%s318 + $0x4] sm:$0x2]
      %v3089 = vsel %vm1237, %v3071, %v3088
      %3090 = vst [vmem:[%s318 + $0x4] sm:$0x2] %v3089
      %v3091 = vld [vmem:[%s318 + $0xc] sm:$0x2]
      %v3092 = vsel %vm1237, %v3075, %v3091
      %3093 = vst [vmem:[%s318 + $0xc] sm:$0x2] %v3092
      %v3094 = vld [vmem:[%s318 + $0x14] sm:$0x2]
      %v3095 = vsel %vm1237, %v3079, %v3094
      %3096 = vst [vmem:[%s318 + $0x14] sm:$0x2] %v3095
      %v3097 = vld [vmem:[%s318 + $0x1c] sm:$0x2]
      %v3098 = vsel %vm1237, %v3083, %v3097
      %3099 = vst [vmem:[%s318 + $0x1c] sm:$0x2] %v3098
      %v3100 = vld [vmem:[%s308 + $0xc] sm:$0x1]
      %v3101 = vld [vmem:[%s1] sm:$0xff]
      %v3102 = vld [vmem:[%s1 + $0x8] sm:$0xff]
      %v3103 = vlaneseq
      %v3104 = vshrl.u32 %v3103, 7
      %v3105 = vsub.s32 0, %v3104
      %v3106 = vrot.slane %v3100, %v3105
      %3108 = vset.pattern.permute.xlu0 0
      %3109 = vperm.xlu0 %3108, %v3101
      %v3110 = vpop.permute.xlu0 %3109
      %3113 = vset.pattern.permute.xlu0 0
      %3114 = vperm.xlu0 %3113, %v3102
      %v3115 = vpop.permute.xlu0 %3114
      %v3117 = vsub.f32 %v3106, %v3110
      %v3118 = vsub.f32 %v3106, %v3115
      %v3119 = vmul.f32 %v3117, %v348
      %v3120 = vmul.f32 %v3118, %v348
      %v3121 = vmul.f32 %v3119, %v3119
      %v3122 = vmul.f32 %v3120, %v3120
      %v3123 = vmul.f32 %v3121, -0.5
      %v3124 = vmul.f32 %v3122, -0.5
      %v3125 = vmul.f32 %v3123, 1.442695
      %v3126 = vpow.pop %v3125
      %v3127 = vmul.f32 %v3124, 1.442695
      %v3128 = vpow.pop %v3127
      %v3129 = vld [vmem:[%s3] sm:$0xf]
      %v3130 = vld [vmem:[%s3 + $0x4] sm:$0xf]
      %v3131 = vpack.c.bf16 %v3128, %v3126
      %v3132 = vld [vmem:[%s4] sm:$0xff]
      %v3133 = vld [vmem:[%s4 + $0x8] sm:$0xff]
      %3135 = vset.pattern.permute.xlu0 0
      %3136 = vperm.xlu0 %3135, %v3132
      %v3137 = vpop.permute.xlu0 %3136
      %3140 = vset.pattern.permute.xlu0 0
      %3141 = vperm.xlu0 %3140, %v3133
      %v3142 = vpop.permute.xlu0 %3141
      %v3146 = vunpack.c.l.b16 %v3129
      %v3147 = vunpack.c.l.b16 %v3130
      %v3148 = vpack.c.b16 %v3147, %v3146
      %v3150 = vsel %vm380, %v3148, 0
      %3152 = vmatprep.subr.bf16.mxu0 0
      %3153 = vmatpush1.bf16.msra.mxu0 %v3131
      %3154 = vmatprep.subr.bf16.mxu0 0
      %3155 = vmatpush1.bf16.msra.mxu0 0
      %3156 = vmatprep.subr.bf16.mxu0 0
      %3157 = vmatpush1.bf16.msra.mxu0 0
      %3158 = vmatprep.subr.bf16.mxu0 0
      %3159 = vmatpush1.bf16.msra.mxu0 0
      %3160 = vmatprep.subr.bf16.mxu0 0
      %3161 = vmatpush1.bf16.msra.mxu0 0
      %3162 = vmatprep.subr.bf16.mxu0 0
      %3163 = vmatpush1.bf16.msra.mxu0 0
      %3164 = vmatprep.subr.bf16.mxu0 0
      %3165 = vmatpush1.bf16.msra.mxu0 0
      %3166 = vmatprep.subr.bf16.mxu0 0
      %3167 = vmatpush1.bf16.msra.mxu0 0
      %3168 = vmatprep.subr.bf16.mxu0 0
      %3169 = vmatpush1.bf16.msra.mxu0 0
      %3170 = vmatprep.subr.bf16.mxu0 0
      %3171 = vmatpush1.bf16.msra.mxu0 0
      %3172 = vmatprep.subr.bf16.mxu0 0
      %3173 = vmatpush1.bf16.msra.mxu0 0
      %3174 = vmatprep.subr.bf16.mxu0 0
      %3175 = vmatpush1.bf16.msra.mxu0 0
      %3176 = vmatprep.subr.bf16.mxu0 0
      %3177 = vmatpush1.bf16.msra.mxu0 0
      %3178 = vmatprep.subr.bf16.mxu0 0
      %3179 = vmatpush1.bf16.msra.mxu0 0
      %3180 = vmatprep.subr.bf16.mxu0 0
      %3181 = vmatpush1.bf16.msra.mxu0 0
      %3182 = vmatprep.subr.bf16.mxu0 0
      %3183 = vmatpush1.bf16.msra.mxu0 0
      %3184 = vmatprep.mubr.bf16.mxu0 0
      %3185 = vmatmul.mubr.bf16.gmra.mrb[0].mxu0 %v3150
      %v3186 = vpop.f32.mrb[0].mxu0
      %v3187 = vadd.f32 %v3137, %v3186
      %v3188 = vpop.f32.mrb[0].mxu0
      %v3189 = vpop.f32.mrb[0].mxu0
      %v3190 = vadd.f32 %v3142, %v3189
      %v3191 = vpop.f32.mrb[0].mxu0
      %3192 = vdwg.mxu0
      %v3193 = vmul.f32 %v3187, %v3187
      %v3194 = vmul.f32 %v3190, %v3190
      %v3195 = vmul.f32 %v3187, %v3193
      %v3196 = vmul.f32 %v3190, %v3194
      %v3197 = vmul.f32 %v3195, 0.044715
      %v3198 = vmul.f32 %v3196, 0.044715
      %v3199 = vadd.f32 %v3187, %v3197
      %v3200 = vadd.f32 %v3190, %v3198
      %v3201 = vmul.f32 %v3199, 0.7978846
      %v3202 = vmul.f32 %v3200, 0.7978846
      %v3203 = vtanh.pop %v3201
      %v3204 = vtanh.pop %v3202
      %v3205 = vadd.f32 %v3203, 1.0
      %v3206 = vadd.f32 %v3204, 1.0
      %v3207 = vmul.f32 %v3205, 0.5
      %v3208 = vmul.f32 %v3206, 0.5
      %v3209 = vmul.f32 %v3187, %v3207
      %v3210 = vmul.f32 %v3190, %v3208
      %v3211 = vld [vmem:[%s5] sm:$0x3]
      %v3212 = vpack.c.bf16 %v3210, %v3209
      %v3213 = vld [vmem:[%s6] sm:$0xf]
      %3215 = vset.pattern.permute.xlu0 0
      %3216 = vperm.xlu0 %3215, %v3213
      %v3217 = vpop.permute.xlu0 %3216
      %v3220 = vsel %vm380, %v3211, 0
      %3222 = vmatprep.subr.bf16.mxu0 0
      %3223 = vmatpush1.bf16.msra.mxu0 %v3212
      %3224 = vmatprep.subr.bf16.mxu0 0
      %3225 = vmatpush1.bf16.msra.mxu0 0
      %3226 = vmatprep.subr.bf16.mxu0 0
      %3227 = vmatpush1.bf16.msra.mxu0 0
      %3228 = vmatprep.subr.bf16.mxu0 0
      %3229 = vmatpush1.bf16.msra.mxu0 0
      %3230 = vmatprep.subr.bf16.mxu0 0
      %3231 = vmatpush1.bf16.msra.mxu0 0
      %3232 = vmatprep.subr.bf16.mxu0 0
      %3233 = vmatpush1.bf16.msra.mxu0 0
      %3234 = vmatprep.subr.bf16.mxu0 0
      %3235 = vmatpush1.bf16.msra.mxu0 0
      %3236 = vmatprep.subr.bf16.mxu0 0
      %3237 = vmatpush1.bf16.msra.mxu0 0
      %3238 = vmatprep.subr.bf16.mxu0 0
      %3239 = vmatpush1.bf16.msra.mxu0 0
      %3240 = vmatprep.subr.bf16.mxu0 0
      %3241 = vmatpush1.bf16.msra.mxu0 0
      %3242 = vmatprep.subr.bf16.mxu0 0
      %3243 = vmatpush1.bf16.msra.mxu0 0
      %3244 = vmatprep.subr.bf16.mxu0 0
      %3245 = vmatpush1.bf16.msra.mxu0 0
      %3246 = vmatprep.subr.bf16.mxu0 0
      %3247 = vmatpush1.bf16.msra.mxu0 0
      %3248 = vmatprep.subr.bf16.mxu0 0
      %3249 = vmatpush1.bf16.msra.mxu0 0
      %3250 = vmatprep.subr.bf16.mxu0 0
      %3251 = vmatpush1.bf16.msra.mxu0 0
      %3252 = vmatprep.subr.bf16.mxu0 0
      %3253 = vmatpush1.bf16.msra.mxu0 0
      %3254 = vmatprep.mubr.bf16.mxu0 0
      %3255 = vmatmul.mubr.bf16.gmra.mrb[0].mxu0 %v3220
      %v3256 = vpop.f32.mrb[0].mxu0
      %v3257 = vadd.f32 %v3217, %v3256
      %v3258 = vpop.f32.mrb[0].mxu0
      %v3259 = vpop.f32.mrb[0].mxu0
      %v3260 = vpop.f32.mrb[0].mxu0
      %3261 = vdwg.mxu0
      %v3264 = vunpack.c.l.s4 1966171168
      %v3265 = vunpack.c.0.s8 %v3264
      %v3266 = vlaneseq
      %v3267 = vshrl.u32 %v3266, 7
      %v3268 = vsub.s32 %v3265, %v3267
      %v3269 = vrot.slane %v3257, %v3268
      %v3270 = vcombine.high %v3269, %v3269
      %v3272 = vunpack.c.l.s4 1966171168
      %v3273 = vunpack.c.0.s8 %v3272
      %v3274 = vlaneseq
      %v3275 = vshrl.u32 %v3274, 7
      %v3276 = vsub.s32 %v3273, %v3275
      %v3277 = vrot.slane %v3269, %v3276
      %v3279 = vunpack.c.l.s4 1966171168
      %v3280 = vunpack.c.0.s8 %v3279
      %v3281 = vlaneseq
      %v3282 = vshrl.u32 %v3281, 7
      %v3283 = vsub.s32 %v3280, %v3282
      %v3284 = vrot.slane %v3270, %v3283
      %v3285 = vcombine.high %v3277, %v3277
      %v3286 = vcombine.high %v3284, %v3284
      %v3291 = vpack.c.bf16 %v3277, %v3277
      %v3292 = vpack.c.bf16 %v3284, %v3284
      %v3293 = vpack.c.bf16 %v3285, %v3285
      %v3294 = vpack.c.bf16 %v3286, %v3286
      %v3299 = vunpack.c.l.b16 %v3291
      %v3300 = vunpack.c.l.b16 %v3292
      %v3301 = vunpack.c.l.b16 %v3293
      %v3302 = vunpack.c.l.b16 %v3294
      %v3303 = vpack.c.b16 %v3299, %v3299
      %v3304 = vpack.c.b16 %v3300, %v3300
      %v3305 = vpack.c.b16 %v3301, %v3301
      %v3306 = vpack.c.b16 %v3302, %v3302
      %v3307 = vrot.slane %v3303, 6
      %v3308 = vrot.slane %v3304, 6
      %v3309 = vrot.slane %v3305, 6
      %v3310 = vrot.slane %v3306, 6
      %v3315 = vld [vmem:[%s318 + $0x4] sm:$0x4]
      %v3316 = vsel %vm1467, %v3307, %v3315
      %3317 = vst [vmem:[%s318 + $0x4] sm:$0x4] %v3316
      %v3318 = vld [vmem:[%s318 + $0xc] sm:$0x4]
      %v3319 = vsel %vm1467, %v3308, %v3318
      %3320 = vst [vmem:[%s318 + $0xc] sm:$0x4] %v3319
      %v3321 = vld [vmem:[%s318 + $0x14] sm:$0x4]
      %v3322 = vsel %vm1467, %v3309, %v3321
      %3323 = vst [vmem:[%s318 + $0x14] sm:$0x4] %v3322
      %v3324 = vld [vmem:[%s318 + $0x1c] sm:$0x4]
      %v3325 = vsel %vm1467, %v3310, %v3324
      %3326 = vst [vmem:[%s318 + $0x1c] sm:$0x4] %v3325
      %v3327 = vld [vmem:[%s308 + $0xd] sm:$0x1]
      %v3328 = vld [vmem:[%s1] sm:$0xff]
      %v3329 = vld [vmem:[%s1 + $0x8] sm:$0xff]
      %v3330 = vlaneseq
      %v3331 = vshrl.u32 %v3330, 7
      %v3332 = vsub.s32 0, %v3331
      %v3333 = vrot.slane %v3327, %v3332
      %3335 = vset.pattern.permute.xlu0 0
      %3336 = vperm.xlu0 %3335, %v3328
      %v3337 = vpop.permute.xlu0 %3336
      %3340 = vset.pattern.permute.xlu0 0
      %3341 = vperm.xlu0 %3340, %v3329
      %v3342 = vpop.permute.xlu0 %3341
      %v3344 = vsub.f32 %v3333, %v3337
      %v3345 = vsub.f32 %v3333, %v3342
      %v3346 = vmul.f32 %v3344, %v348
      %v3347 = vmul.f32 %v3345, %v348
      %v3348 = vmul.f32 %v3346, %v3346
      %v3349 = vmul.f32 %v3347, %v3347
      %v3350 = vmul.f32 %v3348, -0.5
      %v3351 = vmul.f32 %v3349, -0.5
      %v3352 = vmul.f32 %v3350, 1.442695
      %v3353 = vpow.pop %v3352
      %v3354 = vmul.f32 %v3351, 1.442695
      %v3355 = vpow.pop %v3354
      %v3356 = vld [vmem:[%s3] sm:$0xf]
      %v3357 = vld [vmem:[%s3 + $0x4] sm:$0xf]
      %v3358 = vpack.c.bf16 %v3355, %v3353
      %v3359 = vld [vmem:[%s4] sm:$0xff]
      %v3360 = vld [vmem:[%s4 + $0x8] sm:$0xff]
      %3362 = vset.pattern.permute.xlu0 0
      %3363 = vperm.xlu0 %3362, %v3359
      %v3364 = vpop.permute.xlu0 %3363
      %3367 = vset.pattern.permute.xlu0 0
      %3368 = vperm.xlu0 %3367, %v3360
      %v3369 = vpop.permute.xlu0 %3368
      %v3373 = vunpack.c.l.b16 %v3356
      %v3374 = vunpack.c.l.b16 %v3357
      %v3375 = vpack.c.b16 %v3374, %v3373
      %v3377 = vsel %vm380, %v3375, 0
      %3379 = vmatprep.subr.bf16.mxu0 0
      %3380 = vmatpush1.bf16.msra.mxu0 %v3358
      %3381 = vmatprep.subr.bf16.mxu0 0
      %3382 = vmatpush1.bf16.msra.mxu0 0
      %3383 = vmatprep.subr.bf16.mxu0 0
      %3384 = vmatpush1.bf16.msra.mxu0 0
      %3385 = vmatprep.subr.bf16.mxu0 0
      %3386 = vmatpush1.bf16.msra.mxu0 0
      %3387 = vmatprep.subr.bf16.mxu0 0
      %3388 = vmatpush1.bf16.msra.mxu0 0
      %3389 = vmatprep.subr.bf16.mxu0 0
      %3390 = vmatpush1.bf16.msra.mxu0 0
      %3391 = vmatprep.subr.bf16.mxu0 0
      %3392 = vmatpush1.bf16.msra.mxu0 0
      %3393 = vmatprep.subr.bf16.mxu0 0
      %3394 = vmatpush1.bf16.msra.mxu0 0
      %3395 = vmatprep.subr.bf16.mxu0 0
      %3396 = vmatpush1.bf16.msra.mxu0 0
      %3397 = vmatprep.subr.bf16.mxu0 0
      %3398 = vmatpush1.bf16.msra.mxu0 0
      %3399 = vmatprep.subr.bf16.mxu0 0
      %3400 = vmatpush1.bf16.msra.mxu0 0
      %3401 = vmatprep.subr.bf16.mxu0 0
      %3402 = vmatpush1.bf16.msra.mxu0 0
      %3403 = vmatprep.subr.bf16.mxu0 0
      %3404 = vmatpush1.bf16.msra.mxu0 0
      %3405 = vmatprep.subr.bf16.mxu0 0
      %3406 = vmatpush1.bf16.msra.mxu0 0
      %3407 = vmatprep.subr.bf16.mxu0 0
      %3408 = vmatpush1.bf16.msra.mxu0 0
      %3409 = vmatprep.subr.bf16.mxu0 0
      %3410 = vmatpush1.bf16.msra.mxu0 0
      %3411 = vmatprep.mubr.bf16.mxu0 0
      %3412 = vmatmul.mubr.bf16.gmra.mrb[0].mxu0 %v3377
      %v3413 = vpop.f32.mrb[0].mxu0
      %v3414 = vadd.f32 %v3364, %v3413
      %v3415 = vpop.f32.mrb[0].mxu0
      %v3416 = vpop.f32.mrb[0].mxu0
      %v3417 = vadd.f32 %v3369, %v3416
      %v3418 = vpop.f32.mrb[0].mxu0
      %3419 = vdwg.mxu0
      %v3420 = vmul.f32 %v3414, %v3414
      %v3421 = vmul.f32 %v3417, %v3417
      %v3422 = vmul.f32 %v3414, %v3420
      %v3423 = vmul.f32 %v3417, %v3421
      %v3424 = vmul.f32 %v3422, 0.044715
      %v3425 = vmul.f32 %v3423, 0.044715
      %v3426 = vadd.f32 %v3414, %v3424
      %v3427 = vadd.f32 %v3417, %v3425
      %v3428 = vmul.f32 %v3426, 0.7978846
      %v3429 = vmul.f32 %v3427, 0.7978846
      %v3430 = vtanh.pop %v3428
      %v3431 = vtanh.pop %v3429
      %v3432 = vadd.f32 %v3430, 1.0
      %v3433 = vadd.f32 %v3431, 1.0
      %v3434 = vmul.f32 %v3432, 0.5
      %v3435 = vmul.f32 %v3433, 0.5
      %v3436 = vmul.f32 %v3414, %v3434
      %v3437 = vmul.f32 %v3417, %v3435
      %v3438 = vld [vmem:[%s5] sm:$0x3]
      %v3439 = vpack.c.bf16 %v3437, %v3436
      %v3440 = vld [vmem:[%s6] sm:$0xf]
      %3442 = vset.pattern.permute.xlu0 0
      %3443 = vperm.xlu0 %3442, %v3440
      %v3444 = vpop.permute.xlu0 %3443
      %v3447 = vsel %vm380, %v3438, 0
      %3449 = vmatprep.subr.bf16.mxu0 0
      %3450 = vmatpush1.bf16.msra.mxu0 %v3439
      %3451 = vmatprep.subr.bf16.mxu0 0
      %3452 = vmatpush1.bf16.msra.mxu0 0
      %3453 = vmatprep.subr.bf16.mxu0 0
      %3454 = vmatpush1.bf16.msra.mxu0 0
      %3455 = vmatprep.subr.bf16.mxu0 0
      %3456 = vmatpush1.bf16.msra.mxu0 0
      %3457 = vmatprep.subr.bf16.mxu0 0
      %3458 = vmatpush1.bf16.msra.mxu0 0
      %3459 = vmatprep.subr.bf16.mxu0 0
      %3460 = vmatpush1.bf16.msra.mxu0 0
      %3461 = vmatprep.subr.bf16.mxu0 0
      %3462 = vmatpush1.bf16.msra.mxu0 0
      %3463 = vmatprep.subr.bf16.mxu0 0
      %3464 = vmatpush1.bf16.msra.mxu0 0
      %3465 = vmatprep.subr.bf16.mxu0 0
      %3466 = vmatpush1.bf16.msra.mxu0 0
      %3467 = vmatprep.subr.bf16.mxu0 0
      %3468 = vmatpush1.bf16.msra.mxu0 0
      %3469 = vmatprep.subr.bf16.mxu0 0
      %3470 = vmatpush1.bf16.msra.mxu0 0
      %3471 = vmatprep.subr.bf16.mxu0 0
      %3472 = vmatpush1.bf16.msra.mxu0 0
      %3473 = vmatprep.subr.bf16.mxu0 0
      %3474 = vmatpush1.bf16.msra.mxu0 0
      %3475 = vmatprep.subr.bf16.mxu0 0
      %3476 = vmatpush1.bf16.msra.mxu0 0
      %3477 = vmatprep.subr.bf16.mxu0 0
      %3478 = vmatpush1.bf16.msra.mxu0 0
      %3479 = vmatprep.subr.bf16.mxu0 0
      %3480 = vmatpush1.bf16.msra.mxu0 0
      %3481 = vmatprep.mubr.bf16.mxu0 0
      %3482 = vmatmul.mubr.bf16.gmra.mrb[0].mxu0 %v3447
      %v3483 = vpop.f32.mrb[0].mxu0
      %v3484 = vadd.f32 %v3444, %v3483
      %v3485 = vpop.f32.mrb[0].mxu0
      %v3486 = vpop.f32.mrb[0].mxu0
      %v3487 = vpop.f32.mrb[0].mxu0
      %3488 = vdwg.mxu0
      %v3491 = vunpack.c.l.s4 1966171168
      %v3492 = vunpack.c.0.s8 %v3491
      %v3493 = vlaneseq
      %v3494 = vshrl.u32 %v3493, 7
      %v3495 = vsub.s32 %v3492, %v3494
      %v3496 = vrot.slane %v3484, %v3495
      %v3497 = vcombine.high %v3496, %v3496
      %v3499 = vunpack.c.l.s4 1966171168
      %v3500 = vunpack.c.0.s8 %v3499
      %v3501 = vlaneseq
      %v3502 = vshrl.u32 %v3501, 7
      %v3503 = vsub.s32 %v3500, %v3502
      %v3504 = vrot.slane %v3496, %v3503
      %v3506 = vunpack.c.l.s4 1966171168
      %v3507 = vunpack.c.0.s8 %v3506
      %v3508 = vlaneseq
      %v3509 = vshrl.u32 %v3508, 7
      %v3510 = vsub.s32 %v3507, %v3509
      %v3511 = vrot.slane %v3497, %v3510
      %v3512 = vcombine.high %v3504, %v3504
      %v3513 = vcombine.high %v3511, %v3511
      %v3518 = vpack.c.bf16 %v3504, %v3504
      %v3519 = vpack.c.bf16 %v3511, %v3511
      %v3520 = vpack.c.bf16 %v3512, %v3512
      %v3521 = vpack.c.bf16 %v3513, %v3513
      %v3526 = vunpack.c.l.b16 %v3518
      %v3527 = vunpack.c.l.b16 %v3519
      %v3528 = vunpack.c.l.b16 %v3520
      %v3529 = vunpack.c.l.b16 %v3521
      %v3530 = vpack.c.b16 %v3526, %v3526
      %v3531 = vpack.c.b16 %v3527, %v3527
      %v3532 = vpack.c.b16 %v3528, %v3528
      %v3533 = vpack.c.b16 %v3529, %v3529
      %v3535 = vshll.u32 %v3530, 16
      %v3537 = vrot.slane %v3535, 6
      %v3539 = vshll.u32 %v3531, 16
      %v3541 = vrot.slane %v3539, 6
      %v3543 = vshll.u32 %v3532, 16
      %v3545 = vrot.slane %v3543, 6
      %v3547 = vshll.u32 %v3533, 16
      %v3549 = vrot.slane %v3547, 6
      %v3554 = vld [vmem:[%s318 + $0x4] sm:$0x4]
      %v3555 = vsel %vm1708, %v3537, %v3554
      %3556 = vst [vmem:[%s318 + $0x4] sm:$0x4] %v3555
      %v3557 = vld [vmem:[%s318 + $0xc] sm:$0x4]
      %v3558 = vsel %vm1708, %v3541, %v3557
      %3559 = vst [vmem:[%s318 + $0xc] sm:$0x4] %v3558
      %v3560 = vld [vmem:[%s318 + $0x14] sm:$0x4]
      %v3561 = vsel %vm1708, %v3545, %v3560
      %3562 = vst [vmem:[%s318 + $0x14] sm:$0x4] %v3561
      %v3563 = vld [vmem:[%s318 + $0x1c] sm:$0x4]
      %v3564 = vsel %vm1708, %v3549, %v3563
      %3565 = vst [vmem:[%s318 + $0x1c] sm:$0x4] %v3564
      %v3566 = vld [vmem:[%s308 + $0xe] sm:$0x1]
      %v3567 = vld [vmem:[%s1] sm:$0xff]
      %v3568 = vld [vmem:[%s1 + $0x8] sm:$0xff]
      %v3569 = vlaneseq
      %v3570 = vshrl.u32 %v3569, 7
      %v3571 = vsub.s32 0, %v3570
      %v3572 = vrot.slane %v3566, %v3571
      %3574 = vset.pattern.permute.xlu0 0
      %3575 = vperm.xlu0 %3574, %v3567
      %v3576 = vpop.permute.xlu0 %3575
      %3579 = vset.pattern.permute.xlu0 0
      %3580 = vperm.xlu0 %3579, %v3568
      %v3581 = vpop.permute.xlu0 %3580
      %v3583 = vsub.f32 %v3572, %v3576
      %v3584 = vsub.f32 %v3572, %v3581
      %v3585 = vmul.f32 %v3583, %v348
      %v3586 = vmul.f32 %v3584, %v348
      %v3587 = vmul.f32 %v3585, %v3585
      %v3588 = vmul.f32 %v3586, %v3586
      %v3589 = vmul.f32 %v3587, -0.5
      %v3590 = vmul.f32 %v3588, -0.5
      %v3591 = vmul.f32 %v3589, 1.442695
      %v3592 = vpow.pop %v3591
      %v3593 = vmul.f32 %v3590, 1.442695
      %v3594 = vpow.pop %v3593
      %v3595 = vld [vmem:[%s3] sm:$0xf]
      %v3596 = vld [vmem:[%s3 + $0x4] sm:$0xf]
      %v3597 = vpack.c.bf16 %v3594, %v3592
      %v3598 = vld [vmem:[%s4] sm:$0xff]
      %v3599 = vld [vmem:[%s4 + $0x8] sm:$0xff]
      %3601 = vset.pattern.permute.xlu0 0
      %3602 = vperm.xlu0 %3601, %v3598
      %v3603 = vpop.permute.xlu0 %3602
      %3606 = vset.pattern.permute.xlu0 0
      %3607 = vperm.xlu0 %3606, %v3599
      %v3608 = vpop.permute.xlu0 %3607
      %v3612 = vunpack.c.l.b16 %v3595
      %v3613 = vunpack.c.l.b16 %v3596
      %v3614 = vpack.c.b16 %v3613, %v3612
      %v3616 = vsel %vm380, %v3614, 0
      %3618 = vmatprep.subr.bf16.mxu0 0
      %3619 = vmatpush1.bf16.msra.mxu0 %v3597
      %3620 = vmatprep.subr.bf16.mxu0 0
      %3621 = vmatpush1.bf16.msra.mxu0 0
      %3622 = vmatprep.subr.bf16.mxu0 0
      %3623 = vmatpush1.bf16.msra.mxu0 0
      %3624 = vmatprep.subr.bf16.mxu0 0
      %3625 = vmatpush1.bf16.msra.mxu0 0
      %3626 = vmatprep.subr.bf16.mxu0 0
      %3627 = vmatpush1.bf16.msra.mxu0 0
      %3628 = vmatprep.subr.bf16.mxu0 0
      %3629 = vmatpush1.bf16.msra.mxu0 0
      %3630 = vmatprep.subr.bf16.mxu0 0
      %3631 = vmatpush1.bf16.msra.mxu0 0
      %3632 = vmatprep.subr.bf16.mxu0 0
      %3633 = vmatpush1.bf16.msra.mxu0 0
      %3634 = vmatprep.subr.bf16.mxu0 0
      %3635 = vmatpush1.bf16.msra.mxu0 0
      %3636 = vmatprep.subr.bf16.mxu0 0
      %3637 = vmatpush1.bf16.msra.mxu0 0
      %3638 = vmatprep.subr.bf16.mxu0 0
      %3639 = vmatpush1.bf16.msra.mxu0 0
      %3640 = vmatprep.subr.bf16.mxu0 0
      %3641 = vmatpush1.bf16.msra.mxu0 0
      %3642 = vmatprep.subr.bf16.mxu0 0
      %3643 = vmatpush1.bf16.msra.mxu0 0
      %3644 = vmatprep.subr.bf16.mxu0 0
      %3645 = vmatpush1.bf16.msra.mxu0 0
      %3646 = vmatprep.subr.bf16.mxu0 0
      %3647 = vmatpush1.bf16.msra.mxu0 0
      %3648 = vmatprep.subr.bf16.mxu0 0
      %3649 = vmatpush1.bf16.msra.mxu0 0
      %3650 = vmatprep.mubr.bf16.mxu0 0
      %3651 = vmatmul.mubr.bf16.gmra.mrb[0].mxu0 %v3616
      %v3652 = vpop.f32.mrb[0].mxu0
      %v3653 = vadd.f32 %v3603, %v3652
      %v3654 = vpop.f32.mrb[0].mxu0
      %v3655 = vpop.f32.mrb[0].mxu0
      %v3656 = vadd.f32 %v3608, %v3655
      %v3657 = vpop.f32.mrb[0].mxu0
      %3658 = vdwg.mxu0
      %v3659 = vmul.f32 %v3653, %v3653
      %v3660 = vmul.f32 %v3656, %v3656
      %v3661 = vmul.f32 %v3653, %v3659
      %v3662 = vmul.f32 %v3656, %v3660
      %v3663 = vmul.f32 %v3661, 0.044715
      %v3664 = vmul.f32 %v3662, 0.044715
      %v3665 = vadd.f32 %v3653, %v3663
      %v3666 = vadd.f32 %v3656, %v3664
      %v3667 = vmul.f32 %v3665, 0.7978846
      %v3668 = vmul.f32 %v3666, 0.7978846
      %v3669 = vtanh.pop %v3667
      %v3670 = vtanh.pop %v3668
      %v3671 = vadd.f32 %v3669, 1.0
      %v3672 = vadd.f32 %v3670, 1.0
      %v3673 = vmul.f32 %v3671, 0.5
      %v3674 = vmul.f32 %v3672, 0.5
      %v3675 = vmul.f32 %v3653, %v3673
      %v3676 = vmul.f32 %v3656, %v3674
      %v3677 = vld [vmem:[%s5] sm:$0x3]
      %v3678 = vpack.c.bf16 %v3676, %v3675
      %v3679 = vld [vmem:[%s6] sm:$0xf]
      %3681 = vset.pattern.permute.xlu0 0
      %3682 = vperm.xlu0 %3681, %v3679
      %v3683 = vpop.permute.xlu0 %3682
      %v3686 = vsel %vm380, %v3677, 0
      %3688 = vmatprep.subr.bf16.mxu0 0
      %3689 = vmatpush1.bf16.msra.mxu0 %v3678
      %3690 = vmatprep.subr.bf16.mxu0 0
      %3691 = vmatpush1.bf16.msra.mxu0 0
      %3692 = vmatprep.subr.bf16.mxu0 0
      %3693 = vmatpush1.bf16.msra.mxu0 0
      %3694 = vmatprep.subr.bf16.mxu0 0
      %3695 = vmatpush1.bf16.msra.mxu0 0
      %3696 = vmatprep.subr.bf16.mxu0 0
      %3697 = vmatpush1.bf16.msra.mxu0 0
      %3698 = vmatprep.subr.bf16.mxu0 0
      %3699 = vmatpush1.bf16.msra.mxu0 0
      %3700 = vmatprep.subr.bf16.mxu0 0
      %3701 = vmatpush1.bf16.msra.mxu0 0
      %3702 = vmatprep.subr.bf16.mxu0 0
      %3703 = vmatpush1.bf16.msra.mxu0 0
      %3704 = vmatprep.subr.bf16.mxu0 0
      %3705 = vmatpush1.bf16.msra.mxu0 0
      %3706 = vmatprep.subr.bf16.mxu0 0
      %3707 = vmatpush1.bf16.msra.mxu0 0
      %3708 = vmatprep.subr.bf16.mxu0 0
      %3709 = vmatpush1.bf16.msra.mxu0 0
      %3710 = vmatprep.subr.bf16.mxu0 0
      %3711 = vmatpush1.bf16.msra.mxu0 0
      %3712 = vmatprep.subr.bf16.mxu0 0
      %3713 = vmatpush1.bf16.msra.mxu0 0
      %3714 = vmatprep.subr.bf16.mxu0 0
      %3715 = vmatpush1.bf16.msra.mxu0 0
      %3716 = vmatprep.subr.bf16.mxu0 0
      %3717 = vmatpush1.bf16.msra.mxu0 0
      %3718 = vmatprep.subr.bf16.mxu0 0
      %3719 = vmatpush1.bf16.msra.mxu0 0
      %3720 = vmatprep.mubr.bf16.mxu0 0
      %3721 = vmatmul.mubr.bf16.gmra.mrb[0].mxu0 %v3686
      %v3722 = vpop.f32.mrb[0].mxu0
      %v3723 = vadd.f32 %v3683, %v3722
      %v3724 = vpop.f32.mrb[0].mxu0
      %v3725 = vpop.f32.mrb[0].mxu0
      %v3726 = vpop.f32.mrb[0].mxu0
      %3727 = vdwg.mxu0
      %v3730 = vunpack.c.l.s4 1966171168
      %v3731 = vunpack.c.0.s8 %v3730
      %v3732 = vlaneseq
      %v3733 = vshrl.u32 %v3732, 7
      %v3734 = vsub.s32 %v3731, %v3733
      %v3735 = vrot.slane %v3723, %v3734
      %v3736 = vcombine.high %v3735, %v3735
      %v3738 = vunpack.c.l.s4 1966171168
      %v3739 = vunpack.c.0.s8 %v3738
      %v3740 = vlaneseq
      %v3741 = vshrl.u32 %v3740, 7
      %v3742 = vsub.s32 %v3739, %v3741
      %v3743 = vrot.slane %v3735, %v3742
      %v3745 = vunpack.c.l.s4 1966171168
      %v3746 = vunpack.c.0.s8 %v3745
      %v3747 = vlaneseq
      %v3748 = vshrl.u32 %v3747, 7
      %v3749 = vsub.s32 %v3746, %v3748
      %v3750 = vrot.slane %v3736, %v3749
      %v3751 = vcombine.high %v3743, %v3743
      %v3752 = vcombine.high %v3750, %v3750
      %v3757 = vpack.c.bf16 %v3743, %v3743
      %v3758 = vpack.c.bf16 %v3750, %v3750
      %v3759 = vpack.c.bf16 %v3751, %v3751
      %v3760 = vpack.c.bf16 %v3752, %v3752
      %v3765 = vunpack.c.l.b16 %v3757
      %v3766 = vunpack.c.l.b16 %v3758
      %v3767 = vunpack.c.l.b16 %v3759
      %v3768 = vunpack.c.l.b16 %v3760
      %v3769 = vpack.c.b16 %v3765, %v3765
      %v3770 = vpack.c.b16 %v3766, %v3766
      %v3771 = vpack.c.b16 %v3767, %v3767
      %v3772 = vpack.c.b16 %v3768, %v3768
      %v3773 = vrot.slane %v3769, 5
      %v3774 = vrot.slane %v3770, 5
      %v3775 = vrot.slane %v3771, 5
      %v3776 = vrot.slane %v3772, 5
      %v3781 = vld [vmem:[%s318 + $0x4] sm:$0x8]
      %v3782 = vsel %vm1938, %v3773, %v3781
      %3783 = vst [vmem:[%s318 + $0x4] sm:$0x8] %v3782
      %v3784 = vld [vmem:[%s318 + $0xc] sm:$0x8]
      %v3785 = vsel %vm1938, %v3774, %v3784
      %3786 = vst [vmem:[%s318 + $0xc] sm:$0x8] %v3785
      %v3787 = vld [vmem:[%s318 + $0x14] sm:$0x8]
      %v3788 = vsel %vm1938, %v3775, %v3787
      %3789 = vst [vmem:[%s318 + $0x14] sm:$0x8] %v3788
      %v3790 = vld [vmem:[%s318 + $0x1c] sm:$0x8]
      %v3791 = vsel %vm1938, %v3776, %v3790
      %3792 = vst [vmem:[%s318 + $0x1c] sm:$0x8] %v3791
      %v3793 = vld [vmem:[%s308 + $0xf] sm:$0x1]
      %v3794 = vld [vmem:[%s1] sm:$0xff]
      %v3795 = vld [vmem:[%s1 + $0x8] sm:$0xff]
      %v3796 = vlaneseq
      %v3797 = vshrl.u32 %v3796, 7
      %v3798 = vsub.s32 0, %v3797
      %v3799 = vrot.slane %v3793, %v3798
      %3801 = vset.pattern.permute.xlu0 0
      %3802 = vperm.xlu0 %3801, %v3794
      %v3803 = vpop.permute.xlu0 %3802
      %3806 = vset.pattern.permute.xlu0 0
      %3807 = vperm.xlu0 %3806, %v3795
      %v3808 = vpop.permute.xlu0 %3807
      %v3810 = vsub.f32 %v3799, %v3803
      %v3811 = vsub.f32 %v3799, %v3808
      %v3812 = vmul.f32 %v3810, %v348
      %v3813 = vmul.f32 %v3811, %v348
      %v3814 = vmul.f32 %v3812, %v3812
      %v3815 = vmul.f32 %v3813, %v3813
      %v3816 = vmul.f32 %v3814, -0.5
      %v3817 = vmul.f32 %v3815, -0.5
      %v3818 = vmul.f32 %v3816, 1.442695
      %v3819 = vpow.pop %v3818
      %v3820 = vmul.f32 %v3817, 1.442695
      %v3821 = vpow.pop %v3820
      %v3822 = vld [vmem:[%s3] sm:$0xf]
      %v3823 = vld [vmem:[%s3 + $0x4] sm:$0xf]
      %v3824 = vpack.c.bf16 %v3821, %v3819
      %v3825 = vld [vmem:[%s4] sm:$0xff]
      %v3826 = vld [vmem:[%s4 + $0x8] sm:$0xff]
      %3828 = vset.pattern.permute.xlu0 0
      %3829 = vperm.xlu0 %3828, %v3825
      %v3830 = vpop.permute.xlu0 %3829
      %3833 = vset.pattern.permute.xlu0 0
      %3834 = vperm.xlu0 %3833, %v3826
      %v3835 = vpop.permute.xlu0 %3834
      %v3839 = vunpack.c.l.b16 %v3822
      %v3840 = vunpack.c.l.b16 %v3823
      %v3841 = vpack.c.b16 %v3840, %v3839
      %v3843 = vsel %vm380, %v3841, 0
      %3845 = vmatprep.subr.bf16.mxu0 0
      %3846 = vmatpush1.bf16.msra.mxu0 %v3824
      %3847 = vmatprep.subr.bf16.mxu0 0
      %3848 = vmatpush1.bf16.msra.mxu0 0
      %3849 = vmatprep.subr.bf16.mxu0 0
      %3850 = vmatpush1.bf16.msra.mxu0 0
      %3851 = vmatprep.subr.bf16.mxu0 0
      %3852 = vmatpush1.bf16.msra.mxu0 0
      %3853 = vmatprep.subr.bf16.mxu0 0
      %3854 = vmatpush1.bf16.msra.mxu0 0
      %3855 = vmatprep.subr.bf16.mxu0 0
      %3856 = vmatpush1.bf16.msra.mxu0 0
      %3857 = vmatprep.subr.bf16.mxu0 0
      %3858 = vmatpush1.bf16.msra.mxu0 0
      %3859 = vmatprep.subr.bf16.mxu0 0
      %3860 = vmatpush1.bf16.msra.mxu0 0
      %3861 = vmatprep.subr.bf16.mxu0 0
      %3862 = vmatpush1.bf16.msra.mxu0 0
      %3863 = vmatprep.subr.bf16.mxu0 0
      %3864 = vmatpush1.bf16.msra.mxu0 0
      %3865 = vmatprep.subr.bf16.mxu0 0
      %3866 = vmatpush1.bf16.msra.mxu0 0
      %3867 = vmatprep.subr.bf16.mxu0 0
      %3868 = vmatpush1.bf16.msra.mxu0 0
      %3869 = vmatprep.subr.bf16.mxu0 0
      %3870 = vmatpush1.bf16.msra.mxu0 0
      %3871 = vmatprep.subr.bf16.mxu0 0
      %3872 = vmatpush1.bf16.msra.mxu0 0
      %3873 = vmatprep.subr.bf16.mxu0 0
      %3874 = vmatpush1.bf16.msra.mxu0 0
      %3875 = vmatprep.subr.bf16.mxu0 0
      %3876 = vmatpush1.bf16.msra.mxu0 0
      %3877 = vmatprep.mubr.bf16.mxu0 0
      %3878 = vmatmul.mubr.bf16.gmra.mrb[0].mxu0 %v3843
      %v3879 = vpop.f32.mrb[0].mxu0
      %v3880 = vadd.f32 %v3830, %v3879
      %v3881 = vpop.f32.mrb[0].mxu0
      %v3882 = vpop.f32.mrb[0].mxu0
      %v3883 = vadd.f32 %v3835, %v3882
      %v3884 = vpop.f32.mrb[0].mxu0
      %3885 = vdwg.mxu0
      %v3886 = vmul.f32 %v3880, %v3880
      %v3887 = vmul.f32 %v3883, %v3883
      %v3888 = vmul.f32 %v3880, %v3886
      %v3889 = vmul.f32 %v3883, %v3887
      %v3890 = vmul.f32 %v3888, 0.044715
      %v3891 = vmul.f32 %v3889, 0.044715
      %v3892 = vadd.f32 %v3880, %v3890
      %v3893 = vadd.f32 %v3883, %v3891
      %v3894 = vmul.f32 %v3892, 0.7978846
      %v3895 = vmul.f32 %v3893, 0.7978846
      %v3896 = vtanh.pop %v3894
      %v3897 = vtanh.pop %v3895
      %v3898 = vadd.f32 %v3896, 1.0
      %v3899 = vadd.f32 %v3897, 1.0
      %v3900 = vmul.f32 %v3898, 0.5
      %v3901 = vmul.f32 %v3899, 0.5
      %v3902 = vmul.f32 %v3880, %v3900
      %v3903 = vmul.f32 %v3883, %v3901
      %v3904 = vld [vmem:[%s5] sm:$0x3]
      %v3905 = vpack.c.bf16 %v3903, %v3902
      %v3906 = vld [vmem:[%s6] sm:$0xf]
      %3908 = vset.pattern.permute.xlu0 0
      %3909 = vperm.xlu0 %3908, %v3906
      %v3910 = vpop.permute.xlu0 %3909
      %v3913 = vsel %vm380, %v3904, 0
      %3915 = vmatprep.subr.bf16.mxu0 0
      %3916 = vmatpush1.bf16.msra.mxu0 %v3905
      %3917 = vmatprep.subr.bf16.mxu0 0
      %3918 = vmatpush1.bf16.msra.mxu0 0
      %3919 = vmatprep.subr.bf16.mxu0 0
      %3920 = vmatpush1.bf16.msra.mxu0 0
      %3921 = vmatprep.subr.bf16.mxu0 0
      %3922 = vmatpush1.bf16.msra.mxu0 0
      %3923 = vmatprep.subr.bf16.mxu0 0
      %3924 = vmatpush1.bf16.msra.mxu0 0
      %3925 = vmatprep.subr.bf16.mxu0 0
      %3926 = vmatpush1.bf16.msra.mxu0 0
      %3927 = vmatprep.subr.bf16.mxu0 0
      %3928 = vmatpush1.bf16.msra.mxu0 0
      %3929 = vmatprep.subr.bf16.mxu0 0
      %3930 = vmatpush1.bf16.msra.mxu0 0
      %3931 = vmatprep.subr.bf16.mxu0 0
      %3932 = vmatpush1.bf16.msra.mxu0 0
      %3933 = vmatprep.subr.bf16.mxu0 0
      %3934 = vmatpush1.bf16.msra.mxu0 0
      %3935 = vmatprep.subr.bf16.mxu0 0
      %3936 = vmatpush1.bf16.msra.mxu0 0
      %3937 = vmatprep.subr.bf16.mxu0 0
      %3938 = vmatpush1.bf16.msra.mxu0 0
      %3939 = vmatprep.subr.bf16.mxu0 0
      %3940 = vmatpush1.bf16.msra.mxu0 0
      %3941 = vmatprep.subr.bf16.mxu0 0
      %3942 = vmatpush1.bf16.msra.mxu0 0
      %3943 = vmatprep.subr.bf16.mxu0 0
      %3944 = vmatpush1.bf16.msra.mxu0 0
      %3945 = vmatprep.subr.bf16.mxu0 0
      %3946 = vmatpush1.bf16.msra.mxu0 0
      %3947 = vmatprep.mubr.bf16.mxu0 0
      %3948 = vmatmul.mubr.bf16.gmra.mrb[0].mxu0 %v3913
      %v3949 = vpop.f32.mrb[0].mxu0
      %v3950 = vadd.f32 %v3910, %v3949
      %v3951 = vpop.f32.mrb[0].mxu0
      %v3952 = vpop.f32.mrb[0].mxu0
      %v3953 = vpop.f32.mrb[0].mxu0
      %3954 = vdwg.mxu0
      %v3957 = vunpack.c.l.s4 1966171168
      %v3958 = vunpack.c.0.s8 %v3957
      %v3959 = vlaneseq
      %v3960 = vshrl.u32 %v3959, 7
      %v3961 = vsub.s32 %v3958, %v3960
      %v3962 = vrot.slane %v3950, %v3961
      %v3963 = vcombine.high %v3962, %v3962
      %v3965 = vunpack.c.l.s4 1966171168
      %v3966 = vunpack.c.0.s8 %v3965
      %v3967 = vlaneseq
      %v3968 = vshrl.u32 %v3967, 7
      %v3969 = vsub.s32 %v3966, %v3968
      %v3970 = vrot.slane %v3962, %v3969
      %v3972 = vunpack.c.l.s4 1966171168
      %v3973 = vunpack.c.0.s8 %v3972
      %v3974 = vlaneseq
      %v3975 = vshrl.u32 %v3974, 7
      %v3976 = vsub.s32 %v3973, %v3975
      %v3977 = vrot.slane %v3963, %v3976
      %v3978 = vcombine.high %v3970, %v3970
      %v3979 = vcombine.high %v3977, %v3977
      %v3984 = vpack.c.bf16 %v3970, %v3970
      %v3985 = vpack.c.bf16 %v3977, %v3977
      %v3986 = vpack.c.bf16 %v3978, %v3978
      %v3987 = vpack.c.bf16 %v3979, %v3979
      %v3992 = vunpack.c.l.b16 %v3984
      %v3993 = vunpack.c.l.b16 %v3985
      %v3994 = vunpack.c.l.b16 %v3986
      %v3995 = vunpack.c.l.b16 %v3987
      %v3996 = vpack.c.b16 %v3992, %v3992
      %v3997 = vpack.c.b16 %v3993, %v3993
      %v3998 = vpack.c.b16 %v3994, %v3994
      %v3999 = vpack.c.b16 %v3995, %v3995
      %v4001 = vshll.u32 %v3996, 16
      %v4003 = vrot.slane %v4001, 5
      %v4005 = vshll.u32 %v3997, 16
      %v4007 = vrot.slane %v4005, 5
      %v4009 = vshll.u32 %v3998, 16
      %v4011 = vrot.slane %v4009, 5
      %v4013 = vshll.u32 %v3999, 16
      %v4015 = vrot.slane %v4013, 5
      %v4020 = vld [vmem:[%s318 + $0x4] sm:$0x8]
      %v4021 = vsel %vm2179, %v4003, %v4020
      %4022 = vst [vmem:[%s318 + $0x4] sm:$0x8] %v4021
      %v4023 = vld [vmem:[%s318 + $0xc] sm:$0x8]
      %v4024 = vsel %vm2179, %v4007, %v4023
      %4025 = vst [vmem:[%s318 + $0xc] sm:$0x8] %v4024
      %v4026 = vld [vmem:[%s318 + $0x14] sm:$0x8]
      %v4027 = vsel %vm2179, %v4011, %v4026
      %4028 = vst [vmem:[%s318 + $0x14] sm:$0x8] %v4027
      %v4029 = vld [vmem:[%s318 + $0x1c] sm:$0x8]
      %v4030 = vsel %vm2179, %v4015, %v4029
      %4031 = vst [vmem:[%s318 + $0x1c] sm:$0x8] %v4030
      %s4032 = smul.u32 2, %s25
      %p4033 = scmp.lt.s32.totalorder %s24, 1
      %s4034 = scalar_select %p4033, %s24, 1
      %p4035 = scmp.lt.s32.totalorder %s4032, 1
      %s4036 = scalar_select %p4035, %s4032, 1
      %s4037 = smul.addr %s4034, 8
      %s4038 = sadd.s32 %s4036, %s4037
      %s4039 = smul.addr %s4038, 4
      %s4040 = scalar_lea.vmem %s7, %s4039
      // Predicated region
      $region49: #{_dense_forward.10} parent=47 // pred_check
        %p4041 = pneg %p206
      $region50: #{_dense_forward.10} parent=47 // pred_check_branch
        %4043 = sbr.rel (%p4041) target = $region52
      $region51: #{_dense_forward.10} parent=47 // pred_region
        %s4044 = smul.u32 2, %s25
      $region52: #{_dense_forward.10} parent=47 // pred_fallthru
        _
    $region48: #{_dense_forward.10} parent=5 // pred_fallthru
      _
    %p4045 = scmp.le.s32.totalorder 2, %s15
    // Predicated region
    $region53: #{_dense_forward.10} parent=5 // pred_check
      %p4046 = pneg %p4045
    $region54: #{_dense_forward.10} parent=5 // pred_check_branch
      %4048 = sbr.rel (%p4046) target = $region56
    $region55: #{_dense_forward.10} parent=5 // pred_region
      %s4049 = ssub.s32 %s15, 2
      // Predicated region
      $region57: #{_dense_forward.10} parent=55 // pred_check
        %p4050 = pneg %p212
      $region58: #{_dense_forward.10} parent=55 // pred_check_branch
        %4052 = sbr.rel (%p4050) target = $region60
      $region59: #{_dense_forward.10} parent=55 // pred_region
        %s4053 = smul.u32 2, %s27
        %p4054 = scmp.lt.s32.totalorder %s26, 1
        %s4055 = scalar_select %p4054, %s26, 1
        %p4056 = scmp.lt.s32.totalorder %s4053, 1
        %s4057 = scalar_select %p4056, %s4053, 1
        %s4058 = smul.addr %s4055, 8
        %s4059 = sadd.s32 %s4057, %s4058
        %s4060 = smul.addr %s4059, 4
        %s4061 = scalar_lea.vmem %s7, %s4060
      $region60: #{_dense_forward.10} parent=55 // pred_fallthru
        _
    $region56: #{_dense_forward.10} parent=5 // pred_fallthru
      _
  $region6: #{_dense_forward.10} parent=0 // loop_footer
    %s19 = sadd.s32 1, %s15
  $region7: #{_dense_forward.10} parent=0 // loop_footer_branch
    %14 = sbr.rel target = $region3
  $region8: #{_dense_forward.10} parent=0 // loop_exit
    _

</llo_original>
